<compile_context>
chip_gen: v7x
topology: tpu7x:2x2x1
jax: 0.10.0
libtpu: 0.0.40
codegen_flags: <defaults>
</compile_context>

<pallas_src>
import functools
import math

import jax
import jax.numpy as jnp
from jax.experimental import pallas as pl
from jax.experimental.pallas import tpu as pltpu


_CD = jnp.bfloat16                 # MXU operand / cross-stage dtype (f32 accum)
_VMEM_LIMIT = 40 * 1024 * 1024     # <= 62.5% of v7x physical VMEM; fine on v5e/v6e
_HEAD_PAD = 128                    # lane-dense padded width of the 4-wide head


# ---------------------------------------------------------------------------
# small helpers
# ---------------------------------------------------------------------------
def _round_up(a, b):
    return (a + b - 1) // b * b


def _pick_group_tile(G, cap):
    """Group tile: multiple of 16 (bf16 sublane packing), capped for VMEM."""
    # TODO(synk): on v7x prefer an even grid-step count so both TensorCores
    # stay busy; at these caps the step count is usually 1 or even already.
    return min(cap, _round_up(G, 16))


def _const_spec(arr):
    """Weight/bias BlockSpec: full array, constant block index (VMEM-resident)."""
    nd = arr.ndim
    return pl.BlockSpec(arr.shape, lambda *_: (0,) * nd)


def _mm(x, w):
    """bf16 MXU matmul with f32 accumulation."""
    return jnp.dot(x.astype(_CD), w.astype(_CD),
                   preferred_element_type=jnp.float32)


def _mm_bias_relu(x, w, b):
    return jnp.maximum(_mm(x, w) + b, 0.0)


# ---------------------------------------------------------------------------
# Pallas kernels (one per fused stage)
# ---------------------------------------------------------------------------
def _stage1_kernel(x_ref, w1, b1, w2, b2, w3, b3, w4a, w4b, b4, w5, b5, o_ref):
    """Fused conv1-3 + max_k + conv4(split, no concat) + conv5 + max_k.

    x_ref: (gt, k, 6) bf16 node-centered neighbor features; o_ref: (gt, 128) bf16.
    """
    gt, k, c0 = x_ref.shape
    x = x_ref[...].reshape(gt * k, c0)
    h = _mm_bias_relu(x, w1[...], b1[...]).astype(_CD)
    h = _mm_bias_relu(h, w2[...], b2[...]).astype(_CD)
    h = _mm_bias_relu(h, w3[...], b3[...]).astype(_CD)           # (gt*k, 64)
    c3 = h.shape[-1]
    hmax = jnp.max(h.reshape(gt, k, c3), axis=1)                 # (gt, 64)
    # conv4 on concat(per-point, pooled) == h @ W4a + pooled @ W4b  (no concat)
    t = _mm(h, w4a[...]) + b4[...]                               # (gt*k, 128) f32
    tp = _mm(hmax, w4b[...])                                     # (gt, 128)   f32
    c4 = t.shape[-1]
    h4 = jnp.maximum(t.reshape(gt, k, c4) + tp[:, None, :], 0.0).astype(_CD)
    h5 = _mm_bias_relu(h4.reshape(gt * k, c4), w5[...], b5[...]) # (gt*k, 128)
    c5 = h5.shape[-1]
    o_ref[...] = jnp.max(h5.reshape(gt, k, c5), axis=1).astype(o_ref.dtype)


def _stage2_kernel(coords_ref, feat_ref, pn_ref,
                   wf1c, wf1f, bf1, wf2, bf2, wf3, bf3,
                   ws1a, ws1b, bs1, ws2, bs2,
                   w1a, w1b, b1, w2, b2, w3, b3, o_ref):
    """Fused GeneralKNNFusionModule + head (mlp1/mlp2/mlp3), K flattened in rows.

    coords_ref: (K, gt, 3) bf16, feat_ref: (K, gt, 128) bf16,
    pn_ref: (gt, 128) bf16 (second_pn_out_max). o_ref: (gt, 128) f32 (lanes 0..3 valid).
    """
    K, gt, cc = coords_ref.shape
    cf = feat_ref.shape[-1]
    coords = coords_ref[...].reshape(K * gt, cc)
    feats = feat_ref[...].reshape(K * gt, cf)
    # knn_f1 on the un-materialized concat([coords, feats]) (split weights)
    h = jnp.maximum(_mm(coords, wf1c[...]) + _mm(feats, wf1f[...]) + bf1[...], 0.0)
    h = _mm_bias_relu(h, wf2[...], bf2[...])
    h = _mm_bias_relu(h, wf3[...], bf3[...]).astype(_CD)         # (K*gt, 256)
    c3 = h.shape[-1]
    # max over K: leading-axis slab maxima (pure VPU, no XLU reduction)
    hk = h.reshape(K, gt, c3)
    hmax = hk[0]
    for j in range(1, K):
        hmax = jnp.maximum(hmax, hk[j])                          # (gt, 256) bf16
    # knn_s1 on concat([per-neighbor, pooled]) == h @ Ws1a + pooled @ Ws1b
    pooled = _mm(hmax, ws1b[...])                                # (gt, 512)   f32
    t = _mm(h, ws1a[...])                                        # (K*gt, 512) f32
    cs = t.shape[-1]
    g = jnp.maximum(t.reshape(K, gt, cs) + pooled[None, :, :] + bs1[...], 0.0)
    g = _mm_bias_relu(g.reshape(K * gt, cs), ws2[...], bs2[...]) # (K*gt, 512)
    gk = g.astype(_CD).reshape(K, gt, cs)
    knn_feat = gk[0]
    for j in range(1, K):
        knn_feat = jnp.maximum(knn_feat, gk[j])                  # (gt, 512) bf16
    # fused head: mlp1 (split over [second_max | knn_feature]) -> mlp2 -> mlp3
    y = jnp.maximum(_mm(pn_ref[...], w1a[...]) + _mm(knn_feat, w1b[...])
                    + b1[...], 0.0)                              # (gt, 512)
    pd = _mm_bias_relu(y, w2[...], b2[...])                      # (gt, 256)
    o_ref[...] = (_mm(pd, w3[...]) + b3[...]).astype(o_ref.dtype)


# ---------------------------------------------------------------------------
# stage wrappers (pallas_call setup)
# ---------------------------------------------------------------------------
def first_pointnet(x_ball, p):
    """x_ball: (G, k, 6) bf16 -> (G, 128) bf16 max-pooled PointNet features."""
    G, k, c0 = x_ball.shape
    gt = _pick_group_tile(G, 128)
    Gp = _round_up(G, gt)
    if Gp != G:
        # padding is whole fake groups -> garbage rows are sliced off below
        x_ball = jnp.pad(x_ball, ((0, Gp - G), (0, 0), (0, 0)))
    weights = [
        p["conv1_w"].astype(_CD), p["conv1_b"],
        p["conv2_w"].astype(_CD), p["conv2_b"],
        p["conv3_w"].astype(_CD), p["conv3_b"],
        p["conv4a_w"].astype(_CD), p["conv4b_w"].astype(_CD), p["conv4_b"],
        p["conv5_w"].astype(_CD), p["conv5_b"],
    ]
    out = pl.pallas_call(
        _stage1_kernel,
        out_shape=jax.ShapeDtypeStruct((Gp, 128), _CD),
        grid_spec=pltpu.PrefetchScalarGridSpec(
            num_scalar_prefetch=0,
            grid=(Gp // gt,),
            in_specs=[pl.BlockSpec((gt, k, c0), lambda i: (i, 0, 0))]
                     + [_const_spec(w) for w in weights],
            out_specs=pl.BlockSpec((gt, 128), lambda i: (i, 0)),
        ),
        compiler_params=pltpu.CompilerParams(
            dimension_semantics=("parallel",),
            vmem_limit_bytes=_VMEM_LIMIT),
    )(x_ball, *weights)
    return out[:G]


def knn_fusion_head(coords_kfirst, feats_kfirst, second_max, p):
    """(K,G,3) bf16, (K,G,128) bf16, (G,128) bf16 -> (G, 4) f32 head output."""
    K, G, _ = coords_kfirst.shape
    gt = _pick_group_tile(G, 512)
    Gp = _round_up(G, gt)
    if Gp != G:
        pad = Gp - G
        coords_kfirst = jnp.pad(coords_kfirst, ((0, 0), (0, pad), (0, 0)))
        feats_kfirst = jnp.pad(feats_kfirst, ((0, 0), (0, pad), (0, 0)))
        second_max = jnp.pad(second_max, ((0, pad), (0, 0)))
    # lane-dense head: pad mlp3 to 128 output lanes (zeros), slice [:, :4] after
    w3_pad = jnp.pad(p["mlp3_w"], ((0, 0), (0, _HEAD_PAD - p["mlp3_w"].shape[1])))
    b3_pad = jnp.pad(p["mlp3_b"], ((0, 0), (0, _HEAD_PAD - p["mlp3_b"].shape[1])))
    weights = [
        p["knn_f1c_w"].astype(_CD), p["knn_f1f_w"].astype(_CD), p["knn_f1_b"],
        p["knn_f2_w"].astype(_CD), p["knn_f2_b"],
        p["knn_f3_w"].astype(_CD), p["knn_f3_b"],
        p["knn_s1a_w"].astype(_CD), p["knn_s1b_w"].astype(_CD), p["knn_s1_b"],
        p["knn_s2_w"].astype(_CD), p["knn_s2_b"],
        p["mlp1a_w"].astype(_CD), p["mlp1b_w"].astype(_CD), p["mlp1_b"],
        p["mlp2_w"].astype(_CD), p["mlp2_b"],
        w3_pad.astype(_CD), b3_pad,
    ]
    out = pl.pallas_call(
        _stage2_kernel,
        out_shape=jax.ShapeDtypeStruct((Gp, _HEAD_PAD), jnp.float32),
        grid_spec=pltpu.PrefetchScalarGridSpec(
            num_scalar_prefetch=0,
            grid=(Gp // gt,),
            in_specs=[pl.BlockSpec((K, gt, 3), lambda i: (0, i, 0)),
                      pl.BlockSpec((K, gt, 128), lambda i: (0, i, 0)),
                      pl.BlockSpec((gt, 128), lambda i: (i, 0))]
                     + [_const_spec(w) for w in weights],
            out_specs=pl.BlockSpec((gt, _HEAD_PAD), lambda i: (i, 0)),
        ),
        compiler_params=pltpu.CompilerParams(
            dimension_semantics=("parallel",),
            vmem_limit_bytes=_VMEM_LIMIT),
    )(coords_kfirst, feats_kfirst, second_max, *weights)
    return out[:G, :4]


# ---------------------------------------------------------------------------
# Glue (plain JAX): kNN index selection and gathers
# ---------------------------------------------------------------------------
def gather_points(feat_nc, idx):
    """feat_nc: (B, N, C), idx: (B, M, K) -> (B, M, K, C)."""
    B, M, K = idx.shape
    C = feat_nc.shape[-1]
    flat = idx.reshape(B, M * K)
    g = jnp.take_along_axis(feat_nc, flat[:, :, None], axis=1)
    return g.reshape(B, M, K, C)


def gather_kfirst(feat_nc, idx):
    """feat_nc: (B, N, C), idx: (B, M, K) -> (K, B*M, C) K-major gather.

    The transpose happens on the tiny index array, never on the gathered
    features, so no big HBM transpose/concat is materialized.
    """
    B, M, K = idx.shape
    C = feat_nc.shape[-1]
    idx_k = jnp.transpose(idx, (2, 0, 1))                        # (K, B, M)
    g = jax.vmap(
        lambda i: jnp.take_along_axis(feat_nc, i[:, :, None], axis=1))(idx_k)
    return g.reshape(K, B * M, C)


def _pairwise_sqdist(a, b):
    """a: (B, M, 3), b: (B, N, 3) -> (B, M, N) squared distances (Gram form)."""
    return (jnp.sum(a * a, axis=-1)[:, :, None]
            + jnp.sum(b * b, axis=-1)[:, None, :]
            - 2.0 * jnp.einsum("bmc,bnc->bmn", a, b))


# ---------------------------------------------------------------------------
# Parameters
# ---------------------------------------------------------------------------
def _init_linear(key, cin, cout, fan_in):
    bound = 1.0 / math.sqrt(fan_in)
    kw, kb = jax.random.split(key)
    w = jax.random.uniform(kw, (cin, cout), jnp.float32, -bound, bound)
    b = jax.random.uniform(kb, (1, cout), jnp.float32, -bound, bound)
    return w, b


def init_params(key):
    keys = iter(jax.random.split(key, 16))
    p = {}

    def lin(name, cin, cout):
        w, b = _init_linear(next(keys), cin, cout, cin)
        p[name + "_w"], p[name + "_b"] = w, b

    lin("conv1", 6, 64)
    lin("conv2", 64, 64)
    lin("conv3", 64, 64)
    # conv4: 128 -> 128, split over [per-point 64 | pooled-max 64] inputs
    w4, b4 = _init_linear(next(keys), 128, 128, 128)
    p["conv4a_w"], p["conv4b_w"], p["conv4_b"] = w4[:64], w4[64:], b4
    lin("conv5", 128, 128)
    # knn_f1: 131 -> 256, split over [coords 3 | features 128] inputs
    wk1, bk1 = _init_linear(next(keys), 131, 256, 131)
    p["knn_f1c_w"], p["knn_f1f_w"], p["knn_f1_b"] = wk1[:3], wk1[3:], bk1
    lin("knn_f2", 256, 256)
    lin("knn_f3", 256, 256)
    # knn_s1: 512 -> 512, split over [per-neighbor 256 | pooled-max 256]
    ws1, bs1 = _init_linear(next(keys), 512, 512, 512)
    p["knn_s1a_w"], p["knn_s1b_w"], p["knn_s1_b"] = ws1[:256], ws1[256:], bs1
    lin("knn_s2", 512, 512)
    # mlp1: 640 -> 512, split over [second_pn_max 128 | knn_feature 512]
    w1, b1 = _init_linear(next(keys), 640, 512, 640)
    p["mlp1a_w"], p["mlp1b_w"], p["mlp1_b"] = w1[:128], w1[128:], b1
    lin("mlp2", 512, 256)
    # mlp3: weight ~ N(0, 1e-4), bias = 0  (matches module __init__)
    p["mlp3_w"] = jax.random.normal(next(keys), (256, 4), jnp.float32) * 1e-4
    p["mlp3_b"] = jnp.zeros((1, 4), jnp.float32)
    return p


# ---------------------------------------------------------------------------
# Forward pass
# ---------------------------------------------------------------------------
def forward(params, x, sn, node, *, knn_K=4, ball_k=64, sigma_lower_bound=1e-3):
    """x, sn: (B, 3, N); node: (B, 3, M) — same conventions as the torch module.

    Note: bf16 MXU operands drift ~1e-2 relative from the fp32 torch reference;
    acceptable for inference.
    """
    B, _, N = x.shape
    M = node.shape[2]
    C1 = 128
    G = B * M

    x_nc = jnp.transpose(x, (0, 2, 1))                              # (B, N, 3)
    sn_nc = jnp.transpose(sn, (0, 2, 1))                            # (B, N, 3)
    node_mc = jnp.transpose(node, (0, 2, 1))                        # (B, M, 3)
    x_aug_nc = jnp.concatenate([x_nc, sn_nc], axis=-1)              # (B, N, 6)

    # --- top-k (k=64) nearest points per node (torch.topk largest=False) ----
    # TODO(synk): for production N, replace the full (B,M,N) top_k with
    # jax.lax.approx_min_k or a scalar-prefetch Pallas kernel streaming x in
    # N-tiles with a running top-64 per node.
    d2 = _pairwise_sqdist(node_mc, x_nc)                            # (B, M, N)
    _, nn_idx = jax.lax.top_k(-d2, ball_k)                          # (B, M, k)

    x_aug_knn = gather_points(x_aug_nc, nn_idx)                     # (B, M, k, 6)
    x_aug_knn = x_aug_knn.at[..., 0:3].add(-node_mc[:, :, None, :])
    x_aug_knn = x_aug_knn.astype(_CD)                               # bf16 stage-1 in

    # --- fused first PointNet (conv1-5 + both max-pools) ---------------------
    second_max = first_pointnet(x_aug_knn.reshape(G, ball_k, 6), params)  # (G,128) bf16
    second_max_bmc = second_max.reshape(B, M, C1)

    # --- node-kNN indices (query=database=node; self-neighbor included,
    #     matching topk over the full database; eval path, no training noise) -
    nd2 = _pairwise_sqdist(node_mc, node_mc)                        # (B, M, M)
    _, knn_idx = jax.lax.top_k(-nd2, knn_K)                         # (B, M, K)

    node_flat = node_mc.reshape(G, 3)
    nbr_coords = (gather_kfirst(node_mc, knn_idx)
                  - node_flat[None, :, :]).astype(_CD)              # (K, G, 3)
    nbr_feat = gather_kfirst(second_max_bmc, knn_idx)               # (K, G, 128) bf16

    # --- fused GeneralKNNFusionModule + mlp1/mlp2/mlp3 head ------------------
    ks = knn_fusion_head(nbr_coords, nbr_feat, second_max, params)  # (G, 4) f32
    ks = ks.reshape(B, M, 4)

    keypoints = jnp.transpose(ks[:, :, 0:3], (0, 2, 1)) + node      # (B, 3, M)
    sigmas = jax.nn.softplus(ks[:, :, 3]) + sigma_lower_bound       # (B, M)
    descriptors = None
    return node, keypoints, sigmas, descriptors


# ---------------------------------------------------------------------------
if __name__ == "__main__":
    B, N, M = 2, 128, 8
    key = jax.random.PRNGKey(0)
    kx, ksn, knode, kp = jax.random.split(key, 4)

    x = jax.random.normal(kx, (B, 3, N), jnp.float32) * 0.5
    sn = jax.random.normal(ksn, (B, 3, N), jnp.float32)
    sn = sn / (jnp.linalg.norm(sn, axis=1, keepdims=True) + 1e-8)
    node = jax.random.normal(knode, (B, 3, M), jnp.float32) * 0.5

    params = init_params(kp)

    fwd = jax.jit(functools.partial(forward, knn_K=4, ball_k=64,
                                    sigma_lower_bound=1e-3))
    node_out, keypoints, sigmas, descriptors = fwd(params, x, sn, node)
    jax.block_until_ready((node_out, keypoints, sigmas))

    assert node_out.shape == (B, 3, M)
    assert keypoints.shape == (B, 3, M)
    assert sigmas.shape == (B, M)
    assert bool(jnp.all(jnp.isfinite(keypoints))) and bool(jnp.all(sigmas > 0))
    print("KERNEL_OK")
</pallas_src>

<mosaic_0001>
module attributes {stable_mosaic.version = 11 : i64} {
  func.func @_stage1_kernel(%arg0: i32, %arg1: memref<16x64x6xbf16, #tpu.memory_space<vmem>>, %arg2: memref<6x64xbf16, #tpu.memory_space<vmem>>, %arg3: memref<1x64xf32, #tpu.memory_space<vmem>>, %arg4: memref<64x64xbf16, #tpu.memory_space<vmem>>, %arg5: memref<1x64xf32, #tpu.memory_space<vmem>>, %arg6: memref<64x64xbf16, #tpu.memory_space<vmem>>, %arg7: memref<1x64xf32, #tpu.memory_space<vmem>>, %arg8: memref<64x128xbf16, #tpu.memory_space<vmem>>, %arg9: memref<64x128xbf16, #tpu.memory_space<vmem>>, %arg10: memref<1x128xf32, #tpu.memory_space<vmem>>, %arg11: memref<128x128xbf16, #tpu.memory_space<vmem>>, %arg12: memref<1x128xf32, #tpu.memory_space<vmem>>, %arg13: memref<16x128xbf16, #tpu.memory_space<vmem>>) attributes {dimension_semantics = [#tpu.dimension_semantics<parallel>], iteration_bounds = array<i64: 1>, scalar_prefetch = 0 : i64, scratch_operands = 0 : i64, tpu.core_type = #tpu.core_type<tc>, window_params = [{transform_indices = @transform_0, window_bounds = array<i64: 16, 64, 6>}, {pipeline_mode = #tpu.pipeline_mode<synchronous>, transform_indices = @transform_1, window_bounds = array<i64: 6, 64>}, {pipeline_mode = #tpu.pipeline_mode<synchronous>, transform_indices = @transform_2, window_bounds = array<i64: 1, 64>}, {pipeline_mode = #tpu.pipeline_mode<synchronous>, transform_indices = @transform_3, window_bounds = array<i64: 64, 64>}, {pipeline_mode = #tpu.pipeline_mode<synchronous>, transform_indices = @transform_4, window_bounds = array<i64: 1, 64>}, {pipeline_mode = #tpu.pipeline_mode<synchronous>, transform_indices = @transform_5, window_bounds = array<i64: 64, 64>}, {pipeline_mode = #tpu.pipeline_mode<synchronous>, transform_indices = @transform_6, window_bounds = array<i64: 1, 64>}, {pipeline_mode = #tpu.pipeline_mode<synchronous>, transform_indices = @transform_7, window_bounds = array<i64: 64, 128>}, {pipeline_mode = #tpu.pipeline_mode<synchronous>, transform_indices = @transform_8, window_bounds = array<i64: 64, 128>}, {pipeline_mode = #tpu.pipeline_mode<synchronous>, transform_indices = @transform_9, window_bounds = array<i64: 1, 128>}, {pipeline_mode = #tpu.pipeline_mode<synchronous>, transform_indices = @transform_10, window_bounds = array<i64: 128, 128>}, {pipeline_mode = #tpu.pipeline_mode<synchronous>, transform_indices = @transform_11, window_bounds = array<i64: 1, 128>}, {transform_indices = @transform_12, window_bounds = array<i64: 16, 128>}]} {
    %c0 = arith.constant 0 : index
    %c0_0 = arith.constant 0 : index
    %c0_1 = arith.constant 0 : index
    %0 = vector.load %arg1[%c0, %c0_0, %c0_1] : memref<16x64x6xbf16, #tpu.memory_space<vmem>>, vector<16x64x6xbf16>
    %1 = vector.shape_cast %0 : vector<16x64x6xbf16> to vector<1024x6xbf16>
    %c0_2 = arith.constant 0 : index
    %c0_3 = arith.constant 0 : index
    %2 = vector.load %arg2[%c0_2, %c0_3] : memref<6x64xbf16, #tpu.memory_space<vmem>>, vector<6x64xbf16>
    %c0_4 = arith.constant 0 : index
    %c0_5 = arith.constant 0 : index
    %3 = vector.load %arg3[%c0_4, %c0_5] : memref<1x64xf32, #tpu.memory_space<vmem>>, vector<1x64xf32>
    %cst = arith.constant dense<0.000000e+00> : vector<1024x64xf32>
    %4 = tpu.matmul %1, %2, %cst {dimension_numbers = #tpu.dot_dimension_numbers<[1], [0], [0], [1], [0, 0, 1, 1], [], []>} : vector<1024x6xbf16>, vector<6x64xbf16>, vector<1024x64xf32> -> vector<1024x64xf32>
    %5 = vector.broadcast %3 : vector<1x64xf32> to vector<1024x64xf32>
    %6 = arith.addf %4, %5 : vector<1024x64xf32>
    %cst_6 = arith.constant 0.000000e+00 : f32
    %7 = vector.broadcast %cst_6 : f32 to vector<1024x64xf32>
    %8 = arith.maximumf %6, %7 : vector<1024x64xf32>
    %9 = arith.truncf %8 : vector<1024x64xf32> to vector<1024x64xbf16>
    %c0_7 = arith.constant 0 : index
    %c0_8 = arith.constant 0 : index
    %10 = vector.load %arg4[%c0_7, %c0_8] : memref<64x64xbf16, #tpu.memory_space<vmem>>, vector<64x64xbf16>
    %c0_9 = arith.constant 0 : index
    %c0_10 = arith.constant 0 : index
    %11 = vector.load %arg5[%c0_9, %c0_10] : memref<1x64xf32, #tpu.memory_space<vmem>>, vector<1x64xf32>
    %cst_11 = arith.constant dense<0.000000e+00> : vector<1024x64xf32>
    %12 = tpu.matmul %9, %10, %cst_11 {dimension_numbers = #tpu.dot_dimension_numbers<[1], [0], [0], [1], [0, 0, 1, 1], [], []>} : vector<1024x64xbf16>, vector<64x64xbf16>, vector<1024x64xf32> -> vector<1024x64xf32>
    %13 = vector.broadcast %11 : vector<1x64xf32> to vector<1024x64xf32>
    %14 = arith.addf %12, %13 : vector<1024x64xf32>
    %cst_12 = arith.constant 0.000000e+00 : f32
    %15 = vector.broadcast %cst_12 : f32 to vector<1024x64xf32>
    %16 = arith.maximumf %14, %15 : vector<1024x64xf32>
    %17 = arith.truncf %16 : vector<1024x64xf32> to vector<1024x64xbf16>
    %c0_13 = arith.constant 0 : index
    %c0_14 = arith.constant 0 : index
    %18 = vector.load %arg6[%c0_13, %c0_14] : memref<64x64xbf16, #tpu.memory_space<vmem>>, vector<64x64xbf16>
    %c0_15 = arith.constant 0 : index
    %c0_16 = arith.constant 0 : index
    %19 = vector.load %arg7[%c0_15, %c0_16] : memref<1x64xf32, #tpu.memory_space<vmem>>, vector<1x64xf32>
    %cst_17 = arith.constant dense<0.000000e+00> : vector<1024x64xf32>
    %20 = tpu.matmul %17, %18, %cst_17 {dimension_numbers = #tpu.dot_dimension_numbers<[1], [0], [0], [1], [0, 0, 1, 1], [], []>} : vector<1024x64xbf16>, vector<64x64xbf16>, vector<1024x64xf32> -> vector<1024x64xf32>
    %21 = vector.broadcast %19 : vector<1x64xf32> to vector<1024x64xf32>
    %22 = arith.addf %20, %21 : vector<1024x64xf32>
    %cst_18 = arith.constant 0.000000e+00 : f32
    %23 = vector.broadcast %cst_18 : f32 to vector<1024x64xf32>
    %24 = arith.maximumf %22, %23 : vector<1024x64xf32>
    %25 = arith.truncf %24 : vector<1024x64xf32> to vector<1024x64xbf16>
    %26 = vector.shape_cast %25 : vector<1024x64xbf16> to vector<16x64x64xbf16>
    %cst_19 = arith.constant dense<0xFF80> : vector<16x64xbf16>
    %27 = vector.multi_reduction <maximumf>, %26, %cst_19 [1] : vector<16x64x64xbf16> to vector<16x64xbf16>
    %c0_20 = arith.constant 0 : index
    %c0_21 = arith.constant 0 : index
    %28 = vector.load %arg8[%c0_20, %c0_21] : memref<64x128xbf16, #tpu.memory_space<vmem>>, vector<64x128xbf16>
    %cst_22 = arith.constant dense<0.000000e+00> : vector<1024x128xf32>
    %29 = tpu.matmul %25, %28, %cst_22 {dimension_numbers = #tpu.dot_dimension_numbers<[1], [0], [0], [1], [0, 0, 1, 1], [], []>} : vector<1024x64xbf16>, vector<64x128xbf16>, vector<1024x128xf32> -> vector<1024x128xf32>
    %c0_23 = arith.constant 0 : index
    %c0_24 = arith.constant 0 : index
    %30 = vector.load %arg10[%c0_23, %c0_24] : memref<1x128xf32, #tpu.memory_space<vmem>>, vector<1x128xf32>
    %31 = vector.broadcast %30 : vector<1x128xf32> to vector<1024x128xf32>
    %32 = arith.addf %29, %31 : vector<1024x128xf32>
    %c0_25 = arith.constant 0 : index
    %c0_26 = arith.constant 0 : index
    %33 = vector.load %arg9[%c0_25, %c0_26] : memref<64x128xbf16, #tpu.memory_space<vmem>>, vector<64x128xbf16>
    %cst_27 = arith.constant dense<0.000000e+00> : vector<16x128xf32>
    %34 = tpu.matmul %27, %33, %cst_27 {dimension_numbers = #tpu.dot_dimension_numbers<[1], [0], [0], [1], [0, 0, 1, 1], [], []>} : vector<16x64xbf16>, vector<64x128xbf16>, vector<16x128xf32> -> vector<16x128xf32>
    %35 = vector.shape_cast %32 : vector<1024x128xf32> to vector<16x64x128xf32>
    %36 = vector.shape_cast %34 : vector<16x128xf32> to vector<16x1x128xf32>
    %37 = vector.broadcast %36 : vector<16x1x128xf32> to vector<16x64x128xf32>
    %38 = arith.addf %35, %37 : vector<16x64x128xf32>
    %cst_28 = arith.constant 0.000000e+00 : f32
    %39 = vector.broadcast %cst_28 : f32 to vector<16x64x128xf32>
    %40 = arith.maximumf %38, %39 : vector<16x64x128xf32>
    %41 = arith.truncf %40 : vector<16x64x128xf32> to vector<16x64x128xbf16>
    %42 = vector.shape_cast %41 : vector<16x64x128xbf16> to vector<1024x128xbf16>
    %c0_29 = arith.constant 0 : index
    %c0_30 = arith.constant 0 : index
    %43 = vector.load %arg11[%c0_29, %c0_30] : memref<128x128xbf16, #tpu.memory_space<vmem>>, vector<128x128xbf16>
    %c0_31 = arith.constant 0 : index
    %c0_32 = arith.constant 0 : index
    %44 = vector.load %arg12[%c0_31, %c0_32] : memref<1x128xf32, #tpu.memory_space<vmem>>, vector<1x128xf32>
    %cst_33 = arith.constant dense<0.000000e+00> : vector<1024x128xf32>
    %45 = tpu.matmul %42, %43, %cst_33 {dimension_numbers = #tpu.dot_dimension_numbers<[1], [0], [0], [1], [0, 0, 1, 1], [], []>} : vector<1024x128xbf16>, vector<128x128xbf16>, vector<1024x128xf32> -> vector<1024x128xf32>
    %46 = vector.broadcast %44 : vector<1x128xf32> to vector<1024x128xf32>
    %47 = arith.addf %45, %46 : vector<1024x128xf32>
    %cst_34 = arith.constant 0.000000e+00 : f32
    %48 = vector.broadcast %cst_34 : f32 to vector<1024x128xf32>
    %49 = arith.maximumf %47, %48 : vector<1024x128xf32>
    %50 = vector.shape_cast %49 : vector<1024x128xf32> to vector<16x64x128xf32>
    %cst_35 = arith.constant dense<0xFF800000> : vector<16x128xf32>
    %51 = vector.multi_reduction <maximumf>, %50, %cst_35 [1] : vector<16x64x128xf32> to vector<16x128xf32>
    %52 = arith.truncf %51 : vector<16x128xf32> to vector<16x128xbf16>
    %c0_36 = arith.constant 0 : index
    %c0_37 = arith.constant 0 : index
    %53 = vector.load %arg13[%c0_36, %c0_37] : memref<16x128xbf16, #tpu.memory_space<vmem>>, vector<16x128xbf16>
    tpu.vector_store %arg13[%c0_36, %c0_37], %52 {strides = array<i32>} : memref<16x128xbf16, #tpu.memory_space<vmem>>, vector<16x128xbf16>,
    return
  }
  func.func @transform_0(%arg0: i32) -> (i32, i32, i32) {
    %c0_i32 = arith.constant 0 : i32
    %c0_i32_0 = arith.constant 0 : i32
    %c0_i32_1 = arith.constant 0 : i32
    return %arg0, %c0_i32, %c0_i32_0 : i32, i32, i32
  }
  func.func @transform_1(%arg0: i32) -> (i32, i32) {
    %c0_i32 = arith.constant 0 : i32
    %c0_i32_0 = arith.constant 0 : i32
    %c0_i32_1 = arith.constant 0 : i32
    return %c0_i32, %c0_i32_0 : i32, i32
  }
  func.func @transform_2(%arg0: i32) -> (i32, i32) {
    %c0_i32 = arith.constant 0 : i32
    %c0_i32_0 = arith.constant 0 : i32
    %c0_i32_1 = arith.constant 0 : i32
    return %c0_i32, %c0_i32_0 : i32, i32
  }
  func.func @transform_3(%arg0: i32) -> (i32, i32) {
    %c0_i32 = arith.constant 0 : i32
    %c0_i32_0 = arith.constant 0 : i32
    %c0_i32_1 = arith.constant 0 : i32
    return %c0_i32, %c0_i32_0 : i32, i32
  }
  func.func @transform_4(%arg0: i32) -> (i32, i32) {
    %c0_i32 = arith.constant 0 : i32
    %c0_i32_0 = arith.constant 0 : i32
    %c0_i32_1 = arith.constant 0 : i32
    return %c0_i32, %c0_i32_0 : i32, i32
  }
  func.func @transform_5(%arg0: i32) -> (i32, i32) {
    %c0_i32 = arith.constant 0 : i32
    %c0_i32_0 = arith.constant 0 : i32
    %c0_i32_1 = arith.constant 0 : i32
    return %c0_i32, %c0_i32_0 : i32, i32
  }
  func.func @transform_6(%arg0: i32) -> (i32, i32) {
    %c0_i32 = arith.constant 0 : i32
    %c0_i32_0 = arith.constant 0 : i32
    %c0_i32_1 = arith.constant 0 : i32
    return %c0_i32, %c0_i32_0 : i32, i32
  }
  func.func @transform_7(%arg0: i32) -> (i32, i32) {
    %c0_i32 = arith.constant 0 : i32
    %c0_i32_0 = arith.constant 0 : i32
    %c0_i32_1 = arith.constant 0 : i32
    return %c0_i32, %c0_i32_0 : i32, i32
  }
  func.func @transform_8(%arg0: i32) -> (i32, i32) {
    %c0_i32 = arith.constant 0 : i32
    %c0_i32_0 = arith.constant 0 : i32
    %c0_i32_1 = arith.constant 0 : i32
    return %c0_i32, %c0_i32_0 : i32, i32
  }
  func.func @transform_9(%arg0: i32) -> (i32, i32) {
    %c0_i32 = arith.constant 0 : i32
    %c0_i32_0 = arith.constant 0 : i32
    %c0_i32_1 = arith.constant 0 : i32
    return %c0_i32, %c0_i32_0 : i32, i32
  }
  func.func @transform_10(%arg0: i32) -> (i32, i32) {
    %c0_i32 = arith.constant 0 : i32
    %c0_i32_0 = arith.constant 0 : i32
    %c0_i32_1 = arith.constant 0 : i32
    return %c0_i32, %c0_i32_0 : i32, i32
  }
  func.func @transform_11(%arg0: i32) -> (i32, i32) {
    %c0_i32 = arith.constant 0 : i32
    %c0_i32_0 = arith.constant 0 : i32
    %c0_i32_1 = arith.constant 0 : i32
    return %c0_i32, %c0_i32_0 : i32, i32
  }
  func.func @transform_12(%arg0: i32) -> (i32, i32) {
    %c0_i32 = arith.constant 0 : i32
    %c0_i32_0 = arith.constant 0 : i32
    return %arg0, %c0_i32 : i32, i32
  }
}

module attributes {stable_mosaic.version = 11 : i64} {
  func.func @_stage2_kernel(%arg0: i32, %arg1: memref<4x16x3xbf16, #tpu.memory_space<vmem>>, %arg2: memref<4x16x128xbf16, #tpu.memory_space<vmem>>, %arg3: memref<16x128xbf16, #tpu.memory_space<vmem>>, %arg4: memref<3x256xbf16, #tpu.memory_space<vmem>>, %arg5: memref<128x256xbf16, #tpu.memory_space<vmem>>, %arg6: memref<1x256xf32, #tpu.memory_space<vmem>>, %arg7: memref<256x256xbf16, #tpu.memory_space<vmem>>, %arg8: memref<1x256xf32, #tpu.memory_space<vmem>>, %arg9: memref<256x256xbf16, #tpu.memory_space<vmem>>, %arg10: memref<1x256xf32, #tpu.memory_space<vmem>>, %arg11: memref<256x512xbf16, #tpu.memory_space<vmem>>, %arg12: memref<256x512xbf16, #tpu.memory_space<vmem>>, %arg13: memref<1x512xf32, #tpu.memory_space<vmem>>, %arg14: memref<512x512xbf16, #tpu.memory_space<vmem>>, %arg15: memref<1x512xf32, #tpu.memory_space<vmem>>, %arg16: memref<128x512xbf16, #tpu.memory_space<vmem>>, %arg17: memref<512x512xbf16, #tpu.memory_space<vmem>>, %arg18: memref<1x512xf32, #tpu.memory_space<vmem>>, %arg19: memref<512x256xbf16, #tpu.memory_space<vmem>>, %arg20: memref<1x256xf32, #tpu.memory_space<vmem>>, %arg21: memref<256x128xbf16, #tpu.memory_space<vmem>>, %arg22: memref<1x128xf32, #tpu.memory_space<vmem>>, %arg23: memref<16x128xf32, #tpu.memory_space<vmem>>) attributes {dimension_semantics = [#tpu.dimension_semantics<parallel>], iteration_bounds = array<i64: 1>, scalar_prefetch = 0 : i64, scratch_operands = 0 : i64, tpu.core_type = #tpu.core_type<tc>, window_params = [{transform_indices = @transform_0, window_bounds = array<i64: 4, 16, 3>}, {transform_indices = @transform_1, window_bounds = array<i64: 4, 16, 128>}, {transform_indices = @transform_2, window_bounds = array<i64: 16, 128>}, {pipeline_mode = #tpu.pipeline_mode<synchronous>, transform_indices = @transform_3, window_bounds = array<i64: 3, 256>}, {pipeline_mode = #tpu.pipeline_mode<synchronous>, transform_indices = @transform_4, window_bounds = array<i64: 128, 256>}, {pipeline_mode = #tpu.pipeline_mode<synchronous>, transform_indices = @transform_5, window_bounds = array<i64: 1, 256>}, {pipeline_mode = #tpu.pipeline_mode<synchronous>, transform_indices = @transform_6, window_bounds = array<i64: 256, 256>}, {pipeline_mode = #tpu.pipeline_mode<synchronous>, transform_indices = @transform_7, window_bounds = array<i64: 1, 256>}, {pipeline_mode = #tpu.pipeline_mode<synchronous>, transform_indices = @transform_8, window_bounds = array<i64: 256, 256>}, {pipeline_mode = #tpu.pipeline_mode<synchronous>, transform_indices = @transform_9, window_bounds = array<i64: 1, 256>}, {pipeline_mode = #tpu.pipeline_mode<synchronous>, transform_indices = @transform_10, window_bounds = array<i64: 256, 512>}, {pipeline_mode = #tpu.pipeline_mode<synchronous>, transform_indices = @transform_11, window_bounds = array<i64: 256, 512>}, {pipeline_mode = #tpu.pipeline_mode<synchronous>, transform_indices = @transform_12, window_bounds = array<i64: 1, 512>}, {pipeline_mode = #tpu.pipeline_mode<synchronous>, transform_indices = @transform_13, window_bounds = array<i64: 512, 512>}, {pipeline_mode = #tpu.pipeline_mode<synchronous>, transform_indices = @transform_14, window_bounds = array<i64: 1, 512>}, {pipeline_mode = #tpu.pipeline_mode<synchronous>, transform_indices = @transform_15, window_bounds = array<i64: 128, 512>}, {pipeline_mode = #tpu.pipeline_mode<synchronous>, transform_indices = @transform_16, window_bounds = array<i64: 512, 512>}, {pipeline_mode = #tpu.pipeline_mode<synchronous>, transform_indices = @transform_17, window_bounds = array<i64: 1, 512>}, {pipeline_mode = #tpu.pipeline_mode<synchronous>, transform_indices = @transform_18, window_bounds = array<i64: 512, 256>}, {pipeline_mode = #tpu.pipeline_mode<synchronous>, transform_indices = @transform_19, window_bounds = array<i64: 1, 256>}, {pipeline_mode = #tpu.pipeline_mode<synchronous>, transform_indices = @transform_20, window_bounds = array<i64: 256, 128>}, {pipeline_mode = #tpu.pipeline_mode<synchronous>, transform_indices = @transform_21, window_bounds = array<i64: 1, 128>}, {transform_indices = @transform_22, window_bounds = array<i64: 16, 128>}]} {
    %c0 = arith.constant 0 : index
    %c0_0 = arith.constant 0 : index
    %c0_1 = arith.constant 0 : index
    %0 = vector.load %arg1[%c0, %c0_0, %c0_1] : memref<4x16x3xbf16, #tpu.memory_space<vmem>>, vector<4x16x3xbf16>
    %1 = vector.shape_cast %0 : vector<4x16x3xbf16> to vector<64x3xbf16>
    %c0_2 = arith.constant 0 : index
    %c0_3 = arith.constant 0 : index
    %c0_4 = arith.constant 0 : index
    %2 = vector.load %arg2[%c0_2, %c0_3, %c0_4] : memref<4x16x128xbf16, #tpu.memory_space<vmem>>, vector<4x16x128xbf16>
    %3 = vector.shape_cast %2 : vector<4x16x128xbf16> to vector<64x128xbf16>
    %c0_5 = arith.constant 0 : index
    %c0_6 = arith.constant 0 : index
    %4 = vector.load %arg4[%c0_5, %c0_6] : memref<3x256xbf16, #tpu.memory_space<vmem>>, vector<3x256xbf16>
    %cst = arith.constant dense<0.000000e+00> : vector<64x256xf32>
    %5 = tpu.matmul %1, %4, %cst {dimension_numbers = #tpu.dot_dimension_numbers<[1], [0], [0], [1], [0, 0, 1, 1], [], []>} : vector<64x3xbf16>, vector<3x256xbf16>, vector<64x256xf32> -> vector<64x256xf32>
    %c0_7 = arith.constant 0 : index
    %c0_8 = arith.constant 0 : index
    %6 = vector.load %arg5[%c0_7, %c0_8] : memref<128x256xbf16, #tpu.memory_space<vmem>>, vector<128x256xbf16>
    %cst_9 = arith.constant dense<0.000000e+00> : vector<64x256xf32>
    %7 = tpu.matmul %3, %6, %cst_9 {dimension_numbers = #tpu.dot_dimension_numbers<[1], [0], [0], [1], [0, 0, 1, 1], [], []>} : vector<64x128xbf16>, vector<128x256xbf16>, vector<64x256xf32> -> vector<64x256xf32>
    %8 = arith.addf %5, %7 : vector<64x256xf32>
    %c0_10 = arith.constant 0 : index
    %c0_11 = arith.constant 0 : index
    %9 = vector.load %arg6[%c0_10, %c0_11] : memref<1x256xf32, #tpu.memory_space<vmem>>, vector<1x256xf32>
    %10 = vector.broadcast %9 : vector<1x256xf32> to vector<64x256xf32>
    %11 = arith.addf %8, %10 : vector<64x256xf32>
    %cst_12 = arith.constant 0.000000e+00 : f32
    %12 = vector.broadcast %cst_12 : f32 to vector<64x256xf32>
    %13 = arith.maximumf %11, %12 : vector<64x256xf32>
    %c0_13 = arith.constant 0 : index
    %c0_14 = arith.constant 0 : index
    %14 = vector.load %arg7[%c0_13, %c0_14] : memref<256x256xbf16, #tpu.memory_space<vmem>>, vector<256x256xbf16>
    %c0_15 = arith.constant 0 : index
    %c0_16 = arith.constant 0 : index
    %15 = vector.load %arg8[%c0_15, %c0_16] : memref<1x256xf32, #tpu.memory_space<vmem>>, vector<1x256xf32>
    %16 = arith.truncf %13 : vector<64x256xf32> to vector<64x256xbf16>
    %cst_17 = arith.constant dense<0.000000e+00> : vector<64x256xf32>
    %17 = tpu.matmul %16, %14, %cst_17 {dimension_numbers = #tpu.dot_dimension_numbers<[1], [0], [0], [1], [0, 0, 1, 1], [], []>} : vector<64x256xbf16>, vector<256x256xbf16>, vector<64x256xf32> -> vector<64x256xf32>
    %18 = vector.broadcast %15 : vector<1x256xf32> to vector<64x256xf32>
    %19 = arith.addf %17, %18 : vector<64x256xf32>
    %cst_18 = arith.constant 0.000000e+00 : f32
    %20 = vector.broadcast %cst_18 : f32 to vector<64x256xf32>
    %21 = arith.maximumf %19, %20 : vector<64x256xf32>
    %c0_19 = arith.constant 0 : index
    %c0_20 = arith.constant 0 : index
    %22 = vector.load %arg9[%c0_19, %c0_20] : memref<256x256xbf16, #tpu.memory_space<vmem>>, vector<256x256xbf16>
    %c0_21 = arith.constant 0 : index
    %c0_22 = arith.constant 0 : index
    %23 = vector.load %arg10[%c0_21, %c0_22] : memref<1x256xf32, #tpu.memory_space<vmem>>, vector<1x256xf32>
    %24 = arith.truncf %21 : vector<64x256xf32> to vector<64x256xbf16>
    %cst_23 = arith.constant dense<0.000000e+00> : vector<64x256xf32>
    %25 = tpu.matmul %24, %22, %cst_23 {dimension_numbers = #tpu.dot_dimension_numbers<[1], [0], [0], [1], [0, 0, 1, 1], [], []>} : vector<64x256xbf16>, vector<256x256xbf16>, vector<64x256xf32> -> vector<64x256xf32>
    %26 = vector.broadcast %23 : vector<1x256xf32> to vector<64x256xf32>
    %27 = arith.addf %25, %26 : vector<64x256xf32>
    %cst_24 = arith.constant 0.000000e+00 : f32
    %28 = vector.broadcast %cst_24 : f32 to vector<64x256xf32>
    %29 = arith.maximumf %27, %28 : vector<64x256xf32>
    %30 = arith.truncf %29 : vector<64x256xf32> to vector<64x256xbf16>
    %31 = vector.shape_cast %30 : vector<64x256xbf16> to vector<4x16x256xbf16>
    %32 = vector.extract_strided_slice %31 {offsets = [0, 0, 0], sizes = [1, 16, 256], strides = [1, 1, 1]} : vector<4x16x256xbf16> to vector<1x16x256xbf16>
    %33 = vector.shape_cast %32 : vector<1x16x256xbf16> to vector<16x256xbf16>
    %34 = vector.extract_strided_slice %31 {offsets = [1, 0, 0], sizes = [1, 16, 256], strides = [1, 1, 1]} : vector<4x16x256xbf16> to vector<1x16x256xbf16>
    %35 = vector.shape_cast %34 : vector<1x16x256xbf16> to vector<16x256xbf16>
    %36 = arith.maximumf %33, %35 : vector<16x256xbf16>
    %37 = vector.extract_strided_slice %31 {offsets = [2, 0, 0], sizes = [1, 16, 256], strides = [1, 1, 1]} : vector<4x16x256xbf16> to vector<1x16x256xbf16>
    %38 = vector.shape_cast %37 : vector<1x16x256xbf16> to vector<16x256xbf16>
    %39 = arith.maximumf %36, %38 : vector<16x256xbf16>
    %40 = vector.extract_strided_slice %31 {offsets = [3, 0, 0], sizes = [1, 16, 256], strides = [1, 1, 1]} : vector<4x16x256xbf16> to vector<1x16x256xbf16>
    %41 = vector.shape_cast %40 : vector<1x16x256xbf16> to vector<16x256xbf16>
    %42 = arith.maximumf %39, %41 : vector<16x256xbf16>
    %c0_25 = arith.constant 0 : index
    %c0_26 = arith.constant 0 : index
    %43 = vector.load %arg12[%c0_25, %c0_26] : memref<256x512xbf16, #tpu.memory_space<vmem>>, vector<256x512xbf16>
    %cst_27 = arith.constant dense<0.000000e+00> : vector<16x512xf32>
    %44 = tpu.matmul %42, %43, %cst_27 {dimension_numbers = #tpu.dot_dimension_numbers<[1], [0], [0], [1], [0, 0, 1, 1], [], []>} : vector<16x256xbf16>, vector<256x512xbf16>, vector<16x512xf32> -> vector<16x512xf32>
    %c0_28 = arith.constant 0 : index
    %c0_29 = arith.constant 0 : index
    %45 = vector.load %arg11[%c0_28, %c0_29] : memref<256x512xbf16, #tpu.memory_space<vmem>>, vector<256x512xbf16>
    %cst_30 = arith.constant dense<0.000000e+00> : vector<64x512xf32>
    %46 = tpu.matmul %30, %45, %cst_30 {dimension_numbers = #tpu.dot_dimension_numbers<[1], [0], [0], [1], [0, 0, 1, 1], [], []>} : vector<64x256xbf16>, vector<256x512xbf16>, vector<64x512xf32> -> vector<64x512xf32>
    %47 = vector.shape_cast %46 : vector<64x512xf32> to vector<4x16x512xf32>
    %48 = vector.shape_cast %44 : vector<16x512xf32> to vector<1x16x512xf32>
    %49 = vector.broadcast %48 : vector<1x16x512xf32> to vector<4x16x512xf32>
    %50 = arith.addf %47, %49 : vector<4x16x512xf32>
    %c0_31 = arith.constant 0 : index
    %c0_32 = arith.constant 0 : index
    %51 = vector.load %arg13[%c0_31, %c0_32] : memref<1x512xf32, #tpu.memory_space<vmem>>, vector<1x512xf32>
    %52 = vector.shape_cast %51 : vector<1x512xf32> to vector<1x1x512xf32>
    %53 = vector.broadcast %52 : vector<1x1x512xf32> to vector<4x16x512xf32>
    %54 = arith.addf %50, %53 : vector<4x16x512xf32>
    %cst_33 = arith.constant 0.000000e+00 : f32
    %55 = vector.broadcast %cst_33 : f32 to vector<4x16x512xf32>
    %56 = arith.maximumf %54, %55 : vector<4x16x512xf32>
    %57 = vector.shape_cast %56 : vector<4x16x512xf32> to vector<64x512xf32>
    %c0_34 = arith.constant 0 : index
    %c0_35 = arith.constant 0 : index
    %58 = vector.load %arg14[%c0_34, %c0_35] : memref<512x512xbf16, #tpu.memory_space<vmem>>, vector<512x512xbf16>
    %c0_36 = arith.constant 0 : index
    %c0_37 = arith.constant 0 : index
    %59 = vector.load %arg15[%c0_36, %c0_37] : memref<1x512xf32, #tpu.memory_space<vmem>>, vector<1x512xf32>
    %60 = arith.truncf %57 : vector<64x512xf32> to vector<64x512xbf16>
    %cst_38 = arith.constant dense<0.000000e+00> : vector<64x512xf32>
    %61 = tpu.matmul %60, %58, %cst_38 {dimension_numbers = #tpu.dot_dimension_numbers<[1], [0], [0], [1], [0, 0, 1, 1], [], []>} : vector<64x512xbf16>, vector<512x512xbf16>, vector<64x512xf32> -> vector<64x512xf32>
    %62 = vector.broadcast %59 : vector<1x512xf32> to vector<64x512xf32>
    %63 = arith.addf %61, %62 : vector<64x512xf32>
    %cst_39 = arith.constant 0.000000e+00 : f32
    %64 = vector.broadcast %cst_39 : f32 to vector<64x512xf32>
    %65 = arith.maximumf %63, %64 : vector<64x512xf32>
    %66 = arith.truncf %65 : vector<64x512xf32> to vector<64x512xbf16>
    %67 = vector.shape_cast %66 : vector<64x512xbf16> to vector<4x16x512xbf16>
    %68 = vector.extract_strided_slice %67 {offsets = [0, 0, 0], sizes = [1, 16, 512], strides = [1, 1, 1]} : vector<4x16x512xbf16> to vector<1x16x512xbf16>
    %69 = vector.shape_cast %68 : vector<1x16x512xbf16> to vector<16x512xbf16>
    %70 = vector.extract_strided_slice %67 {offsets = [1, 0, 0], sizes = [1, 16, 512], strides = [1, 1, 1]} : vector<4x16x512xbf16> to vector<1x16x512xbf16>
    %71 = vector.shape_cast %70 : vector<1x16x512xbf16> to vector<16x512xbf16>
    %72 = arith.maximumf %69, %71 : vector<16x512xbf16>
    %73 = vector.extract_strided_slice %67 {offsets = [2, 0, 0], sizes = [1, 16, 512], strides = [1, 1, 1]} : vector<4x16x512xbf16> to vector<1x16x512xbf16>
    %74 = vector.shape_cast %73 : vector<1x16x512xbf16> to vector<16x512xbf16>
    %75 = arith.maximumf %72, %74 : vector<16x512xbf16>
    %76 = vector.extract_strided_slice %67 {offsets = [3, 0, 0], sizes = [1, 16, 512], strides = [1, 1, 1]} : vector<4x16x512xbf16> to vector<1x16x512xbf16>
    %77 = vector.shape_cast %76 : vector<1x16x512xbf16> to vector<16x512xbf16>
    %78 = arith.maximumf %75, %77 : vector<16x512xbf16>
    %c0_40 = arith.constant 0 : index
    %c0_41 = arith.constant 0 : index
    %79 = vector.load %arg3[%c0_40, %c0_41] : memref<16x128xbf16, #tpu.memory_space<vmem>>, vector<16x128xbf16>
    %c0_42 = arith.constant 0 : index
    %c0_43 = arith.constant 0 : index
    %80 = vector.load %arg16[%c0_42, %c0_43] : memref<128x512xbf16, #tpu.memory_space<vmem>>, vector<128x512xbf16>
    %cst_44 = arith.constant dense<0.000000e+00> : vector<16x512xf32>
    %81 = tpu.matmul %79, %80, %cst_44 {dimension_numbers = #tpu.dot_dimension_numbers<[1], [0], [0], [1], [0, 0, 1, 1], [], []>} : vector<16x128xbf16>, vector<128x512xbf16>, vector<16x512xf32> -> vector<16x512xf32>
    %c0_45 = arith.constant 0 : index
    %c0_46 = arith.constant 0 : index
    %82 = vector.load %arg17[%c0_45, %c0_46] : memref<512x512xbf16, #tpu.memory_space<vmem>>, vector<512x512xbf16>
    %cst_47 = arith.constant dense<0.000000e+00> : vector<16x512xf32>
    %83 = tpu.matmul %78, %82, %cst_47 {dimension_numbers = #tpu.dot_dimension_numbers<[1], [0], [0], [1], [0, 0, 1, 1], [], []>} : vector<16x512xbf16>, vector<512x512xbf16>, vector<16x512xf32> -> vector<16x512xf32>
    %84 = arith.addf %81, %83 : vector<16x512xf32>
    %c0_48 = arith.constant 0 : index
    %c0_49 = arith.constant 0 : index
    %85 = vector.load %arg18[%c0_48, %c0_49] : memref<1x512xf32, #tpu.memory_space<vmem>>, vector<1x512xf32>
    %86 = vector.broadcast %85 : vector<1x512xf32> to vector<16x512xf32>
    %87 = arith.addf %84, %86 : vector<16x512xf32>
    %cst_50 = arith.constant 0.000000e+00 : f32
    %88 = vector.broadcast %cst_50 : f32 to vector<16x512xf32>
    %89 = arith.maximumf %87, %88 : vector<16x512xf32>
    %c0_51 = arith.constant 0 : index
    %c0_52 = arith.constant 0 : index
    %90 = vector.load %arg19[%c0_51, %c0_52] : memref<512x256xbf16, #tpu.memory_space<vmem>>, vector<512x256xbf16>
    %c0_53 = arith.constant 0 : index
    %c0_54 = arith.constant 0 : index
    %91 = vector.load %arg20[%c0_53, %c0_54] : memref<1x256xf32, #tpu.memory_space<vmem>>, vector<1x256xf32>
    %92 = arith.truncf %89 : vector<16x512xf32> to vector<16x512xbf16>
    %cst_55 = arith.constant dense<0.000000e+00> : vector<16x256xf32>
    %93 = tpu.matmul %92, %90, %cst_55 {dimension_numbers = #tpu.dot_dimension_numbers<[1], [0], [0], [1], [0, 0, 1, 1], [], []>} : vector<16x512xbf16>, vector<512x256xbf16>, vector<16x256xf32> -> vector<16x256xf32>
    %94 = vector.broadcast %91 : vector<1x256xf32> to vector<16x256xf32>
    %95 = arith.addf %93, %94 : vector<16x256xf32>
    %cst_56 = arith.constant 0.000000e+00 : f32
    %96 = vector.broadcast %cst_56 : f32 to vector<16x256xf32>
    %97 = arith.maximumf %95, %96 : vector<16x256xf32>
    %c0_57 = arith.constant 0 : index
    %c0_58 = arith.constant 0 : index
    %98 = vector.load %arg21[%c0_57, %c0_58] : memref<256x128xbf16, #tpu.memory_space<vmem>>, vector<256x128xbf16>
    %99 = arith.truncf %97 : vector<16x256xf32> to vector<16x256xbf16>
    %cst_59 = arith.constant dense<0.000000e+00> : vector<16x128xf32>
    %100 = tpu.matmul %99, %98, %cst_59 {dimension_numbers = #tpu.dot_dimension_numbers<[1], [0], [0], [1], [0, 0, 1, 1], [], []>} : vector<16x256xbf16>, vector<256x128xbf16>, vector<16x128xf32> -> vector<16x128xf32>
    %c0_60 = arith.constant 0 : index
    %c0_61 = arith.constant 0 : index
    %101 = vector.load %arg22[%c0_60, %c0_61] : memref<1x128xf32, #tpu.memory_space<vmem>>, vector<1x128xf32>
    %102 = vector.broadcast %101 : vector<1x128xf32> to vector<16x128xf32>
    %103 = arith.addf %100, %102 : vector<16x128xf32>
    %c0_62 = arith.constant 0 : index
    %c0_63 = arith.constant 0 : index
    %104 = vector.load %arg23[%c0_62, %c0_63] : memref<16x128xf32, #tpu.memory_space<vmem>>, vector<16x128xf32>
    tpu.vector_store %arg23[%c0_62, %c0_63], %103 {strides = array<i32>} : memref<16x128xf32, #tpu.memory_space<vmem>>, vector<16x128xf32>,
    return
  }
  func.func @transform_0(%arg0: i32) -> (i32, i32, i32) {
    %c0_i32 = arith.constant 0 : i32
    %c0_i32_0 = arith.constant 0 : i32
    %c0_i32_1 = arith.constant 0 : i32
    return %c0_i32, %arg0, %c0_i32_0 : i32, i32, i32
  }
  func.func @transform_1(%arg0: i32) -> (i32, i32, i32) {
    %c0_i32 = arith.constant 0 : i32
    %c0_i32_0 = arith.constant 0 : i32
    %c0_i32_1 = arith.constant 0 : i32
    return %c0_i32, %arg0, %c0_i32_0 : i32, i32, i32
  }
  func.func @transform_2(%arg0: i32) -> (i32, i32) {
    %c0_i32 = arith.constant 0 : i32
    %c0_i32_0 = arith.constant 0 : i32
    return %arg0, %c0_i32 : i32, i32
  }
  func.func @transform_3(%arg0: i32) -> (i32, i32) {
    %c0_i32 = arith.constant 0 : i32
    %c0_i32_0 = arith.constant 0 : i32
    %c0_i32_1 = arith.constant 0 : i32
    return %c0_i32, %c0_i32_0 : i32, i32
  }
  func.func @transform_4(%arg0: i32) -> (i32, i32) {
    %c0_i32 = arith.constant 0 : i32
    %c0_i32_0 = arith.constant 0 : i32
    %c0_i32_1 = arith.constant 0 : i32
    return %c0_i32, %c0_i32_0 : i32, i32
  }
  func.func @transform_5(%arg0: i32) -> (i32, i32) {
    %c0_i32 = arith.constant 0 : i32
    %c0_i32_0 = arith.constant 0 : i32
    %c0_i32_1 = arith.constant 0 : i32
    return %c0_i32, %c0_i32_0 : i32, i32
  }
  func.func @transform_6(%arg0: i32) -> (i32, i32) {
    %c0_i32 = arith.constant 0 : i32
    %c0_i32_0 = arith.constant 0 : i32
    %c0_i32_1 = arith.constant 0 : i32
    return %c0_i32, %c0_i32_0 : i32, i32
  }
  func.func @transform_7(%arg0: i32) -> (i32, i32) {
    %c0_i32 = arith.constant 0 : i32
    %c0_i32_0 = arith.constant 0 : i32
    %c0_i32_1 = arith.constant 0 : i32
    return %c0_i32, %c0_i32_0 : i32, i32
  }
  func.func @transform_8(%arg0: i32) -> (i32, i32) {
    %c0_i32 = arith.constant 0 : i32
    %c0_i32_0 = arith.constant 0 : i32
    %c0_i32_1 = arith.constant 0 : i32
    return %c0_i32, %c0_i32_0 : i32, i32
  }
  func.func @transform_9(%arg0: i32) -> (i32, i32) {
    %c0_i32 = arith.constant 0 : i32
    %c0_i32_0 = arith.constant 0 : i32
    %c0_i32_1 = arith.constant 0 : i32
    return %c0_i32, %c0_i32_0 : i32, i32
  }
  func.func @transform_10(%arg0: i32) -> (i32, i32) {
    %c0_i32 = arith.constant 0 : i32
    %c0_i32_0 = arith.constant 0 : i32
    %c0_i32_1 = arith.constant 0 : i32
    return %c0_i32, %c0_i32_0 : i32, i32
  }
  func.func @transform_11(%arg0: i32) -> (i32, i32) {
    %c0_i32 = arith.constant 0 : i32
    %c0_i32_0 = arith.constant 0 : i32
    %c0_i32_1 = arith.constant 0 : i32
    return %c0_i32, %c0_i32_0 : i32, i32
  }
  func.func @transform_12(%arg0: i32) -> (i32, i32) {
    %c0_i32 = arith.constant 0 : i32
    %c0_i32_0 = arith.constant 0 : i32
    %c0_i32_1 = arith.constant 0 : i32
    return %c0_i32, %c0_i32_0 : i32, i32
  }
  func.func @transform_13(%arg0: i32) -> (i32, i32) {
    %c0_i32 = arith.constant 0 : i32
    %c0_i32_0 = arith.constant 0 : i32
    %c0_i32_1 = arith.constant 0 : i32
    return %c0_i32, %c0_i32_0 : i32, i32
  }
  func.func @transform_14(%arg0: i32) -> (i32, i32) {
    %c0_i32 = arith.constant 0 : i32
    %c0_i32_0 = arith.constant 0 : i32
    %c0_i32_1 = arith.constant 0 : i32
    return %c0_i32, %c0_i32_0 : i32, i32
  }
  func.func @transform_15(%arg0: i32) -> (i32, i32) {
    %c0_i32 = arith.constant 0 : i32
    %c0_i32_0 = arith.constant 0 : i32
    %c0_i32_1 = arith.constant 0 : i32
    return %c0_i32, %c0_i32_0 : i32, i32
  }
  func.func @transform_16(%arg0: i32) -> (i32, i32) {
    %c0_i32 = arith.constant 0 : i32
    %c0_i32_0 = arith.constant 0 : i32
    %c0_i32_1 = arith.constant 0 : i32
    return %c0_i32, %c0_i32_0 : i32, i32
  }
  func.func @transform_17(%arg0: i32) -> (i32, i32) {
    %c0_i32 = arith.constant 0 : i32
    %c0_i32_0 = arith.constant 0 : i32
    %c0_i32_1 = arith.constant 0 : i32
    return %c0_i32, %c0_i32_0 : i32, i32
  }
  func.func @transform_18(%arg0: i32) -> (i32, i32) {
    %c0_i32 = arith.constant 0 : i32
    %c0_i32_0 = arith.constant 0 : i32
    %c0_i32_1 = arith.constant 0 : i32
    return %c0_i32, %c0_i32_0 : i32, i32
  }
  func.func @transform_19(%arg0: i32) -> (i32, i32) {
    %c0_i32 = arith.constant 0 : i32
    %c0_i32_0 = arith.constant 0 : i32
    %c0_i32_1 = arith.constant 0 : i32
    return %c0_i32, %c0_i32_0 : i32, i32
  }
  func.func @transform_20(%arg0: i32) -> (i32, i32) {
    %c0_i32 = arith.constant 0 : i32
    %c0_i32_0 = arith.constant 0 : i32
    %c0_i32_1 = arith.constant 0 : i32
    return %c0_i32, %c0_i32_0 : i32, i32
  }
  func.func @transform_21(%arg0: i32) -> (i32, i32) {
    %c0_i32 = arith.constant 0 : i32
    %c0_i32_0 = arith.constant 0 : i32
    %c0_i32_1 = arith.constant 0 : i32
    return %c0_i32, %c0_i32_0 : i32, i32
  }
  func.func @transform_22(%arg0: i32) -> (i32, i32) {
    %c0_i32 = arith.constant 0 : i32
    %c0_i32_0 = arith.constant 0 : i32
    return %arg0, %c0_i32 : i32, i32
  }
}

</mosaic_0001>

<llo_original>
// kernel: forward.2
$region0: #{forward.2}
  #allocation0 [shape = 'u32[]', space=smem, size = 0x4, offset = 0x4, fixed_abs, tag = 'smem constant byte address 0x4 - core index']
  #allocation1 [shape = 'u32[144,128]{1,0:T(1,128)}', space=vmem, size = 0x12000, scoped, tag = 'internal scratch']
  %s0 = inlined_call_operand.vmem [shape: bf16[16,64,6], index: 0, kind: input, shape index: {}]
  %s1 = inlined_call_operand.vmem [shape: bf16[6,64], index: 1, kind: input, shape index: {}]
  %s2 = inlined_call_operand.vmem [shape: f32[1,64], index: 2, kind: input, shape index: {}]
  %s3 = inlined_call_operand.vmem [shape: bf16[64,64], index: 3, kind: input, shape index: {}]
  %s4 = inlined_call_operand.vmem [shape: f32[1,64], index: 4, kind: input, shape index: {}]
  %s5 = inlined_call_operand.vmem [shape: bf16[64,64], index: 5, kind: input, shape index: {}]
  %s6 = inlined_call_operand.vmem [shape: f32[1,64], index: 6, kind: input, shape index: {}]
  %s7 = inlined_call_operand.vmem [shape: bf16[64,128], index: 7, kind: input, shape index: {}]
  %s8 = inlined_call_operand.vmem [shape: bf16[64,128], index: 8, kind: input, shape index: {}]
  %s9 = inlined_call_operand.vmem [shape: f32[1,128], index: 9, kind: input, shape index: {}]
  %s10 = inlined_call_operand.vmem [shape: bf16[128,128], index: 10, kind: input, shape index: {}]
  %s11 = inlined_call_operand.vmem [shape: f32[1,128], index: 11, kind: input, shape index: {}]
  %s12 = inlined_call_operand.vmem [shape: bf16[16,128], index: 12, kind: output, shape index: {}]
  %s13 = sld [smem:[#allocation0]]
  $region58: #{forward.2} parent=0
    _
  %s15 = ssub.s32 1, %s13
  %s16 = scalar_select 0, %s15, %s13
  // Predicated region
  $region2: #{forward.2} parent=0 // pred_check
    _
  $region3: #{forward.2} parent=0 // pred_check_branch
    %18 = sbr.rel (0) target = $region5
  $region4: #{forward.2} parent=0 // pred_region
    _
  $region5: #{forward.2} parent=0 // pred_fallthru
    _
  // Predicated region
  $region6: #{forward.2} parent=0 // pred_check
    _
  $region7: #{forward.2} parent=0 // pred_check_branch
    %20 = sbr.rel (0) target = $region9
  $region8: #{forward.2} parent=0 // pred_region
    _
  $region9: #{forward.2} parent=0 // pred_fallthru
    _
  // Predicated region
  $region10: #{forward.2} parent=0 // pred_check
    _
  $region11: #{forward.2} parent=0 // pred_check_branch
    %22 = sbr.rel (0) target = $region13
  $region12: #{forward.2} parent=0 // pred_region
    _
  $region13: #{forward.2} parent=0 // pred_fallthru
    _
  // Predicated region
  $region14: #{forward.2} parent=0 // pred_check
    _
  $region15: #{forward.2} parent=0 // pred_check_branch
    %24 = sbr.rel (0) target = $region17
  $region16: #{forward.2} parent=0 // pred_region
    _
  $region17: #{forward.2} parent=0 // pred_fallthru
    _
  // Predicated region
  $region18: #{forward.2} parent=0 // pred_check
    _
  $region19: #{forward.2} parent=0 // pred_check_branch
    %26 = sbr.rel (0) target = $region21
  $region20: #{forward.2} parent=0 // pred_region
    _
  $region21: #{forward.2} parent=0 // pred_fallthru
    _
  // Predicated region
  $region22: #{forward.2} parent=0 // pred_check
    _
  $region23: #{forward.2} parent=0 // pred_check_branch
    %28 = sbr.rel (0) target = $region25
  $region24: #{forward.2} parent=0 // pred_region
    _
  $region25: #{forward.2} parent=0 // pred_fallthru
    _
  // Predicated region
  $region26: #{forward.2} parent=0 // pred_check
    _
  $region27: #{forward.2} parent=0 // pred_check_branch
    %30 = sbr.rel (0) target = $region29
  $region28: #{forward.2} parent=0 // pred_region
    _
  $region29: #{forward.2} parent=0 // pred_fallthru
    _
  // Predicated region
  $region30: #{forward.2} parent=0 // pred_check
    _
  $region31: #{forward.2} parent=0 // pred_check_branch
    %32 = sbr.rel (0) target = $region33
  $region32: #{forward.2} parent=0 // pred_region
    _
  $region33: #{forward.2} parent=0 // pred_fallthru
    _
  // Predicated region
  $region34: #{forward.2} parent=0 // pred_check
    _
  $region35: #{forward.2} parent=0 // pred_check_branch
    %34 = sbr.rel (0) target = $region37
  $region36: #{forward.2} parent=0 // pred_region
    _
  $region37: #{forward.2} parent=0 // pred_fallthru
    _
  // Predicated region
  $region38: #{forward.2} parent=0 // pred_check
    _
  $region39: #{forward.2} parent=0 // pred_check_branch
    %36 = sbr.rel (0) target = $region41
  $region40: #{forward.2} parent=0 // pred_region
    _
  $region41: #{forward.2} parent=0 // pred_fallthru
    _
  // Predicated region
  $region42: #{forward.2} parent=0 // pred_check
    _
  $region43: #{forward.2} parent=0 // pred_check_branch
    %38 = sbr.rel (0) target = $region45
  $region44: #{forward.2} parent=0 // pred_region
    _
  $region45: #{forward.2} parent=0 // pred_fallthru
    _
  // Predicated region
  $region46: #{forward.2} parent=0 // pred_check
    _
  $region47: #{forward.2} parent=0 // pred_check_branch
    %40 = sbr.rel (0) target = $region49
  $region48: #{forward.2} parent=0 // pred_region
    _
  $region49: #{forward.2} parent=0 // pred_fallthru
    _
  %v43 = vld [vmem:[%s0] sm:$0xf]
  %v44 = vld [vmem:[%s0 + $0x4] sm:$0xf]
  %v45 = vld [vmem:[%s0 + $0x8] sm:$0xf]
  %v46 = vld [vmem:[%s0 + $0xc] sm:$0xf]
  %v47 = vld [vmem:[%s0 + $0x10] sm:$0xf]
  %v48 = vld [vmem:[%s0 + $0x14] sm:$0xf]
  %v49 = vld [vmem:[%s0 + $0x18] sm:$0xf]
  %v50 = vld [vmem:[%s0 + $0x1c] sm:$0xf]
  %v51 = vld [vmem:[%s0 + $0x20] sm:$0xf]
  %v52 = vld [vmem:[%s0 + $0x24] sm:$0xf]
  %v53 = vld [vmem:[%s0 + $0x28] sm:$0xf]
  %v54 = vld [vmem:[%s0 + $0x2c] sm:$0xf]
  %v55 = vld [vmem:[%s0 + $0x30] sm:$0xf]
  %v56 = vld [vmem:[%s0 + $0x34] sm:$0xf]
  %v57 = vld [vmem:[%s0 + $0x38] sm:$0xf]
  %v58 = vld [vmem:[%s0 + $0x3c] sm:$0xf]
  %v59 = vld [vmem:[%s0 + $0x40] sm:$0xf]
  %v60 = vld [vmem:[%s0 + $0x44] sm:$0xf]
  %v61 = vld [vmem:[%s0 + $0x48] sm:$0xf]
  %v62 = vld [vmem:[%s0 + $0x4c] sm:$0xf]
  %v63 = vld [vmem:[%s0 + $0x50] sm:$0xf]
  %v64 = vld [vmem:[%s0 + $0x54] sm:$0xf]
  %v65 = vld [vmem:[%s0 + $0x58] sm:$0xf]
  %v66 = vld [vmem:[%s0 + $0x5c] sm:$0xf]
  %v67 = vld [vmem:[%s0 + $0x60] sm:$0xf]
  %v68 = vld [vmem:[%s0 + $0x64] sm:$0xf]
  %v69 = vld [vmem:[%s0 + $0x68] sm:$0xf]
  %v70 = vld [vmem:[%s0 + $0x6c] sm:$0xf]
  %v71 = vld [vmem:[%s0 + $0x70] sm:$0xf]
  %v72 = vld [vmem:[%s0 + $0x74] sm:$0xf]
  %v73 = vld [vmem:[%s0 + $0x78] sm:$0xf]
  %v74 = vld [vmem:[%s0 + $0x7c] sm:$0xf]
  %v75 = vld [vmem:[%s0 + $0x80] sm:$0xf]
  %v76 = vld [vmem:[%s0 + $0x84] sm:$0xf]
  %v77 = vld [vmem:[%s0 + $0x88] sm:$0xf]
  %v78 = vld [vmem:[%s0 + $0x8c] sm:$0xf]
  %v79 = vld [vmem:[%s0 + $0x90] sm:$0xf]
  %v80 = vld [vmem:[%s0 + $0x94] sm:$0xf]
  %v81 = vld [vmem:[%s0 + $0x98] sm:$0xf]
  %v82 = vld [vmem:[%s0 + $0x9c] sm:$0xf]
  %v83 = vld [vmem:[%s0 + $0xa0] sm:$0xf]
  %v84 = vld [vmem:[%s0 + $0xa4] sm:$0xf]
  %v85 = vld [vmem:[%s0 + $0xa8] sm:$0xf]
  %v86 = vld [vmem:[%s0 + $0xac] sm:$0xf]
  %v87 = vld [vmem:[%s0 + $0xb0] sm:$0xf]
  %v88 = vld [vmem:[%s0 + $0xb4] sm:$0xf]
  %v89 = vld [vmem:[%s0 + $0xb8] sm:$0xf]
  %v90 = vld [vmem:[%s0 + $0xbc] sm:$0xf]
  %v91 = vld [vmem:[%s0 + $0xc0] sm:$0xf]
  %v92 = vld [vmem:[%s0 + $0xc4] sm:$0xf]
  %v93 = vld [vmem:[%s0 + $0xc8] sm:$0xf]
  %v94 = vld [vmem:[%s0 + $0xcc] sm:$0xf]
  %v95 = vld [vmem:[%s0 + $0xd0] sm:$0xf]
  %v96 = vld [vmem:[%s0 + $0xd4] sm:$0xf]
  %v97 = vld [vmem:[%s0 + $0xd8] sm:$0xf]
  %v98 = vld [vmem:[%s0 + $0xdc] sm:$0xf]
  %v99 = vld [vmem:[%s0 + $0xe0] sm:$0xf]
  %v100 = vld [vmem:[%s0 + $0xe4] sm:$0xf]
  %v101 = vld [vmem:[%s0 + $0xe8] sm:$0xf]
  %v102 = vld [vmem:[%s0 + $0xec] sm:$0xf]
  %v103 = vld [vmem:[%s0 + $0xf0] sm:$0xf]
  %v104 = vld [vmem:[%s0 + $0xf4] sm:$0xf]
  %v105 = vld [vmem:[%s0 + $0xf8] sm:$0xf]
  %v106 = vld [vmem:[%s0 + $0xfc] sm:$0xf]
  %v107 = vld [vmem:[%s0 + $0x100] sm:$0xf]
  %v108 = vld [vmem:[%s0 + $0x104] sm:$0xf]
  %v109 = vld [vmem:[%s0 + $0x108] sm:$0xf]
  %v110 = vld [vmem:[%s0 + $0x10c] sm:$0xf]
  %v111 = vld [vmem:[%s0 + $0x110] sm:$0xf]
  %v112 = vld [vmem:[%s0 + $0x114] sm:$0xf]
  %v113 = vld [vmem:[%s0 + $0x118] sm:$0xf]
  %v114 = vld [vmem:[%s0 + $0x11c] sm:$0xf]
  %v115 = vld [vmem:[%s0 + $0x120] sm:$0xf]
  %v116 = vld [vmem:[%s0 + $0x124] sm:$0xf]
  %v117 = vld [vmem:[%s0 + $0x128] sm:$0xf]
  %v118 = vld [vmem:[%s0 + $0x12c] sm:$0xf]
  %v119 = vld [vmem:[%s0 + $0x130] sm:$0xf]
  %v120 = vld [vmem:[%s0 + $0x134] sm:$0xf]
  %v121 = vld [vmem:[%s0 + $0x138] sm:$0xf]
  %v122 = vld [vmem:[%s0 + $0x13c] sm:$0xf]
  %v123 = vld [vmem:[%s0 + $0x140] sm:$0xf]
  %v124 = vld [vmem:[%s0 + $0x144] sm:$0xf]
  %v125 = vld [vmem:[%s0 + $0x148] sm:$0xf]
  %v126 = vld [vmem:[%s0 + $0x14c] sm:$0xf]
  %v127 = vld [vmem:[%s0 + $0x150] sm:$0xf]
  %v128 = vld [vmem:[%s0 + $0x154] sm:$0xf]
  %v129 = vld [vmem:[%s0 + $0x158] sm:$0xf]
  %v130 = vld [vmem:[%s0 + $0x15c] sm:$0xf]
  %v131 = vld [vmem:[%s0 + $0x160] sm:$0xf]
  %v132 = vld [vmem:[%s0 + $0x164] sm:$0xf]
  %v133 = vld [vmem:[%s0 + $0x168] sm:$0xf]
  %v134 = vld [vmem:[%s0 + $0x16c] sm:$0xf]
  %v135 = vld [vmem:[%s0 + $0x170] sm:$0xf]
  %v136 = vld [vmem:[%s0 + $0x174] sm:$0xf]
  %v137 = vld [vmem:[%s0 + $0x178] sm:$0xf]
  %v138 = vld [vmem:[%s0 + $0x17c] sm:$0xf]
  %v139 = vld [vmem:[%s0 + $0x180] sm:$0xf]
  %v140 = vld [vmem:[%s0 + $0x184] sm:$0xf]
  %v141 = vld [vmem:[%s0 + $0x188] sm:$0xf]
  %v142 = vld [vmem:[%s0 + $0x18c] sm:$0xf]
  %v143 = vld [vmem:[%s0 + $0x190] sm:$0xf]
  %v144 = vld [vmem:[%s0 + $0x194] sm:$0xf]
  %v145 = vld [vmem:[%s0 + $0x198] sm:$0xf]
  %v146 = vld [vmem:[%s0 + $0x19c] sm:$0xf]
  %v147 = vld [vmem:[%s0 + $0x1a0] sm:$0xf]
  %v148 = vld [vmem:[%s0 + $0x1a4] sm:$0xf]
  %v149 = vld [vmem:[%s0 + $0x1a8] sm:$0xf]
  %v150 = vld [vmem:[%s0 + $0x1ac] sm:$0xf]
  %v151 = vld [vmem:[%s0 + $0x1b0] sm:$0xf]
  %v152 = vld [vmem:[%s0 + $0x1b4] sm:$0xf]
  %v153 = vld [vmem:[%s0 + $0x1b8] sm:$0xf]
  %v154 = vld [vmem:[%s0 + $0x1bc] sm:$0xf]
  %v155 = vld [vmem:[%s0 + $0x1c0] sm:$0xf]
  %v156 = vld [vmem:[%s0 + $0x1c4] sm:$0xf]
  %v157 = vld [vmem:[%s0 + $0x1c8] sm:$0xf]
  %v158 = vld [vmem:[%s0 + $0x1cc] sm:$0xf]
  %v159 = vld [vmem:[%s0 + $0x1d0] sm:$0xf]
  %v160 = vld [vmem:[%s0 + $0x1d4] sm:$0xf]
  %v161 = vld [vmem:[%s0 + $0x1d8] sm:$0xf]
  %v162 = vld [vmem:[%s0 + $0x1dc] sm:$0xf]
  %v163 = vld [vmem:[%s0 + $0x1e0] sm:$0xf]
  %v164 = vld [vmem:[%s0 + $0x1e4] sm:$0xf]
  %v165 = vld [vmem:[%s0 + $0x1e8] sm:$0xf]
  %v166 = vld [vmem:[%s0 + $0x1ec] sm:$0xf]
  %v167 = vld [vmem:[%s0 + $0x1f0] sm:$0xf]
  %v168 = vld [vmem:[%s0 + $0x1f4] sm:$0xf]
  %v169 = vld [vmem:[%s0 + $0x1f8] sm:$0xf]
  %v170 = vld [vmem:[%s0 + $0x1fc] sm:$0xf]
  %v171 = vld [vmem:[%s1] sm:$0x7]
  %v172 = vld [vmem:[%s2] sm:$0x1]
  %v174 = vlaneseq
  %v175 = vshrl.u32 %v174, 7
  %v176 = vsub.s32 0, %v175
  %v177 = vrot.slane %v172, %v176
  %v307 = vunpack.c.l.b16 %v43
  %v308 = vunpack.c.l.b16 %v44
  %v309 = vunpack.c.l.b16 %v45
  %v310 = vunpack.c.l.b16 %v46
  %v311 = vunpack.c.l.b16 %v47
  %v312 = vunpack.c.l.b16 %v48
  %v313 = vunpack.c.l.b16 %v49
  %v314 = vunpack.c.l.b16 %v50
  %v315 = vunpack.c.l.b16 %v51
  %v316 = vunpack.c.l.b16 %v52
  %v317 = vunpack.c.l.b16 %v53
  %v318 = vunpack.c.l.b16 %v54
  %v319 = vunpack.c.l.b16 %v55
  %v320 = vunpack.c.l.b16 %v56
  %v321 = vunpack.c.l.b16 %v57
  %v322 = vunpack.c.l.b16 %v58
  %v323 = vunpack.c.l.b16 %v59
  %v324 = vunpack.c.l.b16 %v60
  %v325 = vunpack.c.l.b16 %v61
  %v326 = vunpack.c.l.b16 %v62
  %v327 = vunpack.c.l.b16 %v63
  %v328 = vunpack.c.l.b16 %v64
  %v329 = vunpack.c.l.b16 %v65
  %v330 = vunpack.c.l.b16 %v66
  %v331 = vunpack.c.l.b16 %v67
  %v332 = vunpack.c.l.b16 %v68
  %v333 = vunpack.c.l.b16 %v69
  %v334 = vunpack.c.l.b16 %v70
  %v335 = vunpack.c.l.b16 %v71
  %v336 = vunpack.c.l.b16 %v72
  %v337 = vunpack.c.l.b16 %v73
  %v338 = vunpack.c.l.b16 %v74
  %v339 = vunpack.c.l.b16 %v75
  %v340 = vunpack.c.l.b16 %v76
  %v341 = vunpack.c.l.b16 %v77
  %v342 = vunpack.c.l.b16 %v78
  %v343 = vunpack.c.l.b16 %v79
  %v344 = vunpack.c.l.b16 %v80
  %v345 = vunpack.c.l.b16 %v81
  %v346 = vunpack.c.l.b16 %v82
  %v347 = vunpack.c.l.b16 %v83
  %v348 = vunpack.c.l.b16 %v84
  %v349 = vunpack.c.l.b16 %v85
  %v350 = vunpack.c.l.b16 %v86
  %v351 = vunpack.c.l.b16 %v87
  %v352 = vunpack.c.l.b16 %v88
  %v353 = vunpack.c.l.b16 %v89
  %v354 = vunpack.c.l.b16 %v90
  %v355 = vunpack.c.l.b16 %v91
  %v356 = vunpack.c.l.b16 %v92
  %v357 = vunpack.c.l.b16 %v93
  %v358 = vunpack.c.l.b16 %v94
  %v359 = vunpack.c.l.b16 %v95
  %v360 = vunpack.c.l.b16 %v96
  %v361 = vunpack.c.l.b16 %v97
  %v362 = vunpack.c.l.b16 %v98
  %v363 = vunpack.c.l.b16 %v99
  %v364 = vunpack.c.l.b16 %v100
  %v365 = vunpack.c.l.b16 %v101
  %v366 = vunpack.c.l.b16 %v102
  %v367 = vunpack.c.l.b16 %v103
  %v368 = vunpack.c.l.b16 %v104
  %v369 = vunpack.c.l.b16 %v105
  %v370 = vunpack.c.l.b16 %v106
  %v371 = vunpack.c.l.b16 %v107
  %v372 = vunpack.c.l.b16 %v108
  %v373 = vunpack.c.l.b16 %v109
  %v374 = vunpack.c.l.b16 %v110
  %v375 = vunpack.c.l.b16 %v111
  %v376 = vunpack.c.l.b16 %v112
  %v377 = vunpack.c.l.b16 %v113
  %v378 = vunpack.c.l.b16 %v114
  %v379 = vunpack.c.l.b16 %v115
  %v380 = vunpack.c.l.b16 %v116
  %v381 = vunpack.c.l.b16 %v117
  %v382 = vunpack.c.l.b16 %v118
  %v383 = vunpack.c.l.b16 %v119
  %v384 = vunpack.c.l.b16 %v120
  %v385 = vunpack.c.l.b16 %v121
  %v386 = vunpack.c.l.b16 %v122
  %v387 = vunpack.c.l.b16 %v123
  %v388 = vunpack.c.l.b16 %v124
  %v389 = vunpack.c.l.b16 %v125
  %v390 = vunpack.c.l.b16 %v126
  %v391 = vunpack.c.l.b16 %v127
  %v392 = vunpack.c.l.b16 %v128
  %v393 = vunpack.c.l.b16 %v129
  %v394 = vunpack.c.l.b16 %v130
  %v395 = vunpack.c.l.b16 %v131
  %v396 = vunpack.c.l.b16 %v132
  %v397 = vunpack.c.l.b16 %v133
  %v398 = vunpack.c.l.b16 %v134
  %v399 = vunpack.c.l.b16 %v135
  %v400 = vunpack.c.l.b16 %v136
  %v401 = vunpack.c.l.b16 %v137
  %v402 = vunpack.c.l.b16 %v138
  %v403 = vunpack.c.l.b16 %v139
  %v404 = vunpack.c.l.b16 %v140
  %v405 = vunpack.c.l.b16 %v141
  %v406 = vunpack.c.l.b16 %v142
  %v407 = vunpack.c.l.b16 %v143
  %v408 = vunpack.c.l.b16 %v144
  %v409 = vunpack.c.l.b16 %v145
  %v410 = vunpack.c.l.b16 %v146
  %v411 = vunpack.c.l.b16 %v147
  %v412 = vunpack.c.l.b16 %v148
  %v413 = vunpack.c.l.b16 %v149
  %v414 = vunpack.c.l.b16 %v150
  %v415 = vunpack.c.l.b16 %v151
  %v416 = vunpack.c.l.b16 %v152
  %v417 = vunpack.c.l.b16 %v153
  %v418 = vunpack.c.l.b16 %v154
  %v419 = vunpack.c.l.b16 %v155
  %v420 = vunpack.c.l.b16 %v156
  %v421 = vunpack.c.l.b16 %v157
  %v422 = vunpack.c.l.b16 %v158
  %v423 = vunpack.c.l.b16 %v159
  %v424 = vunpack.c.l.b16 %v160
  %v425 = vunpack.c.l.b16 %v161
  %v426 = vunpack.c.l.b16 %v162
  %v427 = vunpack.c.l.b16 %v163
  %v428 = vunpack.c.l.b16 %v164
  %v429 = vunpack.c.l.b16 %v165
  %v430 = vunpack.c.l.b16 %v166
  %v431 = vunpack.c.l.b16 %v167
  %v432 = vunpack.c.l.b16 %v168
  %v433 = vunpack.c.l.b16 %v169
  %v434 = vunpack.c.l.b16 %v170
  %v435 = vpack.c.b16 %v308, %v307
  %v436 = vpack.c.b16 %v310, %v309
  %v437 = vpack.c.b16 %v312, %v311
  %v438 = vpack.c.b16 %v314, %v313
  %v439 = vpack.c.b16 %v316, %v315
  %v440 = vpack.c.b16 %v318, %v317
  %v441 = vpack.c.b16 %v320, %v319
  %v442 = vpack.c.b16 %v322, %v321
  %v443 = vpack.c.b16 %v324, %v323
  %v444 = vpack.c.b16 %v326, %v325
  %v445 = vpack.c.b16 %v328, %v327
  %v446 = vpack.c.b16 %v330, %v329
  %v447 = vpack.c.b16 %v332, %v331
  %v448 = vpack.c.b16 %v334, %v333
  %v449 = vpack.c.b16 %v336, %v335
  %v450 = vpack.c.b16 %v338, %v337
  %v451 = vpack.c.b16 %v340, %v339
  %v452 = vpack.c.b16 %v342, %v341
  %v453 = vpack.c.b16 %v344, %v343
  %v454 = vpack.c.b16 %v346, %v345
  %v455 = vpack.c.b16 %v348, %v347
  %v456 = vpack.c.b16 %v350, %v349
  %v457 = vpack.c.b16 %v352, %v351
  %v458 = vpack.c.b16 %v354, %v353
  %v459 = vpack.c.b16 %v356, %v355
  %v460 = vpack.c.b16 %v358, %v357
  %v461 = vpack.c.b16 %v360, %v359
  %v462 = vpack.c.b16 %v362, %v361
  %v463 = vpack.c.b16 %v364, %v363
  %v464 = vpack.c.b16 %v366, %v365
  %v465 = vpack.c.b16 %v368, %v367
  %v466 = vpack.c.b16 %v370, %v369
  %v467 = vpack.c.b16 %v372, %v371
  %v468 = vpack.c.b16 %v374, %v373
  %v469 = vpack.c.b16 %v376, %v375
  %v470 = vpack.c.b16 %v378, %v377
  %v471 = vpack.c.b16 %v380, %v379
  %v472 = vpack.c.b16 %v382, %v381
  %v473 = vpack.c.b16 %v384, %v383
  %v474 = vpack.c.b16 %v386, %v385
  %v475 = vpack.c.b16 %v388, %v387
  %v476 = vpack.c.b16 %v390, %v389
  %v477 = vpack.c.b16 %v392, %v391
  %v478 = vpack.c.b16 %v394, %v393
  %v479 = vpack.c.b16 %v396, %v395
  %v480 = vpack.c.b16 %v398, %v397
  %v481 = vpack.c.b16 %v400, %v399
  %v482 = vpack.c.b16 %v402, %v401
  %v483 = vpack.c.b16 %v404, %v403
  %v484 = vpack.c.b16 %v406, %v405
  %v485 = vpack.c.b16 %v408, %v407
  %v486 = vpack.c.b16 %v410, %v409
  %v487 = vpack.c.b16 %v412, %v411
  %v488 = vpack.c.b16 %v414, %v413
  %v489 = vpack.c.b16 %v416, %v415
  %v490 = vpack.c.b16 %v418, %v417
  %v491 = vpack.c.b16 %v420, %v419
  %v492 = vpack.c.b16 %v422, %v421
  %v493 = vpack.c.b16 %v424, %v423
  %v494 = vpack.c.b16 %v426, %v425
  %v495 = vpack.c.b16 %v428, %v427
  %v496 = vpack.c.b16 %v430, %v429
  %v497 = vpack.c.b16 %v432, %v431
  %v498 = vpack.c.b16 %v434, %v433
  %vm499 = vcmask 48128
  %v501 = vsel %vm499, %v435, 0
  %v504 = vsel %vm499, %v436, 0
  %v507 = vsel %vm499, %v437, 0
  %v510 = vsel %vm499, %v438, 0
  %v513 = vsel %vm499, %v439, 0
  %v516 = vsel %vm499, %v440, 0
  %v519 = vsel %vm499, %v441, 0
  %v522 = vsel %vm499, %v442, 0
  %v525 = vsel %vm499, %v443, 0
  %v528 = vsel %vm499, %v444, 0
  %v531 = vsel %vm499, %v445, 0
  %v534 = vsel %vm499, %v446, 0
  %v537 = vsel %vm499, %v447, 0
  %v540 = vsel %vm499, %v448, 0
  %v543 = vsel %vm499, %v449, 0
  %v546 = vsel %vm499, %v450, 0
  %v549 = vsel %vm499, %v451, 0
  %v552 = vsel %vm499, %v452, 0
  %v555 = vsel %vm499, %v453, 0
  %v558 = vsel %vm499, %v454, 0
  %v561 = vsel %vm499, %v455, 0
  %v564 = vsel %vm499, %v456, 0
  %v567 = vsel %vm499, %v457, 0
  %v570 = vsel %vm499, %v458, 0
  %v573 = vsel %vm499, %v459, 0
  %v576 = vsel %vm499, %v460, 0
  %v579 = vsel %vm499, %v461, 0
  %v582 = vsel %vm499, %v462, 0
  %v585 = vsel %vm499, %v463, 0
  %v588 = vsel %vm499, %v464, 0
  %v591 = vsel %vm499, %v465, 0
  %v594 = vsel %vm499, %v466, 0
  %v597 = vsel %vm499, %v467, 0
  %v600 = vsel %vm499, %v468, 0
  %v603 = vsel %vm499, %v469, 0
  %v606 = vsel %vm499, %v470, 0
  %v609 = vsel %vm499, %v471, 0
  %v612 = vsel %vm499, %v472, 0
  %v615 = vsel %vm499, %v473, 0
  %v618 = vsel %vm499, %v474, 0
  %v621 = vsel %vm499, %v475, 0
  %v624 = vsel %vm499, %v476, 0
  %v627 = vsel %vm499, %v477, 0
  %v630 = vsel %vm499, %v478, 0
  %v633 = vsel %vm499, %v479, 0
  %v636 = vsel %vm499, %v480, 0
  %v639 = vsel %vm499, %v481, 0
  %v642 = vsel %vm499, %v482, 0
  %v645 = vsel %vm499, %v483, 0
  %v648 = vsel %vm499, %v484, 0
  %v651 = vsel %vm499, %v485, 0
  %v654 = vsel %vm499, %v486, 0
  %v657 = vsel %vm499, %v487, 0
  %v660 = vsel %vm499, %v488, 0
  %v663 = vsel %vm499, %v489, 0
  %v666 = vsel %vm499, %v490, 0
  %v669 = vsel %vm499, %v491, 0
  %v672 = vsel %vm499, %v492, 0
  %v675 = vsel %vm499, %v493, 0
  %v678 = vsel %vm499, %v494, 0
  %v681 = vsel %vm499, %v495, 0
  %v684 = vsel %vm499, %v496, 0
  %v687 = vsel %vm499, %v497, 0
  %v690 = vsel %vm499, %v498, 0
  %vm692 = vcmask 1042432
  %v694 = vsel %vm692, %v171, 0
  %696 = vmatprep.subr.bf16.mxu0 0
  %697 = vmatpush1.bf16.msra.mxu0 %v694
  %698 = vmatprep.subr.bf16.mxu0 0
  %699 = vmatpush1.bf16.msra.mxu0 0
  %700 = vmatprep.subr.bf16.mxu0 0
  %701 = vmatpush1.bf16.msra.mxu0 0
  %702 = vmatprep.subr.bf16.mxu0 0
  %703 = vmatpush1.bf16.msra.mxu0 0
  %704 = vmatprep.subr.bf16.mxu0 0
  %705 = vmatpush1.bf16.msra.mxu0 0
  %706 = vmatprep.subr.bf16.mxu0 0
  %707 = vmatpush1.bf16.msra.mxu0 0
  %708 = vmatprep.subr.bf16.mxu0 0
  %709 = vmatpush1.bf16.msra.mxu0 0
  %710 = vmatprep.subr.bf16.mxu0 0
  %711 = vmatpush1.bf16.msra.mxu0 0
  %712 = vmatprep.subr.bf16.mxu0 0
  %713 = vmatpush1.bf16.msra.mxu0 0
  %714 = vmatprep.subr.bf16.mxu0 0
  %715 = vmatpush1.bf16.msra.mxu0 0
  %716 = vmatprep.subr.bf16.mxu0 0
  %717 = vmatpush1.bf16.msra.mxu0 0
  %718 = vmatprep.subr.bf16.mxu0 0
  %719 = vmatpush1.bf16.msra.mxu0 0
  %720 = vmatprep.subr.bf16.mxu0 0
  %721 = vmatpush1.bf16.msra.mxu0 0
  %722 = vmatprep.subr.bf16.mxu0 0
  %723 = vmatpush1.bf16.msra.mxu0 0
  %724 = vmatprep.subr.bf16.mxu0 0
  %725 = vmatpush1.bf16.msra.mxu0 0
  %726 = vmatprep.subr.bf16.mxu0 0
  %727 = vmatpush1.bf16.msra.mxu0 0
  %728 = vmatprep.mubr.bf16.mxu0 0
  %729 = vmatmul.mubr.bf16.gmra.mrb[0].mxu0 %v501
  %v730 = vpop.f32.mrb[0].mxu0
  %v731 = vadd.f32 %v177, %v730
  %v732 = vpop.f32.mrb[0].mxu0
  %v733 = vpop.f32.mrb[0].mxu0
  %v734 = vadd.f32 %v177, %v733
  %v735 = vpop.f32.mrb[0].mxu0
  %736 = vmatprep.mubr.bf16.mxu0 0
  %737 = vmatmul.mubr.bf16.gmra.mrb[0].mxu0 %v504
  %v738 = vpop.f32.mrb[0].mxu0
  %v739 = vadd.f32 %v177, %v738
  %v740 = vpop.f32.mrb[0].mxu0
  %v741 = vpop.f32.mrb[0].mxu0
  %v742 = vadd.f32 %v177, %v741
  %v743 = vpop.f32.mrb[0].mxu0
  %744 = vmatprep.mubr.bf16.mxu0 0
  %745 = vmatmul.mubr.bf16.gmra.mrb[0].mxu0 %v507
  %v746 = vpop.f32.mrb[0].mxu0
  %v747 = vadd.f32 %v177, %v746
  %v748 = vpop.f32.mrb[0].mxu0
  %v749 = vpop.f32.mrb[0].mxu0
  %v750 = vadd.f32 %v177, %v749
  %v751 = vpop.f32.mrb[0].mxu0
  %752 = vmatprep.mubr.bf16.mxu0 0
  %753 = vmatmul.mubr.bf16.gmra.mrb[0].mxu0 %v510
  %v754 = vpop.f32.mrb[0].mxu0
  %v755 = vadd.f32 %v177, %v754
  %v756 = vpop.f32.mrb[0].mxu0
  %v757 = vpop.f32.mrb[0].mxu0
  %v758 = vadd.f32 %v177, %v757
  %v759 = vpop.f32.mrb[0].mxu0
  %760 = vmatprep.mubr.bf16.mxu0 0
  %761 = vmatmul.mubr.bf16.gmra.mrb[0].mxu0 %v513
  %v762 = vpop.f32.mrb[0].mxu0
  %v763 = vadd.f32 %v177, %v762
  %v764 = vpop.f32.mrb[0].mxu0
  %v765 = vpop.f32.mrb[0].mxu0
  %v766 = vadd.f32 %v177, %v765
  %v767 = vpop.f32.mrb[0].mxu0
  %768 = vmatprep.mubr.bf16.mxu0 0
  %769 = vmatmul.mubr.bf16.gmra.mrb[0].mxu0 %v516
  %v770 = vpop.f32.mrb[0].mxu0
  %v771 = vadd.f32 %v177, %v770
  %v772 = vpop.f32.mrb[0].mxu0
  %v773 = vpop.f32.mrb[0].mxu0
  %v774 = vadd.f32 %v177, %v773
  %v775 = vpop.f32.mrb[0].mxu0
  %776 = vmatprep.mubr.bf16.mxu0 0
  %777 = vmatmul.mubr.bf16.gmra.mrb[0].mxu0 %v519
  %v778 = vpop.f32.mrb[0].mxu0
  %v779 = vadd.f32 %v177, %v778
  %v780 = vpop.f32.mrb[0].mxu0
  %v781 = vpop.f32.mrb[0].mxu0
  %v782 = vadd.f32 %v177, %v781
  %v783 = vpop.f32.mrb[0].mxu0
  %784 = vmatprep.mubr.bf16.mxu0 0
  %785 = vmatmul.mubr.bf16.gmra.mrb[0].mxu0 %v522
  %v786 = vpop.f32.mrb[0].mxu0
  %v787 = vadd.f32 %v177, %v786
  %v788 = vpop.f32.mrb[0].mxu0
  %v789 = vpop.f32.mrb[0].mxu0
  %v790 = vadd.f32 %v177, %v789
  %v791 = vpop.f32.mrb[0].mxu0
  %792 = vmatprep.mubr.bf16.mxu0 0
  %793 = vmatmul.mubr.bf16.gmra.mrb[0].mxu0 %v525
  %v794 = vpop.f32.mrb[0].mxu0
  %v795 = vadd.f32 %v177, %v794
  %v796 = vpop.f32.mrb[0].mxu0
  %v797 = vpop.f32.mrb[0].mxu0
  %v798 = vadd.f32 %v177, %v797
  %v799 = vpop.f32.mrb[0].mxu0
  %800 = vmatprep.mubr.bf16.mxu0 0
  %801 = vmatmul.mubr.bf16.gmra.mrb[0].mxu0 %v528
  %v802 = vpop.f32.mrb[0].mxu0
  %v803 = vadd.f32 %v177, %v802
  %v804 = vpop.f32.mrb[0].mxu0
  %v805 = vpop.f32.mrb[0].mxu0
  %v806 = vadd.f32 %v177, %v805
  %v807 = vpop.f32.mrb[0].mxu0
  %808 = vmatprep.mubr.bf16.mxu0 0
  %809 = vmatmul.mubr.bf16.gmra.mrb[0].mxu0 %v531
  %v810 = vpop.f32.mrb[0].mxu0
  %v811 = vadd.f32 %v177, %v810
  %v812 = vpop.f32.mrb[0].mxu0
  %v813 = vpop.f32.mrb[0].mxu0
  %v814 = vadd.f32 %v177, %v813
  %v815 = vpop.f32.mrb[0].mxu0
  %816 = vmatprep.mubr.bf16.mxu0 0
  %817 = vmatmul.mubr.bf16.gmra.mrb[0].mxu0 %v534
  %v818 = vpop.f32.mrb[0].mxu0
  %v819 = vadd.f32 %v177, %v818
  %v820 = vpop.f32.mrb[0].mxu0
  %v821 = vpop.f32.mrb[0].mxu0
  %v822 = vadd.f32 %v177, %v821
  %v823 = vpop.f32.mrb[0].mxu0
  %824 = vmatprep.mubr.bf16.mxu0 0
  %825 = vmatmul.mubr.bf16.gmra.mrb[0].mxu0 %v537
  %v826 = vpop.f32.mrb[0].mxu0
  %v827 = vadd.f32 %v177, %v826
  %v828 = vpop.f32.mrb[0].mxu0
  %v829 = vpop.f32.mrb[0].mxu0
  %v830 = vadd.f32 %v177, %v829
  %v831 = vpop.f32.mrb[0].mxu0
  %832 = vmatprep.mubr.bf16.mxu0 0
  %833 = vmatmul.mubr.bf16.gmra.mrb[0].mxu0 %v540
  %v834 = vpop.f32.mrb[0].mxu0
  %v835 = vadd.f32 %v177, %v834
  %v836 = vpop.f32.mrb[0].mxu0
  %v837 = vpop.f32.mrb[0].mxu0
  %v838 = vadd.f32 %v177, %v837
  %v839 = vpop.f32.mrb[0].mxu0
  %840 = vmatprep.mubr.bf16.mxu0 0
  %841 = vmatmul.mubr.bf16.gmra.mrb[0].mxu0 %v543
  %v842 = vpop.f32.mrb[0].mxu0
  %v843 = vadd.f32 %v177, %v842
  %v844 = vpop.f32.mrb[0].mxu0
  %v845 = vpop.f32.mrb[0].mxu0
  %v846 = vadd.f32 %v177, %v845
  %v847 = vpop.f32.mrb[0].mxu0
  %848 = vmatprep.mubr.bf16.mxu0 0
  %849 = vmatmul.mubr.bf16.gmra.mrb[0].mxu0 %v546
  %v850 = vpop.f32.mrb[0].mxu0
  %v851 = vadd.f32 %v177, %v850
  %v852 = vpop.f32.mrb[0].mxu0
  %v853 = vpop.f32.mrb[0].mxu0
  %v854 = vadd.f32 %v177, %v853
  %v855 = vpop.f32.mrb[0].mxu0
  %856 = vmatprep.mubr.bf16.mxu0 0
  %857 = vmatmul.mubr.bf16.gmra.mrb[0].mxu0 %v549
  %v858 = vpop.f32.mrb[0].mxu0
  %v859 = vadd.f32 %v177, %v858
  %v860 = vpop.f32.mrb[0].mxu0
  %v861 = vpop.f32.mrb[0].mxu0
  %v862 = vadd.f32 %v177, %v861
  %v863 = vpop.f32.mrb[0].mxu0
  %864 = vmatprep.mubr.bf16.mxu0 0
  %865 = vmatmul.mubr.bf16.gmra.mrb[0].mxu0 %v552
  %v866 = vpop.f32.mrb[0].mxu0
  %v867 = vadd.f32 %v177, %v866
  %v868 = vpop.f32.mrb[0].mxu0
  %v869 = vpop.f32.mrb[0].mxu0
  %v870 = vadd.f32 %v177, %v869
  %v871 = vpop.f32.mrb[0].mxu0
  %872 = vmatprep.mubr.bf16.mxu0 0
  %873 = vmatmul.mubr.bf16.gmra.mrb[0].mxu0 %v555
  %v874 = vpop.f32.mrb[0].mxu0
  %v875 = vadd.f32 %v177, %v874
  %v876 = vpop.f32.mrb[0].mxu0
  %v877 = vpop.f32.mrb[0].mxu0
  %v878 = vadd.f32 %v177, %v877
  %v879 = vpop.f32.mrb[0].mxu0
  %880 = vmatprep.mubr.bf16.mxu0 0
  %881 = vmatmul.mubr.bf16.gmra.mrb[0].mxu0 %v558
  %v882 = vpop.f32.mrb[0].mxu0
  %v883 = vadd.f32 %v177, %v882
  %v884 = vpop.f32.mrb[0].mxu0
  %v885 = vpop.f32.mrb[0].mxu0
  %v886 = vadd.f32 %v177, %v885
  %v887 = vpop.f32.mrb[0].mxu0
  %888 = vmatprep.mubr.bf16.mxu0 0
  %889 = vmatmul.mubr.bf16.gmra.mrb[0].mxu0 %v561
  %v890 = vpop.f32.mrb[0].mxu0
  %v891 = vadd.f32 %v177, %v890
  %v892 = vpop.f32.mrb[0].mxu0
  %v893 = vpop.f32.mrb[0].mxu0
  %v894 = vadd.f32 %v177, %v893
  %v895 = vpop.f32.mrb[0].mxu0
  %896 = vmatprep.mubr.bf16.mxu0 0
  %897 = vmatmul.mubr.bf16.gmra.mrb[0].mxu0 %v564
  %v898 = vpop.f32.mrb[0].mxu0
  %v899 = vadd.f32 %v177, %v898
  %v900 = vpop.f32.mrb[0].mxu0
  %v901 = vpop.f32.mrb[0].mxu0
  %v902 = vadd.f32 %v177, %v901
  %v903 = vpop.f32.mrb[0].mxu0
  %904 = vmatprep.mubr.bf16.mxu0 0
  %905 = vmatmul.mubr.bf16.gmra.mrb[0].mxu0 %v567
  %v906 = vpop.f32.mrb[0].mxu0
  %v907 = vadd.f32 %v177, %v906
  %v908 = vpop.f32.mrb[0].mxu0
  %v909 = vpop.f32.mrb[0].mxu0
  %v910 = vadd.f32 %v177, %v909
  %v911 = vpop.f32.mrb[0].mxu0
  %912 = vmatprep.mubr.bf16.mxu0 0
  %913 = vmatmul.mubr.bf16.gmra.mrb[0].mxu0 %v570
  %v914 = vpop.f32.mrb[0].mxu0
  %v915 = vadd.f32 %v177, %v914
  %v916 = vpop.f32.mrb[0].mxu0
  %v917 = vpop.f32.mrb[0].mxu0
  %v918 = vadd.f32 %v177, %v917
  %v919 = vpop.f32.mrb[0].mxu0
  %920 = vmatprep.mubr.bf16.mxu0 0
  %921 = vmatmul.mubr.bf16.gmra.mrb[0].mxu0 %v573
  %v922 = vpop.f32.mrb[0].mxu0
  %v923 = vadd.f32 %v177, %v922
  %v924 = vpop.f32.mrb[0].mxu0
  %v925 = vpop.f32.mrb[0].mxu0
  %v926 = vadd.f32 %v177, %v925
  %v927 = vpop.f32.mrb[0].mxu0
  %928 = vmatprep.mubr.bf16.mxu0 0
  %929 = vmatmul.mubr.bf16.gmra.mrb[0].mxu0 %v576
  %v930 = vpop.f32.mrb[0].mxu0
  %v931 = vadd.f32 %v177, %v930
  %v932 = vpop.f32.mrb[0].mxu0
  %v933 = vpop.f32.mrb[0].mxu0
  %v934 = vadd.f32 %v177, %v933
  %v935 = vpop.f32.mrb[0].mxu0
  %936 = vmatprep.mubr.bf16.mxu0 0
  %937 = vmatmul.mubr.bf16.gmra.mrb[0].mxu0 %v579
  %v938 = vpop.f32.mrb[0].mxu0
  %v939 = vadd.f32 %v177, %v938
  %v940 = vpop.f32.mrb[0].mxu0
  %v941 = vpop.f32.mrb[0].mxu0
  %v942 = vadd.f32 %v177, %v941
  %v943 = vpop.f32.mrb[0].mxu0
  %944 = vmatprep.mubr.bf16.mxu0 0
  %945 = vmatmul.mubr.bf16.gmra.mrb[0].mxu0 %v582
  %v946 = vpop.f32.mrb[0].mxu0
  %v947 = vadd.f32 %v177, %v946
  %v948 = vpop.f32.mrb[0].mxu0
  %v949 = vpop.f32.mrb[0].mxu0
  %v950 = vadd.f32 %v177, %v949
  %v951 = vpop.f32.mrb[0].mxu0
  %952 = vmatprep.mubr.bf16.mxu0 0
  %953 = vmatmul.mubr.bf16.gmra.mrb[0].mxu0 %v585
  %v954 = vpop.f32.mrb[0].mxu0
  %v955 = vadd.f32 %v177, %v954
  %v956 = vpop.f32.mrb[0].mxu0
  %v957 = vpop.f32.mrb[0].mxu0
  %v958 = vadd.f32 %v177, %v957
  %v959 = vpop.f32.mrb[0].mxu0
  %960 = vmatprep.mubr.bf16.mxu0 0
  %961 = vmatmul.mubr.bf16.gmra.mrb[0].mxu0 %v588
  %v962 = vpop.f32.mrb[0].mxu0
  %v963 = vadd.f32 %v177, %v962
  %v964 = vpop.f32.mrb[0].mxu0
  %v965 = vpop.f32.mrb[0].mxu0
  %v966 = vadd.f32 %v177, %v965
  %v967 = vpop.f32.mrb[0].mxu0
  %968 = vmatprep.mubr.bf16.mxu0 0
  %969 = vmatmul.mubr.bf16.gmra.mrb[0].mxu0 %v591
  %v970 = vpop.f32.mrb[0].mxu0
  %v971 = vadd.f32 %v177, %v970
  %v972 = vpop.f32.mrb[0].mxu0
  %v973 = vpop.f32.mrb[0].mxu0
  %v974 = vadd.f32 %v177, %v973
  %v975 = vpop.f32.mrb[0].mxu0
  %976 = vmatprep.mubr.bf16.mxu0 0
  %977 = vmatmul.mubr.bf16.gmra.mrb[0].mxu0 %v594
  %v978 = vpop.f32.mrb[0].mxu0
  %v979 = vadd.f32 %v177, %v978
  %v980 = vpop.f32.mrb[0].mxu0
  %v981 = vpop.f32.mrb[0].mxu0
  %v982 = vadd.f32 %v177, %v981
  %v983 = vpop.f32.mrb[0].mxu0
  %984 = vmatprep.mubr.bf16.mxu0 0
  %985 = vmatmul.mubr.bf16.gmra.mrb[0].mxu0 %v597
  %v986 = vpop.f32.mrb[0].mxu0
  %v987 = vadd.f32 %v177, %v986
  %v988 = vpop.f32.mrb[0].mxu0
  %v989 = vpop.f32.mrb[0].mxu0
  %v990 = vadd.f32 %v177, %v989
  %v991 = vpop.f32.mrb[0].mxu0
  %992 = vmatprep.mubr.bf16.mxu0 0
  %993 = vmatmul.mubr.bf16.gmra.mrb[0].mxu0 %v600
  %v994 = vpop.f32.mrb[0].mxu0
  %v995 = vadd.f32 %v177, %v994
  %v996 = vpop.f32.mrb[0].mxu0
  %v997 = vpop.f32.mrb[0].mxu0
  %v998 = vadd.f32 %v177, %v997
  %v999 = vpop.f32.mrb[0].mxu0
  %1000 = vmatprep.mubr.bf16.mxu0 0
  %1001 = vmatmul.mubr.bf16.gmra.mrb[0].mxu0 %v603
  %v1002 = vpop.f32.mrb[0].mxu0
  %v1003 = vadd.f32 %v177, %v1002
  %v1004 = vpop.f32.mrb[0].mxu0
  %v1005 = vpop.f32.mrb[0].mxu0
  %v1006 = vadd.f32 %v177, %v1005
  %v1007 = vpop.f32.mrb[0].mxu0
  %1008 = vmatprep.mubr.bf16.mxu0 0
  %1009 = vmatmul.mubr.bf16.gmra.mrb[0].mxu0 %v606
  %v1010 = vpop.f32.mrb[0].mxu0
  %v1011 = vadd.f32 %v177, %v1010
  %v1012 = vpop.f32.mrb[0].mxu0
  %v1013 = vpop.f32.mrb[0].mxu0
  %v1014 = vadd.f32 %v177, %v1013
  %v1015 = vpop.f32.mrb[0].mxu0
  %1016 = vmatprep.mubr.bf16.mxu0 0
  %1017 = vmatmul.mubr.bf16.gmra.mrb[0].mxu0 %v609
  %v1018 = vpop.f32.mrb[0].mxu0
  %v1019 = vadd.f32 %v177, %v1018
  %v1020 = vpop.f32.mrb[0].mxu0
  %v1021 = vpop.f32.mrb[0].mxu0
  %v1022 = vadd.f32 %v177, %v1021
  %v1023 = vpop.f32.mrb[0].mxu0
  %1024 = vmatprep.mubr.bf16.mxu0 0
  %1025 = vmatmul.mubr.bf16.gmra.mrb[0].mxu0 %v612
  %v1026 = vpop.f32.mrb[0].mxu0
  %v1027 = vadd.f32 %v177, %v1026
  %v1028 = vpop.f32.mrb[0].mxu0
  %v1029 = vpop.f32.mrb[0].mxu0
  %v1030 = vadd.f32 %v177, %v1029
  %v1031 = vpop.f32.mrb[0].mxu0
  %1032 = vmatprep.mubr.bf16.mxu0 0
  %1033 = vmatmul.mubr.bf16.gmra.mrb[0].mxu0 %v615
  %v1034 = vpop.f32.mrb[0].mxu0
  %v1035 = vadd.f32 %v177, %v1034
  %v1036 = vpop.f32.mrb[0].mxu0
  %v1037 = vpop.f32.mrb[0].mxu0
  %v1038 = vadd.f32 %v177, %v1037
  %v1039 = vpop.f32.mrb[0].mxu0
  %1040 = vmatprep.mubr.bf16.mxu0 0
  %1041 = vmatmul.mubr.bf16.gmra.mrb[0].mxu0 %v618
  %v1042 = vpop.f32.mrb[0].mxu0
  %v1043 = vadd.f32 %v177, %v1042
  %v1044 = vpop.f32.mrb[0].mxu0
  %v1045 = vpop.f32.mrb[0].mxu0
  %v1046 = vadd.f32 %v177, %v1045
  %v1047 = vpop.f32.mrb[0].mxu0
  %1048 = vmatprep.mubr.bf16.mxu0 0
  %1049 = vmatmul.mubr.bf16.gmra.mrb[0].mxu0 %v621
  %v1050 = vpop.f32.mrb[0].mxu0
  %v1051 = vadd.f32 %v177, %v1050
  %v1052 = vpop.f32.mrb[0].mxu0
  %v1053 = vpop.f32.mrb[0].mxu0
  %v1054 = vadd.f32 %v177, %v1053
  %v1055 = vpop.f32.mrb[0].mxu0
  %1056 = vmatprep.mubr.bf16.mxu0 0
  %1057 = vmatmul.mubr.bf16.gmra.mrb[0].mxu0 %v624
  %v1058 = vpop.f32.mrb[0].mxu0
  %v1059 = vadd.f32 %v177, %v1058
  %v1060 = vpop.f32.mrb[0].mxu0
  %v1061 = vpop.f32.mrb[0].mxu0
  %v1062 = vadd.f32 %v177, %v1061
  %v1063 = vpop.f32.mrb[0].mxu0
  %1064 = vmatprep.mubr.bf16.mxu0 0
  %1065 = vmatmul.mubr.bf16.gmra.mrb[0].mxu0 %v627
  %v1066 = vpop.f32.mrb[0].mxu0
  %v1067 = vadd.f32 %v177, %v1066
  %v1068 = vpop.f32.mrb[0].mxu0
  %v1069 = vpop.f32.mrb[0].mxu0
  %v1070 = vadd.f32 %v177, %v1069
  %v1071 = vpop.f32.mrb[0].mxu0
  %1072 = vmatprep.mubr.bf16.mxu0 0
  %1073 = vmatmul.mubr.bf16.gmra.mrb[0].mxu0 %v630
  %v1074 = vpop.f32.mrb[0].mxu0
  %v1075 = vadd.f32 %v177, %v1074
  %v1076 = vpop.f32.mrb[0].mxu0
  %v1077 = vpop.f32.mrb[0].mxu0
  %v1078 = vadd.f32 %v177, %v1077
  %v1079 = vpop.f32.mrb[0].mxu0
  %1080 = vmatprep.mubr.bf16.mxu0 0
  %1081 = vmatmul.mubr.bf16.gmra.mrb[0].mxu0 %v633
  %v1082 = vpop.f32.mrb[0].mxu0
  %v1083 = vadd.f32 %v177, %v1082
  %v1084 = vpop.f32.mrb[0].mxu0
  %v1085 = vpop.f32.mrb[0].mxu0
  %v1086 = vadd.f32 %v177, %v1085
  %v1087 = vpop.f32.mrb[0].mxu0
  %1088 = vmatprep.mubr.bf16.mxu0 0
  %1089 = vmatmul.mubr.bf16.gmra.mrb[0].mxu0 %v636
  %v1090 = vpop.f32.mrb[0].mxu0
  %v1091 = vadd.f32 %v177, %v1090
  %v1092 = vpop.f32.mrb[0].mxu0
  %v1093 = vpop.f32.mrb[0].mxu0
  %v1094 = vadd.f32 %v177, %v1093
  %v1095 = vpop.f32.mrb[0].mxu0
  %1096 = vmatprep.mubr.bf16.mxu0 0
  %1097 = vmatmul.mubr.bf16.gmra.mrb[0].mxu0 %v639
  %v1098 = vpop.f32.mrb[0].mxu0
  %v1099 = vadd.f32 %v177, %v1098
  %v1100 = vpop.f32.mrb[0].mxu0
  %v1101 = vpop.f32.mrb[0].mxu0
  %v1102 = vadd.f32 %v177, %v1101
  %v1103 = vpop.f32.mrb[0].mxu0
  %1104 = vmatprep.mubr.bf16.mxu0 0
  %1105 = vmatmul.mubr.bf16.gmra.mrb[0].mxu0 %v642
  %v1106 = vpop.f32.mrb[0].mxu0
  %v1107 = vadd.f32 %v177, %v1106
  %v1108 = vpop.f32.mrb[0].mxu0
  %v1109 = vpop.f32.mrb[0].mxu0
  %v1110 = vadd.f32 %v177, %v1109
  %v1111 = vpop.f32.mrb[0].mxu0
  %1112 = vmatprep.mubr.bf16.mxu0 0
  %1113 = vmatmul.mubr.bf16.gmra.mrb[0].mxu0 %v645
  %v1114 = vpop.f32.mrb[0].mxu0
  %v1115 = vadd.f32 %v177, %v1114
  %v1116 = vpop.f32.mrb[0].mxu0
  %v1117 = vpop.f32.mrb[0].mxu0
  %v1118 = vadd.f32 %v177, %v1117
  %v1119 = vpop.f32.mrb[0].mxu0
  %1120 = vmatprep.mubr.bf16.mxu0 0
  %1121 = vmatmul.mubr.bf16.gmra.mrb[0].mxu0 %v648
  %v1122 = vpop.f32.mrb[0].mxu0
  %v1123 = vadd.f32 %v177, %v1122
  %v1124 = vpop.f32.mrb[0].mxu0
  %v1125 = vpop.f32.mrb[0].mxu0
  %v1126 = vadd.f32 %v177, %v1125
  %v1127 = vpop.f32.mrb[0].mxu0
  %1128 = vmatprep.mubr.bf16.mxu0 0
  %1129 = vmatmul.mubr.bf16.gmra.mrb[0].mxu0 %v651
  %v1130 = vpop.f32.mrb[0].mxu0
  %v1131 = vadd.f32 %v177, %v1130
  %v1132 = vpop.f32.mrb[0].mxu0
  %v1133 = vpop.f32.mrb[0].mxu0
  %v1134 = vadd.f32 %v177, %v1133
  %v1135 = vpop.f32.mrb[0].mxu0
  %1136 = vmatprep.mubr.bf16.mxu0 0
  %1137 = vmatmul.mubr.bf16.gmra.mrb[0].mxu0 %v654
  %v1138 = vpop.f32.mrb[0].mxu0
  %v1139 = vadd.f32 %v177, %v1138
  %v1140 = vpop.f32.mrb[0].mxu0
  %v1141 = vpop.f32.mrb[0].mxu0
  %v1142 = vadd.f32 %v177, %v1141
  %v1143 = vpop.f32.mrb[0].mxu0
  %1144 = vmatprep.mubr.bf16.mxu0 0
  %1145 = vmatmul.mubr.bf16.gmra.mrb[0].mxu0 %v657
  %v1146 = vpop.f32.mrb[0].mxu0
  %v1147 = vadd.f32 %v177, %v1146
  %v1148 = vpop.f32.mrb[0].mxu0
  %v1149 = vpop.f32.mrb[0].mxu0
  %v1150 = vadd.f32 %v177, %v1149
  %v1151 = vpop.f32.mrb[0].mxu0
  %1152 = vmatprep.mubr.bf16.mxu0 0
  %1153 = vmatmul.mubr.bf16.gmra.mrb[0].mxu0 %v660
  %v1154 = vpop.f32.mrb[0].mxu0
  %v1155 = vadd.f32 %v177, %v1154
  %v1156 = vpop.f32.mrb[0].mxu0
  %v1157 = vpop.f32.mrb[0].mxu0
  %v1158 = vadd.f32 %v177, %v1157
  %v1159 = vpop.f32.mrb[0].mxu0
  %1160 = vmatprep.mubr.bf16.mxu0 0
  %1161 = vmatmul.mubr.bf16.gmra.mrb[0].mxu0 %v663
  %v1162 = vpop.f32.mrb[0].mxu0
  %v1163 = vadd.f32 %v177, %v1162
  %v1164 = vpop.f32.mrb[0].mxu0
  %v1165 = vpop.f32.mrb[0].mxu0
  %v1166 = vadd.f32 %v177, %v1165
  %v1167 = vpop.f32.mrb[0].mxu0
  %1168 = vmatprep.mubr.bf16.mxu0 0
  %1169 = vmatmul.mubr.bf16.gmra.mrb[0].mxu0 %v666
  %v1170 = vpop.f32.mrb[0].mxu0
  %v1171 = vadd.f32 %v177, %v1170
  %v1172 = vpop.f32.mrb[0].mxu0
  %v1173 = vpop.f32.mrb[0].mxu0
  %v1174 = vadd.f32 %v177, %v1173
  %v1175 = vpop.f32.mrb[0].mxu0
  %1176 = vmatprep.mubr.bf16.mxu0 0
  %1177 = vmatmul.mubr.bf16.gmra.mrb[0].mxu0 %v669
  %v1178 = vpop.f32.mrb[0].mxu0
  %v1179 = vadd.f32 %v177, %v1178
  %v1180 = vpop.f32.mrb[0].mxu0
  %v1181 = vpop.f32.mrb[0].mxu0
  %v1182 = vadd.f32 %v177, %v1181
  %v1183 = vpop.f32.mrb[0].mxu0
  %1184 = vmatprep.mubr.bf16.mxu0 0
  %1185 = vmatmul.mubr.bf16.gmra.mrb[0].mxu0 %v672
  %v1186 = vpop.f32.mrb[0].mxu0
  %v1187 = vadd.f32 %v177, %v1186
  %v1188 = vpop.f32.mrb[0].mxu0
  %v1189 = vpop.f32.mrb[0].mxu0
  %v1190 = vadd.f32 %v177, %v1189
  %v1191 = vpop.f32.mrb[0].mxu0
  %1192 = vmatprep.mubr.bf16.mxu0 0
  %1193 = vmatmul.mubr.bf16.gmra.mrb[0].mxu0 %v675
  %v1194 = vpop.f32.mrb[0].mxu0
  %v1195 = vadd.f32 %v177, %v1194
  %v1196 = vpop.f32.mrb[0].mxu0
  %v1197 = vpop.f32.mrb[0].mxu0
  %v1198 = vadd.f32 %v177, %v1197
  %v1199 = vpop.f32.mrb[0].mxu0
  %1200 = vmatprep.mubr.bf16.mxu0 0
  %1201 = vmatmul.mubr.bf16.gmra.mrb[0].mxu0 %v678
  %v1202 = vpop.f32.mrb[0].mxu0
  %v1203 = vadd.f32 %v177, %v1202
  %v1204 = vpop.f32.mrb[0].mxu0
  %v1205 = vpop.f32.mrb[0].mxu0
  %v1206 = vadd.f32 %v177, %v1205
  %v1207 = vpop.f32.mrb[0].mxu0
  %1208 = vmatprep.mubr.bf16.mxu0 0
  %1209 = vmatmul.mubr.bf16.gmra.mrb[0].mxu0 %v681
  %v1210 = vpop.f32.mrb[0].mxu0
  %v1211 = vadd.f32 %v177, %v1210
  %v1212 = vpop.f32.mrb[0].mxu0
  %v1213 = vpop.f32.mrb[0].mxu0
  %v1214 = vadd.f32 %v177, %v1213
  %v1215 = vpop.f32.mrb[0].mxu0
  %1216 = vmatprep.mubr.bf16.mxu0 0
  %1217 = vmatmul.mubr.bf16.gmra.mrb[0].mxu0 %v684
  %v1218 = vpop.f32.mrb[0].mxu0
  %v1219 = vadd.f32 %v177, %v1218
  %v1220 = vpop.f32.mrb[0].mxu0
  %v1221 = vpop.f32.mrb[0].mxu0
  %v1222 = vadd.f32 %v177, %v1221
  %v1223 = vpop.f32.mrb[0].mxu0
  %1224 = vmatprep.mubr.bf16.mxu0 0
  %1225 = vmatmul.mubr.bf16.gmra.mrb[0].mxu0 %v687
  %v1226 = vpop.f32.mrb[0].mxu0
  %v1227 = vadd.f32 %v177, %v1226
  %v1228 = vpop.f32.mrb[0].mxu0
  %v1229 = vpop.f32.mrb[0].mxu0
  %v1230 = vadd.f32 %v177, %v1229
  %v1231 = vpop.f32.mrb[0].mxu0
  %1232 = vmatprep.mubr.bf16.mxu0 0
  %1233 = vmatmul.mubr.bf16.gmra.mrb[0].mxu0 %v690
  %v1234 = vpop.f32.mrb[0].mxu0
  %v1235 = vadd.f32 %v177, %v1234
  %v1236 = vpop.f32.mrb[0].mxu0
  %v1237 = vpop.f32.mrb[0].mxu0
  %v1238 = vadd.f32 %v177, %v1237
  %v1239 = vpop.f32.mrb[0].mxu0
  %1240 = vdwg.mxu0
  %v1241 = vmax.f32 %v731, 0.0
  %v1242 = vmax.f32 %v734, 0.0
  %v1243 = vmax.f32 %v739, 0.0
  %v1244 = vmax.f32 %v742, 0.0
  %v1245 = vmax.f32 %v747, 0.0
  %v1246 = vmax.f32 %v750, 0.0
  %v1247 = vmax.f32 %v755, 0.0
  %v1248 = vmax.f32 %v758, 0.0
  %v1249 = vmax.f32 %v763, 0.0
  %v1250 = vmax.f32 %v766, 0.0
  %v1251 = vmax.f32 %v771, 0.0
  %v1252 = vmax.f32 %v774, 0.0
  %v1253 = vmax.f32 %v779, 0.0
  %v1254 = vmax.f32 %v782, 0.0
  %v1255 = vmax.f32 %v787, 0.0
  %v1256 = vmax.f32 %v790, 0.0
  %v1257 = vmax.f32 %v795, 0.0
  %v1258 = vmax.f32 %v798, 0.0
  %v1259 = vmax.f32 %v803, 0.0
  %v1260 = vmax.f32 %v806, 0.0
  %v1261 = vmax.f32 %v811, 0.0
  %v1262 = vmax.f32 %v814, 0.0
  %v1263 = vmax.f32 %v819, 0.0
  %v1264 = vmax.f32 %v822, 0.0
  %v1265 = vmax.f32 %v827, 0.0
  %v1266 = vmax.f32 %v830, 0.0
  %v1267 = vmax.f32 %v835, 0.0
  %v1268 = vmax.f32 %v838, 0.0
  %v1269 = vmax.f32 %v843, 0.0
  %v1270 = vmax.f32 %v846, 0.0
  %v1271 = vmax.f32 %v851, 0.0
  %v1272 = vmax.f32 %v854, 0.0
  %v1273 = vmax.f32 %v859, 0.0
  %v1274 = vmax.f32 %v862, 0.0
  %v1275 = vmax.f32 %v867, 0.0
  %v1276 = vmax.f32 %v870, 0.0
  %v1277 = vmax.f32 %v875, 0.0
  %v1278 = vmax.f32 %v878, 0.0
  %v1279 = vmax.f32 %v883, 0.0
  %v1280 = vmax.f32 %v886, 0.0
  %v1281 = vmax.f32 %v891, 0.0
  %v1282 = vmax.f32 %v894, 0.0
  %v1283 = vmax.f32 %v899, 0.0
  %v1284 = vmax.f32 %v902, 0.0
  %v1285 = vmax.f32 %v907, 0.0
  %v1286 = vmax.f32 %v910, 0.0
  %v1287 = vmax.f32 %v915, 0.0
  %v1288 = vmax.f32 %v918, 0.0
  %v1289 = vmax.f32 %v923, 0.0
  %v1290 = vmax.f32 %v926, 0.0
  %v1291 = vmax.f32 %v931, 0.0
  %v1292 = vmax.f32 %v934, 0.0
  %v1293 = vmax.f32 %v939, 0.0
  %v1294 = vmax.f32 %v942, 0.0
  %v1295 = vmax.f32 %v947, 0.0
  %v1296 = vmax.f32 %v950, 0.0
  %v1297 = vmax.f32 %v955, 0.0
  %v1298 = vmax.f32 %v958, 0.0
  %v1299 = vmax.f32 %v963, 0.0
  %v1300 = vmax.f32 %v966, 0.0
  %v1301 = vmax.f32 %v971, 0.0
  %v1302 = vmax.f32 %v974, 0.0
  %v1303 = vmax.f32 %v979, 0.0
  %v1304 = vmax.f32 %v982, 0.0
  %v1305 = vmax.f32 %v987, 0.0
  %v1306 = vmax.f32 %v990, 0.0
  %v1307 = vmax.f32 %v995, 0.0
  %v1308 = vmax.f32 %v998, 0.0
  %v1309 = vmax.f32 %v1003, 0.0
  %v1310 = vmax.f32 %v1006, 0.0
  %v1311 = vmax.f32 %v1011, 0.0
  %v1312 = vmax.f32 %v1014, 0.0
  %v1313 = vmax.f32 %v1019, 0.0
  %v1314 = vmax.f32 %v1022, 0.0
  %v1315 = vmax.f32 %v1027, 0.0
  %v1316 = vmax.f32 %v1030, 0.0
  %v1317 = vmax.f32 %v1035, 0.0
  %v1318 = vmax.f32 %v1038, 0.0
  %v1319 = vmax.f32 %v1043, 0.0
  %v1320 = vmax.f32 %v1046, 0.0
  %v1321 = vmax.f32 %v1051, 0.0
  %v1322 = vmax.f32 %v1054, 0.0
  %v1323 = vmax.f32 %v1059, 0.0
  %v1324 = vmax.f32 %v1062, 0.0
  %v1325 = vmax.f32 %v1067, 0.0
  %v1326 = vmax.f32 %v1070, 0.0
  %v1327 = vmax.f32 %v1075, 0.0
  %v1328 = vmax.f32 %v1078, 0.0
  %v1329 = vmax.f32 %v1083, 0.0
  %v1330 = vmax.f32 %v1086, 0.0
  %v1331 = vmax.f32 %v1091, 0.0
  %v1332 = vmax.f32 %v1094, 0.0
  %v1333 = vmax.f32 %v1099, 0.0
  %v1334 = vmax.f32 %v1102, 0.0
  %v1335 = vmax.f32 %v1107, 0.0
  %v1336 = vmax.f32 %v1110, 0.0
  %v1337 = vmax.f32 %v1115, 0.0
  %v1338 = vmax.f32 %v1118, 0.0
  %v1339 = vmax.f32 %v1123, 0.0
  %v1340 = vmax.f32 %v1126, 0.0
  %v1341 = vmax.f32 %v1131, 0.0
  %v1342 = vmax.f32 %v1134, 0.0
  %v1343 = vmax.f32 %v1139, 0.0
  %v1344 = vmax.f32 %v1142, 0.0
  %v1345 = vmax.f32 %v1147, 0.0
  %v1346 = vmax.f32 %v1150, 0.0
  %v1347 = vmax.f32 %v1155, 0.0
  %v1348 = vmax.f32 %v1158, 0.0
  %v1349 = vmax.f32 %v1163, 0.0
  %v1350 = vmax.f32 %v1166, 0.0
  %v1351 = vmax.f32 %v1171, 0.0
  %v1352 = vmax.f32 %v1174, 0.0
  %v1353 = vmax.f32 %v1179, 0.0
  %v1354 = vmax.f32 %v1182, 0.0
  %v1355 = vmax.f32 %v1187, 0.0
  %v1356 = vmax.f32 %v1190, 0.0
  %v1357 = vmax.f32 %v1195, 0.0
  %v1358 = vmax.f32 %v1198, 0.0
  %v1359 = vmax.f32 %v1203, 0.0
  %v1360 = vmax.f32 %v1206, 0.0
  %v1361 = vmax.f32 %v1211, 0.0
  %v1362 = vmax.f32 %v1214, 0.0
  %v1363 = vmax.f32 %v1219, 0.0
  %v1364 = vmax.f32 %v1222, 0.0
  %v1365 = vmax.f32 %v1227, 0.0
  %v1366 = vmax.f32 %v1230, 0.0
  %v1367 = vmax.f32 %v1235, 0.0
  %v1368 = vmax.f32 %v1238, 0.0
  %v1369 = vpack.c.bf16 %v1242, %v1241
  %v1370 = vpack.c.bf16 %v1244, %v1243
  %v1371 = vpack.c.bf16 %v1246, %v1245
  %v1372 = vpack.c.bf16 %v1248, %v1247
  %v1373 = vpack.c.bf16 %v1250, %v1249
  %v1374 = vpack.c.bf16 %v1252, %v1251
  %v1375 = vpack.c.bf16 %v1254, %v1253
  %v1376 = vpack.c.bf16 %v1256, %v1255
  %v1377 = vpack.c.bf16 %v1258, %v1257
  %v1378 = vpack.c.bf16 %v1260, %v1259
  %v1379 = vpack.c.bf16 %v1262, %v1261
  %v1380 = vpack.c.bf16 %v1264, %v1263
  %v1381 = vpack.c.bf16 %v1266, %v1265
  %v1382 = vpack.c.bf16 %v1268, %v1267
  %v1383 = vpack.c.bf16 %v1270, %v1269
  %v1384 = vpack.c.bf16 %v1272, %v1271
  %v1385 = vpack.c.bf16 %v1274, %v1273
  %v1386 = vpack.c.bf16 %v1276, %v1275
  %v1387 = vpack.c.bf16 %v1278, %v1277
  %v1388 = vpack.c.bf16 %v1280, %v1279
  %v1389 = vpack.c.bf16 %v1282, %v1281
  %v1390 = vpack.c.bf16 %v1284, %v1283
  %v1391 = vpack.c.bf16 %v1286, %v1285
  %v1392 = vpack.c.bf16 %v1288, %v1287
  %v1393 = vpack.c.bf16 %v1290, %v1289
  %v1394 = vpack.c.bf16 %v1292, %v1291
  %v1395 = vpack.c.bf16 %v1294, %v1293
  %v1396 = vpack.c.bf16 %v1296, %v1295
  %v1397 = vpack.c.bf16 %v1298, %v1297
  %v1398 = vpack.c.bf16 %v1300, %v1299
  %v1399 = vpack.c.bf16 %v1302, %v1301
  %v1400 = vpack.c.bf16 %v1304, %v1303
  %v1401 = vpack.c.bf16 %v1306, %v1305
  %v1402 = vpack.c.bf16 %v1308, %v1307
  %v1403 = vpack.c.bf16 %v1310, %v1309
  %v1404 = vpack.c.bf16 %v1312, %v1311
  %v1405 = vpack.c.bf16 %v1314, %v1313
  %v1406 = vpack.c.bf16 %v1316, %v1315
  %v1407 = vpack.c.bf16 %v1318, %v1317
  %v1408 = vpack.c.bf16 %v1320, %v1319
  %v1409 = vpack.c.bf16 %v1322, %v1321
  %v1410 = vpack.c.bf16 %v1324, %v1323
  %v1411 = vpack.c.bf16 %v1326, %v1325
  %v1412 = vpack.c.bf16 %v1328, %v1327
  %v1413 = vpack.c.bf16 %v1330, %v1329
  %v1414 = vpack.c.bf16 %v1332, %v1331
  %v1415 = vpack.c.bf16 %v1334, %v1333
  %v1416 = vpack.c.bf16 %v1336, %v1335
  %v1417 = vpack.c.bf16 %v1338, %v1337
  %v1418 = vpack.c.bf16 %v1340, %v1339
  %v1419 = vpack.c.bf16 %v1342, %v1341
  %v1420 = vpack.c.bf16 %v1344, %v1343
  %v1421 = vpack.c.bf16 %v1346, %v1345
  %v1422 = vpack.c.bf16 %v1348, %v1347
  %v1423 = vpack.c.bf16 %v1350, %v1349
  %v1424 = vpack.c.bf16 %v1352, %v1351
  %v1425 = vpack.c.bf16 %v1354, %v1353
  %v1426 = vpack.c.bf16 %v1356, %v1355
  %v1427 = vpack.c.bf16 %v1358, %v1357
  %v1428 = vpack.c.bf16 %v1360, %v1359
  %v1429 = vpack.c.bf16 %v1362, %v1361
  %v1430 = vpack.c.bf16 %v1364, %v1363
  %v1431 = vpack.c.bf16 %v1366, %v1365
  %v1432 = vpack.c.bf16 %v1368, %v1367
  %v1433 = vld [vmem:[%s3] sm:$0xf]
  %v1434 = vld [vmem:[%s3 + $0x4] sm:$0xf]
  %v1435 = vld [vmem:[%s3 + $0x8] sm:$0xf]
  %v1436 = vld [vmem:[%s3 + $0xc] sm:$0xf]
  %v1437 = vld [vmem:[%s3 + $0x10] sm:$0xf]
  %v1438 = vld [vmem:[%s3 + $0x14] sm:$0xf]
  %v1439 = vld [vmem:[%s3 + $0x18] sm:$0xf]
  %v1440 = vld [vmem:[%s3 + $0x1c] sm:$0xf]
  %v1441 = vld [vmem:[%s4] sm:$0x1]
  %v1443 = vlaneseq
  %v1444 = vshrl.u32 %v1443, 7
  %v1445 = vsub.s32 0, %v1444
  %v1446 = vrot.slane %v1441, %v1445
  %v1456 = vunpack.c.l.b16 %v1433
  %v1457 = vunpack.c.l.b16 %v1434
  %v1458 = vunpack.c.l.b16 %v1435
  %v1459 = vunpack.c.l.b16 %v1436
  %v1460 = vunpack.c.l.b16 %v1437
  %v1461 = vunpack.c.l.b16 %v1438
  %v1462 = vunpack.c.l.b16 %v1439
  %v1463 = vunpack.c.l.b16 %v1440
  %v1464 = vpack.c.b16 %v1457, %v1456
  %v1465 = vpack.c.b16 %v1459, %v1458
  %v1466 = vpack.c.b16 %v1461, %v1460
  %v1467 = vpack.c.b16 %v1463, %v1462
  %vm1472 = vcmask 523264
  %v1474 = vsel %vm1472, %v1369, 0
  %v1477 = vsel %vm1472, %v1370, 0
  %v1480 = vsel %vm1472, %v1371, 0
  %v1483 = vsel %vm1472, %v1372, 0
  %v1486 = vsel %vm1472, %v1373, 0
  %v1489 = vsel %vm1472, %v1374, 0
  %v1492 = vsel %vm1472, %v1375, 0
  %v1495 = vsel %vm1472, %v1376, 0
  %v1498 = vsel %vm1472, %v1377, 0
  %v1501 = vsel %vm1472, %v1378, 0
  %v1504 = vsel %vm1472, %v1379, 0
  %v1507 = vsel %vm1472, %v1380, 0
  %v1510 = vsel %vm1472, %v1381, 0
  %v1513 = vsel %vm1472, %v1382, 0
  %v1516 = vsel %vm1472, %v1383, 0
  %v1519 = vsel %vm1472, %v1384, 0
  %v1522 = vsel %vm1472, %v1385, 0
  %v1525 = vsel %vm1472, %v1386, 0
  %v1528 = vsel %vm1472, %v1387, 0
  %v1531 = vsel %vm1472, %v1388, 0
  %v1534 = vsel %vm1472, %v1389, 0
  %v1537 = vsel %vm1472, %v1390, 0
  %v1540 = vsel %vm1472, %v1391, 0
  %v1543 = vsel %vm1472, %v1392, 0
  %v1546 = vsel %vm1472, %v1393, 0
  %v1549 = vsel %vm1472, %v1394, 0
  %v1552 = vsel %vm1472, %v1395, 0
  %v1555 = vsel %vm1472, %v1396, 0
  %v1558 = vsel %vm1472, %v1397, 0
  %v1561 = vsel %vm1472, %v1398, 0
  %v1564 = vsel %vm1472, %v1399, 0
  %v1567 = vsel %vm1472, %v1400, 0
  %v1570 = vsel %vm1472, %v1401, 0
  %v1573 = vsel %vm1472, %v1402, 0
  %v1576 = vsel %vm1472, %v1403, 0
  %v1579 = vsel %vm1472, %v1404, 0
  %v1582 = vsel %vm1472, %v1405, 0
  %v1585 = vsel %vm1472, %v1406, 0
  %v1588 = vsel %vm1472, %v1407, 0
  %v1591 = vsel %vm1472, %v1408, 0
  %v1594 = vsel %vm1472, %v1409, 0
  %v1597 = vsel %vm1472, %v1410, 0
  %v1600 = vsel %vm1472, %v1411, 0
  %v1603 = vsel %vm1472, %v1412, 0
  %v1606 = vsel %vm1472, %v1413, 0
  %v1609 = vsel %vm1472, %v1414, 0
  %v1612 = vsel %vm1472, %v1415, 0
  %v1615 = vsel %vm1472, %v1416, 0
  %v1618 = vsel %vm1472, %v1417, 0
  %v1621 = vsel %vm1472, %v1418, 0
  %v1624 = vsel %vm1472, %v1419, 0
  %v1627 = vsel %vm1472, %v1420, 0
  %v1630 = vsel %vm1472, %v1421, 0
  %v1633 = vsel %vm1472, %v1422, 0
  %v1636 = vsel %vm1472, %v1423, 0
  %v1639 = vsel %vm1472, %v1424, 0
  %v1642 = vsel %vm1472, %v1425, 0
  %v1645 = vsel %vm1472, %v1426, 0
  %v1648 = vsel %vm1472, %v1427, 0
  %v1651 = vsel %vm1472, %v1428, 0
  %v1654 = vsel %vm1472, %v1429, 0
  %v1657 = vsel %vm1472, %v1430, 0
  %v1660 = vsel %vm1472, %v1431, 0
  %v1663 = vsel %vm1472, %v1432, 0
  %1665 = vmatprep.subr.bf16.mxu0 0
  %1666 = vmatpush1.bf16.msra.mxu0 %v1464
  %1667 = vmatprep.subr.bf16.mxu0 0
  %1668 = vmatpush1.bf16.msra.mxu0 %v1465
  %1669 = vmatprep.subr.bf16.mxu0 0
  %1670 = vmatpush1.bf16.msra.mxu0 %v1466
  %1671 = vmatprep.subr.bf16.mxu0 0
  %1672 = vmatpush1.bf16.msra.mxu0 %v1467
  %1673 = vmatprep.subr.bf16.mxu0 0
  %1674 = vmatpush1.bf16.msra.mxu0 0
  %1675 = vmatprep.subr.bf16.mxu0 0
  %1676 = vmatpush1.bf16.msra.mxu0 0
  %1677 = vmatprep.subr.bf16.mxu0 0
  %1678 = vmatpush1.bf16.msra.mxu0 0
  %1679 = vmatprep.subr.bf16.mxu0 0
  %1680 = vmatpush1.bf16.msra.mxu0 0
  %1681 = vmatprep.subr.bf16.mxu0 0
  %1682 = vmatpush1.bf16.msra.mxu0 0
  %1683 = vmatprep.subr.bf16.mxu0 0
  %1684 = vmatpush1.bf16.msra.mxu0 0
  %1685 = vmatprep.subr.bf16.mxu0 0
  %1686 = vmatpush1.bf16.msra.mxu0 0
  %1687 = vmatprep.subr.bf16.mxu0 0
  %1688 = vmatpush1.bf16.msra.mxu0 0
  %1689 = vmatprep.subr.bf16.mxu0 0
  %1690 = vmatpush1.bf16.msra.mxu0 0
  %1691 = vmatprep.subr.bf16.mxu0 0
  %1692 = vmatpush1.bf16.msra.mxu0 0
  %1693 = vmatprep.subr.bf16.mxu0 0
  %1694 = vmatpush1.bf16.msra.mxu0 0
  %1695 = vmatprep.subr.bf16.mxu0 0
  %1696 = vmatpush1.bf16.msra.mxu0 0
  %1697 = vmatprep.mubr.bf16.mxu0 0
  %1698 = vmatmul.mubr.bf16.gmra.mrb[0].mxu0 %v1474
  %v1699 = vpop.f32.mrb[0].mxu0
  %v1700 = vadd.f32 %v1446, %v1699
  %v1701 = vpop.f32.mrb[0].mxu0
  %v1702 = vpop.f32.mrb[0].mxu0
  %v1703 = vadd.f32 %v1446, %v1702
  %v1704 = vpop.f32.mrb[0].mxu0
  %1705 = vmatprep.mubr.bf16.mxu0 0
  %1706 = vmatmul.mubr.bf16.gmra.mrb[0].mxu0 %v1477
  %v1707 = vpop.f32.mrb[0].mxu0
  %v1708 = vadd.f32 %v1446, %v1707
  %v1709 = vpop.f32.mrb[0].mxu0
  %v1710 = vpop.f32.mrb[0].mxu0
  %v1711 = vadd.f32 %v1446, %v1710
  %v1712 = vpop.f32.mrb[0].mxu0
  %1713 = vmatprep.mubr.bf16.mxu0 0
  %1714 = vmatmul.mubr.bf16.gmra.mrb[0].mxu0 %v1480
  %v1715 = vpop.f32.mrb[0].mxu0
  %v1716 = vadd.f32 %v1446, %v1715
  %v1717 = vpop.f32.mrb[0].mxu0
  %v1718 = vpop.f32.mrb[0].mxu0
  %v1719 = vadd.f32 %v1446, %v1718
  %v1720 = vpop.f32.mrb[0].mxu0
  %1721 = vmatprep.mubr.bf16.mxu0 0
  %1722 = vmatmul.mubr.bf16.gmra.mrb[0].mxu0 %v1483
  %v1723 = vpop.f32.mrb[0].mxu0
  %v1724 = vadd.f32 %v1446, %v1723
  %v1725 = vpop.f32.mrb[0].mxu0
  %v1726 = vpop.f32.mrb[0].mxu0
  %v1727 = vadd.f32 %v1446, %v1726
  %v1728 = vpop.f32.mrb[0].mxu0
  %1729 = vmatprep.mubr.bf16.mxu0 0
  %1730 = vmatmul.mubr.bf16.gmra.mrb[0].mxu0 %v1486
  %v1731 = vpop.f32.mrb[0].mxu0
  %v1732 = vadd.f32 %v1446, %v1731
  %v1733 = vpop.f32.mrb[0].mxu0
  %v1734 = vpop.f32.mrb[0].mxu0
  %v1735 = vadd.f32 %v1446, %v1734
  %v1736 = vpop.f32.mrb[0].mxu0
  %1737 = vmatprep.mubr.bf16.mxu0 0
  %1738 = vmatmul.mubr.bf16.gmra.mrb[0].mxu0 %v1489
  %v1739 = vpop.f32.mrb[0].mxu0
  %v1740 = vadd.f32 %v1446, %v1739
  %v1741 = vpop.f32.mrb[0].mxu0
  %v1742 = vpop.f32.mrb[0].mxu0
  %v1743 = vadd.f32 %v1446, %v1742
  %v1744 = vpop.f32.mrb[0].mxu0
  %1745 = vmatprep.mubr.bf16.mxu0 0
  %1746 = vmatmul.mubr.bf16.gmra.mrb[0].mxu0 %v1492
  %v1747 = vpop.f32.mrb[0].mxu0
  %v1748 = vadd.f32 %v1446, %v1747
  %v1749 = vpop.f32.mrb[0].mxu0
  %v1750 = vpop.f32.mrb[0].mxu0
  %v1751 = vadd.f32 %v1446, %v1750
  %v1752 = vpop.f32.mrb[0].mxu0
  %1753 = vmatprep.mubr.bf16.mxu0 0
  %1754 = vmatmul.mubr.bf16.gmra.mrb[0].mxu0 %v1495
  %v1755 = vpop.f32.mrb[0].mxu0
  %v1756 = vadd.f32 %v1446, %v1755
  %v1757 = vpop.f32.mrb[0].mxu0
  %v1758 = vpop.f32.mrb[0].mxu0
  %v1759 = vadd.f32 %v1446, %v1758
  %v1760 = vpop.f32.mrb[0].mxu0
  %1761 = vmatprep.mubr.bf16.mxu0 0
  %1762 = vmatmul.mubr.bf16.gmra.mrb[0].mxu0 %v1498
  %v1763 = vpop.f32.mrb[0].mxu0
  %v1764 = vadd.f32 %v1446, %v1763
  %v1765 = vpop.f32.mrb[0].mxu0
  %v1766 = vpop.f32.mrb[0].mxu0
  %v1767 = vadd.f32 %v1446, %v1766
  %v1768 = vpop.f32.mrb[0].mxu0
  %1769 = vmatprep.mubr.bf16.mxu0 0
  %1770 = vmatmul.mubr.bf16.gmra.mrb[0].mxu0 %v1501
  %v1771 = vpop.f32.mrb[0].mxu0
  %v1772 = vadd.f32 %v1446, %v1771
  %v1773 = vpop.f32.mrb[0].mxu0
  %v1774 = vpop.f32.mrb[0].mxu0
  %v1775 = vadd.f32 %v1446, %v1774
  %v1776 = vpop.f32.mrb[0].mxu0
  %1777 = vmatprep.mubr.bf16.mxu0 0
  %1778 = vmatmul.mubr.bf16.gmra.mrb[0].mxu0 %v1504
  %v1779 = vpop.f32.mrb[0].mxu0
  %v1780 = vadd.f32 %v1446, %v1779
  %v1781 = vpop.f32.mrb[0].mxu0
  %v1782 = vpop.f32.mrb[0].mxu0
  %v1783 = vadd.f32 %v1446, %v1782
  %v1784 = vpop.f32.mrb[0].mxu0
  %1785 = vmatprep.mubr.bf16.mxu0 0
  %1786 = vmatmul.mubr.bf16.gmra.mrb[0].mxu0 %v1507
  %v1787 = vpop.f32.mrb[0].mxu0
  %v1788 = vadd.f32 %v1446, %v1787
  %v1789 = vpop.f32.mrb[0].mxu0
  %v1790 = vpop.f32.mrb[0].mxu0
  %v1791 = vadd.f32 %v1446, %v1790
  %v1792 = vpop.f32.mrb[0].mxu0
  %1793 = vmatprep.mubr.bf16.mxu0 0
  %1794 = vmatmul.mubr.bf16.gmra.mrb[0].mxu0 %v1510
  %v1795 = vpop.f32.mrb[0].mxu0
  %v1796 = vadd.f32 %v1446, %v1795
  %v1797 = vpop.f32.mrb[0].mxu0
  %v1798 = vpop.f32.mrb[0].mxu0
  %v1799 = vadd.f32 %v1446, %v1798
  %v1800 = vpop.f32.mrb[0].mxu0
  %1801 = vmatprep.mubr.bf16.mxu0 0
  %1802 = vmatmul.mubr.bf16.gmra.mrb[0].mxu0 %v1513
  %v1803 = vpop.f32.mrb[0].mxu0
  %v1804 = vadd.f32 %v1446, %v1803
  %v1805 = vpop.f32.mrb[0].mxu0
  %v1806 = vpop.f32.mrb[0].mxu0
  %v1807 = vadd.f32 %v1446, %v1806
  %v1808 = vpop.f32.mrb[0].mxu0
  %1809 = vmatprep.mubr.bf16.mxu0 0
  %1810 = vmatmul.mubr.bf16.gmra.mrb[0].mxu0 %v1516
  %v1811 = vpop.f32.mrb[0].mxu0
  %v1812 = vadd.f32 %v1446, %v1811
  %v1813 = vpop.f32.mrb[0].mxu0
  %v1814 = vpop.f32.mrb[0].mxu0
  %v1815 = vadd.f32 %v1446, %v1814
  %v1816 = vpop.f32.mrb[0].mxu0
  %1817 = vmatprep.mubr.bf16.mxu0 0
  %1818 = vmatmul.mubr.bf16.gmra.mrb[0].mxu0 %v1519
  %v1819 = vpop.f32.mrb[0].mxu0
  %v1820 = vadd.f32 %v1446, %v1819
  %v1821 = vpop.f32.mrb[0].mxu0
  %v1822 = vpop.f32.mrb[0].mxu0
  %v1823 = vadd.f32 %v1446, %v1822
  %v1824 = vpop.f32.mrb[0].mxu0
  %1825 = vmatprep.mubr.bf16.mxu0 0
  %1826 = vmatmul.mubr.bf16.gmra.mrb[0].mxu0 %v1522
  %v1827 = vpop.f32.mrb[0].mxu0
  %v1828 = vadd.f32 %v1446, %v1827
  %v1829 = vpop.f32.mrb[0].mxu0
  %v1830 = vpop.f32.mrb[0].mxu0
  %v1831 = vadd.f32 %v1446, %v1830
  %v1832 = vpop.f32.mrb[0].mxu0
  %1833 = vmatprep.mubr.bf16.mxu0 0
  %1834 = vmatmul.mubr.bf16.gmra.mrb[0].mxu0 %v1525
  %v1835 = vpop.f32.mrb[0].mxu0
  %v1836 = vadd.f32 %v1446, %v1835
  %v1837 = vpop.f32.mrb[0].mxu0
  %v1838 = vpop.f32.mrb[0].mxu0
  %v1839 = vadd.f32 %v1446, %v1838
  %v1840 = vpop.f32.mrb[0].mxu0
  %1841 = vmatprep.mubr.bf16.mxu0 0
  %1842 = vmatmul.mubr.bf16.gmra.mrb[0].mxu0 %v1528
  %v1843 = vpop.f32.mrb[0].mxu0
  %v1844 = vadd.f32 %v1446, %v1843
  %v1845 = vpop.f32.mrb[0].mxu0
  %v1846 = vpop.f32.mrb[0].mxu0
  %v1847 = vadd.f32 %v1446, %v1846
  %v1848 = vpop.f32.mrb[0].mxu0
  %1849 = vmatprep.mubr.bf16.mxu0 0
  %1850 = vmatmul.mubr.bf16.gmra.mrb[0].mxu0 %v1531
  %v1851 = vpop.f32.mrb[0].mxu0
  %v1852 = vadd.f32 %v1446, %v1851
  %v1853 = vpop.f32.mrb[0].mxu0
  %v1854 = vpop.f32.mrb[0].mxu0
  %v1855 = vadd.f32 %v1446, %v1854
  %v1856 = vpop.f32.mrb[0].mxu0
  %1857 = vmatprep.mubr.bf16.mxu0 0
  %1858 = vmatmul.mubr.bf16.gmra.mrb[0].mxu0 %v1534
  %v1859 = vpop.f32.mrb[0].mxu0
  %v1860 = vadd.f32 %v1446, %v1859
  %v1861 = vpop.f32.mrb[0].mxu0
  %v1862 = vpop.f32.mrb[0].mxu0
  %v1863 = vadd.f32 %v1446, %v1862
  %v1864 = vpop.f32.mrb[0].mxu0
  %1865 = vmatprep.mubr.bf16.mxu0 0
  %1866 = vmatmul.mubr.bf16.gmra.mrb[0].mxu0 %v1537
  %v1867 = vpop.f32.mrb[0].mxu0
  %v1868 = vadd.f32 %v1446, %v1867
  %v1869 = vpop.f32.mrb[0].mxu0
  %v1870 = vpop.f32.mrb[0].mxu0
  %v1871 = vadd.f32 %v1446, %v1870
  %v1872 = vpop.f32.mrb[0].mxu0
  %1873 = vmatprep.mubr.bf16.mxu0 0
  %1874 = vmatmul.mubr.bf16.gmra.mrb[0].mxu0 %v1540
  %v1875 = vpop.f32.mrb[0].mxu0
  %v1876 = vadd.f32 %v1446, %v1875
  %v1877 = vpop.f32.mrb[0].mxu0
  %v1878 = vpop.f32.mrb[0].mxu0
  %v1879 = vadd.f32 %v1446, %v1878
  %v1880 = vpop.f32.mrb[0].mxu0
  %1881 = vmatprep.mubr.bf16.mxu0 0
  %1882 = vmatmul.mubr.bf16.gmra.mrb[0].mxu0 %v1543
  %v1883 = vpop.f32.mrb[0].mxu0
  %v1884 = vadd.f32 %v1446, %v1883
  %v1885 = vpop.f32.mrb[0].mxu0
  %v1886 = vpop.f32.mrb[0].mxu0
  %v1887 = vadd.f32 %v1446, %v1886
  %v1888 = vpop.f32.mrb[0].mxu0
  %1889 = vmatprep.mubr.bf16.mxu0 0
  %1890 = vmatmul.mubr.bf16.gmra.mrb[0].mxu0 %v1546
  %v1891 = vpop.f32.mrb[0].mxu0
  %v1892 = vadd.f32 %v1446, %v1891
  %v1893 = vpop.f32.mrb[0].mxu0
  %v1894 = vpop.f32.mrb[0].mxu0
  %v1895 = vadd.f32 %v1446, %v1894
  %v1896 = vpop.f32.mrb[0].mxu0
  %1897 = vmatprep.mubr.bf16.mxu0 0
  %1898 = vmatmul.mubr.bf16.gmra.mrb[0].mxu0 %v1549
  %v1899 = vpop.f32.mrb[0].mxu0
  %v1900 = vadd.f32 %v1446, %v1899
  %v1901 = vpop.f32.mrb[0].mxu0
  %v1902 = vpop.f32.mrb[0].mxu0
  %v1903 = vadd.f32 %v1446, %v1902
  %v1904 = vpop.f32.mrb[0].mxu0
  %1905 = vmatprep.mubr.bf16.mxu0 0
  %1906 = vmatmul.mubr.bf16.gmra.mrb[0].mxu0 %v1552
  %v1907 = vpop.f32.mrb[0].mxu0
  %v1908 = vadd.f32 %v1446, %v1907
  %v1909 = vpop.f32.mrb[0].mxu0
  %v1910 = vpop.f32.mrb[0].mxu0
  %v1911 = vadd.f32 %v1446, %v1910
  %v1912 = vpop.f32.mrb[0].mxu0
  %1913 = vmatprep.mubr.bf16.mxu0 0
  %1914 = vmatmul.mubr.bf16.gmra.mrb[0].mxu0 %v1555
  %v1915 = vpop.f32.mrb[0].mxu0
  %v1916 = vadd.f32 %v1446, %v1915
  %v1917 = vpop.f32.mrb[0].mxu0
  %v1918 = vpop.f32.mrb[0].mxu0
  %v1919 = vadd.f32 %v1446, %v1918
  %v1920 = vpop.f32.mrb[0].mxu0
  %1921 = vmatprep.mubr.bf16.mxu0 0
  %1922 = vmatmul.mubr.bf16.gmra.mrb[0].mxu0 %v1558
  %v1923 = vpop.f32.mrb[0].mxu0
  %v1924 = vadd.f32 %v1446, %v1923
  %v1925 = vpop.f32.mrb[0].mxu0
  %v1926 = vpop.f32.mrb[0].mxu0
  %v1927 = vadd.f32 %v1446, %v1926
  %v1928 = vpop.f32.mrb[0].mxu0
  %1929 = vmatprep.mubr.bf16.mxu0 0
  %1930 = vmatmul.mubr.bf16.gmra.mrb[0].mxu0 %v1561
  %v1931 = vpop.f32.mrb[0].mxu0
  %v1932 = vadd.f32 %v1446, %v1931
  %v1933 = vpop.f32.mrb[0].mxu0
  %v1934 = vpop.f32.mrb[0].mxu0
  %v1935 = vadd.f32 %v1446, %v1934
  %v1936 = vpop.f32.mrb[0].mxu0
  %1937 = vmatprep.mubr.bf16.mxu0 0
  %1938 = vmatmul.mubr.bf16.gmra.mrb[0].mxu0 %v1564
  %v1939 = vpop.f32.mrb[0].mxu0
  %v1940 = vadd.f32 %v1446, %v1939
  %v1941 = vpop.f32.mrb[0].mxu0
  %v1942 = vpop.f32.mrb[0].mxu0
  %v1943 = vadd.f32 %v1446, %v1942
  %v1944 = vpop.f32.mrb[0].mxu0
  %1945 = vmatprep.mubr.bf16.mxu0 0
  %1946 = vmatmul.mubr.bf16.gmra.mrb[0].mxu0 %v1567
  %v1947 = vpop.f32.mrb[0].mxu0
  %v1948 = vadd.f32 %v1446, %v1947
  %v1949 = vpop.f32.mrb[0].mxu0
  %v1950 = vpop.f32.mrb[0].mxu0
  %v1951 = vadd.f32 %v1446, %v1950
  %v1952 = vpop.f32.mrb[0].mxu0
  %1953 = vmatprep.mubr.bf16.mxu0 0
  %1954 = vmatmul.mubr.bf16.gmra.mrb[0].mxu0 %v1570
  %v1955 = vpop.f32.mrb[0].mxu0
  %v1956 = vadd.f32 %v1446, %v1955
  %v1957 = vpop.f32.mrb[0].mxu0
  %v1958 = vpop.f32.mrb[0].mxu0
  %v1959 = vadd.f32 %v1446, %v1958
  %v1960 = vpop.f32.mrb[0].mxu0
  %1961 = vmatprep.mubr.bf16.mxu0 0
  %1962 = vmatmul.mubr.bf16.gmra.mrb[0].mxu0 %v1573
  %v1963 = vpop.f32.mrb[0].mxu0
  %v1964 = vadd.f32 %v1446, %v1963
  %v1965 = vpop.f32.mrb[0].mxu0
  %v1966 = vpop.f32.mrb[0].mxu0
  %v1967 = vadd.f32 %v1446, %v1966
  %v1968 = vpop.f32.mrb[0].mxu0
  %1969 = vmatprep.mubr.bf16.mxu0 0
  %1970 = vmatmul.mubr.bf16.gmra.mrb[0].mxu0 %v1576
  %v1971 = vpop.f32.mrb[0].mxu0
  %v1972 = vadd.f32 %v1446, %v1971
  %v1973 = vpop.f32.mrb[0].mxu0
  %v1974 = vpop.f32.mrb[0].mxu0
  %v1975 = vadd.f32 %v1446, %v1974
  %v1976 = vpop.f32.mrb[0].mxu0
  %1977 = vmatprep.mubr.bf16.mxu0 0
  %1978 = vmatmul.mubr.bf16.gmra.mrb[0].mxu0 %v1579
  %v1979 = vpop.f32.mrb[0].mxu0
  %v1980 = vadd.f32 %v1446, %v1979
  %v1981 = vpop.f32.mrb[0].mxu0
  %v1982 = vpop.f32.mrb[0].mxu0
  %v1983 = vadd.f32 %v1446, %v1982
  %v1984 = vpop.f32.mrb[0].mxu0
  %1985 = vmatprep.mubr.bf16.mxu0 0
  %1986 = vmatmul.mubr.bf16.gmra.mrb[0].mxu0 %v1582
  %v1987 = vpop.f32.mrb[0].mxu0
  %v1988 = vadd.f32 %v1446, %v1987
  %v1989 = vpop.f32.mrb[0].mxu0
  %v1990 = vpop.f32.mrb[0].mxu0
  %v1991 = vadd.f32 %v1446, %v1990
  %v1992 = vpop.f32.mrb[0].mxu0
  %1993 = vmatprep.mubr.bf16.mxu0 0
  %1994 = vmatmul.mubr.bf16.gmra.mrb[0].mxu0 %v1585
  %v1995 = vpop.f32.mrb[0].mxu0
  %v1996 = vadd.f32 %v1446, %v1995
  %v1997 = vpop.f32.mrb[0].mxu0
  %v1998 = vpop.f32.mrb[0].mxu0
  %v1999 = vadd.f32 %v1446, %v1998
  %v2000 = vpop.f32.mrb[0].mxu0
  %2001 = vmatprep.mubr.bf16.mxu0 0
  %2002 = vmatmul.mubr.bf16.gmra.mrb[0].mxu0 %v1588
  %v2003 = vpop.f32.mrb[0].mxu0
  %v2004 = vadd.f32 %v1446, %v2003
  %v2005 = vpop.f32.mrb[0].mxu0
  %v2006 = vpop.f32.mrb[0].mxu0
  %v2007 = vadd.f32 %v1446, %v2006
  %v2008 = vpop.f32.mrb[0].mxu0
  %2009 = vmatprep.mubr.bf16.mxu0 0
  %2010 = vmatmul.mubr.bf16.gmra.mrb[0].mxu0 %v1591
  %v2011 = vpop.f32.mrb[0].mxu0
  %v2012 = vadd.f32 %v1446, %v2011
  %v2013 = vpop.f32.mrb[0].mxu0
  %v2014 = vpop.f32.mrb[0].mxu0
  %v2015 = vadd.f32 %v1446, %v2014
  %v2016 = vpop.f32.mrb[0].mxu0
  %2017 = vmatprep.mubr.bf16.mxu0 0
  %2018 = vmatmul.mubr.bf16.gmra.mrb[0].mxu0 %v1594
  %v2019 = vpop.f32.mrb[0].mxu0
  %v2020 = vadd.f32 %v1446, %v2019
  %v2021 = vpop.f32.mrb[0].mxu0
  %v2022 = vpop.f32.mrb[0].mxu0
  %v2023 = vadd.f32 %v1446, %v2022
  %v2024 = vpop.f32.mrb[0].mxu0
  %2025 = vmatprep.mubr.bf16.mxu0 0
  %2026 = vmatmul.mubr.bf16.gmra.mrb[0].mxu0 %v1597
  %v2027 = vpop.f32.mrb[0].mxu0
  %v2028 = vadd.f32 %v1446, %v2027
  %v2029 = vpop.f32.mrb[0].mxu0
  %v2030 = vpop.f32.mrb[0].mxu0
  %v2031 = vadd.f32 %v1446, %v2030
  %v2032 = vpop.f32.mrb[0].mxu0
  %2033 = vmatprep.mubr.bf16.mxu0 0
  %2034 = vmatmul.mubr.bf16.gmra.mrb[0].mxu0 %v1600
  %v2035 = vpop.f32.mrb[0].mxu0
  %v2036 = vadd.f32 %v1446, %v2035
  %v2037 = vpop.f32.mrb[0].mxu0
  %v2038 = vpop.f32.mrb[0].mxu0
  %v2039 = vadd.f32 %v1446, %v2038
  %v2040 = vpop.f32.mrb[0].mxu0
  %2041 = vmatprep.mubr.bf16.mxu0 0
  %2042 = vmatmul.mubr.bf16.gmra.mrb[0].mxu0 %v1603
  %v2043 = vpop.f32.mrb[0].mxu0
  %v2044 = vadd.f32 %v1446, %v2043
  %v2045 = vpop.f32.mrb[0].mxu0
  %v2046 = vpop.f32.mrb[0].mxu0
  %v2047 = vadd.f32 %v1446, %v2046
  %v2048 = vpop.f32.mrb[0].mxu0
  %2049 = vmatprep.mubr.bf16.mxu0 0
  %2050 = vmatmul.mubr.bf16.gmra.mrb[0].mxu0 %v1606
  %v2051 = vpop.f32.mrb[0].mxu0
  %v2052 = vadd.f32 %v1446, %v2051
  %v2053 = vpop.f32.mrb[0].mxu0
  %v2054 = vpop.f32.mrb[0].mxu0
  %v2055 = vadd.f32 %v1446, %v2054
  %v2056 = vpop.f32.mrb[0].mxu0
  %2057 = vmatprep.mubr.bf16.mxu0 0
  %2058 = vmatmul.mubr.bf16.gmra.mrb[0].mxu0 %v1609
  %v2059 = vpop.f32.mrb[0].mxu0
  %v2060 = vadd.f32 %v1446, %v2059
  %v2061 = vpop.f32.mrb[0].mxu0
  %v2062 = vpop.f32.mrb[0].mxu0
  %v2063 = vadd.f32 %v1446, %v2062
  %v2064 = vpop.f32.mrb[0].mxu0
  %2065 = vmatprep.mubr.bf16.mxu0 0
  %2066 = vmatmul.mubr.bf16.gmra.mrb[0].mxu0 %v1612
  %v2067 = vpop.f32.mrb[0].mxu0
  %v2068 = vadd.f32 %v1446, %v2067
  %v2069 = vpop.f32.mrb[0].mxu0
  %v2070 = vpop.f32.mrb[0].mxu0
  %v2071 = vadd.f32 %v1446, %v2070
  %v2072 = vpop.f32.mrb[0].mxu0
  %2073 = vmatprep.mubr.bf16.mxu0 0
  %2074 = vmatmul.mubr.bf16.gmra.mrb[0].mxu0 %v1615
  %v2075 = vpop.f32.mrb[0].mxu0
  %v2076 = vadd.f32 %v1446, %v2075
  %v2077 = vpop.f32.mrb[0].mxu0
  %v2078 = vpop.f32.mrb[0].mxu0
  %v2079 = vadd.f32 %v1446, %v2078
  %v2080 = vpop.f32.mrb[0].mxu0
  %2081 = vmatprep.mubr.bf16.mxu0 0
  %2082 = vmatmul.mubr.bf16.gmra.mrb[0].mxu0 %v1618
  %v2083 = vpop.f32.mrb[0].mxu0
  %v2084 = vadd.f32 %v1446, %v2083
  %v2085 = vpop.f32.mrb[0].mxu0
  %v2086 = vpop.f32.mrb[0].mxu0
  %v2087 = vadd.f32 %v1446, %v2086
  %v2088 = vpop.f32.mrb[0].mxu0
  %2089 = vmatprep.mubr.bf16.mxu0 0
  %2090 = vmatmul.mubr.bf16.gmra.mrb[0].mxu0 %v1621
  %v2091 = vpop.f32.mrb[0].mxu0
  %v2092 = vadd.f32 %v1446, %v2091
  %v2093 = vpop.f32.mrb[0].mxu0
  %v2094 = vpop.f32.mrb[0].mxu0
  %v2095 = vadd.f32 %v1446, %v2094
  %v2096 = vpop.f32.mrb[0].mxu0
  %2097 = vmatprep.mubr.bf16.mxu0 0
  %2098 = vmatmul.mubr.bf16.gmra.mrb[0].mxu0 %v1624
  %v2099 = vpop.f32.mrb[0].mxu0
  %v2100 = vadd.f32 %v1446, %v2099
  %v2101 = vpop.f32.mrb[0].mxu0
  %v2102 = vpop.f32.mrb[0].mxu0
  %v2103 = vadd.f32 %v1446, %v2102
  %v2104 = vpop.f32.mrb[0].mxu0
  %2105 = vmatprep.mubr.bf16.mxu0 0
  %2106 = vmatmul.mubr.bf16.gmra.mrb[0].mxu0 %v1627
  %v2107 = vpop.f32.mrb[0].mxu0
  %v2108 = vadd.f32 %v1446, %v2107
  %v2109 = vpop.f32.mrb[0].mxu0
  %v2110 = vpop.f32.mrb[0].mxu0
  %v2111 = vadd.f32 %v1446, %v2110
  %v2112 = vpop.f32.mrb[0].mxu0
  %2113 = vmatprep.mubr.bf16.mxu0 0
  %2114 = vmatmul.mubr.bf16.gmra.mrb[0].mxu0 %v1630
  %v2115 = vpop.f32.mrb[0].mxu0
  %v2116 = vadd.f32 %v1446, %v2115
  %v2117 = vpop.f32.mrb[0].mxu0
  %v2118 = vpop.f32.mrb[0].mxu0
  %v2119 = vadd.f32 %v1446, %v2118
  %v2120 = vpop.f32.mrb[0].mxu0
  %2121 = vmatprep.mubr.bf16.mxu0 0
  %2122 = vmatmul.mubr.bf16.gmra.mrb[0].mxu0 %v1633
  %v2123 = vpop.f32.mrb[0].mxu0
  %v2124 = vadd.f32 %v1446, %v2123
  %v2125 = vpop.f32.mrb[0].mxu0
  %v2126 = vpop.f32.mrb[0].mxu0
  %v2127 = vadd.f32 %v1446, %v2126
  %v2128 = vpop.f32.mrb[0].mxu0
  %2129 = vmatprep.mubr.bf16.mxu0 0
  %2130 = vmatmul.mubr.bf16.gmra.mrb[0].mxu0 %v1636
  %v2131 = vpop.f32.mrb[0].mxu0
  %v2132 = vadd.f32 %v1446, %v2131
  %v2133 = vpop.f32.mrb[0].mxu0
  %v2134 = vpop.f32.mrb[0].mxu0
  %v2135 = vadd.f32 %v1446, %v2134
  %v2136 = vpop.f32.mrb[0].mxu0
  %2137 = vmatprep.mubr.bf16.mxu0 0
  %2138 = vmatmul.mubr.bf16.gmra.mrb[0].mxu0 %v1639
  %v2139 = vpop.f32.mrb[0].mxu0
  %v2140 = vadd.f32 %v1446, %v2139
  %v2141 = vpop.f32.mrb[0].mxu0
  %v2142 = vpop.f32.mrb[0].mxu0
  %v2143 = vadd.f32 %v1446, %v2142
  %v2144 = vpop.f32.mrb[0].mxu0
  %2145 = vmatprep.mubr.bf16.mxu0 0
  %2146 = vmatmul.mubr.bf16.gmra.mrb[0].mxu0 %v1642
  %v2147 = vpop.f32.mrb[0].mxu0
  %v2148 = vadd.f32 %v1446, %v2147
  %v2149 = vpop.f32.mrb[0].mxu0
  %v2150 = vpop.f32.mrb[0].mxu0
  %v2151 = vadd.f32 %v1446, %v2150
  %v2152 = vpop.f32.mrb[0].mxu0
  %2153 = vmatprep.mubr.bf16.mxu0 0
  %2154 = vmatmul.mubr.bf16.gmra.mrb[0].mxu0 %v1645
  %v2155 = vpop.f32.mrb[0].mxu0
  %v2156 = vadd.f32 %v1446, %v2155
  %v2157 = vpop.f32.mrb[0].mxu0
  %v2158 = vpop.f32.mrb[0].mxu0
  %v2159 = vadd.f32 %v1446, %v2158
  %v2160 = vpop.f32.mrb[0].mxu0
  %2161 = vmatprep.mubr.bf16.mxu0 0
  %2162 = vmatmul.mubr.bf16.gmra.mrb[0].mxu0 %v1648
  %v2163 = vpop.f32.mrb[0].mxu0
  %v2164 = vadd.f32 %v1446, %v2163
  %v2165 = vpop.f32.mrb[0].mxu0
  %v2166 = vpop.f32.mrb[0].mxu0
  %v2167 = vadd.f32 %v1446, %v2166
  %v2168 = vpop.f32.mrb[0].mxu0
  %2169 = vmatprep.mubr.bf16.mxu0 0
  %2170 = vmatmul.mubr.bf16.gmra.mrb[0].mxu0 %v1651
  %v2171 = vpop.f32.mrb[0].mxu0
  %v2172 = vadd.f32 %v1446, %v2171
  %v2173 = vpop.f32.mrb[0].mxu0
  %v2174 = vpop.f32.mrb[0].mxu0
  %v2175 = vadd.f32 %v1446, %v2174
  %v2176 = vpop.f32.mrb[0].mxu0
  %2177 = vmatprep.mubr.bf16.mxu0 0
  %2178 = vmatmul.mubr.bf16.gmra.mrb[0].mxu0 %v1654
  %v2179 = vpop.f32.mrb[0].mxu0
  %v2180 = vadd.f32 %v1446, %v2179
  %v2181 = vpop.f32.mrb[0].mxu0
  %v2182 = vpop.f32.mrb[0].mxu0
  %v2183 = vadd.f32 %v1446, %v2182
  %v2184 = vpop.f32.mrb[0].mxu0
  %2185 = vmatprep.mubr.bf16.mxu0 0
  %2186 = vmatmul.mubr.bf16.gmra.mrb[0].mxu0 %v1657
  %v2187 = vpop.f32.mrb[0].mxu0
  %v2188 = vadd.f32 %v1446, %v2187
  %v2189 = vpop.f32.mrb[0].mxu0
  %v2190 = vpop.f32.mrb[0].mxu0
  %v2191 = vadd.f32 %v1446, %v2190
  %v2192 = vpop.f32.mrb[0].mxu0
  %2193 = vmatprep.mubr.bf16.mxu0 0
  %2194 = vmatmul.mubr.bf16.gmra.mrb[0].mxu0 %v1660
  %v2195 = vpop.f32.mrb[0].mxu0
  %v2196 = vadd.f32 %v1446, %v2195
  %v2197 = vpop.f32.mrb[0].mxu0
  %v2198 = vpop.f32.mrb[0].mxu0
  %v2199 = vadd.f32 %v1446, %v2198
  %v2200 = vpop.f32.mrb[0].mxu0
  %2201 = vmatprep.mubr.bf16.mxu0 0
  %2202 = vmatmul.mubr.bf16.gmra.mrb[0].mxu0 %v1663
  %v2203 = vpop.f32.mrb[0].mxu0
  %v2204 = vadd.f32 %v1446, %v2203
  %v2205 = vpop.f32.mrb[0].mxu0
  %v2206 = vpop.f32.mrb[0].mxu0
  %v2207 = vadd.f32 %v1446, %v2206
  %v2208 = vpop.f32.mrb[0].mxu0
  %2209 = vdwg.mxu0
  %v2210 = vmax.f32 %v1700, 0.0
  %v2211 = vmax.f32 %v1703, 0.0
  %v2212 = vmax.f32 %v1708, 0.0
  %v2213 = vmax.f32 %v1711, 0.0
  %v2214 = vmax.f32 %v1716, 0.0
  %v2215 = vmax.f32 %v1719, 0.0
  %v2216 = vmax.f32 %v1724, 0.0
  %v2217 = vmax.f32 %v1727, 0.0
  %v2218 = vmax.f32 %v1732, 0.0
  %v2219 = vmax.f32 %v1735, 0.0
  %v2220 = vmax.f32 %v1740, 0.0
  %v2221 = vmax.f32 %v1743, 0.0
  %v2222 = vmax.f32 %v1748, 0.0
  %v2223 = vmax.f32 %v1751, 0.0
  %v2224 = vmax.f32 %v1756, 0.0
  %v2225 = vmax.f32 %v1759, 0.0
  %v2226 = vmax.f32 %v1764, 0.0
  %v2227 = vmax.f32 %v1767, 0.0
  %v2228 = vmax.f32 %v1772, 0.0
  %v2229 = vmax.f32 %v1775, 0.0
  %v2230 = vmax.f32 %v1780, 0.0
  %v2231 = vmax.f32 %v1783, 0.0
  %v2232 = vmax.f32 %v1788, 0.0
  %v2233 = vmax.f32 %v1791, 0.0
  %v2234 = vmax.f32 %v1796, 0.0
  %v2235 = vmax.f32 %v1799, 0.0
  %v2236 = vmax.f32 %v1804, 0.0
  %v2237 = vmax.f32 %v1807, 0.0
  %v2238 = vmax.f32 %v1812, 0.0
  %v2239 = vmax.f32 %v1815, 0.0
  %v2240 = vmax.f32 %v1820, 0.0
  %v2241 = vmax.f32 %v1823, 0.0
  %v2242 = vmax.f32 %v1828, 0.0
  %v2243 = vmax.f32 %v1831, 0.0
  %v2244 = vmax.f32 %v1836, 0.0
  %v2245 = vmax.f32 %v1839, 0.0
  %v2246 = vmax.f32 %v1844, 0.0
  %v2247 = vmax.f32 %v1847, 0.0
  %v2248 = vmax.f32 %v1852, 0.0
  %v2249 = vmax.f32 %v1855, 0.0
  %v2250 = vmax.f32 %v1860, 0.0
  %v2251 = vmax.f32 %v1863, 0.0
  %v2252 = vmax.f32 %v1868, 0.0
  %v2253 = vmax.f32 %v1871, 0.0
  %v2254 = vmax.f32 %v1876, 0.0
  %v2255 = vmax.f32 %v1879, 0.0
  %v2256 = vmax.f32 %v1884, 0.0
  %v2257 = vmax.f32 %v1887, 0.0
  %v2258 = vmax.f32 %v1892, 0.0
  %v2259 = vmax.f32 %v1895, 0.0
  %v2260 = vmax.f32 %v1900, 0.0
  %v2261 = vmax.f32 %v1903, 0.0
  %v2262 = vmax.f32 %v1908, 0.0
  %v2263 = vmax.f32 %v1911, 0.0
  %v2264 = vmax.f32 %v1916, 0.0
  %v2265 = vmax.f32 %v1919, 0.0
  %v2266 = vmax.f32 %v1924, 0.0
  %v2267 = vmax.f32 %v1927, 0.0
  %v2268 = vmax.f32 %v1932, 0.0
  %v2269 = vmax.f32 %v1935, 0.0
  %v2270 = vmax.f32 %v1940, 0.0
  %v2271 = vmax.f32 %v1943, 0.0
  %v2272 = vmax.f32 %v1948, 0.0
  %v2273 = vmax.f32 %v1951, 0.0
  %v2274 = vmax.f32 %v1956, 0.0
  %v2275 = vmax.f32 %v1959, 0.0
  %v2276 = vmax.f32 %v1964, 0.0
  %v2277 = vmax.f32 %v1967, 0.0
  %v2278 = vmax.f32 %v1972, 0.0
  %v2279 = vmax.f32 %v1975, 0.0
  %v2280 = vmax.f32 %v1980, 0.0
  %v2281 = vmax.f32 %v1983, 0.0
  %v2282 = vmax.f32 %v1988, 0.0
  %v2283 = vmax.f32 %v1991, 0.0
  %v2284 = vmax.f32 %v1996, 0.0
  %v2285 = vmax.f32 %v1999, 0.0
  %v2286 = vmax.f32 %v2004, 0.0
  %v2287 = vmax.f32 %v2007, 0.0
  %v2288 = vmax.f32 %v2012, 0.0
  %v2289 = vmax.f32 %v2015, 0.0
  %v2290 = vmax.f32 %v2020, 0.0
  %v2291 = vmax.f32 %v2023, 0.0
  %v2292 = vmax.f32 %v2028, 0.0
  %v2293 = vmax.f32 %v2031, 0.0
  %v2294 = vmax.f32 %v2036, 0.0
  %v2295 = vmax.f32 %v2039, 0.0
  %v2296 = vmax.f32 %v2044, 0.0
  %v2297 = vmax.f32 %v2047, 0.0
  %v2298 = vmax.f32 %v2052, 0.0
  %v2299 = vmax.f32 %v2055, 0.0
  %v2300 = vmax.f32 %v2060, 0.0
  %v2301 = vmax.f32 %v2063, 0.0
  %v2302 = vmax.f32 %v2068, 0.0
  %v2303 = vmax.f32 %v2071, 0.0
  %v2304 = vmax.f32 %v2076, 0.0
  %v2305 = vmax.f32 %v2079, 0.0
  %v2306 = vmax.f32 %v2084, 0.0
  %v2307 = vmax.f32 %v2087, 0.0
  %v2308 = vmax.f32 %v2092, 0.0
  %v2309 = vmax.f32 %v2095, 0.0
  %v2310 = vmax.f32 %v2100, 0.0
  %v2311 = vmax.f32 %v2103, 0.0
  %v2312 = vmax.f32 %v2108, 0.0
  %v2313 = vmax.f32 %v2111, 0.0
  %v2314 = vmax.f32 %v2116, 0.0
  %v2315 = vmax.f32 %v2119, 0.0
  %v2316 = vmax.f32 %v2124, 0.0
  %v2317 = vmax.f32 %v2127, 0.0
  %v2318 = vmax.f32 %v2132, 0.0
  %v2319 = vmax.f32 %v2135, 0.0
  %v2320 = vmax.f32 %v2140, 0.0
  %v2321 = vmax.f32 %v2143, 0.0
  %v2322 = vmax.f32 %v2148, 0.0
  %v2323 = vmax.f32 %v2151, 0.0
  %v2324 = vmax.f32 %v2156, 0.0
  %v2325 = vmax.f32 %v2159, 0.0
  %v2326 = vmax.f32 %v2164, 0.0
  %v2327 = vmax.f32 %v2167, 0.0
  %v2328 = vmax.f32 %v2172, 0.0
  %v2329 = vmax.f32 %v2175, 0.0
  %v2330 = vmax.f32 %v2180, 0.0
  %v2331 = vmax.f32 %v2183, 0.0
  %v2332 = vmax.f32 %v2188, 0.0
  %v2333 = vmax.f32 %v2191, 0.0
  %v2334 = vmax.f32 %v2196, 0.0
  %v2335 = vmax.f32 %v2199, 0.0
  %v2336 = vmax.f32 %v2204, 0.0
  %v2337 = vmax.f32 %v2207, 0.0
  %v2338 = vpack.c.bf16 %v2211, %v2210
  %v2339 = vpack.c.bf16 %v2213, %v2212
  %v2340 = vpack.c.bf16 %v2215, %v2214
  %v2341 = vpack.c.bf16 %v2217, %v2216
  %v2342 = vpack.c.bf16 %v2219, %v2218
  %v2343 = vpack.c.bf16 %v2221, %v2220
  %v2344 = vpack.c.bf16 %v2223, %v2222
  %v2345 = vpack.c.bf16 %v2225, %v2224
  %v2346 = vpack.c.bf16 %v2227, %v2226
  %v2347 = vpack.c.bf16 %v2229, %v2228
  %v2348 = vpack.c.bf16 %v2231, %v2230
  %v2349 = vpack.c.bf16 %v2233, %v2232
  %v2350 = vpack.c.bf16 %v2235, %v2234
  %v2351 = vpack.c.bf16 %v2237, %v2236
  %v2352 = vpack.c.bf16 %v2239, %v2238
  %v2353 = vpack.c.bf16 %v2241, %v2240
  %v2354 = vpack.c.bf16 %v2243, %v2242
  %v2355 = vpack.c.bf16 %v2245, %v2244
  %v2356 = vpack.c.bf16 %v2247, %v2246
  %v2357 = vpack.c.bf16 %v2249, %v2248
  %v2358 = vpack.c.bf16 %v2251, %v2250
  %v2359 = vpack.c.bf16 %v2253, %v2252
  %v2360 = vpack.c.bf16 %v2255, %v2254
  %v2361 = vpack.c.bf16 %v2257, %v2256
  %v2362 = vpack.c.bf16 %v2259, %v2258
  %v2363 = vpack.c.bf16 %v2261, %v2260
  %v2364 = vpack.c.bf16 %v2263, %v2262
  %v2365 = vpack.c.bf16 %v2265, %v2264
  %v2366 = vpack.c.bf16 %v2267, %v2266
  %v2367 = vpack.c.bf16 %v2269, %v2268
  %v2368 = vpack.c.bf16 %v2271, %v2270
  %v2369 = vpack.c.bf16 %v2273, %v2272
  %v2370 = vpack.c.bf16 %v2275, %v2274
  %v2371 = vpack.c.bf16 %v2277, %v2276
  %v2372 = vpack.c.bf16 %v2279, %v2278
  %v2373 = vpack.c.bf16 %v2281, %v2280
  %v2374 = vpack.c.bf16 %v2283, %v2282
  %v2375 = vpack.c.bf16 %v2285, %v2284
  %v2376 = vpack.c.bf16 %v2287, %v2286
  %v2377 = vpack.c.bf16 %v2289, %v2288
  %v2378 = vpack.c.bf16 %v2291, %v2290
  %v2379 = vpack.c.bf16 %v2293, %v2292
  %v2380 = vpack.c.bf16 %v2295, %v2294
  %v2381 = vpack.c.bf16 %v2297, %v2296
  %v2382 = vpack.c.bf16 %v2299, %v2298
  %v2383 = vpack.c.bf16 %v2301, %v2300
  %v2384 = vpack.c.bf16 %v2303, %v2302
  %v2385 = vpack.c.bf16 %v2305, %v2304
  %v2386 = vpack.c.bf16 %v2307, %v2306
  %v2387 = vpack.c.bf16 %v2309, %v2308
  %v2388 = vpack.c.bf16 %v2311, %v2310
  %v2389 = vpack.c.bf16 %v2313, %v2312
  %v2390 = vpack.c.bf16 %v2315, %v2314
  %v2391 = vpack.c.bf16 %v2317, %v2316
  %v2392 = vpack.c.bf16 %v2319, %v2318
  %v2393 = vpack.c.bf16 %v2321, %v2320
  %v2394 = vpack.c.bf16 %v2323, %v2322
  %v2395 = vpack.c.bf16 %v2325, %v2324
  %v2396 = vpack.c.bf16 %v2327, %v2326
  %v2397 = vpack.c.bf16 %v2329, %v2328
  %v2398 = vpack.c.bf16 %v2331, %v2330
  %v2399 = vpack.c.bf16 %v2333, %v2332
  %v2400 = vpack.c.bf16 %v2335, %v2334
  %v2401 = vpack.c.bf16 %v2337, %v2336
  %v2402 = vld [vmem:[%s5] sm:$0xf]
  %v2403 = vld [vmem:[%s5 + $0x4] sm:$0xf]
  %v2404 = vld [vmem:[%s5 + $0x8] sm:$0xf]
  %v2405 = vld [vmem:[%s5 + $0xc] sm:$0xf]
  %v2406 = vld [vmem:[%s5 + $0x10] sm:$0xf]
  %v2407 = vld [vmem:[%s5 + $0x14] sm:$0xf]
  %v2408 = vld [vmem:[%s5 + $0x18] sm:$0xf]
  %v2409 = vld [vmem:[%s5 + $0x1c] sm:$0xf]
  %v2410 = vld [vmem:[%s6] sm:$0x1]
  %v2412 = vlaneseq
  %v2413 = vshrl.u32 %v2412, 7
  %v2414 = vsub.s32 0, %v2413
  %v2415 = vrot.slane %v2410, %v2414
  %v2425 = vunpack.c.l.b16 %v2402
  %v2426 = vunpack.c.l.b16 %v2403
  %v2427 = vunpack.c.l.b16 %v2404
  %v2428 = vunpack.c.l.b16 %v2405
  %v2429 = vunpack.c.l.b16 %v2406
  %v2430 = vunpack.c.l.b16 %v2407
  %v2431 = vunpack.c.l.b16 %v2408
  %v2432 = vunpack.c.l.b16 %v2409
  %v2433 = vpack.c.b16 %v2426, %v2425
  %v2434 = vpack.c.b16 %v2428, %v2427
  %v2435 = vpack.c.b16 %v2430, %v2429
  %v2436 = vpack.c.b16 %v2432, %v2431
  %v2442 = vsel %vm1472, %v2338, 0
  %v2445 = vsel %vm1472, %v2339, 0
  %v2448 = vsel %vm1472, %v2340, 0
  %v2451 = vsel %vm1472, %v2341, 0
  %v2454 = vsel %vm1472, %v2342, 0
  %v2457 = vsel %vm1472, %v2343, 0
  %v2460 = vsel %vm1472, %v2344, 0
  %v2463 = vsel %vm1472, %v2345, 0
  %v2466 = vsel %vm1472, %v2346, 0
  %v2469 = vsel %vm1472, %v2347, 0
  %v2472 = vsel %vm1472, %v2348, 0
  %v2475 = vsel %vm1472, %v2349, 0
  %v2478 = vsel %vm1472, %v2350, 0
  %v2481 = vsel %vm1472, %v2351, 0
  %v2484 = vsel %vm1472, %v2352, 0
  %v2487 = vsel %vm1472, %v2353, 0
  %v2490 = vsel %vm1472, %v2354, 0
  %v2493 = vsel %vm1472, %v2355, 0
  %v2496 = vsel %vm1472, %v2356, 0
  %v2499 = vsel %vm1472, %v2357, 0
  %v2502 = vsel %vm1472, %v2358, 0
  %v2505 = vsel %vm1472, %v2359, 0
  %v2508 = vsel %vm1472, %v2360, 0
  %v2511 = vsel %vm1472, %v2361, 0
  %v2514 = vsel %vm1472, %v2362, 0
  %v2517 = vsel %vm1472, %v2363, 0
  %v2520 = vsel %vm1472, %v2364, 0
  %v2523 = vsel %vm1472, %v2365, 0
  %v2526 = vsel %vm1472, %v2366, 0
  %v2529 = vsel %vm1472, %v2367, 0
  %v2532 = vsel %vm1472, %v2368, 0
  %v2535 = vsel %vm1472, %v2369, 0
  %v2538 = vsel %vm1472, %v2370, 0
  %v2541 = vsel %vm1472, %v2371, 0
  %v2544 = vsel %vm1472, %v2372, 0
  %v2547 = vsel %vm1472, %v2373, 0
  %v2550 = vsel %vm1472, %v2374, 0
  %v2553 = vsel %vm1472, %v2375, 0
  %v2556 = vsel %vm1472, %v2376, 0
  %v2559 = vsel %vm1472, %v2377, 0
  %v2562 = vsel %vm1472, %v2378, 0
  %v2565 = vsel %vm1472, %v2379, 0
  %v2568 = vsel %vm1472, %v2380, 0
  %v2571 = vsel %vm1472, %v2381, 0
  %v2574 = vsel %vm1472, %v2382, 0
  %v2577 = vsel %vm1472, %v2383, 0
  %v2580 = vsel %vm1472, %v2384, 0
  %v2583 = vsel %vm1472, %v2385, 0
  %v2586 = vsel %vm1472, %v2386, 0
  %v2589 = vsel %vm1472, %v2387, 0
  %v2592 = vsel %vm1472, %v2388, 0
  %v2595 = vsel %vm1472, %v2389, 0
  %v2598 = vsel %vm1472, %v2390, 0
  %v2601 = vsel %vm1472, %v2391, 0
  %v2604 = vsel %vm1472, %v2392, 0
  %v2607 = vsel %vm1472, %v2393, 0
  %v2610 = vsel %vm1472, %v2394, 0
  %v2613 = vsel %vm1472, %v2395, 0
  %v2616 = vsel %vm1472, %v2396, 0
  %v2619 = vsel %vm1472, %v2397, 0
  %v2622 = vsel %vm1472, %v2398, 0
  %v2625 = vsel %vm1472, %v2399, 0
  %v2628 = vsel %vm1472, %v2400, 0
  %v2631 = vsel %vm1472, %v2401, 0
  %2633 = vmatprep.subr.bf16.mxu0 0
  %2634 = vmatpush1.bf16.msra.mxu0 %v2433
  %2635 = vmatprep.subr.bf16.mxu0 0
  %2636 = vmatpush1.bf16.msra.mxu0 %v2434
  %2637 = vmatprep.subr.bf16.mxu0 0
  %2638 = vmatpush1.bf16.msra.mxu0 %v2435
  %2639 = vmatprep.subr.bf16.mxu0 0
  %2640 = vmatpush1.bf16.msra.mxu0 %v2436
  %2641 = vmatprep.subr.bf16.mxu0 0
  %2642 = vmatpush1.bf16.msra.mxu0 0
  %2643 = vmatprep.subr.bf16.mxu0 0
  %2644 = vmatpush1.bf16.msra.mxu0 0
  %2645 = vmatprep.subr.bf16.mxu0 0
  %2646 = vmatpush1.bf16.msra.mxu0 0
  %2647 = vmatprep.subr.bf16.mxu0 0
  %2648 = vmatpush1.bf16.msra.mxu0 0
  %2649 = vmatprep.subr.bf16.mxu0 0
  %2650 = vmatpush1.bf16.msra.mxu0 0
  %2651 = vmatprep.subr.bf16.mxu0 0
  %2652 = vmatpush1.bf16.msra.mxu0 0
  %2653 = vmatprep.subr.bf16.mxu0 0
  %2654 = vmatpush1.bf16.msra.mxu0 0
  %2655 = vmatprep.subr.bf16.mxu0 0
  %2656 = vmatpush1.bf16.msra.mxu0 0
  %2657 = vmatprep.subr.bf16.mxu0 0
  %2658 = vmatpush1.bf16.msra.mxu0 0
  %2659 = vmatprep.subr.bf16.mxu0 0
  %2660 = vmatpush1.bf16.msra.mxu0 0
  %2661 = vmatprep.subr.bf16.mxu0 0
  %2662 = vmatpush1.bf16.msra.mxu0 0
  %2663 = vmatprep.subr.bf16.mxu0 0
  %2664 = vmatpush1.bf16.msra.mxu0 0
  %2665 = vmatprep.mubr.bf16.mxu0 0
  %2666 = vmatmul.mubr.bf16.gmra.mrb[0].mxu0 %v2442
  %v2667 = vpop.f32.mrb[0].mxu0
  %v2668 = vadd.f32 %v2415, %v2667
  %v2669 = vpop.f32.mrb[0].mxu0
  %v2670 = vpop.f32.mrb[0].mxu0
  %v2671 = vadd.f32 %v2415, %v2670
  %v2672 = vpop.f32.mrb[0].mxu0
  %2673 = vmatprep.mubr.bf16.mxu0 0
  %2674 = vmatmul.mubr.bf16.gmra.mrb[0].mxu0 %v2445
  %v2675 = vpop.f32.mrb[0].mxu0
  %v2676 = vadd.f32 %v2415, %v2675
  %v2677 = vpop.f32.mrb[0].mxu0
  %v2678 = vpop.f32.mrb[0].mxu0
  %v2679 = vadd.f32 %v2415, %v2678
  %v2680 = vpop.f32.mrb[0].mxu0
  %2681 = vmatprep.mubr.bf16.mxu0 0
  %2682 = vmatmul.mubr.bf16.gmra.mrb[0].mxu0 %v2448
  %v2683 = vpop.f32.mrb[0].mxu0
  %v2684 = vadd.f32 %v2415, %v2683
  %v2685 = vpop.f32.mrb[0].mxu0
  %v2686 = vpop.f32.mrb[0].mxu0
  %v2687 = vadd.f32 %v2415, %v2686
  %v2688 = vpop.f32.mrb[0].mxu0
  %2689 = vmatprep.mubr.bf16.mxu0 0
  %2690 = vmatmul.mubr.bf16.gmra.mrb[0].mxu0 %v2451
  %v2691 = vpop.f32.mrb[0].mxu0
  %v2692 = vadd.f32 %v2415, %v2691
  %v2693 = vpop.f32.mrb[0].mxu0
  %v2694 = vpop.f32.mrb[0].mxu0
  %v2695 = vadd.f32 %v2415, %v2694
  %v2696 = vpop.f32.mrb[0].mxu0
  %2697 = vmatprep.mubr.bf16.mxu0 0
  %2698 = vmatmul.mubr.bf16.gmra.mrb[0].mxu0 %v2454
  %v2699 = vpop.f32.mrb[0].mxu0
  %v2700 = vadd.f32 %v2415, %v2699
  %v2701 = vpop.f32.mrb[0].mxu0
  %v2702 = vpop.f32.mrb[0].mxu0
  %v2703 = vadd.f32 %v2415, %v2702
  %v2704 = vpop.f32.mrb[0].mxu0
  %2705 = vmatprep.mubr.bf16.mxu0 0
  %2706 = vmatmul.mubr.bf16.gmra.mrb[0].mxu0 %v2457
  %v2707 = vpop.f32.mrb[0].mxu0
  %v2708 = vadd.f32 %v2415, %v2707
  %v2709 = vpop.f32.mrb[0].mxu0
  %v2710 = vpop.f32.mrb[0].mxu0
  %v2711 = vadd.f32 %v2415, %v2710
  %v2712 = vpop.f32.mrb[0].mxu0
  %2713 = vmatprep.mubr.bf16.mxu0 0
  %2714 = vmatmul.mubr.bf16.gmra.mrb[0].mxu0 %v2460
  %v2715 = vpop.f32.mrb[0].mxu0
  %v2716 = vadd.f32 %v2415, %v2715
  %v2717 = vpop.f32.mrb[0].mxu0
  %v2718 = vpop.f32.mrb[0].mxu0
  %v2719 = vadd.f32 %v2415, %v2718
  %v2720 = vpop.f32.mrb[0].mxu0
  %2721 = vmatprep.mubr.bf16.mxu0 0
  %2722 = vmatmul.mubr.bf16.gmra.mrb[0].mxu0 %v2463
  %v2723 = vpop.f32.mrb[0].mxu0
  %v2724 = vadd.f32 %v2415, %v2723
  %v2725 = vpop.f32.mrb[0].mxu0
  %v2726 = vpop.f32.mrb[0].mxu0
  %v2727 = vadd.f32 %v2415, %v2726
  %v2728 = vpop.f32.mrb[0].mxu0
  %2729 = vmatprep.mubr.bf16.mxu0 0
  %2730 = vmatmul.mubr.bf16.gmra.mrb[0].mxu0 %v2466
  %v2731 = vpop.f32.mrb[0].mxu0
  %v2732 = vadd.f32 %v2415, %v2731
  %v2733 = vpop.f32.mrb[0].mxu0
  %v2734 = vpop.f32.mrb[0].mxu0
  %v2735 = vadd.f32 %v2415, %v2734
  %v2736 = vpop.f32.mrb[0].mxu0
  %2737 = vmatprep.mubr.bf16.mxu0 0
  %2738 = vmatmul.mubr.bf16.gmra.mrb[0].mxu0 %v2469
  %v2739 = vpop.f32.mrb[0].mxu0
  %v2740 = vadd.f32 %v2415, %v2739
  %v2741 = vpop.f32.mrb[0].mxu0
  %v2742 = vpop.f32.mrb[0].mxu0
  %v2743 = vadd.f32 %v2415, %v2742
  %v2744 = vpop.f32.mrb[0].mxu0
  %2745 = vmatprep.mubr.bf16.mxu0 0
  %2746 = vmatmul.mubr.bf16.gmra.mrb[0].mxu0 %v2472
  %v2747 = vpop.f32.mrb[0].mxu0
  %v2748 = vadd.f32 %v2415, %v2747
  %v2749 = vpop.f32.mrb[0].mxu0
  %v2750 = vpop.f32.mrb[0].mxu0
  %v2751 = vadd.f32 %v2415, %v2750
  %v2752 = vpop.f32.mrb[0].mxu0
  %2753 = vmatprep.mubr.bf16.mxu0 0
  %2754 = vmatmul.mubr.bf16.gmra.mrb[0].mxu0 %v2475
  %v2755 = vpop.f32.mrb[0].mxu0
  %v2756 = vadd.f32 %v2415, %v2755
  %v2757 = vpop.f32.mrb[0].mxu0
  %v2758 = vpop.f32.mrb[0].mxu0
  %v2759 = vadd.f32 %v2415, %v2758
  %v2760 = vpop.f32.mrb[0].mxu0
  %2761 = vmatprep.mubr.bf16.mxu0 0
  %2762 = vmatmul.mubr.bf16.gmra.mrb[0].mxu0 %v2478
  %v2763 = vpop.f32.mrb[0].mxu0
  %v2764 = vadd.f32 %v2415, %v2763
  %v2765 = vpop.f32.mrb[0].mxu0
  %v2766 = vpop.f32.mrb[0].mxu0
  %v2767 = vadd.f32 %v2415, %v2766
  %v2768 = vpop.f32.mrb[0].mxu0
  %2769 = vmatprep.mubr.bf16.mxu0 0
  %2770 = vmatmul.mubr.bf16.gmra.mrb[0].mxu0 %v2481
  %v2771 = vpop.f32.mrb[0].mxu0
  %v2772 = vadd.f32 %v2415, %v2771
  %v2773 = vpop.f32.mrb[0].mxu0
  %v2774 = vpop.f32.mrb[0].mxu0
  %v2775 = vadd.f32 %v2415, %v2774
  %v2776 = vpop.f32.mrb[0].mxu0
  %2777 = vmatprep.mubr.bf16.mxu0 0
  %2778 = vmatmul.mubr.bf16.gmra.mrb[0].mxu0 %v2484
  %v2779 = vpop.f32.mrb[0].mxu0
  %v2780 = vadd.f32 %v2415, %v2779
  %v2781 = vpop.f32.mrb[0].mxu0
  %v2782 = vpop.f32.mrb[0].mxu0
  %v2783 = vadd.f32 %v2415, %v2782
  %v2784 = vpop.f32.mrb[0].mxu0
  %2785 = vmatprep.mubr.bf16.mxu0 0
  %2786 = vmatmul.mubr.bf16.gmra.mrb[0].mxu0 %v2487
  %v2787 = vpop.f32.mrb[0].mxu0
  %v2788 = vadd.f32 %v2415, %v2787
  %v2789 = vpop.f32.mrb[0].mxu0
  %v2790 = vpop.f32.mrb[0].mxu0
  %v2791 = vadd.f32 %v2415, %v2790
  %v2792 = vpop.f32.mrb[0].mxu0
  %2793 = vmatprep.mubr.bf16.mxu0 0
  %2794 = vmatmul.mubr.bf16.gmra.mrb[0].mxu0 %v2490
  %v2795 = vpop.f32.mrb[0].mxu0
  %v2796 = vadd.f32 %v2415, %v2795
  %v2797 = vpop.f32.mrb[0].mxu0
  %v2798 = vpop.f32.mrb[0].mxu0
  %v2799 = vadd.f32 %v2415, %v2798
  %v2800 = vpop.f32.mrb[0].mxu0
  %2801 = vmatprep.mubr.bf16.mxu0 0
  %2802 = vmatmul.mubr.bf16.gmra.mrb[0].mxu0 %v2493
  %v2803 = vpop.f32.mrb[0].mxu0
  %v2804 = vadd.f32 %v2415, %v2803
  %v2805 = vpop.f32.mrb[0].mxu0
  %v2806 = vpop.f32.mrb[0].mxu0
  %v2807 = vadd.f32 %v2415, %v2806
  %v2808 = vpop.f32.mrb[0].mxu0
  %2809 = vmatprep.mubr.bf16.mxu0 0
  %2810 = vmatmul.mubr.bf16.gmra.mrb[0].mxu0 %v2496
  %v2811 = vpop.f32.mrb[0].mxu0
  %v2812 = vadd.f32 %v2415, %v2811
  %v2813 = vpop.f32.mrb[0].mxu0
  %v2814 = vpop.f32.mrb[0].mxu0
  %v2815 = vadd.f32 %v2415, %v2814
  %v2816 = vpop.f32.mrb[0].mxu0
  %2817 = vmatprep.mubr.bf16.mxu0 0
  %2818 = vmatmul.mubr.bf16.gmra.mrb[0].mxu0 %v2499
  %v2819 = vpop.f32.mrb[0].mxu0
  %v2820 = vadd.f32 %v2415, %v2819
  %v2821 = vpop.f32.mrb[0].mxu0
  %v2822 = vpop.f32.mrb[0].mxu0
  %v2823 = vadd.f32 %v2415, %v2822
  %v2824 = vpop.f32.mrb[0].mxu0
  %2825 = vmatprep.mubr.bf16.mxu0 0
  %2826 = vmatmul.mubr.bf16.gmra.mrb[0].mxu0 %v2502
  %v2827 = vpop.f32.mrb[0].mxu0
  %v2828 = vadd.f32 %v2415, %v2827
  %v2829 = vpop.f32.mrb[0].mxu0
  %v2830 = vpop.f32.mrb[0].mxu0
  %v2831 = vadd.f32 %v2415, %v2830
  %v2832 = vpop.f32.mrb[0].mxu0
  %2833 = vmatprep.mubr.bf16.mxu0 0
  %2834 = vmatmul.mubr.bf16.gmra.mrb[0].mxu0 %v2505
  %v2835 = vpop.f32.mrb[0].mxu0
  %v2836 = vadd.f32 %v2415, %v2835
  %v2837 = vpop.f32.mrb[0].mxu0
  %v2838 = vpop.f32.mrb[0].mxu0
  %v2839 = vadd.f32 %v2415, %v2838
  %v2840 = vpop.f32.mrb[0].mxu0
  %2841 = vmatprep.mubr.bf16.mxu0 0
  %2842 = vmatmul.mubr.bf16.gmra.mrb[0].mxu0 %v2508
  %v2843 = vpop.f32.mrb[0].mxu0
  %v2844 = vadd.f32 %v2415, %v2843
  %v2845 = vpop.f32.mrb[0].mxu0
  %v2846 = vpop.f32.mrb[0].mxu0
  %v2847 = vadd.f32 %v2415, %v2846
  %v2848 = vpop.f32.mrb[0].mxu0
  %2849 = vmatprep.mubr.bf16.mxu0 0
  %2850 = vmatmul.mubr.bf16.gmra.mrb[0].mxu0 %v2511
  %v2851 = vpop.f32.mrb[0].mxu0
  %v2852 = vadd.f32 %v2415, %v2851
  %v2853 = vpop.f32.mrb[0].mxu0
  %v2854 = vpop.f32.mrb[0].mxu0
  %v2855 = vadd.f32 %v2415, %v2854
  %v2856 = vpop.f32.mrb[0].mxu0
  %2857 = vmatprep.mubr.bf16.mxu0 0
  %2858 = vmatmul.mubr.bf16.gmra.mrb[0].mxu0 %v2514
  %v2859 = vpop.f32.mrb[0].mxu0
  %v2860 = vadd.f32 %v2415, %v2859
  %v2861 = vpop.f32.mrb[0].mxu0
  %v2862 = vpop.f32.mrb[0].mxu0
  %v2863 = vadd.f32 %v2415, %v2862
  %v2864 = vpop.f32.mrb[0].mxu0
  %2865 = vmatprep.mubr.bf16.mxu0 0
  %2866 = vmatmul.mubr.bf16.gmra.mrb[0].mxu0 %v2517
  %v2867 = vpop.f32.mrb[0].mxu0
  %v2868 = vadd.f32 %v2415, %v2867
  %v2869 = vpop.f32.mrb[0].mxu0
  %v2870 = vpop.f32.mrb[0].mxu0
  %v2871 = vadd.f32 %v2415, %v2870
  %v2872 = vpop.f32.mrb[0].mxu0
  %2873 = vmatprep.mubr.bf16.mxu0 0
  %2874 = vmatmul.mubr.bf16.gmra.mrb[0].mxu0 %v2520
  %v2875 = vpop.f32.mrb[0].mxu0
  %v2876 = vadd.f32 %v2415, %v2875
  %v2877 = vpop.f32.mrb[0].mxu0
  %v2878 = vpop.f32.mrb[0].mxu0
  %v2879 = vadd.f32 %v2415, %v2878
  %v2880 = vpop.f32.mrb[0].mxu0
  %2881 = vmatprep.mubr.bf16.mxu0 0
  %2882 = vmatmul.mubr.bf16.gmra.mrb[0].mxu0 %v2523
  %v2883 = vpop.f32.mrb[0].mxu0
  %v2884 = vadd.f32 %v2415, %v2883
  %v2885 = vpop.f32.mrb[0].mxu0
  %v2886 = vpop.f32.mrb[0].mxu0
  %v2887 = vadd.f32 %v2415, %v2886
  %v2888 = vpop.f32.mrb[0].mxu0
  %2889 = vmatprep.mubr.bf16.mxu0 0
  %2890 = vmatmul.mubr.bf16.gmra.mrb[0].mxu0 %v2526
  %v2891 = vpop.f32.mrb[0].mxu0
  %v2892 = vadd.f32 %v2415, %v2891
  %v2893 = vpop.f32.mrb[0].mxu0
  %v2894 = vpop.f32.mrb[0].mxu0
  %v2895 = vadd.f32 %v2415, %v2894
  %v2896 = vpop.f32.mrb[0].mxu0
  %2897 = vmatprep.mubr.bf16.mxu0 0
  %2898 = vmatmul.mubr.bf16.gmra.mrb[0].mxu0 %v2529
  %v2899 = vpop.f32.mrb[0].mxu0
  %v2900 = vadd.f32 %v2415, %v2899
  %v2901 = vpop.f32.mrb[0].mxu0
  %v2902 = vpop.f32.mrb[0].mxu0
  %v2903 = vadd.f32 %v2415, %v2902
  %v2904 = vpop.f32.mrb[0].mxu0
  %2905 = vmatprep.mubr.bf16.mxu0 0
  %2906 = vmatmul.mubr.bf16.gmra.mrb[0].mxu0 %v2532
  %v2907 = vpop.f32.mrb[0].mxu0
  %v2908 = vadd.f32 %v2415, %v2907
  %v2909 = vpop.f32.mrb[0].mxu0
  %v2910 = vpop.f32.mrb[0].mxu0
  %v2911 = vadd.f32 %v2415, %v2910
  %v2912 = vpop.f32.mrb[0].mxu0
  %2913 = vmatprep.mubr.bf16.mxu0 0
  %2914 = vmatmul.mubr.bf16.gmra.mrb[0].mxu0 %v2535
  %v2915 = vpop.f32.mrb[0].mxu0
  %v2916 = vadd.f32 %v2415, %v2915
  %v2917 = vpop.f32.mrb[0].mxu0
  %v2918 = vpop.f32.mrb[0].mxu0
  %v2919 = vadd.f32 %v2415, %v2918
  %v2920 = vpop.f32.mrb[0].mxu0
  %2921 = vmatprep.mubr.bf16.mxu0 0
  %2922 = vmatmul.mubr.bf16.gmra.mrb[0].mxu0 %v2538
  %v2923 = vpop.f32.mrb[0].mxu0
  %v2924 = vadd.f32 %v2415, %v2923
  %v2925 = vpop.f32.mrb[0].mxu0
  %v2926 = vpop.f32.mrb[0].mxu0
  %v2927 = vadd.f32 %v2415, %v2926
  %v2928 = vpop.f32.mrb[0].mxu0
  %2929 = vmatprep.mubr.bf16.mxu0 0
  %2930 = vmatmul.mubr.bf16.gmra.mrb[0].mxu0 %v2541
  %v2931 = vpop.f32.mrb[0].mxu0
  %v2932 = vadd.f32 %v2415, %v2931
  %v2933 = vpop.f32.mrb[0].mxu0
  %v2934 = vpop.f32.mrb[0].mxu0
  %v2935 = vadd.f32 %v2415, %v2934
  %v2936 = vpop.f32.mrb[0].mxu0
  %2937 = vmatprep.mubr.bf16.mxu0 0
  %2938 = vmatmul.mubr.bf16.gmra.mrb[0].mxu0 %v2544
  %v2939 = vpop.f32.mrb[0].mxu0
  %v2940 = vadd.f32 %v2415, %v2939
  %v2941 = vpop.f32.mrb[0].mxu0
  %v2942 = vpop.f32.mrb[0].mxu0
  %v2943 = vadd.f32 %v2415, %v2942
  %v2944 = vpop.f32.mrb[0].mxu0
  %2945 = vmatprep.mubr.bf16.mxu0 0
  %2946 = vmatmul.mubr.bf16.gmra.mrb[0].mxu0 %v2547
  %v2947 = vpop.f32.mrb[0].mxu0
  %v2948 = vadd.f32 %v2415, %v2947
  %v2949 = vpop.f32.mrb[0].mxu0
  %v2950 = vpop.f32.mrb[0].mxu0
  %v2951 = vadd.f32 %v2415, %v2950
  %v2952 = vpop.f32.mrb[0].mxu0
  %2953 = vmatprep.mubr.bf16.mxu0 0
  %2954 = vmatmul.mubr.bf16.gmra.mrb[0].mxu0 %v2550
  %v2955 = vpop.f32.mrb[0].mxu0
  %v2956 = vadd.f32 %v2415, %v2955
  %v2957 = vpop.f32.mrb[0].mxu0
  %v2958 = vpop.f32.mrb[0].mxu0
  %v2959 = vadd.f32 %v2415, %v2958
  %v2960 = vpop.f32.mrb[0].mxu0
  %2961 = vmatprep.mubr.bf16.mxu0 0
  %2962 = vmatmul.mubr.bf16.gmra.mrb[0].mxu0 %v2553
  %v2963 = vpop.f32.mrb[0].mxu0
  %v2964 = vadd.f32 %v2415, %v2963
  %v2965 = vpop.f32.mrb[0].mxu0
  %v2966 = vpop.f32.mrb[0].mxu0
  %v2967 = vadd.f32 %v2415, %v2966
  %v2968 = vpop.f32.mrb[0].mxu0
  %2969 = vmatprep.mubr.bf16.mxu0 0
  %2970 = vmatmul.mubr.bf16.gmra.mrb[0].mxu0 %v2556
  %v2971 = vpop.f32.mrb[0].mxu0
  %v2972 = vadd.f32 %v2415, %v2971
  %v2973 = vpop.f32.mrb[0].mxu0
  %v2974 = vpop.f32.mrb[0].mxu0
  %v2975 = vadd.f32 %v2415, %v2974
  %v2976 = vpop.f32.mrb[0].mxu0
  %2977 = vmatprep.mubr.bf16.mxu0 0
  %2978 = vmatmul.mubr.bf16.gmra.mrb[0].mxu0 %v2559
  %v2979 = vpop.f32.mrb[0].mxu0
  %v2980 = vadd.f32 %v2415, %v2979
  %v2981 = vpop.f32.mrb[0].mxu0
  %v2982 = vpop.f32.mrb[0].mxu0
  %v2983 = vadd.f32 %v2415, %v2982
  %v2984 = vpop.f32.mrb[0].mxu0
  %2985 = vmatprep.mubr.bf16.mxu0 0
  %2986 = vmatmul.mubr.bf16.gmra.mrb[0].mxu0 %v2562
  %v2987 = vpop.f32.mrb[0].mxu0
  %v2988 = vadd.f32 %v2415, %v2987
  %v2989 = vpop.f32.mrb[0].mxu0
  %v2990 = vpop.f32.mrb[0].mxu0
  %v2991 = vadd.f32 %v2415, %v2990
  %v2992 = vpop.f32.mrb[0].mxu0
  %2993 = vmatprep.mubr.bf16.mxu0 0
  %2994 = vmatmul.mubr.bf16.gmra.mrb[0].mxu0 %v2565
  %v2995 = vpop.f32.mrb[0].mxu0
  %v2996 = vadd.f32 %v2415, %v2995
  %v2997 = vpop.f32.mrb[0].mxu0
  %v2998 = vpop.f32.mrb[0].mxu0
  %v2999 = vadd.f32 %v2415, %v2998
  %v3000 = vpop.f32.mrb[0].mxu0
  %3001 = vmatprep.mubr.bf16.mxu0 0
  %3002 = vmatmul.mubr.bf16.gmra.mrb[0].mxu0 %v2568
  %v3003 = vpop.f32.mrb[0].mxu0
  %v3004 = vadd.f32 %v2415, %v3003
  %v3005 = vpop.f32.mrb[0].mxu0
  %v3006 = vpop.f32.mrb[0].mxu0
  %v3007 = vadd.f32 %v2415, %v3006
  %v3008 = vpop.f32.mrb[0].mxu0
  %3009 = vmatprep.mubr.bf16.mxu0 0
  %3010 = vmatmul.mubr.bf16.gmra.mrb[0].mxu0 %v2571
  %v3011 = vpop.f32.mrb[0].mxu0
  %v3012 = vadd.f32 %v2415, %v3011
  %v3013 = vpop.f32.mrb[0].mxu0
  %v3014 = vpop.f32.mrb[0].mxu0
  %v3015 = vadd.f32 %v2415, %v3014
  %v3016 = vpop.f32.mrb[0].mxu0
  %3017 = vmatprep.mubr.bf16.mxu0 0
  %3018 = vmatmul.mubr.bf16.gmra.mrb[0].mxu0 %v2574
  %v3019 = vpop.f32.mrb[0].mxu0
  %v3020 = vadd.f32 %v2415, %v3019
  %v3021 = vpop.f32.mrb[0].mxu0
  %v3022 = vpop.f32.mrb[0].mxu0
  %v3023 = vadd.f32 %v2415, %v3022
  %v3024 = vpop.f32.mrb[0].mxu0
  %3025 = vmatprep.mubr.bf16.mxu0 0
  %3026 = vmatmul.mubr.bf16.gmra.mrb[0].mxu0 %v2577
  %v3027 = vpop.f32.mrb[0].mxu0
  %v3028 = vadd.f32 %v2415, %v3027
  %v3029 = vpop.f32.mrb[0].mxu0
  %v3030 = vpop.f32.mrb[0].mxu0
  %v3031 = vadd.f32 %v2415, %v3030
  %v3032 = vpop.f32.mrb[0].mxu0
  %3033 = vmatprep.mubr.bf16.mxu0 0
  %3034 = vmatmul.mubr.bf16.gmra.mrb[0].mxu0 %v2580
  %v3035 = vpop.f32.mrb[0].mxu0
  %v3036 = vadd.f32 %v2415, %v3035
  %v3037 = vpop.f32.mrb[0].mxu0
  %v3038 = vpop.f32.mrb[0].mxu0
  %v3039 = vadd.f32 %v2415, %v3038
  %v3040 = vpop.f32.mrb[0].mxu0
  %3041 = vmatprep.mubr.bf16.mxu0 0
  %3042 = vmatmul.mubr.bf16.gmra.mrb[0].mxu0 %v2583
  %v3043 = vpop.f32.mrb[0].mxu0
  %v3044 = vadd.f32 %v2415, %v3043
  %v3045 = vpop.f32.mrb[0].mxu0
  %v3046 = vpop.f32.mrb[0].mxu0
  %v3047 = vadd.f32 %v2415, %v3046
  %v3048 = vpop.f32.mrb[0].mxu0
  %3049 = vmatprep.mubr.bf16.mxu0 0
  %3050 = vmatmul.mubr.bf16.gmra.mrb[0].mxu0 %v2586
  %v3051 = vpop.f32.mrb[0].mxu0
  %v3052 = vadd.f32 %v2415, %v3051
  %v3053 = vpop.f32.mrb[0].mxu0
  %v3054 = vpop.f32.mrb[0].mxu0
  %v3055 = vadd.f32 %v2415, %v3054
  %v3056 = vpop.f32.mrb[0].mxu0
  %3057 = vmatprep.mubr.bf16.mxu0 0
  %3058 = vmatmul.mubr.bf16.gmra.mrb[0].mxu0 %v2589
  %v3059 = vpop.f32.mrb[0].mxu0
  %v3060 = vadd.f32 %v2415, %v3059
  %v3061 = vpop.f32.mrb[0].mxu0
  %v3062 = vpop.f32.mrb[0].mxu0
  %v3063 = vadd.f32 %v2415, %v3062
  %v3064 = vpop.f32.mrb[0].mxu0
  %3065 = vmatprep.mubr.bf16.mxu0 0
  %3066 = vmatmul.mubr.bf16.gmra.mrb[0].mxu0 %v2592
  %v3067 = vpop.f32.mrb[0].mxu0
  %v3068 = vadd.f32 %v2415, %v3067
  %v3069 = vpop.f32.mrb[0].mxu0
  %v3070 = vpop.f32.mrb[0].mxu0
  %v3071 = vadd.f32 %v2415, %v3070
  %v3072 = vpop.f32.mrb[0].mxu0
  %3073 = vmatprep.mubr.bf16.mxu0 0
  %3074 = vmatmul.mubr.bf16.gmra.mrb[0].mxu0 %v2595
  %v3075 = vpop.f32.mrb[0].mxu0
  %v3076 = vadd.f32 %v2415, %v3075
  %v3077 = vpop.f32.mrb[0].mxu0
  %v3078 = vpop.f32.mrb[0].mxu0
  %v3079 = vadd.f32 %v2415, %v3078
  %v3080 = vpop.f32.mrb[0].mxu0
  %3081 = vmatprep.mubr.bf16.mxu0 0
  %3082 = vmatmul.mubr.bf16.gmra.mrb[0].mxu0 %v2598
  %v3083 = vpop.f32.mrb[0].mxu0
  %v3084 = vadd.f32 %v2415, %v3083
  %v3085 = vpop.f32.mrb[0].mxu0
  %v3086 = vpop.f32.mrb[0].mxu0
  %v3087 = vadd.f32 %v2415, %v3086
  %v3088 = vpop.f32.mrb[0].mxu0
  %3089 = vmatprep.mubr.bf16.mxu0 0
  %3090 = vmatmul.mubr.bf16.gmra.mrb[0].mxu0 %v2601
  %v3091 = vpop.f32.mrb[0].mxu0
  %v3092 = vadd.f32 %v2415, %v3091
  %v3093 = vpop.f32.mrb[0].mxu0
  %v3094 = vpop.f32.mrb[0].mxu0
  %v3095 = vadd.f32 %v2415, %v3094
  %v3096 = vpop.f32.mrb[0].mxu0
  %3097 = vmatprep.mubr.bf16.mxu0 0
  %3098 = vmatmul.mubr.bf16.gmra.mrb[0].mxu0 %v2604
  %v3099 = vpop.f32.mrb[0].mxu0
  %v3100 = vadd.f32 %v2415, %v3099
  %v3101 = vpop.f32.mrb[0].mxu0
  %v3102 = vpop.f32.mrb[0].mxu0
  %v3103 = vadd.f32 %v2415, %v3102
  %v3104 = vpop.f32.mrb[0].mxu0
  %3105 = vmatprep.mubr.bf16.mxu0 0
  %3106 = vmatmul.mubr.bf16.gmra.mrb[0].mxu0 %v2607
  %v3107 = vpop.f32.mrb[0].mxu0
  %v3108 = vadd.f32 %v2415, %v3107
  %v3109 = vpop.f32.mrb[0].mxu0
  %v3110 = vpop.f32.mrb[0].mxu0
  %v3111 = vadd.f32 %v2415, %v3110
  %v3112 = vpop.f32.mrb[0].mxu0
  %3113 = vmatprep.mubr.bf16.mxu0 0
  %3114 = vmatmul.mubr.bf16.gmra.mrb[0].mxu0 %v2610
  %v3115 = vpop.f32.mrb[0].mxu0
  %v3116 = vadd.f32 %v2415, %v3115
  %v3117 = vpop.f32.mrb[0].mxu0
  %v3118 = vpop.f32.mrb[0].mxu0
  %v3119 = vadd.f32 %v2415, %v3118
  %v3120 = vpop.f32.mrb[0].mxu0
  %3121 = vmatprep.mubr.bf16.mxu0 0
  %3122 = vmatmul.mubr.bf16.gmra.mrb[0].mxu0 %v2613
  %v3123 = vpop.f32.mrb[0].mxu0
  %v3124 = vadd.f32 %v2415, %v3123
  %v3125 = vpop.f32.mrb[0].mxu0
  %v3126 = vpop.f32.mrb[0].mxu0
  %v3127 = vadd.f32 %v2415, %v3126
  %v3128 = vpop.f32.mrb[0].mxu0
  %3129 = vmatprep.mubr.bf16.mxu0 0
  %3130 = vmatmul.mubr.bf16.gmra.mrb[0].mxu0 %v2616
  %v3131 = vpop.f32.mrb[0].mxu0
  %v3132 = vadd.f32 %v2415, %v3131
  %v3133 = vpop.f32.mrb[0].mxu0
  %v3134 = vpop.f32.mrb[0].mxu0
  %v3135 = vadd.f32 %v2415, %v3134
  %v3136 = vpop.f32.mrb[0].mxu0
  %3137 = vmatprep.mubr.bf16.mxu0 0
  %3138 = vmatmul.mubr.bf16.gmra.mrb[0].mxu0 %v2619
  %v3139 = vpop.f32.mrb[0].mxu0
  %v3140 = vadd.f32 %v2415, %v3139
  %v3141 = vpop.f32.mrb[0].mxu0
  %v3142 = vpop.f32.mrb[0].mxu0
  %v3143 = vadd.f32 %v2415, %v3142
  %v3144 = vpop.f32.mrb[0].mxu0
  %3145 = vmatprep.mubr.bf16.mxu0 0
  %3146 = vmatmul.mubr.bf16.gmra.mrb[0].mxu0 %v2622
  %v3147 = vpop.f32.mrb[0].mxu0
  %v3148 = vadd.f32 %v2415, %v3147
  %v3149 = vpop.f32.mrb[0].mxu0
  %v3150 = vpop.f32.mrb[0].mxu0
  %v3151 = vadd.f32 %v2415, %v3150
  %v3152 = vpop.f32.mrb[0].mxu0
  %3153 = vmatprep.mubr.bf16.mxu0 0
  %3154 = vmatmul.mubr.bf16.gmra.mrb[0].mxu0 %v2625
  %v3155 = vpop.f32.mrb[0].mxu0
  %v3156 = vadd.f32 %v2415, %v3155
  %v3157 = vpop.f32.mrb[0].mxu0
  %v3158 = vpop.f32.mrb[0].mxu0
  %v3159 = vadd.f32 %v2415, %v3158
  %v3160 = vpop.f32.mrb[0].mxu0
  %3161 = vmatprep.mubr.bf16.mxu0 0
  %3162 = vmatmul.mubr.bf16.gmra.mrb[0].mxu0 %v2628
  %v3163 = vpop.f32.mrb[0].mxu0
  %v3164 = vadd.f32 %v2415, %v3163
  %v3165 = vpop.f32.mrb[0].mxu0
  %v3166 = vpop.f32.mrb[0].mxu0
  %v3167 = vadd.f32 %v2415, %v3166
  %v3168 = vpop.f32.mrb[0].mxu0
  %3169 = vmatprep.mubr.bf16.mxu0 0
  %3170 = vmatmul.mubr.bf16.gmra.mrb[0].mxu0 %v2631
  %v3171 = vpop.f32.mrb[0].mxu0
  %v3172 = vadd.f32 %v2415, %v3171
  %v3173 = vpop.f32.mrb[0].mxu0
  %v3174 = vpop.f32.mrb[0].mxu0
  %v3175 = vadd.f32 %v2415, %v3174
  %v3176 = vpop.f32.mrb[0].mxu0
  %3177 = vdwg.mxu0
  %v3178 = vmax.f32 %v2668, 0.0
  %v3179 = vmax.f32 %v2671, 0.0
  %v3180 = vmax.f32 %v2676, 0.0
  %v3181 = vmax.f32 %v2679, 0.0
  %v3182 = vmax.f32 %v2684, 0.0
  %v3183 = vmax.f32 %v2687, 0.0
  %v3184 = vmax.f32 %v2692, 0.0
  %v3185 = vmax.f32 %v2695, 0.0
  %v3186 = vmax.f32 %v2700, 0.0
  %v3187 = vmax.f32 %v2703, 0.0
  %v3188 = vmax.f32 %v2708, 0.0
  %v3189 = vmax.f32 %v2711, 0.0
  %v3190 = vmax.f32 %v2716, 0.0
  %v3191 = vmax.f32 %v2719, 0.0
  %v3192 = vmax.f32 %v2724, 0.0
  %v3193 = vmax.f32 %v2727, 0.0
  %v3194 = vmax.f32 %v2732, 0.0
  %v3195 = vmax.f32 %v2735, 0.0
  %v3196 = vmax.f32 %v2740, 0.0
  %v3197 = vmax.f32 %v2743, 0.0
  %v3198 = vmax.f32 %v2748, 0.0
  %v3199 = vmax.f32 %v2751, 0.0
  %v3200 = vmax.f32 %v2756, 0.0
  %v3201 = vmax.f32 %v2759, 0.0
  %v3202 = vmax.f32 %v2764, 0.0
  %v3203 = vmax.f32 %v2767, 0.0
  %v3204 = vmax.f32 %v2772, 0.0
  %v3205 = vmax.f32 %v2775, 0.0
  %v3206 = vmax.f32 %v2780, 0.0
  %v3207 = vmax.f32 %v2783, 0.0
  %v3208 = vmax.f32 %v2788, 0.0
  %v3209 = vmax.f32 %v2791, 0.0
  %v3210 = vmax.f32 %v2796, 0.0
  %v3211 = vmax.f32 %v2799, 0.0
  %v3212 = vmax.f32 %v2804, 0.0
  %v3213 = vmax.f32 %v2807, 0.0
  %v3214 = vmax.f32 %v2812, 0.0
  %v3215 = vmax.f32 %v2815, 0.0
  %v3216 = vmax.f32 %v2820, 0.0
  %v3217 = vmax.f32 %v2823, 0.0
  %v3218 = vmax.f32 %v2828, 0.0
  %v3219 = vmax.f32 %v2831, 0.0
  %v3220 = vmax.f32 %v2836, 0.0
  %v3221 = vmax.f32 %v2839, 0.0
  %v3222 = vmax.f32 %v2844, 0.0
  %v3223 = vmax.f32 %v2847, 0.0
  %v3224 = vmax.f32 %v2852, 0.0
  %v3225 = vmax.f32 %v2855, 0.0
  %v3226 = vmax.f32 %v2860, 0.0
  %v3227 = vmax.f32 %v2863, 0.0
  %v3228 = vmax.f32 %v2868, 0.0
  %v3229 = vmax.f32 %v2871, 0.0
  %v3230 = vmax.f32 %v2876, 0.0
  %v3231 = vmax.f32 %v2879, 0.0
  %v3232 = vmax.f32 %v2884, 0.0
  %v3233 = vmax.f32 %v2887, 0.0
  %v3234 = vmax.f32 %v2892, 0.0
  %v3235 = vmax.f32 %v2895, 0.0
  %v3236 = vmax.f32 %v2900, 0.0
  %v3237 = vmax.f32 %v2903, 0.0
  %v3238 = vmax.f32 %v2908, 0.0
  %v3239 = vmax.f32 %v2911, 0.0
  %v3240 = vmax.f32 %v2916, 0.0
  %v3241 = vmax.f32 %v2919, 0.0
  %v3242 = vmax.f32 %v2924, 0.0
  %v3243 = vmax.f32 %v2927, 0.0
  %v3244 = vmax.f32 %v2932, 0.0
  %v3245 = vmax.f32 %v2935, 0.0
  %v3246 = vmax.f32 %v2940, 0.0
  %v3247 = vmax.f32 %v2943, 0.0
  %v3248 = vmax.f32 %v2948, 0.0
  %v3249 = vmax.f32 %v2951, 0.0
  %v3250 = vmax.f32 %v2956, 0.0
  %v3251 = vmax.f32 %v2959, 0.0
  %v3252 = vmax.f32 %v2964, 0.0
  %v3253 = vmax.f32 %v2967, 0.0
  %v3254 = vmax.f32 %v2972, 0.0
  %v3255 = vmax.f32 %v2975, 0.0
  %v3256 = vmax.f32 %v2980, 0.0
  %v3257 = vmax.f32 %v2983, 0.0
  %v3258 = vmax.f32 %v2988, 0.0
  %v3259 = vmax.f32 %v2991, 0.0
  %v3260 = vmax.f32 %v2996, 0.0
  %v3261 = vmax.f32 %v2999, 0.0
  %v3262 = vmax.f32 %v3004, 0.0
  %v3263 = vmax.f32 %v3007, 0.0
  %v3264 = vmax.f32 %v3012, 0.0
  %v3265 = vmax.f32 %v3015, 0.0
  %v3266 = vmax.f32 %v3020, 0.0
  %v3267 = vmax.f32 %v3023, 0.0
  %v3268 = vmax.f32 %v3028, 0.0
  %v3269 = vmax.f32 %v3031, 0.0
  %v3270 = vmax.f32 %v3036, 0.0
  %v3271 = vmax.f32 %v3039, 0.0
  %v3272 = vmax.f32 %v3044, 0.0
  %v3273 = vmax.f32 %v3047, 0.0
  %v3274 = vmax.f32 %v3052, 0.0
  %v3275 = vmax.f32 %v3055, 0.0
  %v3276 = vmax.f32 %v3060, 0.0
  %v3277 = vmax.f32 %v3063, 0.0
  %v3278 = vmax.f32 %v3068, 0.0
  %v3279 = vmax.f32 %v3071, 0.0
  %v3280 = vmax.f32 %v3076, 0.0
  %v3281 = vmax.f32 %v3079, 0.0
  %v3282 = vmax.f32 %v3084, 0.0
  %v3283 = vmax.f32 %v3087, 0.0
  %v3284 = vmax.f32 %v3092, 0.0
  %v3285 = vmax.f32 %v3095, 0.0
  %v3286 = vmax.f32 %v3100, 0.0
  %v3287 = vmax.f32 %v3103, 0.0
  %v3288 = vmax.f32 %v3108, 0.0
  %v3289 = vmax.f32 %v3111, 0.0
  %v3290 = vmax.f32 %v3116, 0.0
  %v3291 = vmax.f32 %v3119, 0.0
  %v3292 = vmax.f32 %v3124, 0.0
  %v3293 = vmax.f32 %v3127, 0.0
  %v3294 = vmax.f32 %v3132, 0.0
  %v3295 = vmax.f32 %v3135, 0.0
  %v3296 = vmax.f32 %v3140, 0.0
  %v3297 = vmax.f32 %v3143, 0.0
  %v3298 = vmax.f32 %v3148, 0.0
  %v3299 = vmax.f32 %v3151, 0.0
  %v3300 = vmax.f32 %v3156, 0.0
  %v3301 = vmax.f32 %v3159, 0.0
  %v3302 = vmax.f32 %v3164, 0.0
  %v3303 = vmax.f32 %v3167, 0.0
  %v3304 = vmax.f32 %v3172, 0.0
  %v3305 = vmax.f32 %v3175, 0.0
  %v3306 = vpack.c.bf16 %v3179, %v3178
  %v3307 = vpack.c.bf16 %v3181, %v3180
  %v3308 = vpack.c.bf16 %v3183, %v3182
  %v3309 = vpack.c.bf16 %v3185, %v3184
  %v3310 = vpack.c.bf16 %v3187, %v3186
  %v3311 = vpack.c.bf16 %v3189, %v3188
  %v3312 = vpack.c.bf16 %v3191, %v3190
  %v3313 = vpack.c.bf16 %v3193, %v3192
  %v3314 = vpack.c.bf16 %v3195, %v3194
  %v3315 = vpack.c.bf16 %v3197, %v3196
  %v3316 = vpack.c.bf16 %v3199, %v3198
  %v3317 = vpack.c.bf16 %v3201, %v3200
  %v3318 = vpack.c.bf16 %v3203, %v3202
  %v3319 = vpack.c.bf16 %v3205, %v3204
  %v3320 = vpack.c.bf16 %v3207, %v3206
  %v3321 = vpack.c.bf16 %v3209, %v3208
  %v3322 = vpack.c.bf16 %v3211, %v3210
  %v3323 = vpack.c.bf16 %v3213, %v3212
  %v3324 = vpack.c.bf16 %v3215, %v3214
  %v3325 = vpack.c.bf16 %v3217, %v3216
  %v3326 = vpack.c.bf16 %v3219, %v3218
  %v3327 = vpack.c.bf16 %v3221, %v3220
  %v3328 = vpack.c.bf16 %v3223, %v3222
  %v3329 = vpack.c.bf16 %v3225, %v3224
  %v3330 = vpack.c.bf16 %v3227, %v3226
  %v3331 = vpack.c.bf16 %v3229, %v3228
  %v3332 = vpack.c.bf16 %v3231, %v3230
  %v3333 = vpack.c.bf16 %v3233, %v3232
  %v3334 = vpack.c.bf16 %v3235, %v3234
  %v3335 = vpack.c.bf16 %v3237, %v3236
  %v3336 = vpack.c.bf16 %v3239, %v3238
  %v3337 = vpack.c.bf16 %v3241, %v3240
  %v3338 = vpack.c.bf16 %v3243, %v3242
  %v3339 = vpack.c.bf16 %v3245, %v3244
  %v3340 = vpack.c.bf16 %v3247, %v3246
  %v3341 = vpack.c.bf16 %v3249, %v3248
  %v3342 = vpack.c.bf16 %v3251, %v3250
  %v3343 = vpack.c.bf16 %v3253, %v3252
  %v3344 = vpack.c.bf16 %v3255, %v3254
  %v3345 = vpack.c.bf16 %v3257, %v3256
  %v3346 = vpack.c.bf16 %v3259, %v3258
  %v3347 = vpack.c.bf16 %v3261, %v3260
  %v3348 = vpack.c.bf16 %v3263, %v3262
  %v3349 = vpack.c.bf16 %v3265, %v3264
  %v3350 = vpack.c.bf16 %v3267, %v3266
  %v3351 = vpack.c.bf16 %v3269, %v3268
  %v3352 = vpack.c.bf16 %v3271, %v3270
  %v3353 = vpack.c.bf16 %v3273, %v3272
  %v3354 = vpack.c.bf16 %v3275, %v3274
  %v3355 = vpack.c.bf16 %v3277, %v3276
  %v3356 = vpack.c.bf16 %v3279, %v3278
  %v3357 = vpack.c.bf16 %v3281, %v3280
  %v3358 = vpack.c.bf16 %v3283, %v3282
  %v3359 = vpack.c.bf16 %v3285, %v3284
  %v3360 = vpack.c.bf16 %v3287, %v3286
  %v3361 = vpack.c.bf16 %v3289, %v3288
  %v3362 = vpack.c.bf16 %v3291, %v3290
  %v3363 = vpack.c.bf16 %v3293, %v3292
  %v3364 = vpack.c.bf16 %v3295, %v3294
  %v3365 = vpack.c.bf16 %v3297, %v3296
  %v3366 = vpack.c.bf16 %v3299, %v3298
  %v3367 = vpack.c.bf16 %v3301, %v3300
  %v3368 = vpack.c.bf16 %v3303, %v3302
  %v3369 = vpack.c.bf16 %v3305, %v3304
  %v3372 = vsel %vm1472, %v3306, 4286644096
  %v3375 = vsel %vm1472, %v3307, 4286644096
  %v3377 = vmax.bf16 %v3372, %v3375
  %v3379 = vsel %vm1472, %v3308, 4286644096
  %v3381 = vmax.bf16 %v3377, %v3379
  %v3383 = vsel %vm1472, %v3309, 4286644096
  %v3385 = vmax.bf16 %v3381, %v3383
  %v3386 = vunpack.i.l.bf16 %v3385
  %v3387 = vunpack.i.h.bf16 %v3385
  %v3388 = vmax.f32 %v3386, %v3387
  %v3389 = vrot.slane %v3388, 4
  %v3390 = vmax.f32 %v3388, %v3389
  %v3391 = vrot.slane %v3390, 2
  %v3392 = vmax.f32 %v3390, %v3391
  %v3393 = vrot.slane %v3392, 1
  %v3394 = vmax.f32 %v3392, %v3393
  %v3395 = vpack.i.bf16 %v3394, %v3394
  %v3397 = vsel %vm1472, %v3310, 4286644096
  %v3400 = vsel %vm1472, %v3311, 4286644096
  %v3402 = vmax.bf16 %v3397, %v3400
  %v3404 = vsel %vm1472, %v3312, 4286644096
  %v3406 = vmax.bf16 %v3402, %v3404
  %v3408 = vsel %vm1472, %v3313, 4286644096
  %v3410 = vmax.bf16 %v3406, %v3408
  %v3411 = vunpack.i.l.bf16 %v3410
  %v3412 = vunpack.i.h.bf16 %v3410
  %v3413 = vmax.f32 %v3411, %v3412
  %v3414 = vrot.slane %v3413, 4
  %v3415 = vmax.f32 %v3413, %v3414
  %v3416 = vrot.slane %v3415, 2
  %v3417 = vmax.f32 %v3415, %v3416
  %v3418 = vrot.slane %v3417, 1
  %v3419 = vmax.f32 %v3417, %v3418
  %v3420 = vpack.i.bf16 %v3419, %v3419
  %v3422 = vsel %vm1472, %v3314, 4286644096
  %v3425 = vsel %vm1472, %v3315, 4286644096
  %v3427 = vmax.bf16 %v3422, %v3425
  %v3429 = vsel %vm1472, %v3316, 4286644096
  %v3431 = vmax.bf16 %v3427, %v3429
  %v3433 = vsel %vm1472, %v3317, 4286644096
  %v3435 = vmax.bf16 %v3431, %v3433
  %v3436 = vunpack.i.l.bf16 %v3435
  %v3437 = vunpack.i.h.bf16 %v3435
  %v3438 = vmax.f32 %v3436, %v3437
  %v3439 = vrot.slane %v3438, 4
  %v3440 = vmax.f32 %v3438, %v3439
  %v3441 = vrot.slane %v3440, 2
  %v3442 = vmax.f32 %v3440, %v3441
  %v3443 = vrot.slane %v3442, 1
  %v3444 = vmax.f32 %v3442, %v3443
  %v3445 = vpack.i.bf16 %v3444, %v3444
  %v3447 = vsel %vm1472, %v3318, 4286644096
  %v3450 = vsel %vm1472, %v3319, 4286644096
  %v3452 = vmax.bf16 %v3447, %v3450
  %v3454 = vsel %vm1472, %v3320, 4286644096
  %v3456 = vmax.bf16 %v3452, %v3454
  %v3458 = vsel %vm1472, %v3321, 4286644096
  %v3460 = vmax.bf16 %v3456, %v3458
  %v3461 = vunpack.i.l.bf16 %v3460
  %v3462 = vunpack.i.h.bf16 %v3460
  %v3463 = vmax.f32 %v3461, %v3462
  %v3464 = vrot.slane %v3463, 4
  %v3465 = vmax.f32 %v3463, %v3464
  %v3466 = vrot.slane %v3465, 2
  %v3467 = vmax.f32 %v3465, %v3466
  %v3468 = vrot.slane %v3467, 1
  %v3469 = vmax.f32 %v3467, %v3468
  %v3470 = vpack.i.bf16 %v3469, %v3469
  %v3472 = vsel %vm1472, %v3322, 4286644096
  %v3475 = vsel %vm1472, %v3323, 4286644096
  %v3477 = vmax.bf16 %v3472, %v3475
  %v3479 = vsel %vm1472, %v3324, 4286644096
  %v3481 = vmax.bf16 %v3477, %v3479
  %v3483 = vsel %vm1472, %v3325, 4286644096
  %v3485 = vmax.bf16 %v3481, %v3483
  %v3486 = vunpack.i.l.bf16 %v3485
  %v3487 = vunpack.i.h.bf16 %v3485
  %v3488 = vmax.f32 %v3486, %v3487
  %v3489 = vrot.slane %v3488, 4
  %v3490 = vmax.f32 %v3488, %v3489
  %v3491 = vrot.slane %v3490, 2
  %v3492 = vmax.f32 %v3490, %v3491
  %v3493 = vrot.slane %v3492, 1
  %v3494 = vmax.f32 %v3492, %v3493
  %v3495 = vpack.i.bf16 %v3494, %v3494
  %v3497 = vsel %vm1472, %v3326, 4286644096
  %v3500 = vsel %vm1472, %v3327, 4286644096
  %v3502 = vmax.bf16 %v3497, %v3500
  %v3504 = vsel %vm1472, %v3328, 4286644096
  %v3506 = vmax.bf16 %v3502, %v3504
  %v3508 = vsel %vm1472, %v3329, 4286644096
  %v3510 = vmax.bf16 %v3506, %v3508
  %v3511 = vunpack.i.l.bf16 %v3510
  %v3512 = vunpack.i.h.bf16 %v3510
  %v3513 = vmax.f32 %v3511, %v3512
  %v3514 = vrot.slane %v3513, 4
  %v3515 = vmax.f32 %v3513, %v3514
  %v3516 = vrot.slane %v3515, 2
  %v3517 = vmax.f32 %v3515, %v3516
  %v3518 = vrot.slane %v3517, 1
  %v3519 = vmax.f32 %v3517, %v3518
  %v3520 = vpack.i.bf16 %v3519, %v3519
  %v3522 = vsel %vm1472, %v3330, 4286644096
  %v3525 = vsel %vm1472, %v3331, 4286644096
  %v3527 = vmax.bf16 %v3522, %v3525
  %v3529 = vsel %vm1472, %v3332, 4286644096
  %v3531 = vmax.bf16 %v3527, %v3529
  %v3533 = vsel %vm1472, %v3333, 4286644096
  %v3535 = vmax.bf16 %v3531, %v3533
  %v3536 = vunpack.i.l.bf16 %v3535
  %v3537 = vunpack.i.h.bf16 %v3535
  %v3538 = vmax.f32 %v3536, %v3537
  %v3539 = vrot.slane %v3538, 4
  %v3540 = vmax.f32 %v3538, %v3539
  %v3541 = vrot.slane %v3540, 2
  %v3542 = vmax.f32 %v3540, %v3541
  %v3543 = vrot.slane %v3542, 1
  %v3544 = vmax.f32 %v3542, %v3543
  %v3545 = vpack.i.bf16 %v3544, %v3544
  %v3547 = vsel %vm1472, %v3334, 4286644096
  %v3550 = vsel %vm1472, %v3335, 4286644096
  %v3552 = vmax.bf16 %v3547, %v3550
  %v3554 = vsel %vm1472, %v3336, 4286644096
  %v3556 = vmax.bf16 %v3552, %v3554
  %v3558 = vsel %vm1472, %v3337, 4286644096
  %v3560 = vmax.bf16 %v3556, %v3558
  %v3561 = vunpack.i.l.bf16 %v3560
  %v3562 = vunpack.i.h.bf16 %v3560
  %v3563 = vmax.f32 %v3561, %v3562
  %v3564 = vrot.slane %v3563, 4
  %v3565 = vmax.f32 %v3563, %v3564
  %v3566 = vrot.slane %v3565, 2
  %v3567 = vmax.f32 %v3565, %v3566
  %v3568 = vrot.slane %v3567, 1
  %v3569 = vmax.f32 %v3567, %v3568
  %v3570 = vpack.i.bf16 %v3569, %v3569
  %v3572 = vsel %vm1472, %v3338, 4286644096
  %v3575 = vsel %vm1472, %v3339, 4286644096
  %v3577 = vmax.bf16 %v3572, %v3575
  %v3579 = vsel %vm1472, %v3340, 4286644096
  %v3581 = vmax.bf16 %v3577, %v3579
  %v3583 = vsel %vm1472, %v3341, 4286644096
  %v3585 = vmax.bf16 %v3581, %v3583
  %v3586 = vunpack.i.l.bf16 %v3585
  %v3587 = vunpack.i.h.bf16 %v3585
  %v3588 = vmax.f32 %v3586, %v3587
  %v3589 = vrot.slane %v3588, 4
  %v3590 = vmax.f32 %v3588, %v3589
  %v3591 = vrot.slane %v3590, 2
  %v3592 = vmax.f32 %v3590, %v3591
  %v3593 = vrot.slane %v3592, 1
  %v3594 = vmax.f32 %v3592, %v3593
  %v3595 = vpack.i.bf16 %v3594, %v3594
  %v3597 = vsel %vm1472, %v3342, 4286644096
  %v3600 = vsel %vm1472, %v3343, 4286644096
  %v3602 = vmax.bf16 %v3597, %v3600
  %v3604 = vsel %vm1472, %v3344, 4286644096
  %v3606 = vmax.bf16 %v3602, %v3604
  %v3608 = vsel %vm1472, %v3345, 4286644096
  %v3610 = vmax.bf16 %v3606, %v3608
  %v3611 = vunpack.i.l.bf16 %v3610
  %v3612 = vunpack.i.h.bf16 %v3610
  %v3613 = vmax.f32 %v3611, %v3612
  %v3614 = vrot.slane %v3613, 4
  %v3615 = vmax.f32 %v3613, %v3614
  %v3616 = vrot.slane %v3615, 2
  %v3617 = vmax.f32 %v3615, %v3616
  %v3618 = vrot.slane %v3617, 1
  %v3619 = vmax.f32 %v3617, %v3618
  %v3620 = vpack.i.bf16 %v3619, %v3619
  %v3622 = vsel %vm1472, %v3346, 4286644096
  %v3625 = vsel %vm1472, %v3347, 4286644096
  %v3627 = vmax.bf16 %v3622, %v3625
  %v3629 = vsel %vm1472, %v3348, 4286644096
  %v3631 = vmax.bf16 %v3627, %v3629
  %v3633 = vsel %vm1472, %v3349, 4286644096
  %v3635 = vmax.bf16 %v3631, %v3633
  %v3636 = vunpack.i.l.bf16 %v3635
  %v3637 = vunpack.i.h.bf16 %v3635
  %v3638 = vmax.f32 %v3636, %v3637
  %v3639 = vrot.slane %v3638, 4
  %v3640 = vmax.f32 %v3638, %v3639
  %v3641 = vrot.slane %v3640, 2
  %v3642 = vmax.f32 %v3640, %v3641
  %v3643 = vrot.slane %v3642, 1
  %v3644 = vmax.f32 %v3642, %v3643
  %v3645 = vpack.i.bf16 %v3644, %v3644
  %v3647 = vsel %vm1472, %v3350, 4286644096
  %v3650 = vsel %vm1472, %v3351, 4286644096
  %v3652 = vmax.bf16 %v3647, %v3650
  %v3654 = vsel %vm1472, %v3352, 4286644096
  %v3656 = vmax.bf16 %v3652, %v3654
  %v3658 = vsel %vm1472, %v3353, 4286644096
  %v3660 = vmax.bf16 %v3656, %v3658
  %v3661 = vunpack.i.l.bf16 %v3660
  %v3662 = vunpack.i.h.bf16 %v3660
  %v3663 = vmax.f32 %v3661, %v3662
  %v3664 = vrot.slane %v3663, 4
  %v3665 = vmax.f32 %v3663, %v3664
  %v3666 = vrot.slane %v3665, 2
  %v3667 = vmax.f32 %v3665, %v3666
  %v3668 = vrot.slane %v3667, 1
  %v3669 = vmax.f32 %v3667, %v3668
  %v3670 = vpack.i.bf16 %v3669, %v3669
  %v3672 = vsel %vm1472, %v3354, 4286644096
  %v3675 = vsel %vm1472, %v3355, 4286644096
  %v3677 = vmax.bf16 %v3672, %v3675
  %v3679 = vsel %vm1472, %v3356, 4286644096
  %v3681 = vmax.bf16 %v3677, %v3679
  %v3683 = vsel %vm1472, %v3357, 4286644096
  %v3685 = vmax.bf16 %v3681, %v3683
  %v3686 = vunpack.i.l.bf16 %v3685
  %v3687 = vunpack.i.h.bf16 %v3685
  %v3688 = vmax.f32 %v3686, %v3687
  %v3689 = vrot.slane %v3688, 4
  %v3690 = vmax.f32 %v3688, %v3689
  %v3691 = vrot.slane %v3690, 2
  %v3692 = vmax.f32 %v3690, %v3691
  %v3693 = vrot.slane %v3692, 1
  %v3694 = vmax.f32 %v3692, %v3693
  %v3695 = vpack.i.bf16 %v3694, %v3694
  %v3697 = vsel %vm1472, %v3358, 4286644096
  %v3700 = vsel %vm1472, %v3359, 4286644096
  %v3702 = vmax.bf16 %v3697, %v3700
  %v3704 = vsel %vm1472, %v3360, 4286644096
  %v3706 = vmax.bf16 %v3702, %v3704
  %v3708 = vsel %vm1472, %v3361, 4286644096
  %v3710 = vmax.bf16 %v3706, %v3708
  %v3711 = vunpack.i.l.bf16 %v3710
  %v3712 = vunpack.i.h.bf16 %v3710
  %v3713 = vmax.f32 %v3711, %v3712
  %v3714 = vrot.slane %v3713, 4
  %v3715 = vmax.f32 %v3713, %v3714
  %v3716 = vrot.slane %v3715, 2
  %v3717 = vmax.f32 %v3715, %v3716
  %v3718 = vrot.slane %v3717, 1
  %v3719 = vmax.f32 %v3717, %v3718
  %v3720 = vpack.i.bf16 %v3719, %v3719
  %v3722 = vsel %vm1472, %v3362, 4286644096
  %v3725 = vsel %vm1472, %v3363, 4286644096
  %v3727 = vmax.bf16 %v3722, %v3725
  %v3729 = vsel %vm1472, %v3364, 4286644096
  %v3731 = vmax.bf16 %v3727, %v3729
  %v3733 = vsel %vm1472, %v3365, 4286644096
  %v3735 = vmax.bf16 %v3731, %v3733
  %v3736 = vunpack.i.l.bf16 %v3735
  %v3737 = vunpack.i.h.bf16 %v3735
  %v3738 = vmax.f32 %v3736, %v3737
  %v3739 = vrot.slane %v3738, 4
  %v3740 = vmax.f32 %v3738, %v3739
  %v3741 = vrot.slane %v3740, 2
  %v3742 = vmax.f32 %v3740, %v3741
  %v3743 = vrot.slane %v3742, 1
  %v3744 = vmax.f32 %v3742, %v3743
  %v3745 = vpack.i.bf16 %v3744, %v3744
  %v3747 = vsel %vm1472, %v3366, 4286644096
  %v3750 = vsel %vm1472, %v3367, 4286644096
  %v3752 = vmax.bf16 %v3747, %v3750
  %v3754 = vsel %vm1472, %v3368, 4286644096
  %v3756 = vmax.bf16 %v3752, %v3754
  %v3758 = vsel %vm1472, %v3369, 4286644096
  %v3760 = vmax.bf16 %v3756, %v3758
  %v3761 = vunpack.i.l.bf16 %v3760
  %v3762 = vunpack.i.h.bf16 %v3760
  %v3763 = vmax.f32 %v3761, %v3762
  %v3764 = vrot.slane %v3763, 4
  %v3765 = vmax.f32 %v3763, %v3764
  %v3766 = vrot.slane %v3765, 2
  %v3767 = vmax.f32 %v3765, %v3766
  %v3768 = vrot.slane %v3767, 1
  %v3769 = vmax.f32 %v3767, %v3768
  %v3770 = vpack.i.bf16 %v3769, %v3769
  %v3771 = vld [vmem:[%s7] sm:$0xf]
  %v3772 = vld [vmem:[%s7 + $0x4] sm:$0xf]
  %v3773 = vld [vmem:[%s7 + $0x8] sm:$0xf]
  %v3774 = vld [vmem:[%s7 + $0xc] sm:$0xf]
  %v3775 = vld [vmem:[%s7 + $0x10] sm:$0xf]
  %v3776 = vld [vmem:[%s7 + $0x14] sm:$0xf]
  %v3777 = vld [vmem:[%s7 + $0x18] sm:$0xf]
  %v3778 = vld [vmem:[%s7 + $0x1c] sm:$0xf]
  %v3779 = vld [vmem:[%s9] sm:$0x1]
  %v3781 = vlaneseq
  %v3782 = vshrl.u32 %v3781, 7
  %v3783 = vsub.s32 0, %v3782
  %v3784 = vrot.slane %v3779, %v3783
  %v3794 = vunpack.c.l.b16 %v3771
  %v3795 = vunpack.c.l.b16 %v3772
  %v3796 = vunpack.c.l.b16 %v3773
  %v3797 = vunpack.c.l.b16 %v3774
  %v3798 = vunpack.c.l.b16 %v3775
  %v3799 = vunpack.c.l.b16 %v3776
  %v3800 = vunpack.c.l.b16 %v3777
  %v3801 = vunpack.c.l.b16 %v3778
  %v3802 = vpack.c.b16 %v3795, %v3794
  %v3803 = vpack.c.b16 %v3797, %v3796
  %v3804 = vpack.c.b16 %v3799, %v3798
  %v3805 = vpack.c.b16 %v3801, %v3800
  %v3810 = vsel %vm1472, %v3306, 0
  %v3812 = vsel %vm1472, %v3307, 0
  %v3814 = vsel %vm1472, %v3308, 0
  %v3816 = vsel %vm1472, %v3309, 0
  %v3818 = vsel %vm1472, %v3310, 0
  %v3820 = vsel %vm1472, %v3311, 0
  %v3822 = vsel %vm1472, %v3312, 0
  %v3824 = vsel %vm1472, %v3313, 0
  %v3826 = vsel %vm1472, %v3314, 0
  %v3828 = vsel %vm1472, %v3315, 0
  %v3830 = vsel %vm1472, %v3316, 0
  %v3832 = vsel %vm1472, %v3317, 0
  %v3834 = vsel %vm1472, %v3318, 0
  %v3836 = vsel %vm1472, %v3319, 0
  %v3838 = vsel %vm1472, %v3320, 0
  %v3840 = vsel %vm1472, %v3321, 0
  %v3842 = vsel %vm1472, %v3322, 0
  %v3844 = vsel %vm1472, %v3323, 0
  %v3846 = vsel %vm1472, %v3324, 0
  %v3848 = vsel %vm1472, %v3325, 0
  %v3850 = vsel %vm1472, %v3326, 0
  %v3852 = vsel %vm1472, %v3327, 0
  %v3854 = vsel %vm1472, %v3328, 0
  %v3856 = vsel %vm1472, %v3329, 0
  %v3858 = vsel %vm1472, %v3330, 0
  %v3860 = vsel %vm1472, %v3331, 0
  %v3862 = vsel %vm1472, %v3332, 0
  %v3864 = vsel %vm1472, %v3333, 0
  %v3866 = vsel %vm1472, %v3334, 0
  %v3868 = vsel %vm1472, %v3335, 0
  %v3870 = vsel %vm1472, %v3336, 0
  %v3872 = vsel %vm1472, %v3337, 0
  %v3874 = vsel %vm1472, %v3338, 0
  %v3876 = vsel %vm1472, %v3339, 0
  %v3878 = vsel %vm1472, %v3340, 0
  %v3880 = vsel %vm1472, %v3341, 0
  %v3882 = vsel %vm1472, %v3342, 0
  %v3884 = vsel %vm1472, %v3343, 0
  %v3886 = vsel %vm1472, %v3344, 0
  %v3888 = vsel %vm1472, %v3345, 0
  %v3890 = vsel %vm1472, %v3346, 0
  %v3892 = vsel %vm1472, %v3347, 0
  %v3894 = vsel %vm1472, %v3348, 0
  %v3896 = vsel %vm1472, %v3349, 0
  %v3898 = vsel %vm1472, %v3350, 0
  %v3900 = vsel %vm1472, %v3351, 0
  %v3902 = vsel %vm1472, %v3352, 0
  %v3904 = vsel %vm1472, %v3353, 0
  %v3906 = vsel %vm1472, %v3354, 0
  %v3908 = vsel %vm1472, %v3355, 0
  %v3910 = vsel %vm1472, %v3356, 0
  %v3912 = vsel %vm1472, %v3357, 0
  %v3914 = vsel %vm1472, %v3358, 0
  %v3916 = vsel %vm1472, %v3359, 0
  %v3918 = vsel %vm1472, %v3360, 0
  %v3920 = vsel %vm1472, %v3361, 0
  %v3922 = vsel %vm1472, %v3362, 0
  %v3924 = vsel %vm1472, %v3363, 0
  %v3926 = vsel %vm1472, %v3364, 0
  %v3928 = vsel %vm1472, %v3365, 0
  %v3930 = vsel %vm1472, %v3366, 0
  %v3932 = vsel %vm1472, %v3367, 0
  %v3934 = vsel %vm1472, %v3368, 0
  %v3936 = vsel %vm1472, %v3369, 0
  %3938 = vmatprep.subr.bf16.mxu0 0
  %3939 = vmatpush1.bf16.msra.mxu0 %v3802
  %3940 = vmatprep.subr.bf16.mxu0 0
  %3941 = vmatpush1.bf16.msra.mxu0 %v3803
  %3942 = vmatprep.subr.bf16.mxu0 0
  %3943 = vmatpush1.bf16.msra.mxu0 %v3804
  %3944 = vmatprep.subr.bf16.mxu0 0
  %3945 = vmatpush1.bf16.msra.mxu0 %v3805
  %3946 = vmatprep.subr.bf16.mxu0 0
  %3947 = vmatpush1.bf16.msra.mxu0 0
  %3948 = vmatprep.subr.bf16.mxu0 0
  %3949 = vmatpush1.bf16.msra.mxu0 0
  %3950 = vmatprep.subr.bf16.mxu0 0
  %3951 = vmatpush1.bf16.msra.mxu0 0
  %3952 = vmatprep.subr.bf16.mxu0 0
  %3953 = vmatpush1.bf16.msra.mxu0 0
  %3954 = vmatprep.subr.bf16.mxu0 0
  %3955 = vmatpush1.bf16.msra.mxu0 0
  %3956 = vmatprep.subr.bf16.mxu0 0
  %3957 = vmatpush1.bf16.msra.mxu0 0
  %3958 = vmatprep.subr.bf16.mxu0 0
  %3959 = vmatpush1.bf16.msra.mxu0 0
  %3960 = vmatprep.subr.bf16.mxu0 0
  %3961 = vmatpush1.bf16.msra.mxu0 0
  %3962 = vmatprep.subr.bf16.mxu0 0
  %3963 = vmatpush1.bf16.msra.mxu0 0
  %3964 = vmatprep.subr.bf16.mxu0 0
  %3965 = vmatpush1.bf16.msra.mxu0 0
  %3966 = vmatprep.subr.bf16.mxu0 0
  %3967 = vmatpush1.bf16.msra.mxu0 0
  %3968 = vmatprep.subr.bf16.mxu0 0
  %3969 = vmatpush1.bf16.msra.mxu0 0
  %3970 = vmatprep.mubr.bf16.mxu0 0
  %3971 = vmatmul.mubr.bf16.gmra.mrb[0].mxu0 %v3810
  %v3972 = vpop.f32.mrb[0].mxu0
  %v3973 = vadd.f32 %v3784, %v3972
  %v3974 = vpop.f32.mrb[0].mxu0
  %v3975 = vpop.f32.mrb[0].mxu0
  %v3976 = vadd.f32 %v3784, %v3975
  %v3977 = vpop.f32.mrb[0].mxu0
  %3978 = vmatprep.mubr.bf16.mxu0 0
  %3979 = vmatmul.mubr.bf16.gmra.mrb[0].mxu0 %v3812
  %v3980 = vpop.f32.mrb[0].mxu0
  %v3981 = vadd.f32 %v3784, %v3980
  %v3982 = vpop.f32.mrb[0].mxu0
  %v3983 = vpop.f32.mrb[0].mxu0
  %v3984 = vadd.f32 %v3784, %v3983
  %v3985 = vpop.f32.mrb[0].mxu0
  %3986 = vmatprep.mubr.bf16.mxu0 0
  %3987 = vmatmul.mubr.bf16.gmra.mrb[0].mxu0 %v3814
  %v3988 = vpop.f32.mrb[0].mxu0
  %v3989 = vadd.f32 %v3784, %v3988
  %v3990 = vpop.f32.mrb[0].mxu0
  %v3991 = vpop.f32.mrb[0].mxu0
  %v3992 = vadd.f32 %v3784, %v3991
  %v3993 = vpop.f32.mrb[0].mxu0
  %3994 = vmatprep.mubr.bf16.mxu0 0
  %3995 = vmatmul.mubr.bf16.gmra.mrb[0].mxu0 %v3816
  %v3996 = vpop.f32.mrb[0].mxu0
  %v3997 = vadd.f32 %v3784, %v3996
  %v3998 = vpop.f32.mrb[0].mxu0
  %v3999 = vpop.f32.mrb[0].mxu0
  %v4000 = vadd.f32 %v3784, %v3999
  %v4001 = vpop.f32.mrb[0].mxu0
  %4002 = vmatprep.mubr.bf16.mxu0 0
  %4003 = vmatmul.mubr.bf16.gmra.mrb[0].mxu0 %v3818
  %v4004 = vpop.f32.mrb[0].mxu0
  %v4005 = vadd.f32 %v3784, %v4004
  %v4006 = vpop.f32.mrb[0].mxu0
  %v4007 = vpop.f32.mrb[0].mxu0
  %v4008 = vadd.f32 %v3784, %v4007
  %v4009 = vpop.f32.mrb[0].mxu0
  %4010 = vmatprep.mubr.bf16.mxu0 0
  %4011 = vmatmul.mubr.bf16.gmra.mrb[0].mxu0 %v3820
  %v4012 = vpop.f32.mrb[0].mxu0
  %v4013 = vadd.f32 %v3784, %v4012
  %v4014 = vpop.f32.mrb[0].mxu0
  %v4015 = vpop.f32.mrb[0].mxu0
  %v4016 = vadd.f32 %v3784, %v4015
  %v4017 = vpop.f32.mrb[0].mxu0
  %4018 = vmatprep.mubr.bf16.mxu0 0
  %4019 = vmatmul.mubr.bf16.gmra.mrb[0].mxu0 %v3822
  %v4020 = vpop.f32.mrb[0].mxu0
  %v4021 = vadd.f32 %v3784, %v4020
  %v4022 = vpop.f32.mrb[0].mxu0
  %v4023 = vpop.f32.mrb[0].mxu0
  %v4024 = vadd.f32 %v3784, %v4023
  %v4025 = vpop.f32.mrb[0].mxu0
  %4026 = vmatprep.mubr.bf16.mxu0 0
  %4027 = vmatmul.mubr.bf16.gmra.mrb[0].mxu0 %v3824
  %v4028 = vpop.f32.mrb[0].mxu0
  %v4029 = vadd.f32 %v3784, %v4028
  %v4030 = vpop.f32.mrb[0].mxu0
  %v4031 = vpop.f32.mrb[0].mxu0
  %v4032 = vadd.f32 %v3784, %v4031
  %v4033 = vpop.f32.mrb[0].mxu0
  %4034 = vmatprep.mubr.bf16.mxu0 0
  %4035 = vmatmul.mubr.bf16.gmra.mrb[0].mxu0 %v3826
  %v4036 = vpop.f32.mrb[0].mxu0
  %v4037 = vadd.f32 %v3784, %v4036
  %v4038 = vpop.f32.mrb[0].mxu0
  %v4039 = vpop.f32.mrb[0].mxu0
  %v4040 = vadd.f32 %v3784, %v4039
  %v4041 = vpop.f32.mrb[0].mxu0
  %4042 = vmatprep.mubr.bf16.mxu0 0
  %4043 = vmatmul.mubr.bf16.gmra.mrb[0].mxu0 %v3828
  %v4044 = vpop.f32.mrb[0].mxu0
  %v4045 = vadd.f32 %v3784, %v4044
  %v4046 = vpop.f32.mrb[0].mxu0
  %v4047 = vpop.f32.mrb[0].mxu0
  %v4048 = vadd.f32 %v3784, %v4047
  %v4049 = vpop.f32.mrb[0].mxu0
  %4050 = vmatprep.mubr.bf16.mxu0 0
  %4051 = vmatmul.mubr.bf16.gmra.mrb[0].mxu0 %v3830
  %v4052 = vpop.f32.mrb[0].mxu0
  %v4053 = vadd.f32 %v3784, %v4052
  %v4054 = vpop.f32.mrb[0].mxu0
  %v4055 = vpop.f32.mrb[0].mxu0
  %v4056 = vadd.f32 %v3784, %v4055
  %v4057 = vpop.f32.mrb[0].mxu0
  %4058 = vmatprep.mubr.bf16.mxu0 0
  %4059 = vmatmul.mubr.bf16.gmra.mrb[0].mxu0 %v3832
  %v4060 = vpop.f32.mrb[0].mxu0
  %v4061 = vadd.f32 %v3784, %v4060
  %v4062 = vpop.f32.mrb[0].mxu0
  %v4063 = vpop.f32.mrb[0].mxu0
  %v4064 = vadd.f32 %v3784, %v4063
  %v4065 = vpop.f32.mrb[0].mxu0
  %4066 = vmatprep.mubr.bf16.mxu0 0
  %4067 = vmatmul.mubr.bf16.gmra.mrb[0].mxu0 %v3834
  %v4068 = vpop.f32.mrb[0].mxu0
  %v4069 = vadd.f32 %v3784, %v4068
  %v4070 = vpop.f32.mrb[0].mxu0
  %v4071 = vpop.f32.mrb[0].mxu0
  %v4072 = vadd.f32 %v3784, %v4071
  %v4073 = vpop.f32.mrb[0].mxu0
  %4074 = vmatprep.mubr.bf16.mxu0 0
  %4075 = vmatmul.mubr.bf16.gmra.mrb[0].mxu0 %v3836
  %v4076 = vpop.f32.mrb[0].mxu0
  %v4077 = vadd.f32 %v3784, %v4076
  %v4078 = vpop.f32.mrb[0].mxu0
  %v4079 = vpop.f32.mrb[0].mxu0
  %v4080 = vadd.f32 %v3784, %v4079
  %v4081 = vpop.f32.mrb[0].mxu0
  %4082 = vmatprep.mubr.bf16.mxu0 0
  %4083 = vmatmul.mubr.bf16.gmra.mrb[0].mxu0 %v3838
  %v4084 = vpop.f32.mrb[0].mxu0
  %v4085 = vadd.f32 %v3784, %v4084
  %v4086 = vpop.f32.mrb[0].mxu0
  %v4087 = vpop.f32.mrb[0].mxu0
  %v4088 = vadd.f32 %v3784, %v4087
  %v4089 = vpop.f32.mrb[0].mxu0
  %4090 = vmatprep.mubr.bf16.mxu0 0
  %4091 = vmatmul.mubr.bf16.gmra.mrb[0].mxu0 %v3840
  %v4092 = vpop.f32.mrb[0].mxu0
  %v4093 = vadd.f32 %v3784, %v4092
  %v4094 = vpop.f32.mrb[0].mxu0
  %v4095 = vpop.f32.mrb[0].mxu0
  %v4096 = vadd.f32 %v3784, %v4095
  %v4097 = vpop.f32.mrb[0].mxu0
  %4098 = vmatprep.mubr.bf16.mxu0 0
  %4099 = vmatmul.mubr.bf16.gmra.mrb[0].mxu0 %v3842
  %v4100 = vpop.f32.mrb[0].mxu0
  %v4101 = vadd.f32 %v3784, %v4100
  %v4102 = vpop.f32.mrb[0].mxu0
  %v4103 = vpop.f32.mrb[0].mxu0
  %v4104 = vadd.f32 %v3784, %v4103
  %v4105 = vpop.f32.mrb[0].mxu0
  %4106 = vmatprep.mubr.bf16.mxu0 0
  %4107 = vmatmul.mubr.bf16.gmra.mrb[0].mxu0 %v3844
  %v4108 = vpop.f32.mrb[0].mxu0
  %v4109 = vadd.f32 %v3784, %v4108
  %v4110 = vpop.f32.mrb[0].mxu0
  %v4111 = vpop.f32.mrb[0].mxu0
  %v4112 = vadd.f32 %v3784, %v4111
  %v4113 = vpop.f32.mrb[0].mxu0
  %4114 = vmatprep.mubr.bf16.mxu0 0
  %4115 = vmatmul.mubr.bf16.gmra.mrb[0].mxu0 %v3846
  %v4116 = vpop.f32.mrb[0].mxu0
  %v4117 = vadd.f32 %v3784, %v4116
  %v4118 = vpop.f32.mrb[0].mxu0
  %v4119 = vpop.f32.mrb[0].mxu0
  %v4120 = vadd.f32 %v3784, %v4119
  %v4121 = vpop.f32.mrb[0].mxu0
  %4122 = vmatprep.mubr.bf16.mxu0 0
  %4123 = vmatmul.mubr.bf16.gmra.mrb[0].mxu0 %v3848
  %v4124 = vpop.f32.mrb[0].mxu0
  %v4125 = vadd.f32 %v3784, %v4124
  %v4126 = vpop.f32.mrb[0].mxu0
  %v4127 = vpop.f32.mrb[0].mxu0
  %v4128 = vadd.f32 %v3784, %v4127
  %v4129 = vpop.f32.mrb[0].mxu0
  %4130 = vmatprep.mubr.bf16.mxu0 0
  %4131 = vmatmul.mubr.bf16.gmra.mrb[0].mxu0 %v3850
  %v4132 = vpop.f32.mrb[0].mxu0
  %v4133 = vadd.f32 %v3784, %v4132
  %v4134 = vpop.f32.mrb[0].mxu0
  %v4135 = vpop.f32.mrb[0].mxu0
  %v4136 = vadd.f32 %v3784, %v4135
  %v4137 = vpop.f32.mrb[0].mxu0
  %4138 = vmatprep.mubr.bf16.mxu0 0
  %4139 = vmatmul.mubr.bf16.gmra.mrb[0].mxu0 %v3852
  %v4140 = vpop.f32.mrb[0].mxu0
  %v4141 = vadd.f32 %v3784, %v4140
  %v4142 = vpop.f32.mrb[0].mxu0
  %v4143 = vpop.f32.mrb[0].mxu0
  %v4144 = vadd.f32 %v3784, %v4143
  %v4145 = vpop.f32.mrb[0].mxu0
  %4146 = vmatprep.mubr.bf16.mxu0 0
  %4147 = vmatmul.mubr.bf16.gmra.mrb[0].mxu0 %v3854
  %v4148 = vpop.f32.mrb[0].mxu0
  %v4149 = vadd.f32 %v3784, %v4148
  %v4150 = vpop.f32.mrb[0].mxu0
  %v4151 = vpop.f32.mrb[0].mxu0
  %v4152 = vadd.f32 %v3784, %v4151
  %v4153 = vpop.f32.mrb[0].mxu0
  %4154 = vmatprep.mubr.bf16.mxu0 0
  %4155 = vmatmul.mubr.bf16.gmra.mrb[0].mxu0 %v3856
  %v4156 = vpop.f32.mrb[0].mxu0
  %v4157 = vadd.f32 %v3784, %v4156
  %v4158 = vpop.f32.mrb[0].mxu0
  %v4159 = vpop.f32.mrb[0].mxu0
  %v4160 = vadd.f32 %v3784, %v4159
  %v4161 = vpop.f32.mrb[0].mxu0
  %4162 = vmatprep.mubr.bf16.mxu0 0
  %4163 = vmatmul.mubr.bf16.gmra.mrb[0].mxu0 %v3858
  %v4164 = vpop.f32.mrb[0].mxu0
  %v4165 = vadd.f32 %v3784, %v4164
  %v4166 = vpop.f32.mrb[0].mxu0
  %v4167 = vpop.f32.mrb[0].mxu0
  %v4168 = vadd.f32 %v3784, %v4167
  %v4169 = vpop.f32.mrb[0].mxu0
  %4170 = vmatprep.mubr.bf16.mxu0 0
  %4171 = vmatmul.mubr.bf16.gmra.mrb[0].mxu0 %v3860
  %v4172 = vpop.f32.mrb[0].mxu0
  %v4173 = vadd.f32 %v3784, %v4172
  %v4174 = vpop.f32.mrb[0].mxu0
  %v4175 = vpop.f32.mrb[0].mxu0
  %v4176 = vadd.f32 %v3784, %v4175
  %v4177 = vpop.f32.mrb[0].mxu0
  %4178 = vmatprep.mubr.bf16.mxu0 0
  %4179 = vmatmul.mubr.bf16.gmra.mrb[0].mxu0 %v3862
  %v4180 = vpop.f32.mrb[0].mxu0
  %v4181 = vadd.f32 %v3784, %v4180
  %v4182 = vpop.f32.mrb[0].mxu0
  %v4183 = vpop.f32.mrb[0].mxu0
  %v4184 = vadd.f32 %v3784, %v4183
  %v4185 = vpop.f32.mrb[0].mxu0
  %4186 = vmatprep.mubr.bf16.mxu0 0
  %4187 = vmatmul.mubr.bf16.gmra.mrb[0].mxu0 %v3864
  %v4188 = vpop.f32.mrb[0].mxu0
  %v4189 = vadd.f32 %v3784, %v4188
  %v4190 = vpop.f32.mrb[0].mxu0
  %v4191 = vpop.f32.mrb[0].mxu0
  %v4192 = vadd.f32 %v3784, %v4191
  %v4193 = vpop.f32.mrb[0].mxu0
  %4194 = vmatprep.mubr.bf16.mxu0 0
  %4195 = vmatmul.mubr.bf16.gmra.mrb[0].mxu0 %v3866
  %v4196 = vpop.f32.mrb[0].mxu0
  %v4197 = vadd.f32 %v3784, %v4196
  %v4198 = vpop.f32.mrb[0].mxu0
  %v4199 = vpop.f32.mrb[0].mxu0
  %v4200 = vadd.f32 %v3784, %v4199
  %v4201 = vpop.f32.mrb[0].mxu0
  %4202 = vmatprep.mubr.bf16.mxu0 0
  %4203 = vmatmul.mubr.bf16.gmra.mrb[0].mxu0 %v3868
  %v4204 = vpop.f32.mrb[0].mxu0
  %v4205 = vadd.f32 %v3784, %v4204
  %v4206 = vpop.f32.mrb[0].mxu0
  %v4207 = vpop.f32.mrb[0].mxu0
  %v4208 = vadd.f32 %v3784, %v4207
  %v4209 = vpop.f32.mrb[0].mxu0
  %4210 = vmatprep.mubr.bf16.mxu0 0
  %4211 = vmatmul.mubr.bf16.gmra.mrb[0].mxu0 %v3870
  %v4212 = vpop.f32.mrb[0].mxu0
  %v4213 = vadd.f32 %v3784, %v4212
  %v4214 = vpop.f32.mrb[0].mxu0
  %v4215 = vpop.f32.mrb[0].mxu0
  %v4216 = vadd.f32 %v3784, %v4215
  %v4217 = vpop.f32.mrb[0].mxu0
  %4218 = vmatprep.mubr.bf16.mxu0 0
  %4219 = vmatmul.mubr.bf16.gmra.mrb[0].mxu0 %v3872
  %v4220 = vpop.f32.mrb[0].mxu0
  %v4221 = vadd.f32 %v3784, %v4220
  %v4222 = vpop.f32.mrb[0].mxu0
  %v4223 = vpop.f32.mrb[0].mxu0
  %v4224 = vadd.f32 %v3784, %v4223
  %v4225 = vpop.f32.mrb[0].mxu0
  %4226 = vmatprep.mubr.bf16.mxu0 0
  %4227 = vmatmul.mubr.bf16.gmra.mrb[0].mxu0 %v3874
  %v4228 = vpop.f32.mrb[0].mxu0
  %v4229 = vadd.f32 %v3784, %v4228
  %v4230 = vpop.f32.mrb[0].mxu0
  %v4231 = vpop.f32.mrb[0].mxu0
  %v4232 = vadd.f32 %v3784, %v4231
  %v4233 = vpop.f32.mrb[0].mxu0
  %4234 = vmatprep.mubr.bf16.mxu0 0
  %4235 = vmatmul.mubr.bf16.gmra.mrb[0].mxu0 %v3876
  %v4236 = vpop.f32.mrb[0].mxu0
  %v4237 = vadd.f32 %v3784, %v4236
  %v4238 = vpop.f32.mrb[0].mxu0
  %v4239 = vpop.f32.mrb[0].mxu0
  %v4240 = vadd.f32 %v3784, %v4239
  %v4241 = vpop.f32.mrb[0].mxu0
  %4242 = vmatprep.mubr.bf16.mxu0 0
  %4243 = vmatmul.mubr.bf16.gmra.mrb[0].mxu0 %v3878
  %v4244 = vpop.f32.mrb[0].mxu0
  %v4245 = vadd.f32 %v3784, %v4244
  %v4246 = vpop.f32.mrb[0].mxu0
  %v4247 = vpop.f32.mrb[0].mxu0
  %v4248 = vadd.f32 %v3784, %v4247
  %v4249 = vpop.f32.mrb[0].mxu0
  %4250 = vmatprep.mubr.bf16.mxu0 0
  %4251 = vmatmul.mubr.bf16.gmra.mrb[0].mxu0 %v3880
  %v4252 = vpop.f32.mrb[0].mxu0
  %v4253 = vadd.f32 %v3784, %v4252
  %v4254 = vpop.f32.mrb[0].mxu0
  %v4255 = vpop.f32.mrb[0].mxu0
  %v4256 = vadd.f32 %v3784, %v4255
  %v4257 = vpop.f32.mrb[0].mxu0
  %4258 = vmatprep.mubr.bf16.mxu0 0
  %4259 = vmatmul.mubr.bf16.gmra.mrb[0].mxu0 %v3882
  %v4260 = vpop.f32.mrb[0].mxu0
  %v4261 = vadd.f32 %v3784, %v4260
  %v4262 = vpop.f32.mrb[0].mxu0
  %v4263 = vpop.f32.mrb[0].mxu0
  %v4264 = vadd.f32 %v3784, %v4263
  %v4265 = vpop.f32.mrb[0].mxu0
  %4266 = vmatprep.mubr.bf16.mxu0 0
  %4267 = vmatmul.mubr.bf16.gmra.mrb[0].mxu0 %v3884
  %v4268 = vpop.f32.mrb[0].mxu0
  %v4269 = vadd.f32 %v3784, %v4268
  %v4270 = vpop.f32.mrb[0].mxu0
  %v4271 = vpop.f32.mrb[0].mxu0
  %v4272 = vadd.f32 %v3784, %v4271
  %v4273 = vpop.f32.mrb[0].mxu0
  %4274 = vmatprep.mubr.bf16.mxu0 0
  %4275 = vmatmul.mubr.bf16.gmra.mrb[0].mxu0 %v3886
  %v4276 = vpop.f32.mrb[0].mxu0
  %v4277 = vadd.f32 %v3784, %v4276
  %v4278 = vpop.f32.mrb[0].mxu0
  %v4279 = vpop.f32.mrb[0].mxu0
  %v4280 = vadd.f32 %v3784, %v4279
  %v4281 = vpop.f32.mrb[0].mxu0
  %4282 = vmatprep.mubr.bf16.mxu0 0
  %4283 = vmatmul.mubr.bf16.gmra.mrb[0].mxu0 %v3888
  %v4284 = vpop.f32.mrb[0].mxu0
  %v4285 = vadd.f32 %v3784, %v4284
  %v4286 = vpop.f32.mrb[0].mxu0
  %v4287 = vpop.f32.mrb[0].mxu0
  %v4288 = vadd.f32 %v3784, %v4287
  %v4289 = vpop.f32.mrb[0].mxu0
  %4290 = vmatprep.mubr.bf16.mxu0 0
  %4291 = vmatmul.mubr.bf16.gmra.mrb[0].mxu0 %v3890
  %v4292 = vpop.f32.mrb[0].mxu0
  %v4293 = vadd.f32 %v3784, %v4292
  %v4294 = vpop.f32.mrb[0].mxu0
  %v4295 = vpop.f32.mrb[0].mxu0
  %v4296 = vadd.f32 %v3784, %v4295
  %v4297 = vpop.f32.mrb[0].mxu0
  %4298 = vmatprep.mubr.bf16.mxu0 0
  %4299 = vmatmul.mubr.bf16.gmra.mrb[0].mxu0 %v3892
  %v4300 = vpop.f32.mrb[0].mxu0
  %v4301 = vadd.f32 %v3784, %v4300
  %v4302 = vpop.f32.mrb[0].mxu0
  %v4303 = vpop.f32.mrb[0].mxu0
  %v4304 = vadd.f32 %v3784, %v4303
  %v4305 = vpop.f32.mrb[0].mxu0
  %4306 = vmatprep.mubr.bf16.mxu0 0
  %4307 = vmatmul.mubr.bf16.gmra.mrb[0].mxu0 %v3894
  %v4308 = vpop.f32.mrb[0].mxu0
  %v4309 = vadd.f32 %v3784, %v4308
  %v4310 = vpop.f32.mrb[0].mxu0
  %v4311 = vpop.f32.mrb[0].mxu0
  %v4312 = vadd.f32 %v3784, %v4311
  %v4313 = vpop.f32.mrb[0].mxu0
  %4314 = vmatprep.mubr.bf16.mxu0 0
  %4315 = vmatmul.mubr.bf16.gmra.mrb[0].mxu0 %v3896
  %v4316 = vpop.f32.mrb[0].mxu0
  %v4317 = vadd.f32 %v3784, %v4316
  %v4318 = vpop.f32.mrb[0].mxu0
  %v4319 = vpop.f32.mrb[0].mxu0
  %v4320 = vadd.f32 %v3784, %v4319
  %v4321 = vpop.f32.mrb[0].mxu0
  %4322 = vmatprep.mubr.bf16.mxu0 0
  %4323 = vmatmul.mubr.bf16.gmra.mrb[0].mxu0 %v3898
  %v4324 = vpop.f32.mrb[0].mxu0
  %v4325 = vadd.f32 %v3784, %v4324
  %v4326 = vpop.f32.mrb[0].mxu0
  %v4327 = vpop.f32.mrb[0].mxu0
  %v4328 = vadd.f32 %v3784, %v4327
  %v4329 = vpop.f32.mrb[0].mxu0
  %4330 = vmatprep.mubr.bf16.mxu0 0
  %4331 = vmatmul.mubr.bf16.gmra.mrb[0].mxu0 %v3900
  %v4332 = vpop.f32.mrb[0].mxu0
  %v4333 = vadd.f32 %v3784, %v4332
  %v4334 = vpop.f32.mrb[0].mxu0
  %v4335 = vpop.f32.mrb[0].mxu0
  %v4336 = vadd.f32 %v3784, %v4335
  %v4337 = vpop.f32.mrb[0].mxu0
  %4338 = vmatprep.mubr.bf16.mxu0 0
  %4339 = vmatmul.mubr.bf16.gmra.mrb[0].mxu0 %v3902
  %v4340 = vpop.f32.mrb[0].mxu0
  %v4341 = vadd.f32 %v3784, %v4340
  %v4342 = vpop.f32.mrb[0].mxu0
  %v4343 = vpop.f32.mrb[0].mxu0
  %v4344 = vadd.f32 %v3784, %v4343
  %v4345 = vpop.f32.mrb[0].mxu0
  %4346 = vmatprep.mubr.bf16.mxu0 0
  %4347 = vmatmul.mubr.bf16.gmra.mrb[0].mxu0 %v3904
  %v4348 = vpop.f32.mrb[0].mxu0
  %v4349 = vadd.f32 %v3784, %v4348
  %v4350 = vpop.f32.mrb[0].mxu0
  %v4351 = vpop.f32.mrb[0].mxu0
  %v4352 = vadd.f32 %v3784, %v4351
  %v4353 = vpop.f32.mrb[0].mxu0
  %4354 = vmatprep.mubr.bf16.mxu0 0
  %4355 = vmatmul.mubr.bf16.gmra.mrb[0].mxu0 %v3906
  %v4356 = vpop.f32.mrb[0].mxu0
  %v4357 = vadd.f32 %v3784, %v4356
  %v4358 = vpop.f32.mrb[0].mxu0
  %v4359 = vpop.f32.mrb[0].mxu0
  %v4360 = vadd.f32 %v3784, %v4359
  %v4361 = vpop.f32.mrb[0].mxu0
  %4362 = vmatprep.mubr.bf16.mxu0 0
  %4363 = vmatmul.mubr.bf16.gmra.mrb[0].mxu0 %v3908
  %v4364 = vpop.f32.mrb[0].mxu0
  %v4365 = vadd.f32 %v3784, %v4364
  %v4366 = vpop.f32.mrb[0].mxu0
  %v4367 = vpop.f32.mrb[0].mxu0
  %v4368 = vadd.f32 %v3784, %v4367
  %v4369 = vpop.f32.mrb[0].mxu0
  %4370 = vmatprep.mubr.bf16.mxu0 0
  %4371 = vmatmul.mubr.bf16.gmra.mrb[0].mxu0 %v3910
  %v4372 = vpop.f32.mrb[0].mxu0
  %v4373 = vadd.f32 %v3784, %v4372
  %v4374 = vpop.f32.mrb[0].mxu0
  %v4375 = vpop.f32.mrb[0].mxu0
  %v4376 = vadd.f32 %v3784, %v4375
  %v4377 = vpop.f32.mrb[0].mxu0
  %4378 = vmatprep.mubr.bf16.mxu0 0
  %4379 = vmatmul.mubr.bf16.gmra.mrb[0].mxu0 %v3912
  %v4380 = vpop.f32.mrb[0].mxu0
  %v4381 = vadd.f32 %v3784, %v4380
  %v4382 = vpop.f32.mrb[0].mxu0
  %v4383 = vpop.f32.mrb[0].mxu0
  %v4384 = vadd.f32 %v3784, %v4383
  %v4385 = vpop.f32.mrb[0].mxu0
  %4386 = vmatprep.mubr.bf16.mxu0 0
  %4387 = vmatmul.mubr.bf16.gmra.mrb[0].mxu0 %v3914
  %v4388 = vpop.f32.mrb[0].mxu0
  %v4389 = vadd.f32 %v3784, %v4388
  %v4390 = vpop.f32.mrb[0].mxu0
  %v4391 = vpop.f32.mrb[0].mxu0
  %v4392 = vadd.f32 %v3784, %v4391
  %v4393 = vpop.f32.mrb[0].mxu0
  %4394 = vmatprep.mubr.bf16.mxu0 0
  %4395 = vmatmul.mubr.bf16.gmra.mrb[0].mxu0 %v3916
  %v4396 = vpop.f32.mrb[0].mxu0
  %v4397 = vadd.f32 %v3784, %v4396
  %v4398 = vpop.f32.mrb[0].mxu0
  %v4399 = vpop.f32.mrb[0].mxu0
  %v4400 = vadd.f32 %v3784, %v4399
  %v4401 = vpop.f32.mrb[0].mxu0
  %4402 = vmatprep.mubr.bf16.mxu0 0
  %4403 = vmatmul.mubr.bf16.gmra.mrb[0].mxu0 %v3918
  %v4404 = vpop.f32.mrb[0].mxu0
  %v4405 = vadd.f32 %v3784, %v4404
  %v4406 = vpop.f32.mrb[0].mxu0
  %v4407 = vpop.f32.mrb[0].mxu0
  %v4408 = vadd.f32 %v3784, %v4407
  %v4409 = vpop.f32.mrb[0].mxu0
  %4410 = vmatprep.mubr.bf16.mxu0 0
  %4411 = vmatmul.mubr.bf16.gmra.mrb[0].mxu0 %v3920
  %v4412 = vpop.f32.mrb[0].mxu0
  %v4413 = vadd.f32 %v3784, %v4412
  %v4414 = vpop.f32.mrb[0].mxu0
  %v4415 = vpop.f32.mrb[0].mxu0
  %v4416 = vadd.f32 %v3784, %v4415
  %v4417 = vpop.f32.mrb[0].mxu0
  %4418 = vmatprep.mubr.bf16.mxu0 0
  %4419 = vmatmul.mubr.bf16.gmra.mrb[0].mxu0 %v3922
  %v4420 = vpop.f32.mrb[0].mxu0
  %v4421 = vadd.f32 %v3784, %v4420
  %v4422 = vpop.f32.mrb[0].mxu0
  %v4423 = vpop.f32.mrb[0].mxu0
  %v4424 = vadd.f32 %v3784, %v4423
  %v4425 = vpop.f32.mrb[0].mxu0
  %4426 = vmatprep.mubr.bf16.mxu0 0
  %4427 = vmatmul.mubr.bf16.gmra.mrb[0].mxu0 %v3924
  %v4428 = vpop.f32.mrb[0].mxu0
  %v4429 = vadd.f32 %v3784, %v4428
  %v4430 = vpop.f32.mrb[0].mxu0
  %v4431 = vpop.f32.mrb[0].mxu0
  %v4432 = vadd.f32 %v3784, %v4431
  %v4433 = vpop.f32.mrb[0].mxu0
  %4434 = vmatprep.mubr.bf16.mxu0 0
  %4435 = vmatmul.mubr.bf16.gmra.mrb[0].mxu0 %v3926
  %v4436 = vpop.f32.mrb[0].mxu0
  %v4437 = vadd.f32 %v3784, %v4436
  %v4438 = vpop.f32.mrb[0].mxu0
  %v4439 = vpop.f32.mrb[0].mxu0
  %v4440 = vadd.f32 %v3784, %v4439
  %v4441 = vpop.f32.mrb[0].mxu0
  %4442 = vmatprep.mubr.bf16.mxu0 0
  %4443 = vmatmul.mubr.bf16.gmra.mrb[0].mxu0 %v3928
  %v4444 = vpop.f32.mrb[0].mxu0
  %v4445 = vadd.f32 %v3784, %v4444
  %v4446 = vpop.f32.mrb[0].mxu0
  %v4447 = vpop.f32.mrb[0].mxu0
  %v4448 = vadd.f32 %v3784, %v4447
  %v4449 = vpop.f32.mrb[0].mxu0
  %4450 = vmatprep.mubr.bf16.mxu0 0
  %4451 = vmatmul.mubr.bf16.gmra.mrb[0].mxu0 %v3930
  %v4452 = vpop.f32.mrb[0].mxu0
  %v4453 = vadd.f32 %v3784, %v4452
  %v4454 = vpop.f32.mrb[0].mxu0
  %v4455 = vpop.f32.mrb[0].mxu0
  %v4456 = vadd.f32 %v3784, %v4455
  %v4457 = vpop.f32.mrb[0].mxu0
  %4458 = vmatprep.mubr.bf16.mxu0 0
  %4459 = vmatmul.mubr.bf16.gmra.mrb[0].mxu0 %v3932
  %v4460 = vpop.f32.mrb[0].mxu0
  %v4461 = vadd.f32 %v3784, %v4460
  %v4462 = vpop.f32.mrb[0].mxu0
  %v4463 = vpop.f32.mrb[0].mxu0
  %v4464 = vadd.f32 %v3784, %v4463
  %v4465 = vpop.f32.mrb[0].mxu0
  %4466 = vmatprep.mubr.bf16.mxu0 0
  %4467 = vmatmul.mubr.bf16.gmra.mrb[0].mxu0 %v3934
  %v4468 = vpop.f32.mrb[0].mxu0
  %v4469 = vadd.f32 %v3784, %v4468
  %v4470 = vpop.f32.mrb[0].mxu0
  %v4471 = vpop.f32.mrb[0].mxu0
  %v4472 = vadd.f32 %v3784, %v4471
  %v4473 = vpop.f32.mrb[0].mxu0
  %4474 = vmatprep.mubr.bf16.mxu0 0
  %4475 = vmatmul.mubr.bf16.gmra.mrb[0].mxu0 %v3936
  %v4476 = vpop.f32.mrb[0].mxu0
  %v4477 = vadd.f32 %v3784, %v4476
  %v4478 = vpop.f32.mrb[0].mxu0
  %v4479 = vpop.f32.mrb[0].mxu0
  %v4480 = vadd.f32 %v3784, %v4479
  %v4481 = vpop.f32.mrb[0].mxu0
  %4482 = vdwg.mxu0
  %v4483 = vld [vmem:[%s8] sm:$0xf]
  %v4484 = vld [vmem:[%s8 + $0x4] sm:$0xf]
  %v4485 = vld [vmem:[%s8 + $0x8] sm:$0xf]
  %v4486 = vld [vmem:[%s8 + $0xc] sm:$0xf]
  %v4487 = vld [vmem:[%s8 + $0x10] sm:$0xf]
  %v4488 = vld [vmem:[%s8 + $0x14] sm:$0xf]
  %v4489 = vld [vmem:[%s8 + $0x18] sm:$0xf]
  %v4490 = vld [vmem:[%s8 + $0x1c] sm:$0xf]
  %v4507 = vunpack.c.l.b16 %v3395
  %v4508 = vunpack.c.l.b16 %v3420
  %v4509 = vunpack.c.l.b16 %v3445
  %v4510 = vunpack.c.l.b16 %v3470
  %v4511 = vunpack.c.l.b16 %v3495
  %v4512 = vunpack.c.l.b16 %v3520
  %v4513 = vunpack.c.l.b16 %v3545
  %v4514 = vunpack.c.l.b16 %v3570
  %v4515 = vunpack.c.l.b16 %v3595
  %v4516 = vunpack.c.l.b16 %v3620
  %v4517 = vunpack.c.l.b16 %v3645
  %v4518 = vunpack.c.l.b16 %v3670
  %v4519 = vunpack.c.l.b16 %v3695
  %v4520 = vunpack.c.l.b16 %v3720
  %v4521 = vunpack.c.l.b16 %v3745
  %v4522 = vunpack.c.l.b16 %v3770
  %vm4523 = vcmask 1041409
  %v4524 = vsel %vm4523, %v4508, %v4507
  %vm4525 = vcmask 1042434
  %v4526 = vsel %vm4525, %v4509, %v4524
  %vm4527 = vcmask 1043459
  %v4528 = vsel %vm4527, %v4510, %v4526
  %vm4529 = vcmask 1044484
  %v4530 = vsel %vm4529, %v4511, %v4528
  %vm4531 = vcmask 1045509
  %v4532 = vsel %vm4531, %v4512, %v4530
  %vm4533 = vcmask 1046534
  %v4534 = vsel %vm4533, %v4513, %v4532
  %vm4535 = vcmask 1047559
  %v4536 = vsel %vm4535, %v4514, %v4534
  %v4537 = vsel %vm4523, %v4516, %v4515
  %v4538 = vsel %vm4525, %v4517, %v4537
  %v4539 = vsel %vm4527, %v4518, %v4538
  %v4540 = vsel %vm4529, %v4519, %v4539
  %v4541 = vsel %vm4531, %v4520, %v4540
  %v4542 = vsel %vm4533, %v4521, %v4541
  %v4543 = vsel %vm4535, %v4522, %v4542
  %v4544 = vpack.c.b16 %v4543, %v4536
  %v4553 = vunpack.c.l.b16 %v4483
  %v4554 = vunpack.c.l.b16 %v4484
  %v4555 = vunpack.c.l.b16 %v4485
  %v4556 = vunpack.c.l.b16 %v4486
  %v4557 = vunpack.c.l.b16 %v4487
  %v4558 = vunpack.c.l.b16 %v4488
  %v4559 = vunpack.c.l.b16 %v4489
  %v4560 = vunpack.c.l.b16 %v4490
  %v4561 = vpack.c.b16 %v4554, %v4553
  %v4562 = vpack.c.b16 %v4556, %v4555
  %v4563 = vpack.c.b16 %v4558, %v4557
  %v4564 = vpack.c.b16 %v4560, %v4559
  %v4570 = vsel %vm1472, %v4544, 0
  %4572 = vmatprep.subr.bf16.mxu0 0
  %4573 = vmatpush1.bf16.msra.mxu0 %v4561
  %4574 = vmatprep.subr.bf16.mxu0 0
  %4575 = vmatpush1.bf16.msra.mxu0 %v4562
  %4576 = vmatprep.subr.bf16.mxu0 0
  %4577 = vmatpush1.bf16.msra.mxu0 %v4563
  %4578 = vmatprep.subr.bf16.mxu0 0
  %4579 = vmatpush1.bf16.msra.mxu0 %v4564
  %4580 = vmatprep.subr.bf16.mxu0 0
  %4581 = vmatpush1.bf16.msra.mxu0 0
  %4582 = vmatprep.subr.bf16.mxu0 0
  %4583 = vmatpush1.bf16.msra.mxu0 0
  %4584 = vmatprep.subr.bf16.mxu0 0
  %4585 = vmatpush1.bf16.msra.mxu0 0
  %4586 = vmatprep.subr.bf16.mxu0 0
  %4587 = vmatpush1.bf16.msra.mxu0 0
  %4588 = vmatprep.subr.bf16.mxu0 0
  %4589 = vmatpush1.bf16.msra.mxu0 0
  %4590 = vmatprep.subr.bf16.mxu0 0
  %4591 = vmatpush1.bf16.msra.mxu0 0
  %4592 = vmatprep.subr.bf16.mxu0 0
  %4593 = vmatpush1.bf16.msra.mxu0 0
  %4594 = vmatprep.subr.bf16.mxu0 0
  %4595 = vmatpush1.bf16.msra.mxu0 0
  %4596 = vmatprep.subr.bf16.mxu0 0
  %4597 = vmatpush1.bf16.msra.mxu0 0
  %4598 = vmatprep.subr.bf16.mxu0 0
  %4599 = vmatpush1.bf16.msra.mxu0 0
  %4600 = vmatprep.subr.bf16.mxu0 0
  %4601 = vmatpush1.bf16.msra.mxu0 0
  %4602 = vmatprep.subr.bf16.mxu0 0
  %4603 = vmatpush1.bf16.msra.mxu0 0
  %4604 = vmatprep.mubr.bf16.mxu0 0
  %4605 = vmatmul.mubr.bf16.gmra.mrb[0].mxu0 %v4570
  %v4606 = vpop.f32.mrb[0].mxu0
  %v4607 = vadd.f32 0.0, %v4606
  %v4608 = vpop.f32.mrb[0].mxu0
  %v4609 = vpop.f32.mrb[0].mxu0
  %v4610 = vadd.f32 0.0, %v4609
  %v4611 = vpop.f32.mrb[0].mxu0
  %4612 = vdwg.mxu0
  %v4615 = vcombine.high %v4607, %v4607
  %v4617 = vunpack.c.l.s4 1966171168
  %v4618 = vunpack.c.0.s8 %v4617
  %v4619 = vlaneseq
  %v4620 = vshrl.u32 %v4619, 7
  %v4621 = vsub.s32 %v4618, %v4620
  %v4622 = vrot.slane %v4607, %v4621
  %v4624 = vunpack.c.l.s4 1966171168
  %v4625 = vunpack.c.0.s8 %v4624
  %v4626 = vlaneseq
  %v4627 = vshrl.u32 %v4626, 7
  %v4628 = vsub.s32 %v4625, %v4627
  %v4629 = vrot.slane %v4615, %v4628
  %v4630 = vcombine.high %v4622, %v4622
  %v4631 = vcombine.high %v4629, %v4629
  %v4633 = vunpack.c.l.s4 1966171168
  %v4634 = vunpack.c.0.s8 %v4633
  %v4635 = vlaneseq
  %v4636 = vshrl.u32 %v4635, 7
  %v4637 = vsub.s32 %v4634, %v4636
  %v4638 = vrot.slane %v4622, %v4637
  %v4640 = vunpack.c.l.s4 1966171168
  %v4641 = vunpack.c.0.s8 %v4640
  %v4642 = vlaneseq
  %v4643 = vshrl.u32 %v4642, 7
  %v4644 = vsub.s32 %v4641, %v4643
  %v4645 = vrot.slane %v4629, %v4644
  %v4647 = vunpack.c.l.s4 1966171168
  %v4648 = vunpack.c.0.s8 %v4647
  %v4649 = vlaneseq
  %v4650 = vshrl.u32 %v4649, 7
  %v4651 = vsub.s32 %v4648, %v4650
  %v4652 = vrot.slane %v4630, %v4651
  %v4654 = vunpack.c.l.s4 1966171168
  %v4655 = vunpack.c.0.s8 %v4654
  %v4656 = vlaneseq
  %v4657 = vshrl.u32 %v4656, 7
  %v4658 = vsub.s32 %v4655, %v4657
  %v4659 = vrot.slane %v4631, %v4658
  %v4660 = vcombine.high %v4638, %v4638
  %v4661 = vcombine.high %v4645, %v4645
  %v4662 = vcombine.high %v4652, %v4652
  %v4663 = vcombine.high %v4659, %v4659
  %v4664 = vcombine.high %v4610, %v4610
  %v4666 = vunpack.c.l.s4 1966171168
  %v4667 = vunpack.c.0.s8 %v4666
  %v4668 = vlaneseq
  %v4669 = vshrl.u32 %v4668, 7
  %v4670 = vsub.s32 %v4667, %v4669
  %v4671 = vrot.slane %v4610, %v4670
  %v4673 = vunpack.c.l.s4 1966171168
  %v4674 = vunpack.c.0.s8 %v4673
  %v4675 = vlaneseq
  %v4676 = vshrl.u32 %v4675, 7
  %v4677 = vsub.s32 %v4674, %v4676
  %v4678 = vrot.slane %v4664, %v4677
  %v4679 = vcombine.high %v4671, %v4671
  %v4680 = vcombine.high %v4678, %v4678
  %v4682 = vunpack.c.l.s4 1966171168
  %v4683 = vunpack.c.0.s8 %v4682
  %v4684 = vlaneseq
  %v4685 = vshrl.u32 %v4684, 7
  %v4686 = vsub.s32 %v4683, %v4685
  %v4687 = vrot.slane %v4671, %v4686
  %v4689 = vunpack.c.l.s4 1966171168
  %v4690 = vunpack.c.0.s8 %v4689
  %v4691 = vlaneseq
  %v4692 = vshrl.u32 %v4691, 7
  %v4693 = vsub.s32 %v4690, %v4692
  %v4694 = vrot.slane %v4678, %v4693
  %v4696 = vunpack.c.l.s4 1966171168
  %v4697 = vunpack.c.0.s8 %v4696
  %v4698 = vlaneseq
  %v4699 = vshrl.u32 %v4698, 7
  %v4700 = vsub.s32 %v4697, %v4699
  %v4701 = vrot.slane %v4679, %v4700
  %v4703 = vunpack.c.l.s4 1966171168
  %v4704 = vunpack.c.0.s8 %v4703
  %v4705 = vlaneseq
  %v4706 = vshrl.u32 %v4705, 7
  %v4707 = vsub.s32 %v4704, %v4706
  %v4708 = vrot.slane %v4680, %v4707
  %v4709 = vcombine.high %v4687, %v4687
  %v4710 = vcombine.high %v4694, %v4694
  %v4711 = vcombine.high %v4701, %v4701
  %v4712 = vcombine.high %v4708, %v4708
  %v4713 = vlaneseq
  %v4714 = vshrl.u32 %v4713, 7
  %v4715 = vsub.s32 0, %v4714
  %v4716 = vrot.slane %v4638, %v4715
  %v4717 = vlaneseq
  %v4718 = vshrl.u32 %v4717, 7
  %v4719 = vsub.s32 0, %v4718
  %v4720 = vrot.slane %v4652, %v4719
  %v4721 = vlaneseq
  %v4722 = vshrl.u32 %v4721, 7
  %v4723 = vsub.s32 0, %v4722
  %v4724 = vrot.slane %v4660, %v4723
  %v4725 = vlaneseq
  %v4726 = vshrl.u32 %v4725, 7
  %v4727 = vsub.s32 0, %v4726
  %v4728 = vrot.slane %v4662, %v4727
  %v4729 = vlaneseq
  %v4730 = vshrl.u32 %v4729, 7
  %v4731 = vsub.s32 0, %v4730
  %v4732 = vrot.slane %v4645, %v4731
  %v4733 = vlaneseq
  %v4734 = vshrl.u32 %v4733, 7
  %v4735 = vsub.s32 0, %v4734
  %v4736 = vrot.slane %v4659, %v4735
  %v4737 = vlaneseq
  %v4738 = vshrl.u32 %v4737, 7
  %v4739 = vsub.s32 0, %v4738
  %v4740 = vrot.slane %v4661, %v4739
  %v4741 = vlaneseq
  %v4742 = vshrl.u32 %v4741, 7
  %v4743 = vsub.s32 0, %v4742
  %v4744 = vrot.slane %v4663, %v4743
  %v4745 = vlaneseq
  %v4746 = vshrl.u32 %v4745, 7
  %v4747 = vsub.s32 0, %v4746
  %v4748 = vrot.slane %v4687, %v4747
  %v4749 = vlaneseq
  %v4750 = vshrl.u32 %v4749, 7
  %v4751 = vsub.s32 0, %v4750
  %v4752 = vrot.slane %v4701, %v4751
  %v4753 = vlaneseq
  %v4754 = vshrl.u32 %v4753, 7
  %v4755 = vsub.s32 0, %v4754
  %v4756 = vrot.slane %v4709, %v4755
  %v4757 = vlaneseq
  %v4758 = vshrl.u32 %v4757, 7
  %v4759 = vsub.s32 0, %v4758
  %v4760 = vrot.slane %v4711, %v4759
  %v4761 = vlaneseq
  %v4762 = vshrl.u32 %v4761, 7
  %v4763 = vsub.s32 0, %v4762
  %v4764 = vrot.slane %v4694, %v4763
  %v4765 = vlaneseq
  %v4766 = vshrl.u32 %v4765, 7
  %v4767 = vsub.s32 0, %v4766
  %v4768 = vrot.slane %v4708, %v4767
  %v4769 = vlaneseq
  %v4770 = vshrl.u32 %v4769, 7
  %v4771 = vsub.s32 0, %v4770
  %v4772 = vrot.slane %v4710, %v4771
  %v4773 = vlaneseq
  %v4774 = vshrl.u32 %v4773, 7
  %v4775 = vsub.s32 0, %v4774
  %v4776 = vrot.slane %v4712, %v4775
  %v4793 = vadd.f32 %v3973, %v4716
  %v4794 = vadd.f32 %v3976, %v4716
  %v4795 = vadd.f32 %v3981, %v4716
  %v4796 = vadd.f32 %v3984, %v4716
  %v4797 = vadd.f32 %v3989, %v4716
  %v4798 = vadd.f32 %v3992, %v4716
  %v4799 = vadd.f32 %v3997, %v4716
  %v4800 = vadd.f32 %v4000, %v4716
  %v4801 = vadd.f32 %v4005, %v4720
  %v4802 = vadd.f32 %v4008, %v4720
  %v4803 = vadd.f32 %v4013, %v4720
  %v4804 = vadd.f32 %v4016, %v4720
  %v4805 = vadd.f32 %v4021, %v4720
  %v4806 = vadd.f32 %v4024, %v4720
  %v4807 = vadd.f32 %v4029, %v4720
  %v4808 = vadd.f32 %v4032, %v4720
  %v4809 = vadd.f32 %v4037, %v4724
  %v4810 = vadd.f32 %v4040, %v4724
  %v4811 = vadd.f32 %v4045, %v4724
  %v4812 = vadd.f32 %v4048, %v4724
  %v4813 = vadd.f32 %v4053, %v4724
  %v4814 = vadd.f32 %v4056, %v4724
  %v4815 = vadd.f32 %v4061, %v4724
  %v4816 = vadd.f32 %v4064, %v4724
  %v4817 = vadd.f32 %v4069, %v4728
  %v4818 = vadd.f32 %v4072, %v4728
  %v4819 = vadd.f32 %v4077, %v4728
  %v4820 = vadd.f32 %v4080, %v4728
  %v4821 = vadd.f32 %v4085, %v4728
  %v4822 = vadd.f32 %v4088, %v4728
  %v4823 = vadd.f32 %v4093, %v4728
  %v4824 = vadd.f32 %v4096, %v4728
  %v4825 = vadd.f32 %v4101, %v4732
  %v4826 = vadd.f32 %v4104, %v4732
  %v4827 = vadd.f32 %v4109, %v4732
  %v4828 = vadd.f32 %v4112, %v4732
  %v4829 = vadd.f32 %v4117, %v4732
  %v4830 = vadd.f32 %v4120, %v4732
  %v4831 = vadd.f32 %v4125, %v4732
  %v4832 = vadd.f32 %v4128, %v4732
  %v4833 = vadd.f32 %v4133, %v4736
  %v4834 = vadd.f32 %v4136, %v4736
  %v4835 = vadd.f32 %v4141, %v4736
  %v4836 = vadd.f32 %v4144, %v4736
  %v4837 = vadd.f32 %v4149, %v4736
  %v4838 = vadd.f32 %v4152, %v4736
  %v4839 = vadd.f32 %v4157, %v4736
  %v4840 = vadd.f32 %v4160, %v4736
  %v4841 = vadd.f32 %v4165, %v4740
  %v4842 = vadd.f32 %v4168, %v4740
  %v4843 = vadd.f32 %v4173, %v4740
  %v4844 = vadd.f32 %v4176, %v4740
  %v4845 = vadd.f32 %v4181, %v4740
  %v4846 = vadd.f32 %v4184, %v4740
  %v4847 = vadd.f32 %v4189, %v4740
  %v4848 = vadd.f32 %v4192, %v4740
  %v4849 = vadd.f32 %v4197, %v4744
  %v4850 = vadd.f32 %v4200, %v4744
  %v4851 = vadd.f32 %v4205, %v4744
  %v4852 = vadd.f32 %v4208, %v4744
  %v4853 = vadd.f32 %v4213, %v4744
  %v4854 = vadd.f32 %v4216, %v4744
  %v4855 = vadd.f32 %v4221, %v4744
  %v4856 = vadd.f32 %v4224, %v4744
  %v4857 = vadd.f32 %v4229, %v4748
  %v4858 = vadd.f32 %v4232, %v4748
  %v4859 = vadd.f32 %v4237, %v4748
  %v4860 = vadd.f32 %v4240, %v4748
  %v4861 = vadd.f32 %v4245, %v4748
  %v4862 = vadd.f32 %v4248, %v4748
  %v4863 = vadd.f32 %v4253, %v4748
  %v4864 = vadd.f32 %v4256, %v4748
  %v4865 = vadd.f32 %v4261, %v4752
  %v4866 = vadd.f32 %v4264, %v4752
  %v4867 = vadd.f32 %v4269, %v4752
  %v4868 = vadd.f32 %v4272, %v4752
  %v4869 = vadd.f32 %v4277, %v4752
  %v4870 = vadd.f32 %v4280, %v4752
  %v4871 = vadd.f32 %v4285, %v4752
  %v4872 = vadd.f32 %v4288, %v4752
  %v4873 = vadd.f32 %v4293, %v4756
  %v4874 = vadd.f32 %v4296, %v4756
  %v4875 = vadd.f32 %v4301, %v4756
  %v4876 = vadd.f32 %v4304, %v4756
  %v4877 = vadd.f32 %v4309, %v4756
  %v4878 = vadd.f32 %v4312, %v4756
  %v4879 = vadd.f32 %v4317, %v4756
  %v4880 = vadd.f32 %v4320, %v4756
  %v4881 = vadd.f32 %v4325, %v4760
  %v4882 = vadd.f32 %v4328, %v4760
  %v4883 = vadd.f32 %v4333, %v4760
  %v4884 = vadd.f32 %v4336, %v4760
  %v4885 = vadd.f32 %v4341, %v4760
  %v4886 = vadd.f32 %v4344, %v4760
  %v4887 = vadd.f32 %v4349, %v4760
  %v4888 = vadd.f32 %v4352, %v4760
  %v4889 = vadd.f32 %v4357, %v4764
  %v4890 = vadd.f32 %v4360, %v4764
  %v4891 = vadd.f32 %v4365, %v4764
  %v4892 = vadd.f32 %v4368, %v4764
  %v4893 = vadd.f32 %v4373, %v4764
  %v4894 = vadd.f32 %v4376, %v4764
  %v4895 = vadd.f32 %v4381, %v4764
  %v4896 = vadd.f32 %v4384, %v4764
  %v4897 = vadd.f32 %v4389, %v4768
  %v4898 = vadd.f32 %v4392, %v4768
  %v4899 = vadd.f32 %v4397, %v4768
  %v4900 = vadd.f32 %v4400, %v4768
  %v4901 = vadd.f32 %v4405, %v4768
  %v4902 = vadd.f32 %v4408, %v4768
  %v4903 = vadd.f32 %v4413, %v4768
  %v4904 = vadd.f32 %v4416, %v4768
  %v4905 = vadd.f32 %v4421, %v4772
  %v4906 = vadd.f32 %v4424, %v4772
  %v4907 = vadd.f32 %v4429, %v4772
  %v4908 = vadd.f32 %v4432, %v4772
  %v4909 = vadd.f32 %v4437, %v4772
  %v4910 = vadd.f32 %v4440, %v4772
  %v4911 = vadd.f32 %v4445, %v4772
  %v4912 = vadd.f32 %v4448, %v4772
  %v4913 = vadd.f32 %v4453, %v4776
  %v4914 = vadd.f32 %v4456, %v4776
  %v4915 = vadd.f32 %v4461, %v4776
  %v4916 = vadd.f32 %v4464, %v4776
  %v4917 = vadd.f32 %v4469, %v4776
  %v4918 = vadd.f32 %v4472, %v4776
  %v4919 = vadd.f32 %v4477, %v4776
  %v4920 = vadd.f32 %v4480, %v4776
  %v4921 = vmax.f32 %v4793, 0.0
  %v4922 = vmax.f32 %v4794, 0.0
  %v4923 = vmax.f32 %v4795, 0.0
  %v4924 = vmax.f32 %v4796, 0.0
  %v4925 = vmax.f32 %v4797, 0.0
  %v4926 = vmax.f32 %v4798, 0.0
  %v4927 = vmax.f32 %v4799, 0.0
  %v4928 = vmax.f32 %v4800, 0.0
  %v4929 = vmax.f32 %v4801, 0.0
  %v4930 = vmax.f32 %v4802, 0.0
  %v4931 = vmax.f32 %v4803, 0.0
  %v4932 = vmax.f32 %v4804, 0.0
  %v4933 = vmax.f32 %v4805, 0.0
  %v4934 = vmax.f32 %v4806, 0.0
  %v4935 = vmax.f32 %v4807, 0.0
  %v4936 = vmax.f32 %v4808, 0.0
  %v4937 = vmax.f32 %v4809, 0.0
  %v4938 = vmax.f32 %v4810, 0.0
  %v4939 = vmax.f32 %v4811, 0.0
  %v4940 = vmax.f32 %v4812, 0.0
  %v4941 = vmax.f32 %v4813, 0.0
  %v4942 = vmax.f32 %v4814, 0.0
  %v4943 = vmax.f32 %v4815, 0.0
  %v4944 = vmax.f32 %v4816, 0.0
  %v4945 = vmax.f32 %v4817, 0.0
  %v4946 = vmax.f32 %v4818, 0.0
  %v4947 = vmax.f32 %v4819, 0.0
  %v4948 = vmax.f32 %v4820, 0.0
  %v4949 = vmax.f32 %v4821, 0.0
  %v4950 = vmax.f32 %v4822, 0.0
  %v4951 = vmax.f32 %v4823, 0.0
  %v4952 = vmax.f32 %v4824, 0.0
  %v4953 = vmax.f32 %v4825, 0.0
  %v4954 = vmax.f32 %v4826, 0.0
  %v4955 = vmax.f32 %v4827, 0.0
  %v4956 = vmax.f32 %v4828, 0.0
  %v4957 = vmax.f32 %v4829, 0.0
  %v4958 = vmax.f32 %v4830, 0.0
  %v4959 = vmax.f32 %v4831, 0.0
  %v4960 = vmax.f32 %v4832, 0.0
  %v4961 = vmax.f32 %v4833, 0.0
  %v4962 = vmax.f32 %v4834, 0.0
  %v4963 = vmax.f32 %v4835, 0.0
  %v4964 = vmax.f32 %v4836, 0.0
  %v4965 = vmax.f32 %v4837, 0.0
  %v4966 = vmax.f32 %v4838, 0.0
  %v4967 = vmax.f32 %v4839, 0.0
  %v4968 = vmax.f32 %v4840, 0.0
  %v4969 = vmax.f32 %v4841, 0.0
  %v4970 = vmax.f32 %v4842, 0.0
  %v4971 = vmax.f32 %v4843, 0.0
  %v4972 = vmax.f32 %v4844, 0.0
  %v4973 = vmax.f32 %v4845, 0.0
  %v4974 = vmax.f32 %v4846, 0.0
  %v4975 = vmax.f32 %v4847, 0.0
  %v4976 = vmax.f32 %v4848, 0.0
  %v4977 = vmax.f32 %v4849, 0.0
  %v4978 = vmax.f32 %v4850, 0.0
  %v4979 = vmax.f32 %v4851, 0.0
  %v4980 = vmax.f32 %v4852, 0.0
  %v4981 = vmax.f32 %v4853, 0.0
  %v4982 = vmax.f32 %v4854, 0.0
  %v4983 = vmax.f32 %v4855, 0.0
  %v4984 = vmax.f32 %v4856, 0.0
  %v4985 = vmax.f32 %v4857, 0.0
  %v4986 = vmax.f32 %v4858, 0.0
  %v4987 = vmax.f32 %v4859, 0.0
  %v4988 = vmax.f32 %v4860, 0.0
  %v4989 = vmax.f32 %v4861, 0.0
  %v4990 = vmax.f32 %v4862, 0.0
  %v4991 = vmax.f32 %v4863, 0.0
  %v4992 = vmax.f32 %v4864, 0.0
  %v4993 = vmax.f32 %v4865, 0.0
  %v4994 = vmax.f32 %v4866, 0.0
  %v4995 = vmax.f32 %v4867, 0.0
  %v4996 = vmax.f32 %v4868, 0.0
  %v4997 = vmax.f32 %v4869, 0.0
  %v4998 = vmax.f32 %v4870, 0.0
  %v4999 = vmax.f32 %v4871, 0.0
  %v5000 = vmax.f32 %v4872, 0.0
  %v5001 = vmax.f32 %v4873, 0.0
  %v5002 = vmax.f32 %v4874, 0.0
  %v5003 = vmax.f32 %v4875, 0.0
  %v5004 = vmax.f32 %v4876, 0.0
  %v5005 = vmax.f32 %v4877, 0.0
  %v5006 = vmax.f32 %v4878, 0.0
  %v5007 = vmax.f32 %v4879, 0.0
  %v5008 = vmax.f32 %v4880, 0.0
  %v5009 = vmax.f32 %v4881, 0.0
  %v5010 = vmax.f32 %v4882, 0.0
  %v5011 = vmax.f32 %v4883, 0.0
  %v5012 = vmax.f32 %v4884, 0.0
  %v5013 = vmax.f32 %v4885, 0.0
  %v5014 = vmax.f32 %v4886, 0.0
  %v5015 = vmax.f32 %v4887, 0.0
  %v5016 = vmax.f32 %v4888, 0.0
  %v5017 = vmax.f32 %v4889, 0.0
  %v5018 = vmax.f32 %v4890, 0.0
  %v5019 = vmax.f32 %v4891, 0.0
  %v5020 = vmax.f32 %v4892, 0.0
  %v5021 = vmax.f32 %v4893, 0.0
  %v5022 = vmax.f32 %v4894, 0.0
  %v5023 = vmax.f32 %v4895, 0.0
  %v5024 = vmax.f32 %v4896, 0.0
  %v5025 = vmax.f32 %v4897, 0.0
  %v5026 = vmax.f32 %v4898, 0.0
  %v5027 = vmax.f32 %v4899, 0.0
  %v5028 = vmax.f32 %v4900, 0.0
  %v5029 = vmax.f32 %v4901, 0.0
  %v5030 = vmax.f32 %v4902, 0.0
  %v5031 = vmax.f32 %v4903, 0.0
  %v5032 = vmax.f32 %v4904, 0.0
  %v5033 = vmax.f32 %v4905, 0.0
  %v5034 = vmax.f32 %v4906, 0.0
  %v5035 = vmax.f32 %v4907, 0.0
  %v5036 = vmax.f32 %v4908, 0.0
  %v5037 = vmax.f32 %v4909, 0.0
  %v5038 = vmax.f32 %v4910, 0.0
  %v5039 = vmax.f32 %v4911, 0.0
  %v5040 = vmax.f32 %v4912, 0.0
  %v5041 = vmax.f32 %v4913, 0.0
  %v5042 = vmax.f32 %v4914, 0.0
  %v5043 = vmax.f32 %v4915, 0.0
  %v5044 = vmax.f32 %v4916, 0.0
  %v5045 = vmax.f32 %v4917, 0.0
  %v5046 = vmax.f32 %v4918, 0.0
  %v5047 = vmax.f32 %v4919, 0.0
  %v5048 = vmax.f32 %v4920, 0.0
  %v5049 = vpack.c.bf16 %v4922, %v4921
  %v5050 = vpack.c.bf16 %v4924, %v4923
  %v5051 = vpack.c.bf16 %v4926, %v4925
  %v5052 = vpack.c.bf16 %v4928, %v4927
  %v5053 = vpack.c.bf16 %v4930, %v4929
  %v5054 = vpack.c.bf16 %v4932, %v4931
  %v5055 = vpack.c.bf16 %v4934, %v4933
  %v5056 = vpack.c.bf16 %v4936, %v4935
  %v5057 = vpack.c.bf16 %v4938, %v4937
  %v5058 = vpack.c.bf16 %v4940, %v4939
  %v5059 = vpack.c.bf16 %v4942, %v4941
  %v5060 = vpack.c.bf16 %v4944, %v4943
  %v5061 = vpack.c.bf16 %v4946, %v4945
  %v5062 = vpack.c.bf16 %v4948, %v4947
  %v5063 = vpack.c.bf16 %v4950, %v4949
  %v5064 = vpack.c.bf16 %v4952, %v4951
  %v5065 = vpack.c.bf16 %v4954, %v4953
  %v5066 = vpack.c.bf16 %v4956, %v4955
  %v5067 = vpack.c.bf16 %v4958, %v4957
  %v5068 = vpack.c.bf16 %v4960, %v4959
  %v5069 = vpack.c.bf16 %v4962, %v4961
  %v5070 = vpack.c.bf16 %v4964, %v4963
  %v5071 = vpack.c.bf16 %v4966, %v4965
  %v5072 = vpack.c.bf16 %v4968, %v4967
  %v5073 = vpack.c.bf16 %v4970, %v4969
  %v5074 = vpack.c.bf16 %v4972, %v4971
  %v5075 = vpack.c.bf16 %v4974, %v4973
  %v5076 = vpack.c.bf16 %v4976, %v4975
  %v5077 = vpack.c.bf16 %v4978, %v4977
  %v5078 = vpack.c.bf16 %v4980, %v4979
  %v5079 = vpack.c.bf16 %v4982, %v4981
  %v5080 = vpack.c.bf16 %v4984, %v4983
  %v5081 = vpack.c.bf16 %v4986, %v4985
  %v5082 = vpack.c.bf16 %v4988, %v4987
  %v5083 = vpack.c.bf16 %v4990, %v4989
  %v5084 = vpack.c.bf16 %v4992, %v4991
  %v5085 = vpack.c.bf16 %v4994, %v4993
  %v5086 = vpack.c.bf16 %v4996, %v4995
  %v5087 = vpack.c.bf16 %v4998, %v4997
  %v5088 = vpack.c.bf16 %v5000, %v4999
  %v5089 = vpack.c.bf16 %v5002, %v5001
  %v5090 = vpack.c.bf16 %v5004, %v5003
  %v5091 = vpack.c.bf16 %v5006, %v5005
  %v5092 = vpack.c.bf16 %v5008, %v5007
  %v5093 = vpack.c.bf16 %v5010, %v5009
  %v5094 = vpack.c.bf16 %v5012, %v5011
  %v5095 = vpack.c.bf16 %v5014, %v5013
  %v5096 = vpack.c.bf16 %v5016, %v5015
  %v5097 = vpack.c.bf16 %v5018, %v5017
  %v5098 = vpack.c.bf16 %v5020, %v5019
  %v5099 = vpack.c.bf16 %v5022, %v5021
  %v5100 = vpack.c.bf16 %v5024, %v5023
  %v5101 = vpack.c.bf16 %v5026, %v5025
  %v5102 = vpack.c.bf16 %v5028, %v5027
  %v5103 = vpack.c.bf16 %v5030, %v5029
  %v5104 = vpack.c.bf16 %v5032, %v5031
  %v5105 = vpack.c.bf16 %v5034, %v5033
  %v5106 = vpack.c.bf16 %v5036, %v5035
  %v5107 = vpack.c.bf16 %v5038, %v5037
  %v5108 = vpack.c.bf16 %v5040, %v5039
  %v5109 = vpack.c.bf16 %v5042, %v5041
  %v5110 = vpack.c.bf16 %v5044, %v5043
  %v5111 = vpack.c.bf16 %v5046, %v5045
  %v5112 = vpack.c.bf16 %v5048, %v5047
  %v5113 = vld [vmem:[%s10] sm:$0xf]
  %v5114 = vld [vmem:[%s10 + $0x4] sm:$0xf]
  %v5115 = vld [vmem:[%s10 + $0x8] sm:$0xf]
  %v5116 = vld [vmem:[%s10 + $0xc] sm:$0xf]
  %v5117 = vld [vmem:[%s10 + $0x10] sm:$0xf]
  %v5118 = vld [vmem:[%s10 + $0x14] sm:$0xf]
  %v5119 = vld [vmem:[%s10 + $0x18] sm:$0xf]
  %v5120 = vld [vmem:[%s10 + $0x1c] sm:$0xf]
  %v5121 = vld [vmem:[%s10 + $0x20] sm:$0xf]
  %v5122 = vld [vmem:[%s10 + $0x24] sm:$0xf]
  %v5123 = vld [vmem:[%s10 + $0x28] sm:$0xf]
  %v5124 = vld [vmem:[%s10 + $0x2c] sm:$0xf]
  %v5125 = vld [vmem:[%s10 + $0x30] sm:$0xf]
  %v5126 = vld [vmem:[%s10 + $0x34] sm:$0xf]
  %v5127 = vld [vmem:[%s10 + $0x38] sm:$0xf]
  %v5128 = vld [vmem:[%s10 + $0x3c] sm:$0xf]
  %v5129 = vld [vmem:[%s11] sm:$0x1]
  %v5131 = vlaneseq
  %v5132 = vshrl.u32 %v5131, 7
  %v5133 = vsub.s32 0, %v5132
  %v5134 = vrot.slane %v5129, %v5133
  %v5152 = vunpack.c.l.b16 %v5113
  %v5153 = vunpack.c.l.b16 %v5114
  %v5154 = vunpack.c.l.b16 %v5115
  %v5155 = vunpack.c.l.b16 %v5116
  %v5156 = vunpack.c.l.b16 %v5117
  %v5157 = vunpack.c.l.b16 %v5118
  %v5158 = vunpack.c.l.b16 %v5119
  %v5159 = vunpack.c.l.b16 %v5120
  %v5160 = vunpack.c.l.b16 %v5121
  %v5161 = vunpack.c.l.b16 %v5122
  %v5162 = vunpack.c.l.b16 %v5123
  %v5163 = vunpack.c.l.b16 %v5124
  %v5164 = vunpack.c.l.b16 %v5125
  %v5165 = vunpack.c.l.b16 %v5126
  %v5166 = vunpack.c.l.b16 %v5127
  %v5167 = vunpack.c.l.b16 %v5128
  %v5168 = vpack.c.b16 %v5153, %v5152
  %v5169 = vpack.c.b16 %v5155, %v5154
  %v5170 = vpack.c.b16 %v5157, %v5156
  %v5171 = vpack.c.b16 %v5159, %v5158
  %v5172 = vpack.c.b16 %v5161, %v5160
  %v5173 = vpack.c.b16 %v5163, %v5162
  %v5174 = vpack.c.b16 %v5165, %v5164
  %v5175 = vpack.c.b16 %v5167, %v5166
  %5184 = vmatprep.subr.bf16.mxu0 0
  %5185 = vmatpush1.bf16.msra.mxu0 %v5168
  %5186 = vmatprep.subr.bf16.mxu0 0
  %5187 = vmatpush1.bf16.msra.mxu0 %v5169
  %5188 = vmatprep.subr.bf16.mxu0 0
  %5189 = vmatpush1.bf16.msra.mxu0 %v5170
  %5190 = vmatprep.subr.bf16.mxu0 0
  %5191 = vmatpush1.bf16.msra.mxu0 %v5171
  %5192 = vmatprep.subr.bf16.mxu0 0
  %5193 = vmatpush1.bf16.msra.mxu0 %v5172
  %5194 = vmatprep.subr.bf16.mxu0 0
  %5195 = vmatpush1.bf16.msra.mxu0 %v5173
  %5196 = vmatprep.subr.bf16.mxu0 0
  %5197 = vmatpush1.bf16.msra.mxu0 %v5174
  %5198 = vmatprep.subr.bf16.mxu0 0
  %5199 = vmatpush1.bf16.msra.mxu0 %v5175
  %5200 = vmatprep.subr.bf16.mxu0 0
  %5201 = vmatpush1.bf16.msra.mxu0 0
  %5202 = vmatprep.subr.bf16.mxu0 0
  %5203 = vmatpush1.bf16.msra.mxu0 0
  %5204 = vmatprep.subr.bf16.mxu0 0
  %5205 = vmatpush1.bf16.msra.mxu0 0
  %5206 = vmatprep.subr.bf16.mxu0 0
  %5207 = vmatpush1.bf16.msra.mxu0 0
  %5208 = vmatprep.subr.bf16.mxu0 0
  %5209 = vmatpush1.bf16.msra.mxu0 0
  %5210 = vmatprep.subr.bf16.mxu0 0
  %5211 = vmatpush1.bf16.msra.mxu0 0
  %5212 = vmatprep.subr.bf16.mxu0 0
  %5213 = vmatpush1.bf16.msra.mxu0 0
  %5214 = vmatprep.subr.bf16.mxu0 0
  %5215 = vmatpush1.bf16.msra.mxu0 0
  %5216 = vmatprep.mubr.bf16.mxu0 0
  %5217 = vmatmul.mubr.bf16.gmra.mrb[0].mxu0 %v5049
  %v5218 = vpop.f32.mrb[0].mxu0
  %v5219 = vadd.f32 %v5134, %v5218
  %v5220 = vpop.f32.mrb[0].mxu0
  %v5221 = vpop.f32.mrb[0].mxu0
  %v5222 = vadd.f32 %v5134, %v5221
  %v5223 = vpop.f32.mrb[0].mxu0
  %5224 = vmatprep.mubr.bf16.mxu0 0
  %5225 = vmatmul.mubr.bf16.gmra.mrb[0].mxu0 %v5050
  %v5226 = vpop.f32.mrb[0].mxu0
  %v5227 = vadd.f32 %v5134, %v5226
  %v5228 = vpop.f32.mrb[0].mxu0
  %v5229 = vpop.f32.mrb[0].mxu0
  %v5230 = vadd.f32 %v5134, %v5229
  %v5231 = vpop.f32.mrb[0].mxu0
  %5232 = vmatprep.mubr.bf16.mxu0 0
  %5233 = vmatmul.mubr.bf16.gmra.mrb[0].mxu0 %v5051
  %v5234 = vpop.f32.mrb[0].mxu0
  %v5235 = vadd.f32 %v5134, %v5234
  %v5236 = vpop.f32.mrb[0].mxu0
  %v5237 = vpop.f32.mrb[0].mxu0
  %v5238 = vadd.f32 %v5134, %v5237
  %v5239 = vpop.f32.mrb[0].mxu0
  %5240 = vmatprep.mubr.bf16.mxu0 0
  %5241 = vmatmul.mubr.bf16.gmra.mrb[0].mxu0 %v5052
  %v5242 = vpop.f32.mrb[0].mxu0
  %v5243 = vadd.f32 %v5134, %v5242
  %v5244 = vpop.f32.mrb[0].mxu0
  %v5245 = vpop.f32.mrb[0].mxu0
  %v5246 = vadd.f32 %v5134, %v5245
  %v5247 = vpop.f32.mrb[0].mxu0
  %5248 = vmatprep.mubr.bf16.mxu0 0
  %5249 = vmatmul.mubr.bf16.gmra.mrb[0].mxu0 %v5053
  %v5250 = vpop.f32.mrb[0].mxu0
  %v5251 = vadd.f32 %v5134, %v5250
  %v5252 = vpop.f32.mrb[0].mxu0
  %v5253 = vpop.f32.mrb[0].mxu0
  %v5254 = vadd.f32 %v5134, %v5253
  %v5255 = vpop.f32.mrb[0].mxu0
  %5256 = vmatprep.mubr.bf16.mxu0 0
  %5257 = vmatmul.mubr.bf16.gmra.mrb[0].mxu0 %v5054
  %v5258 = vpop.f32.mrb[0].mxu0
  %v5259 = vadd.f32 %v5134, %v5258
  %v5260 = vpop.f32.mrb[0].mxu0
  %v5261 = vpop.f32.mrb[0].mxu0
  %v5262 = vadd.f32 %v5134, %v5261
  %v5263 = vpop.f32.mrb[0].mxu0
  %5264 = vmatprep.mubr.bf16.mxu0 0
  %5265 = vmatmul.mubr.bf16.gmra.mrb[0].mxu0 %v5055
  %v5266 = vpop.f32.mrb[0].mxu0
  %v5267 = vadd.f32 %v5134, %v5266
  %v5268 = vpop.f32.mrb[0].mxu0
  %v5269 = vpop.f32.mrb[0].mxu0
  %v5270 = vadd.f32 %v5134, %v5269
  %v5271 = vpop.f32.mrb[0].mxu0
  %5272 = vmatprep.mubr.bf16.mxu0 0
  %5273 = vmatmul.mubr.bf16.gmra.mrb[0].mxu0 %v5056
  %v5274 = vpop.f32.mrb[0].mxu0
  %v5275 = vadd.f32 %v5134, %v5274
  %v5276 = vpop.f32.mrb[0].mxu0
  %v5277 = vpop.f32.mrb[0].mxu0
  %v5278 = vadd.f32 %v5134, %v5277
  %v5279 = vpop.f32.mrb[0].mxu0
  %5280 = vmatprep.mubr.bf16.mxu0 0
  %5281 = vmatmul.mubr.bf16.gmra.mrb[0].mxu0 %v5057
  %v5282 = vpop.f32.mrb[0].mxu0
  %v5283 = vadd.f32 %v5134, %v5282
  %v5284 = vpop.f32.mrb[0].mxu0
  %v5285 = vpop.f32.mrb[0].mxu0
  %v5286 = vadd.f32 %v5134, %v5285
  %v5287 = vpop.f32.mrb[0].mxu0
  %5288 = vmatprep.mubr.bf16.mxu0 0
  %5289 = vmatmul.mubr.bf16.gmra.mrb[0].mxu0 %v5058
  %v5290 = vpop.f32.mrb[0].mxu0
  %v5291 = vadd.f32 %v5134, %v5290
  %v5292 = vpop.f32.mrb[0].mxu0
  %v5293 = vpop.f32.mrb[0].mxu0
  %v5294 = vadd.f32 %v5134, %v5293
  %v5295 = vpop.f32.mrb[0].mxu0
  %5296 = vmatprep.mubr.bf16.mxu0 0
  %5297 = vmatmul.mubr.bf16.gmra.mrb[0].mxu0 %v5059
  %v5298 = vpop.f32.mrb[0].mxu0
  %v5299 = vadd.f32 %v5134, %v5298
  %v5300 = vpop.f32.mrb[0].mxu0
  %v5301 = vpop.f32.mrb[0].mxu0
  %v5302 = vadd.f32 %v5134, %v5301
  %v5303 = vpop.f32.mrb[0].mxu0
  %5304 = vmatprep.mubr.bf16.mxu0 0
  %5305 = vmatmul.mubr.bf16.gmra.mrb[0].mxu0 %v5060
  %v5306 = vpop.f32.mrb[0].mxu0
  %v5307 = vadd.f32 %v5134, %v5306
  %v5308 = vpop.f32.mrb[0].mxu0
  %v5309 = vpop.f32.mrb[0].mxu0
  %v5310 = vadd.f32 %v5134, %v5309
  %v5311 = vpop.f32.mrb[0].mxu0
  %5312 = vmatprep.mubr.bf16.mxu0 0
  %5313 = vmatmul.mubr.bf16.gmra.mrb[0].mxu0 %v5061
  %v5314 = vpop.f32.mrb[0].mxu0
  %v5315 = vadd.f32 %v5134, %v5314
  %v5316 = vpop.f32.mrb[0].mxu0
  %v5317 = vpop.f32.mrb[0].mxu0
  %v5318 = vadd.f32 %v5134, %v5317
  %v5319 = vpop.f32.mrb[0].mxu0
  %5320 = vmatprep.mubr.bf16.mxu0 0
  %5321 = vmatmul.mubr.bf16.gmra.mrb[0].mxu0 %v5062
  %v5322 = vpop.f32.mrb[0].mxu0
  %v5323 = vadd.f32 %v5134, %v5322
  %v5324 = vpop.f32.mrb[0].mxu0
  %v5325 = vpop.f32.mrb[0].mxu0
  %v5326 = vadd.f32 %v5134, %v5325
  %v5327 = vpop.f32.mrb[0].mxu0
  %5328 = vmatprep.mubr.bf16.mxu0 0
  %5329 = vmatmul.mubr.bf16.gmra.mrb[0].mxu0 %v5063
  %v5330 = vpop.f32.mrb[0].mxu0
  %v5331 = vadd.f32 %v5134, %v5330
  %v5332 = vpop.f32.mrb[0].mxu0
  %v5333 = vpop.f32.mrb[0].mxu0
  %v5334 = vadd.f32 %v5134, %v5333
  %v5335 = vpop.f32.mrb[0].mxu0
  %5336 = vmatprep.mubr.bf16.mxu0 0
  %5337 = vmatmul.mubr.bf16.gmra.mrb[0].mxu0 %v5064
  %v5338 = vpop.f32.mrb[0].mxu0
  %v5339 = vadd.f32 %v5134, %v5338
  %v5340 = vpop.f32.mrb[0].mxu0
  %v5341 = vpop.f32.mrb[0].mxu0
  %v5342 = vadd.f32 %v5134, %v5341
  %v5343 = vpop.f32.mrb[0].mxu0
  %5344 = vmatprep.mubr.bf16.mxu0 0
  %5345 = vmatmul.mubr.bf16.gmra.mrb[0].mxu0 %v5065
  %v5346 = vpop.f32.mrb[0].mxu0
  %v5347 = vadd.f32 %v5134, %v5346
  %v5348 = vpop.f32.mrb[0].mxu0
  %v5349 = vpop.f32.mrb[0].mxu0
  %v5350 = vadd.f32 %v5134, %v5349
  %v5351 = vpop.f32.mrb[0].mxu0
  %5352 = vmatprep.mubr.bf16.mxu0 0
  %5353 = vmatmul.mubr.bf16.gmra.mrb[0].mxu0 %v5066
  %v5354 = vpop.f32.mrb[0].mxu0
  %v5355 = vadd.f32 %v5134, %v5354
  %v5356 = vpop.f32.mrb[0].mxu0
  %v5357 = vpop.f32.mrb[0].mxu0
  %v5358 = vadd.f32 %v5134, %v5357
  %v5359 = vpop.f32.mrb[0].mxu0
  %5360 = vmatprep.mubr.bf16.mxu0 0
  %5361 = vmatmul.mubr.bf16.gmra.mrb[0].mxu0 %v5067
  %v5362 = vpop.f32.mrb[0].mxu0
  %v5363 = vadd.f32 %v5134, %v5362
  %v5364 = vpop.f32.mrb[0].mxu0
  %v5365 = vpop.f32.mrb[0].mxu0
  %v5366 = vadd.f32 %v5134, %v5365
  %v5367 = vpop.f32.mrb[0].mxu0
  %5368 = vmatprep.mubr.bf16.mxu0 0
  %5369 = vmatmul.mubr.bf16.gmra.mrb[0].mxu0 %v5068
  %v5370 = vpop.f32.mrb[0].mxu0
  %v5371 = vadd.f32 %v5134, %v5370
  %v5372 = vpop.f32.mrb[0].mxu0
  %v5373 = vpop.f32.mrb[0].mxu0
  %v5374 = vadd.f32 %v5134, %v5373
  %v5375 = vpop.f32.mrb[0].mxu0
  %5376 = vmatprep.mubr.bf16.mxu0 0
  %5377 = vmatmul.mubr.bf16.gmra.mrb[0].mxu0 %v5069
  %v5378 = vpop.f32.mrb[0].mxu0
  %v5379 = vadd.f32 %v5134, %v5378
  %v5380 = vpop.f32.mrb[0].mxu0
  %v5381 = vpop.f32.mrb[0].mxu0
  %v5382 = vadd.f32 %v5134, %v5381
  %v5383 = vpop.f32.mrb[0].mxu0
  %5384 = vmatprep.mubr.bf16.mxu0 0
  %5385 = vmatmul.mubr.bf16.gmra.mrb[0].mxu0 %v5070
  %v5386 = vpop.f32.mrb[0].mxu0
  %v5387 = vadd.f32 %v5134, %v5386
  %v5388 = vpop.f32.mrb[0].mxu0
  %v5389 = vpop.f32.mrb[0].mxu0
  %v5390 = vadd.f32 %v5134, %v5389
  %v5391 = vpop.f32.mrb[0].mxu0
  %5392 = vmatprep.mubr.bf16.mxu0 0
  %5393 = vmatmul.mubr.bf16.gmra.mrb[0].mxu0 %v5071
  %v5394 = vpop.f32.mrb[0].mxu0
  %v5395 = vadd.f32 %v5134, %v5394
  %v5396 = vpop.f32.mrb[0].mxu0
  %v5397 = vpop.f32.mrb[0].mxu0
  %v5398 = vadd.f32 %v5134, %v5397
  %v5399 = vpop.f32.mrb[0].mxu0
  %5400 = vmatprep.mubr.bf16.mxu0 0
  %5401 = vmatmul.mubr.bf16.gmra.mrb[0].mxu0 %v5072
  %v5402 = vpop.f32.mrb[0].mxu0
  %v5403 = vadd.f32 %v5134, %v5402
  %v5404 = vpop.f32.mrb[0].mxu0
  %v5405 = vpop.f32.mrb[0].mxu0
  %v5406 = vadd.f32 %v5134, %v5405
  %v5407 = vpop.f32.mrb[0].mxu0
  %5408 = vmatprep.mubr.bf16.mxu0 0
  %5409 = vmatmul.mubr.bf16.gmra.mrb[0].mxu0 %v5073
  %v5410 = vpop.f32.mrb[0].mxu0
  %v5411 = vadd.f32 %v5134, %v5410
  %v5412 = vpop.f32.mrb[0].mxu0
  %v5413 = vpop.f32.mrb[0].mxu0
  %v5414 = vadd.f32 %v5134, %v5413
  %v5415 = vpop.f32.mrb[0].mxu0
  %5416 = vmatprep.mubr.bf16.mxu0 0
  %5417 = vmatmul.mubr.bf16.gmra.mrb[0].mxu0 %v5074
  %v5418 = vpop.f32.mrb[0].mxu0
  %v5419 = vadd.f32 %v5134, %v5418
  %v5420 = vpop.f32.mrb[0].mxu0
  %v5421 = vpop.f32.mrb[0].mxu0
  %v5422 = vadd.f32 %v5134, %v5421
  %v5423 = vpop.f32.mrb[0].mxu0
  %5424 = vmatprep.mubr.bf16.mxu0 0
  %5425 = vmatmul.mubr.bf16.gmra.mrb[0].mxu0 %v5075
  %v5426 = vpop.f32.mrb[0].mxu0
  %v5427 = vadd.f32 %v5134, %v5426
  %v5428 = vpop.f32.mrb[0].mxu0
  %v5429 = vpop.f32.mrb[0].mxu0
  %v5430 = vadd.f32 %v5134, %v5429
  %v5431 = vpop.f32.mrb[0].mxu0
  %5432 = vmatprep.mubr.bf16.mxu0 0
  %5433 = vmatmul.mubr.bf16.gmra.mrb[0].mxu0 %v5076
  %v5434 = vpop.f32.mrb[0].mxu0
  %v5435 = vadd.f32 %v5134, %v5434
  %v5436 = vpop.f32.mrb[0].mxu0
  %v5437 = vpop.f32.mrb[0].mxu0
  %v5438 = vadd.f32 %v5134, %v5437
  %v5439 = vpop.f32.mrb[0].mxu0
  %5440 = vmatprep.mubr.bf16.mxu0 0
  %5441 = vmatmul.mubr.bf16.gmra.mrb[0].mxu0 %v5077
  %v5442 = vpop.f32.mrb[0].mxu0
  %v5443 = vadd.f32 %v5134, %v5442
  %v5444 = vpop.f32.mrb[0].mxu0
  %v5445 = vpop.f32.mrb[0].mxu0
  %v5446 = vadd.f32 %v5134, %v5445
  %v5447 = vpop.f32.mrb[0].mxu0
  %5448 = vmatprep.mubr.bf16.mxu0 0
  %5449 = vmatmul.mubr.bf16.gmra.mrb[0].mxu0 %v5078
  %v5450 = vpop.f32.mrb[0].mxu0
  %v5451 = vadd.f32 %v5134, %v5450
  %v5452 = vpop.f32.mrb[0].mxu0
  %v5453 = vpop.f32.mrb[0].mxu0
  %v5454 = vadd.f32 %v5134, %v5453
  %v5455 = vpop.f32.mrb[0].mxu0
  %5456 = vmatprep.mubr.bf16.mxu0 0
  %5457 = vmatmul.mubr.bf16.gmra.mrb[0].mxu0 %v5079
  %v5458 = vpop.f32.mrb[0].mxu0
  %v5459 = vadd.f32 %v5134, %v5458
  %v5460 = vpop.f32.mrb[0].mxu0
  %v5461 = vpop.f32.mrb[0].mxu0
  %v5462 = vadd.f32 %v5134, %v5461
  %v5463 = vpop.f32.mrb[0].mxu0
  %5464 = vmatprep.mubr.bf16.mxu0 0
  %5465 = vmatmul.mubr.bf16.gmra.mrb[0].mxu0 %v5080
  %v5466 = vpop.f32.mrb[0].mxu0
  %v5467 = vadd.f32 %v5134, %v5466
  %v5468 = vpop.f32.mrb[0].mxu0
  %v5469 = vpop.f32.mrb[0].mxu0
  %v5470 = vadd.f32 %v5134, %v5469
  %v5471 = vpop.f32.mrb[0].mxu0
  %5472 = vmatprep.mubr.bf16.mxu0 0
  %5473 = vmatmul.mubr.bf16.gmra.mrb[0].mxu0 %v5081
  %v5474 = vpop.f32.mrb[0].mxu0
  %v5475 = vadd.f32 %v5134, %v5474
  %v5476 = vpop.f32.mrb[0].mxu0
  %v5477 = vpop.f32.mrb[0].mxu0
  %v5478 = vadd.f32 %v5134, %v5477
  %v5479 = vpop.f32.mrb[0].mxu0
  %5480 = vmatprep.mubr.bf16.mxu0 0
  %5481 = vmatmul.mubr.bf16.gmra.mrb[0].mxu0 %v5082
  %v5482 = vpop.f32.mrb[0].mxu0
  %v5483 = vadd.f32 %v5134, %v5482
  %v5484 = vpop.f32.mrb[0].mxu0
  %v5485 = vpop.f32.mrb[0].mxu0
  %v5486 = vadd.f32 %v5134, %v5485
  %v5487 = vpop.f32.mrb[0].mxu0
  %5488 = vmatprep.mubr.bf16.mxu0 0
  %5489 = vmatmul.mubr.bf16.gmra.mrb[0].mxu0 %v5083
  %v5490 = vpop.f32.mrb[0].mxu0
  %v5491 = vadd.f32 %v5134, %v5490
  %v5492 = vpop.f32.mrb[0].mxu0
  %v5493 = vpop.f32.mrb[0].mxu0
  %v5494 = vadd.f32 %v5134, %v5493
  %v5495 = vpop.f32.mrb[0].mxu0
  %5496 = vmatprep.mubr.bf16.mxu0 0
  %5497 = vmatmul.mubr.bf16.gmra.mrb[0].mxu0 %v5084
  %v5498 = vpop.f32.mrb[0].mxu0
  %v5499 = vadd.f32 %v5134, %v5498
  %v5500 = vpop.f32.mrb[0].mxu0
  %v5501 = vpop.f32.mrb[0].mxu0
  %v5502 = vadd.f32 %v5134, %v5501
  %v5503 = vpop.f32.mrb[0].mxu0
  %5504 = vmatprep.mubr.bf16.mxu0 0
  %5505 = vmatmul.mubr.bf16.gmra.mrb[0].mxu0 %v5085
  %v5506 = vpop.f32.mrb[0].mxu0
  %v5507 = vadd.f32 %v5134, %v5506
  %v5508 = vpop.f32.mrb[0].mxu0
  %v5509 = vpop.f32.mrb[0].mxu0
  %v5510 = vadd.f32 %v5134, %v5509
  %v5511 = vpop.f32.mrb[0].mxu0
  %5512 = vmatprep.mubr.bf16.mxu0 0
  %5513 = vmatmul.mubr.bf16.gmra.mrb[0].mxu0 %v5086
  %v5514 = vpop.f32.mrb[0].mxu0
  %v5515 = vadd.f32 %v5134, %v5514
  %v5516 = vpop.f32.mrb[0].mxu0
  %v5517 = vpop.f32.mrb[0].mxu0
  %v5518 = vadd.f32 %v5134, %v5517
  %v5519 = vpop.f32.mrb[0].mxu0
  %5520 = vmatprep.mubr.bf16.mxu0 0
  %5521 = vmatmul.mubr.bf16.gmra.mrb[0].mxu0 %v5087
  %v5522 = vpop.f32.mrb[0].mxu0
  %v5523 = vadd.f32 %v5134, %v5522
  %v5524 = vpop.f32.mrb[0].mxu0
  %v5525 = vpop.f32.mrb[0].mxu0
  %v5526 = vadd.f32 %v5134, %v5525
  %v5527 = vpop.f32.mrb[0].mxu0
  %5528 = vmatprep.mubr.bf16.mxu0 0
  %5529 = vmatmul.mubr.bf16.gmra.mrb[0].mxu0 %v5088
  %v5530 = vpop.f32.mrb[0].mxu0
  %v5531 = vadd.f32 %v5134, %v5530
  %v5532 = vpop.f32.mrb[0].mxu0
  %v5533 = vpop.f32.mrb[0].mxu0
  %v5534 = vadd.f32 %v5134, %v5533
  %v5535 = vpop.f32.mrb[0].mxu0
  %5536 = vmatprep.mubr.bf16.mxu0 0
  %5537 = vmatmul.mubr.bf16.gmra.mrb[0].mxu0 %v5089
  %v5538 = vpop.f32.mrb[0].mxu0
  %v5539 = vadd.f32 %v5134, %v5538
  %v5540 = vpop.f32.mrb[0].mxu0
  %v5541 = vpop.f32.mrb[0].mxu0
  %v5542 = vadd.f32 %v5134, %v5541
  %v5543 = vpop.f32.mrb[0].mxu0
  %5544 = vmatprep.mubr.bf16.mxu0 0
  %5545 = vmatmul.mubr.bf16.gmra.mrb[0].mxu0 %v5090
  %v5546 = vpop.f32.mrb[0].mxu0
  %v5547 = vadd.f32 %v5134, %v5546
  %v5548 = vpop.f32.mrb[0].mxu0
  %v5549 = vpop.f32.mrb[0].mxu0
  %v5550 = vadd.f32 %v5134, %v5549
  %v5551 = vpop.f32.mrb[0].mxu0
  %5552 = vmatprep.mubr.bf16.mxu0 0
  %5553 = vmatmul.mubr.bf16.gmra.mrb[0].mxu0 %v5091
  %v5554 = vpop.f32.mrb[0].mxu0
  %v5555 = vadd.f32 %v5134, %v5554
  %v5556 = vpop.f32.mrb[0].mxu0
  %v5557 = vpop.f32.mrb[0].mxu0
  %v5558 = vadd.f32 %v5134, %v5557
  %v5559 = vpop.f32.mrb[0].mxu0
  %5560 = vmatprep.mubr.bf16.mxu0 0
  %5561 = vmatmul.mubr.bf16.gmra.mrb[0].mxu0 %v5092
  %v5562 = vpop.f32.mrb[0].mxu0
  %v5563 = vadd.f32 %v5134, %v5562
  %v5564 = vpop.f32.mrb[0].mxu0
  %v5565 = vpop.f32.mrb[0].mxu0
  %v5566 = vadd.f32 %v5134, %v5565
  %v5567 = vpop.f32.mrb[0].mxu0
  %5568 = vmatprep.mubr.bf16.mxu0 0
  %5569 = vmatmul.mubr.bf16.gmra.mrb[0].mxu0 %v5093
  %v5570 = vpop.f32.mrb[0].mxu0
  %v5571 = vadd.f32 %v5134, %v5570
  %v5572 = vpop.f32.mrb[0].mxu0
  %v5573 = vpop.f32.mrb[0].mxu0
  %v5574 = vadd.f32 %v5134, %v5573
  %v5575 = vpop.f32.mrb[0].mxu0
  %5576 = vmatprep.mubr.bf16.mxu0 0
  %5577 = vmatmul.mubr.bf16.gmra.mrb[0].mxu0 %v5094
  %v5578 = vpop.f32.mrb[0].mxu0
  %v5579 = vadd.f32 %v5134, %v5578
  %v5580 = vpop.f32.mrb[0].mxu0
  %v5581 = vpop.f32.mrb[0].mxu0
  %v5582 = vadd.f32 %v5134, %v5581
  %v5583 = vpop.f32.mrb[0].mxu0
  %5584 = vmatprep.mubr.bf16.mxu0 0
  %5585 = vmatmul.mubr.bf16.gmra.mrb[0].mxu0 %v5095
  %v5586 = vpop.f32.mrb[0].mxu0
  %v5587 = vadd.f32 %v5134, %v5586
  %v5588 = vpop.f32.mrb[0].mxu0
  %v5589 = vpop.f32.mrb[0].mxu0
  %v5590 = vadd.f32 %v5134, %v5589
  %v5591 = vpop.f32.mrb[0].mxu0
  %5592 = vmatprep.mubr.bf16.mxu0 0
  %5593 = vmatmul.mubr.bf16.gmra.mrb[0].mxu0 %v5096
  %v5594 = vpop.f32.mrb[0].mxu0
  %v5595 = vadd.f32 %v5134, %v5594
  %v5596 = vpop.f32.mrb[0].mxu0
  %v5597 = vpop.f32.mrb[0].mxu0
  %v5598 = vadd.f32 %v5134, %v5597
  %v5599 = vpop.f32.mrb[0].mxu0
  %5600 = vmatprep.mubr.bf16.mxu0 0
  %5601 = vmatmul.mubr.bf16.gmra.mrb[0].mxu0 %v5097
  %v5602 = vpop.f32.mrb[0].mxu0
  %v5603 = vadd.f32 %v5134, %v5602
  %v5604 = vpop.f32.mrb[0].mxu0
  %v5605 = vpop.f32.mrb[0].mxu0
  %v5606 = vadd.f32 %v5134, %v5605
  %v5607 = vpop.f32.mrb[0].mxu0
  %5608 = vmatprep.mubr.bf16.mxu0 0
  %5609 = vmatmul.mubr.bf16.gmra.mrb[0].mxu0 %v5098
  %v5610 = vpop.f32.mrb[0].mxu0
  %v5611 = vadd.f32 %v5134, %v5610
  %v5612 = vpop.f32.mrb[0].mxu0
  %v5613 = vpop.f32.mrb[0].mxu0
  %v5614 = vadd.f32 %v5134, %v5613
  %v5615 = vpop.f32.mrb[0].mxu0
  %5616 = vmatprep.mubr.bf16.mxu0 0
  %5617 = vmatmul.mubr.bf16.gmra.mrb[0].mxu0 %v5099
  %v5618 = vpop.f32.mrb[0].mxu0
  %v5619 = vadd.f32 %v5134, %v5618
  %v5620 = vpop.f32.mrb[0].mxu0
  %v5621 = vpop.f32.mrb[0].mxu0
  %v5622 = vadd.f32 %v5134, %v5621
  %v5623 = vpop.f32.mrb[0].mxu0
  %5624 = vmatprep.mubr.bf16.mxu0 0
  %5625 = vmatmul.mubr.bf16.gmra.mrb[0].mxu0 %v5100
  %v5626 = vpop.f32.mrb[0].mxu0
  %v5627 = vadd.f32 %v5134, %v5626
  %v5628 = vpop.f32.mrb[0].mxu0
  %v5629 = vpop.f32.mrb[0].mxu0
  %v5630 = vadd.f32 %v5134, %v5629
  %v5631 = vpop.f32.mrb[0].mxu0
  %5632 = vmatprep.mubr.bf16.mxu0 0
  %5633 = vmatmul.mubr.bf16.gmra.mrb[0].mxu0 %v5101
  %v5634 = vpop.f32.mrb[0].mxu0
  %v5635 = vadd.f32 %v5134, %v5634
  %v5636 = vpop.f32.mrb[0].mxu0
  %v5637 = vpop.f32.mrb[0].mxu0
  %v5638 = vadd.f32 %v5134, %v5637
  %v5639 = vpop.f32.mrb[0].mxu0
  %5640 = vmatprep.mubr.bf16.mxu0 0
  %5641 = vmatmul.mubr.bf16.gmra.mrb[0].mxu0 %v5102
  %v5642 = vpop.f32.mrb[0].mxu0
  %v5643 = vadd.f32 %v5134, %v5642
  %v5644 = vpop.f32.mrb[0].mxu0
  %v5645 = vpop.f32.mrb[0].mxu0
  %v5646 = vadd.f32 %v5134, %v5645
  %v5647 = vpop.f32.mrb[0].mxu0
  %5648 = vmatprep.mubr.bf16.mxu0 0
  %5649 = vmatmul.mubr.bf16.gmra.mrb[0].mxu0 %v5103
  %v5650 = vpop.f32.mrb[0].mxu0
  %v5651 = vadd.f32 %v5134, %v5650
  %v5652 = vpop.f32.mrb[0].mxu0
  %v5653 = vpop.f32.mrb[0].mxu0
  %v5654 = vadd.f32 %v5134, %v5653
  %v5655 = vpop.f32.mrb[0].mxu0
  %5656 = vmatprep.mubr.bf16.mxu0 0
  %5657 = vmatmul.mubr.bf16.gmra.mrb[0].mxu0 %v5104
  %v5658 = vpop.f32.mrb[0].mxu0
  %v5659 = vadd.f32 %v5134, %v5658
  %v5660 = vpop.f32.mrb[0].mxu0
  %v5661 = vpop.f32.mrb[0].mxu0
  %v5662 = vadd.f32 %v5134, %v5661
  %v5663 = vpop.f32.mrb[0].mxu0
  %5664 = vmatprep.mubr.bf16.mxu0 0
  %5665 = vmatmul.mubr.bf16.gmra.mrb[0].mxu0 %v5105
  %v5666 = vpop.f32.mrb[0].mxu0
  %v5667 = vadd.f32 %v5134, %v5666
  %v5668 = vpop.f32.mrb[0].mxu0
  %v5669 = vpop.f32.mrb[0].mxu0
  %v5670 = vadd.f32 %v5134, %v5669
  %v5671 = vpop.f32.mrb[0].mxu0
  %5672 = vmatprep.mubr.bf16.mxu0 0
  %5673 = vmatmul.mubr.bf16.gmra.mrb[0].mxu0 %v5106
  %v5674 = vpop.f32.mrb[0].mxu0
  %v5675 = vadd.f32 %v5134, %v5674
  %v5676 = vpop.f32.mrb[0].mxu0
  %v5677 = vpop.f32.mrb[0].mxu0
  %v5678 = vadd.f32 %v5134, %v5677
  %v5679 = vpop.f32.mrb[0].mxu0
  %5680 = vmatprep.mubr.bf16.mxu0 0
  %5681 = vmatmul.mubr.bf16.gmra.mrb[0].mxu0 %v5107
  %v5682 = vpop.f32.mrb[0].mxu0
  %v5683 = vadd.f32 %v5134, %v5682
  %v5684 = vpop.f32.mrb[0].mxu0
  %v5685 = vpop.f32.mrb[0].mxu0
  %v5686 = vadd.f32 %v5134, %v5685
  %v5687 = vpop.f32.mrb[0].mxu0
  %5688 = vmatprep.mubr.bf16.mxu0 0
  %5689 = vmatmul.mubr.bf16.gmra.mrb[0].mxu0 %v5108
  %v5690 = vpop.f32.mrb[0].mxu0
  %v5691 = vadd.f32 %v5134, %v5690
  %v5692 = vpop.f32.mrb[0].mxu0
  %v5693 = vpop.f32.mrb[0].mxu0
  %v5694 = vadd.f32 %v5134, %v5693
  %v5695 = vpop.f32.mrb[0].mxu0
  %5696 = vmatprep.mubr.bf16.mxu0 0
  %5697 = vmatmul.mubr.bf16.gmra.mrb[0].mxu0 %v5109
  %v5698 = vpop.f32.mrb[0].mxu0
  %v5699 = vadd.f32 %v5134, %v5698
  %v5700 = vpop.f32.mrb[0].mxu0
  %v5701 = vpop.f32.mrb[0].mxu0
  %v5702 = vadd.f32 %v5134, %v5701
  %v5703 = vpop.f32.mrb[0].mxu0
  %5704 = vmatprep.mubr.bf16.mxu0 0
  %5705 = vmatmul.mubr.bf16.gmra.mrb[0].mxu0 %v5110
  %v5706 = vpop.f32.mrb[0].mxu0
  %v5707 = vadd.f32 %v5134, %v5706
  %v5708 = vpop.f32.mrb[0].mxu0
  %v5709 = vpop.f32.mrb[0].mxu0
  %v5710 = vadd.f32 %v5134, %v5709
  %v5711 = vpop.f32.mrb[0].mxu0
  %5712 = vmatprep.mubr.bf16.mxu0 0
  %5713 = vmatmul.mubr.bf16.gmra.mrb[0].mxu0 %v5111
  %v5714 = vpop.f32.mrb[0].mxu0
  %v5715 = vadd.f32 %v5134, %v5714
  %v5716 = vpop.f32.mrb[0].mxu0
  %v5717 = vpop.f32.mrb[0].mxu0
  %v5718 = vadd.f32 %v5134, %v5717
  %v5719 = vpop.f32.mrb[0].mxu0
  %5720 = vmatprep.mubr.bf16.mxu0 0
  %5721 = vmatmul.mubr.bf16.gmra.mrb[0].mxu0 %v5112
  %v5722 = vpop.f32.mrb[0].mxu0
  %v5723 = vadd.f32 %v5134, %v5722
  %v5724 = vpop.f32.mrb[0].mxu0
  %v5725 = vpop.f32.mrb[0].mxu0
  %v5726 = vadd.f32 %v5134, %v5725
  %v5727 = vpop.f32.mrb[0].mxu0
  %5728 = vdwg.mxu0
  %v5729 = vmax.f32 %v5219, 0.0
  %v5730 = vmax.f32 %v5222, 0.0
  %v5731 = vmax.f32 %v5227, 0.0
  %v5732 = vmax.f32 %v5230, 0.0
  %v5733 = vmax.f32 %v5235, 0.0
  %v5734 = vmax.f32 %v5238, 0.0
  %v5735 = vmax.f32 %v5243, 0.0
  %v5736 = vmax.f32 %v5246, 0.0
  %v5737 = vmax.f32 %v5251, 0.0
  %v5738 = vmax.f32 %v5254, 0.0
  %v5739 = vmax.f32 %v5259, 0.0
  %v5740 = vmax.f32 %v5262, 0.0
  %v5741 = vmax.f32 %v5267, 0.0
  %v5742 = vmax.f32 %v5270, 0.0
  %v5743 = vmax.f32 %v5275, 0.0
  %v5744 = vmax.f32 %v5278, 0.0
  %v5745 = vmax.f32 %v5283, 0.0
  %v5746 = vmax.f32 %v5286, 0.0
  %v5747 = vmax.f32 %v5291, 0.0
  %v5748 = vmax.f32 %v5294, 0.0
  %v5749 = vmax.f32 %v5299, 0.0
  %v5750 = vmax.f32 %v5302, 0.0
  %v5751 = vmax.f32 %v5307, 0.0
  %v5752 = vmax.f32 %v5310, 0.0
  %v5753 = vmax.f32 %v5315, 0.0
  %v5754 = vmax.f32 %v5318, 0.0
  %v5755 = vmax.f32 %v5323, 0.0
  %v5756 = vmax.f32 %v5326, 0.0
  %v5757 = vmax.f32 %v5331, 0.0
  %v5758 = vmax.f32 %v5334, 0.0
  %v5759 = vmax.f32 %v5339, 0.0
  %v5760 = vmax.f32 %v5342, 0.0
  %v5761 = vmax.f32 %v5347, 0.0
  %v5762 = vmax.f32 %v5350, 0.0
  %v5763 = vmax.f32 %v5355, 0.0
  %v5764 = vmax.f32 %v5358, 0.0
  %v5765 = vmax.f32 %v5363, 0.0
  %v5766 = vmax.f32 %v5366, 0.0
  %v5767 = vmax.f32 %v5371, 0.0
  %v5768 = vmax.f32 %v5374, 0.0
  %v5769 = vmax.f32 %v5379, 0.0
  %v5770 = vmax.f32 %v5382, 0.0
  %v5771 = vmax.f32 %v5387, 0.0
  %v5772 = vmax.f32 %v5390, 0.0
  %v5773 = vmax.f32 %v5395, 0.0
  %v5774 = vmax.f32 %v5398, 0.0
  %v5775 = vmax.f32 %v5403, 0.0
  %v5776 = vmax.f32 %v5406, 0.0
  %v5777 = vmax.f32 %v5411, 0.0
  %v5778 = vmax.f32 %v5414, 0.0
  %v5779 = vmax.f32 %v5419, 0.0
  %v5780 = vmax.f32 %v5422, 0.0
  %v5781 = vmax.f32 %v5427, 0.0
  %v5782 = vmax.f32 %v5430, 0.0
  %v5783 = vmax.f32 %v5435, 0.0
  %v5784 = vmax.f32 %v5438, 0.0
  %v5785 = vmax.f32 %v5443, 0.0
  %v5786 = vmax.f32 %v5446, 0.0
  %v5787 = vmax.f32 %v5451, 0.0
  %v5788 = vmax.f32 %v5454, 0.0
  %v5789 = vmax.f32 %v5459, 0.0
  %v5790 = vmax.f32 %v5462, 0.0
  %v5791 = vmax.f32 %v5467, 0.0
  %v5792 = vmax.f32 %v5470, 0.0
  %v5793 = vmax.f32 %v5475, 0.0
  %v5794 = vmax.f32 %v5478, 0.0
  %v5795 = vmax.f32 %v5483, 0.0
  %v5796 = vmax.f32 %v5486, 0.0
  %v5797 = vmax.f32 %v5491, 0.0
  %v5798 = vmax.f32 %v5494, 0.0
  %v5799 = vmax.f32 %v5499, 0.0
  %v5800 = vmax.f32 %v5502, 0.0
  %v5801 = vmax.f32 %v5507, 0.0
  %v5802 = vmax.f32 %v5510, 0.0
  %v5803 = vmax.f32 %v5515, 0.0
  %v5804 = vmax.f32 %v5518, 0.0
  %v5805 = vmax.f32 %v5523, 0.0
  %v5806 = vmax.f32 %v5526, 0.0
  %v5807 = vmax.f32 %v5531, 0.0
  %v5808 = vmax.f32 %v5534, 0.0
  %v5809 = vmax.f32 %v5539, 0.0
  %v5810 = vmax.f32 %v5542, 0.0
  %v5811 = vmax.f32 %v5547, 0.0
  %v5812 = vmax.f32 %v5550, 0.0
  %v5813 = vmax.f32 %v5555, 0.0
  %v5814 = vmax.f32 %v5558, 0.0
  %v5815 = vmax.f32 %v5563, 0.0
  %v5816 = vmax.f32 %v5566, 0.0
  %v5817 = vmax.f32 %v5571, 0.0
  %v5818 = vmax.f32 %v5574, 0.0
  %v5819 = vmax.f32 %v5579, 0.0
  %v5820 = vmax.f32 %v5582, 0.0
  %v5821 = vmax.f32 %v5587, 0.0
  %v5822 = vmax.f32 %v5590, 0.0
  %v5823 = vmax.f32 %v5595, 0.0
  %v5824 = vmax.f32 %v5598, 0.0
  %v5825 = vmax.f32 %v5603, 0.0
  %v5826 = vmax.f32 %v5606, 0.0
  %v5827 = vmax.f32 %v5611, 0.0
  %v5828 = vmax.f32 %v5614, 0.0
  %v5829 = vmax.f32 %v5619, 0.0
  %v5830 = vmax.f32 %v5622, 0.0
  %v5831 = vmax.f32 %v5627, 0.0
  %v5832 = vmax.f32 %v5630, 0.0
  %v5833 = vmax.f32 %v5635, 0.0
  %v5834 = vmax.f32 %v5638, 0.0
  %v5835 = vmax.f32 %v5643, 0.0
  %v5836 = vmax.f32 %v5646, 0.0
  %v5837 = vmax.f32 %v5651, 0.0
  %v5838 = vmax.f32 %v5654, 0.0
  %v5839 = vmax.f32 %v5659, 0.0
  %v5840 = vmax.f32 %v5662, 0.0
  %v5841 = vmax.f32 %v5667, 0.0
  %v5842 = vmax.f32 %v5670, 0.0
  %v5843 = vmax.f32 %v5675, 0.0
  %v5844 = vmax.f32 %v5678, 0.0
  %v5845 = vmax.f32 %v5683, 0.0
  %v5846 = vmax.f32 %v5686, 0.0
  %v5847 = vmax.f32 %v5691, 0.0
  %v5848 = vmax.f32 %v5694, 0.0
  %v5849 = vmax.f32 %v5699, 0.0
  %v5850 = vmax.f32 %v5702, 0.0
  %v5851 = vmax.f32 %v5707, 0.0
  %v5852 = vmax.f32 %v5710, 0.0
  %v5853 = vmax.f32 %v5715, 0.0
  %v5854 = vmax.f32 %v5718, 0.0
  %v5855 = vmax.f32 %v5723, 0.0
  %v5856 = vmax.f32 %v5726, 0.0
  %v5857 = vmax.f32 %v5729, %v5730
  %v5858 = vmax.f32 %v5857, %v5731
  %v5859 = vmax.f32 %v5858, %v5732
  %v5860 = vmax.f32 %v5859, %v5733
  %v5861 = vmax.f32 %v5860, %v5734
  %v5862 = vmax.f32 %v5861, %v5735
  %v5863 = vmax.f32 %v5862, %v5736
  %v5864 = vrot.slane %v5863, 4
  %v5865 = vmax.f32 %v5863, %v5864
  %v5866 = vrot.slane %v5865, 2
  %v5867 = vmax.f32 %v5865, %v5866
  %v5868 = vrot.slane %v5867, 1
  %v5869 = vmax.f32 %v5867, %v5868
  %v5870 = vmax.f32 %v5737, %v5738
  %v5871 = vmax.f32 %v5870, %v5739
  %v5872 = vmax.f32 %v5871, %v5740
  %v5873 = vmax.f32 %v5872, %v5741
  %v5874 = vmax.f32 %v5873, %v5742
  %v5875 = vmax.f32 %v5874, %v5743
  %v5876 = vmax.f32 %v5875, %v5744
  %v5877 = vrot.slane %v5876, 4
  %v5878 = vmax.f32 %v5876, %v5877
  %v5879 = vrot.slane %v5878, 2
  %v5880 = vmax.f32 %v5878, %v5879
  %v5881 = vrot.slane %v5880, 1
  %v5882 = vmax.f32 %v5880, %v5881
  %v5883 = vmax.f32 %v5745, %v5746
  %v5884 = vmax.f32 %v5883, %v5747
  %v5885 = vmax.f32 %v5884, %v5748
  %v5886 = vmax.f32 %v5885, %v5749
  %v5887 = vmax.f32 %v5886, %v5750
  %v5888 = vmax.f32 %v5887, %v5751
  %v5889 = vmax.f32 %v5888, %v5752
  %v5890 = vrot.slane %v5889, 4
  %v5891 = vmax.f32 %v5889, %v5890
  %v5892 = vrot.slane %v5891, 2
  %v5893 = vmax.f32 %v5891, %v5892
  %v5894 = vrot.slane %v5893, 1
  %v5895 = vmax.f32 %v5893, %v5894
  %v5896 = vmax.f32 %v5753, %v5754
  %v5897 = vmax.f32 %v5896, %v5755
  %v5898 = vmax.f32 %v5897, %v5756
  %v5899 = vmax.f32 %v5898, %v5757
  %v5900 = vmax.f32 %v5899, %v5758
  %v5901 = vmax.f32 %v5900, %v5759
  %v5902 = vmax.f32 %v5901, %v5760
  %v5903 = vrot.slane %v5902, 4
  %v5904 = vmax.f32 %v5902, %v5903
  %v5905 = vrot.slane %v5904, 2
  %v5906 = vmax.f32 %v5904, %v5905
  %v5907 = vrot.slane %v5906, 1
  %v5908 = vmax.f32 %v5906, %v5907
  %v5909 = vmax.f32 %v5761, %v5762
  %v5910 = vmax.f32 %v5909, %v5763
  %v5911 = vmax.f32 %v5910, %v5764
  %v5912 = vmax.f32 %v5911, %v5765
  %v5913 = vmax.f32 %v5912, %v5766
  %v5914 = vmax.f32 %v5913, %v5767
  %v5915 = vmax.f32 %v5914, %v5768
  %v5916 = vrot.slane %v5915, 4
  %v5917 = vmax.f32 %v5915, %v5916
  %v5918 = vrot.slane %v5917, 2
  %v5919 = vmax.f32 %v5917, %v5918
  %v5920 = vrot.slane %v5919, 1
  %v5921 = vmax.f32 %v5919, %v5920
  %v5922 = vmax.f32 %v5769, %v5770
  %v5923 = vmax.f32 %v5922, %v5771
  %v5924 = vmax.f32 %v5923, %v5772
  %v5925 = vmax.f32 %v5924, %v5773
  %v5926 = vmax.f32 %v5925, %v5774
  %v5927 = vmax.f32 %v5926, %v5775
  %v5928 = vmax.f32 %v5927, %v5776
  %v5929 = vrot.slane %v5928, 4
  %v5930 = vmax.f32 %v5928, %v5929
  %v5931 = vrot.slane %v5930, 2
  %v5932 = vmax.f32 %v5930, %v5931
  %v5933 = vrot.slane %v5932, 1
  %v5934 = vmax.f32 %v5932, %v5933
  %v5935 = vmax.f32 %v5777, %v5778
  %v5936 = vmax.f32 %v5935, %v5779
  %v5937 = vmax.f32 %v5936, %v5780
  %v5938 = vmax.f32 %v5937, %v5781
  %v5939 = vmax.f32 %v5938, %v5782
  %v5940 = vmax.f32 %v5939, %v5783
  %v5941 = vmax.f32 %v5940, %v5784
  %v5942 = vrot.slane %v5941, 4
  %v5943 = vmax.f32 %v5941, %v5942
  %v5944 = vrot.slane %v5943, 2
  %v5945 = vmax.f32 %v5943, %v5944
  %v5946 = vrot.slane %v5945, 1
  %v5947 = vmax.f32 %v5945, %v5946
  %v5948 = vmax.f32 %v5785, %v5786
  %v5949 = vmax.f32 %v5948, %v5787
  %v5950 = vmax.f32 %v5949, %v5788
  %v5951 = vmax.f32 %v5950, %v5789
  %v5952 = vmax.f32 %v5951, %v5790
  %v5953 = vmax.f32 %v5952, %v5791
  %v5954 = vmax.f32 %v5953, %v5792
  %v5955 = vrot.slane %v5954, 4
  %v5956 = vmax.f32 %v5954, %v5955
  %v5957 = vrot.slane %v5956, 2
  %v5958 = vmax.f32 %v5956, %v5957
  %v5959 = vrot.slane %v5958, 1
  %v5960 = vmax.f32 %v5958, %v5959
  %v5961 = vmax.f32 %v5793, %v5794
  %v5962 = vmax.f32 %v5961, %v5795
  %v5963 = vmax.f32 %v5962, %v5796
  %v5964 = vmax.f32 %v5963, %v5797
  %v5965 = vmax.f32 %v5964, %v5798
  %v5966 = vmax.f32 %v5965, %v5799
  %v5967 = vmax.f32 %v5966, %v5800
  %v5968 = vrot.slane %v5967, 4
  %v5969 = vmax.f32 %v5967, %v5968
  %v5970 = vrot.slane %v5969, 2
  %v5971 = vmax.f32 %v5969, %v5970
  %v5972 = vrot.slane %v5971, 1
  %v5973 = vmax.f32 %v5971, %v5972
  %v5974 = vmax.f32 %v5801, %v5802
  %v5975 = vmax.f32 %v5974, %v5803
  %v5976 = vmax.f32 %v5975, %v5804
  %v5977 = vmax.f32 %v5976, %v5805
  %v5978 = vmax.f32 %v5977, %v5806
  %v5979 = vmax.f32 %v5978, %v5807
  %v5980 = vmax.f32 %v5979, %v5808
  %v5981 = vrot.slane %v5980, 4
  %v5982 = vmax.f32 %v5980, %v5981
  %v5983 = vrot.slane %v5982, 2
  %v5984 = vmax.f32 %v5982, %v5983
  %v5985 = vrot.slane %v5984, 1
  %v5986 = vmax.f32 %v5984, %v5985
  %v5987 = vmax.f32 %v5809, %v5810
  %v5988 = vmax.f32 %v5987, %v5811
  %v5989 = vmax.f32 %v5988, %v5812
  %v5990 = vmax.f32 %v5989, %v5813
  %v5991 = vmax.f32 %v5990, %v5814
  %v5992 = vmax.f32 %v5991, %v5815
  %v5993 = vmax.f32 %v5992, %v5816
  %v5994 = vrot.slane %v5993, 4
  %v5995 = vmax.f32 %v5993, %v5994
  %v5996 = vrot.slane %v5995, 2
  %v5997 = vmax.f32 %v5995, %v5996
  %v5998 = vrot.slane %v5997, 1
  %v5999 = vmax.f32 %v5997, %v5998
  %v6000 = vmax.f32 %v5817, %v5818
  %v6001 = vmax.f32 %v6000, %v5819
  %v6002 = vmax.f32 %v6001, %v5820
  %v6003 = vmax.f32 %v6002, %v5821
  %v6004 = vmax.f32 %v6003, %v5822
  %v6005 = vmax.f32 %v6004, %v5823
  %v6006 = vmax.f32 %v6005, %v5824
  %v6007 = vrot.slane %v6006, 4
  %v6008 = vmax.f32 %v6006, %v6007
  %v6009 = vrot.slane %v6008, 2
  %v6010 = vmax.f32 %v6008, %v6009
  %v6011 = vrot.slane %v6010, 1
  %v6012 = vmax.f32 %v6010, %v6011
  %v6013 = vmax.f32 %v5825, %v5826
  %v6014 = vmax.f32 %v6013, %v5827
  %v6015 = vmax.f32 %v6014, %v5828
  %v6016 = vmax.f32 %v6015, %v5829
  %v6017 = vmax.f32 %v6016, %v5830
  %v6018 = vmax.f32 %v6017, %v5831
  %v6019 = vmax.f32 %v6018, %v5832
  %v6020 = vrot.slane %v6019, 4
  %v6021 = vmax.f32 %v6019, %v6020
  %v6022 = vrot.slane %v6021, 2
  %v6023 = vmax.f32 %v6021, %v6022
  %v6024 = vrot.slane %v6023, 1
  %v6025 = vmax.f32 %v6023, %v6024
  %v6026 = vmax.f32 %v5833, %v5834
  %v6027 = vmax.f32 %v6026, %v5835
  %v6028 = vmax.f32 %v6027, %v5836
  %v6029 = vmax.f32 %v6028, %v5837
  %v6030 = vmax.f32 %v6029, %v5838
  %v6031 = vmax.f32 %v6030, %v5839
  %v6032 = vmax.f32 %v6031, %v5840
  %v6033 = vrot.slane %v6032, 4
  %v6034 = vmax.f32 %v6032, %v6033
  %v6035 = vrot.slane %v6034, 2
  %v6036 = vmax.f32 %v6034, %v6035
  %v6037 = vrot.slane %v6036, 1
  %v6038 = vmax.f32 %v6036, %v6037
  %v6039 = vmax.f32 %v5841, %v5842
  %v6040 = vmax.f32 %v6039, %v5843
  %v6041 = vmax.f32 %v6040, %v5844
  %v6042 = vmax.f32 %v6041, %v5845
  %v6043 = vmax.f32 %v6042, %v5846
  %v6044 = vmax.f32 %v6043, %v5847
  %v6045 = vmax.f32 %v6044, %v5848
  %v6046 = vrot.slane %v6045, 4
  %v6047 = vmax.f32 %v6045, %v6046
  %v6048 = vrot.slane %v6047, 2
  %v6049 = vmax.f32 %v6047, %v6048
  %v6050 = vrot.slane %v6049, 1
  %v6051 = vmax.f32 %v6049, %v6050
  %v6052 = vmax.f32 %v5849, %v5850
  %v6053 = vmax.f32 %v6052, %v5851
  %v6054 = vmax.f32 %v6053, %v5852
  %v6055 = vmax.f32 %v6054, %v5853
  %v6056 = vmax.f32 %v6055, %v5854
  %v6057 = vmax.f32 %v6056, %v5855
  %v6058 = vmax.f32 %v6057, %v5856
  %v6059 = vrot.slane %v6058, 4
  %v6060 = vmax.f32 %v6058, %v6059
  %v6061 = vrot.slane %v6060, 2
  %v6062 = vmax.f32 %v6060, %v6061
  %v6063 = vrot.slane %v6062, 1
  %v6064 = vmax.f32 %v6062, %v6063
  %v6065 = vpack.c.bf16 %v5869, %v5869
  %v6066 = vpack.c.bf16 %v5882, %v5882
  %v6067 = vpack.c.bf16 %v5895, %v5895
  %v6068 = vpack.c.bf16 %v5908, %v5908
  %v6069 = vpack.c.bf16 %v5921, %v5921
  %v6070 = vpack.c.bf16 %v5934, %v5934
  %v6071 = vpack.c.bf16 %v5947, %v5947
  %v6072 = vpack.c.bf16 %v5960, %v5960
  %v6073 = vpack.c.bf16 %v5973, %v5973
  %v6074 = vpack.c.bf16 %v5986, %v5986
  %v6075 = vpack.c.bf16 %v5999, %v5999
  %v6076 = vpack.c.bf16 %v6012, %v6012
  %v6077 = vpack.c.bf16 %v6025, %v6025
  %v6078 = vpack.c.bf16 %v6038, %v6038
  %v6079 = vpack.c.bf16 %v6051, %v6051
  %v6080 = vpack.c.bf16 %v6064, %v6064
  %v6097 = vunpack.c.l.b16 %v6065
  %v6098 = vunpack.c.l.b16 %v6066
  %v6099 = vunpack.c.l.b16 %v6067
  %v6100 = vunpack.c.l.b16 %v6068
  %v6101 = vunpack.c.l.b16 %v6069
  %v6102 = vunpack.c.l.b16 %v6070
  %v6103 = vunpack.c.l.b16 %v6071
  %v6104 = vunpack.c.l.b16 %v6072
  %v6105 = vunpack.c.l.b16 %v6073
  %v6106 = vunpack.c.l.b16 %v6074
  %v6107 = vunpack.c.l.b16 %v6075
  %v6108 = vunpack.c.l.b16 %v6076
  %v6109 = vunpack.c.l.b16 %v6077
  %v6110 = vunpack.c.l.b16 %v6078
  %v6111 = vunpack.c.l.b16 %v6079
  %v6112 = vunpack.c.l.b16 %v6080
  %v6113 = vpack.c.b16 %v6097, %v6097
  %v6114 = vpack.c.b16 %v6098, %v6098
  %v6115 = vpack.c.b16 %v6099, %v6099
  %v6116 = vpack.c.b16 %v6100, %v6100
  %v6117 = vpack.c.b16 %v6101, %v6101
  %v6118 = vpack.c.b16 %v6102, %v6102
  %v6119 = vpack.c.b16 %v6103, %v6103
  %v6120 = vpack.c.b16 %v6104, %v6104
  %v6121 = vpack.c.b16 %v6105, %v6105
  %v6122 = vpack.c.b16 %v6106, %v6106
  %v6123 = vpack.c.b16 %v6107, %v6107
  %v6124 = vpack.c.b16 %v6108, %v6108
  %v6125 = vpack.c.b16 %v6109, %v6109
  %v6126 = vpack.c.b16 %v6110, %v6110
  %v6127 = vpack.c.b16 %v6111, %v6111
  %v6128 = vpack.c.b16 %v6112, %v6112
  %v6129 = vunpack.c.l.b16 %v6113
  %v6130 = vunpack.c.l.b16 %v6114
  %v6131 = vunpack.c.l.b16 %v6115
  %v6132 = vunpack.c.l.b16 %v6116
  %v6133 = vunpack.c.l.b16 %v6117
  %v6134 = vunpack.c.l.b16 %v6118
  %v6135 = vunpack.c.l.b16 %v6119
  %v6136 = vunpack.c.l.b16 %v6120
  %v6137 = vunpack.c.l.b16 %v6121
  %v6138 = vunpack.c.l.b16 %v6122
  %v6139 = vunpack.c.l.b16 %v6123
  %v6140 = vunpack.c.l.b16 %v6124
  %v6141 = vunpack.c.l.b16 %v6125
  %v6142 = vunpack.c.l.b16 %v6126
  %v6143 = vunpack.c.l.b16 %v6127
  %v6144 = vunpack.c.l.b16 %v6128
  %v6145 = vsel %vm4523, %v6130, %v6129
  %v6146 = vsel %vm4525, %v6131, %v6145
  %v6147 = vsel %vm4527, %v6132, %v6146
  %v6148 = vsel %vm4529, %v6133, %v6147
  %v6149 = vsel %vm4531, %v6134, %v6148
  %v6150 = vsel %vm4533, %v6135, %v6149
  %v6151 = vsel %vm4535, %v6136, %v6150
  %v6152 = vsel %vm4523, %v6138, %v6137
  %v6153 = vsel %vm4525, %v6139, %v6152
  %v6154 = vsel %vm4527, %v6140, %v6153
  %v6155 = vsel %vm4529, %v6141, %v6154
  %v6156 = vsel %vm4531, %v6142, %v6155
  %v6157 = vsel %vm4533, %v6143, %v6156
  %v6158 = vsel %vm4535, %v6144, %v6157
  %v6159 = vpack.c.b16 %v6151, %v6151
  %v6160 = vpack.c.b16 %v6158, %v6158
  %6163 = vst [vmem:[%s12] sm:$0xf] %v6159
  %6164 = vst [vmem:[%s12 + $0x4] sm:$0xf] %v6160
  // Predicated region
  $region50: #{forward.2} parent=0 // pred_check
    _
  $region51: #{forward.2} parent=0 // pred_check_branch
    %6166 = sbr.rel (0) target = $region53
  $region52: #{forward.2} parent=0 // pred_region
    _
  $region53: #{forward.2} parent=0 // pred_fallthru
    _
  // Predicated region
  $region54: #{forward.2} parent=0 // pred_check
    _
  $region55: #{forward.2} parent=0 // pred_check_branch
    %6168 = sbr.rel (0) target = $region57
  $region56: #{forward.2} parent=0 // pred_region
    _
  $region57: #{forward.2} parent=0 // pred_fallthru
    _

// kernel: forward.3
$region0: #{forward.3}
  #allocation0 [shape = 'u32[]', space=smem, size = 0x4, offset = 0x4, fixed_abs, tag = 'smem constant byte address 0x4 - core index']
  #allocation1 [shape = 'u32[144,128]{1,0:T(1,128)}', space=vmem, size = 0x12000, scoped, tag = 'internal scratch']
  %s0 = inlined_call_operand.vmem [shape: bf16[4,16,3], index: 0, kind: input, shape index: {}]
  %s1 = inlined_call_operand.vmem [shape: bf16[4,16,128], index: 1, kind: input, shape index: {}]
  %s2 = inlined_call_operand.vmem [shape: bf16[16,128], index: 2, kind: input, shape index: {}]
  %s3 = inlined_call_operand.vmem [shape: bf16[3,256], index: 3, kind: input, shape index: {}]
  %s4 = inlined_call_operand.vmem [shape: bf16[128,256], index: 4, kind: input, shape index: {}]
  %s5 = inlined_call_operand.vmem [shape: f32[1,256], index: 5, kind: input, shape index: {}]
  %s6 = inlined_call_operand.vmem [shape: bf16[256,256], index: 6, kind: input, shape index: {}]
  %s7 = inlined_call_operand.vmem [shape: f32[1,256], index: 7, kind: input, shape index: {}]
  %s8 = inlined_call_operand.vmem [shape: bf16[256,256], index: 8, kind: input, shape index: {}]
  %s9 = inlined_call_operand.vmem [shape: f32[1,256], index: 9, kind: input, shape index: {}]
  %s10 = inlined_call_operand.vmem [shape: bf16[256,512], index: 10, kind: input, shape index: {}]
  %s11 = inlined_call_operand.vmem [shape: bf16[256,512], index: 11, kind: input, shape index: {}]
  %s12 = inlined_call_operand.vmem [shape: f32[1,512], index: 12, kind: input, shape index: {}]
  %s13 = inlined_call_operand.vmem [shape: bf16[512,512], index: 13, kind: input, shape index: {}]
  %s14 = inlined_call_operand.vmem [shape: f32[1,512], index: 14, kind: input, shape index: {}]
  %s15 = inlined_call_operand.vmem [shape: bf16[128,512], index: 15, kind: input, shape index: {}]
  %s16 = inlined_call_operand.vmem [shape: bf16[512,512], index: 16, kind: input, shape index: {}]
  %s17 = inlined_call_operand.vmem [shape: f32[1,512], index: 17, kind: input, shape index: {}]
  %s18 = inlined_call_operand.vmem [shape: bf16[512,256], index: 18, kind: input, shape index: {}]
  %s19 = inlined_call_operand.vmem [shape: f32[1,256], index: 19, kind: input, shape index: {}]
  %s20 = inlined_call_operand.vmem [shape: bf16[256,128], index: 20, kind: input, shape index: {}]
  %s21 = inlined_call_operand.vmem [shape: f32[1,128], index: 21, kind: input, shape index: {}]
  %s22 = inlined_call_operand.vmem [shape: f32[16,128], index: 22, kind: output, shape index: {}]
  %s23 = sld [smem:[#allocation0]]
  $region98: #{forward.3} parent=0
    _
  %s25 = ssub.s32 1, %s23
  %s26 = scalar_select 0, %s25, %s23
  // Predicated region
  $region2: #{forward.3} parent=0 // pred_check
    _
  $region3: #{forward.3} parent=0 // pred_check_branch
    %28 = sbr.rel (0) target = $region5
  $region4: #{forward.3} parent=0 // pred_region
    _
  $region5: #{forward.3} parent=0 // pred_fallthru
    _
  // Predicated region
  $region6: #{forward.3} parent=0 // pred_check
    _
  $region7: #{forward.3} parent=0 // pred_check_branch
    %30 = sbr.rel (0) target = $region9
  $region8: #{forward.3} parent=0 // pred_region
    _
  $region9: #{forward.3} parent=0 // pred_fallthru
    _
  // Predicated region
  $region10: #{forward.3} parent=0 // pred_check
    _
  $region11: #{forward.3} parent=0 // pred_check_branch
    %32 = sbr.rel (0) target = $region13
  $region12: #{forward.3} parent=0 // pred_region
    _
  $region13: #{forward.3} parent=0 // pred_fallthru
    _
  // Predicated region
  $region14: #{forward.3} parent=0 // pred_check
    _
  $region15: #{forward.3} parent=0 // pred_check_branch
    %34 = sbr.rel (0) target = $region17
  $region16: #{forward.3} parent=0 // pred_region
    _
  $region17: #{forward.3} parent=0 // pred_fallthru
    _
  // Predicated region
  $region18: #{forward.3} parent=0 // pred_check
    _
  $region19: #{forward.3} parent=0 // pred_check_branch
    %36 = sbr.rel (0) target = $region21
  $region20: #{forward.3} parent=0 // pred_region
    _
  $region21: #{forward.3} parent=0 // pred_fallthru
    _
  // Predicated region
  $region22: #{forward.3} parent=0 // pred_check
    _
  $region23: #{forward.3} parent=0 // pred_check_branch
    %38 = sbr.rel (0) target = $region25
  $region24: #{forward.3} parent=0 // pred_region
    _
  $region25: #{forward.3} parent=0 // pred_fallthru
    _
  // Predicated region
  $region26: #{forward.3} parent=0 // pred_check
    _
  $region27: #{forward.3} parent=0 // pred_check_branch
    %40 = sbr.rel (0) target = $region29
  $region28: #{forward.3} parent=0 // pred_region
    _
  $region29: #{forward.3} parent=0 // pred_fallthru
    _
  // Predicated region
  $region30: #{forward.3} parent=0 // pred_check
    _
  $region31: #{forward.3} parent=0 // pred_check_branch
    %42 = sbr.rel (0) target = $region33
  $region32: #{forward.3} parent=0 // pred_region
    _
  $region33: #{forward.3} parent=0 // pred_fallthru
    _
  // Predicated region
  $region34: #{forward.3} parent=0 // pred_check
    _
  $region35: #{forward.3} parent=0 // pred_check_branch
    %44 = sbr.rel (0) target = $region37
  $region36: #{forward.3} parent=0 // pred_region
    _
  $region37: #{forward.3} parent=0 // pred_fallthru
    _
  // Predicated region
  $region38: #{forward.3} parent=0 // pred_check
    _
  $region39: #{forward.3} parent=0 // pred_check_branch
    %46 = sbr.rel (0) target = $region41
  $region40: #{forward.3} parent=0 // pred_region
    _
  $region41: #{forward.3} parent=0 // pred_fallthru
    _
  // Predicated region
  $region42: #{forward.3} parent=0 // pred_check
    _
  $region43: #{forward.3} parent=0 // pred_check_branch
    %48 = sbr.rel (0) target = $region45
  $region44: #{forward.3} parent=0 // pred_region
    _
  $region45: #{forward.3} parent=0 // pred_fallthru
    _
  // Predicated region
  $region46: #{forward.3} parent=0 // pred_check
    _
  $region47: #{forward.3} parent=0 // pred_check_branch
    %50 = sbr.rel (0) target = $region49
  $region48: #{forward.3} parent=0 // pred_region
    _
  $region49: #{forward.3} parent=0 // pred_fallthru
    _
  // Predicated region
  $region50: #{forward.3} parent=0 // pred_check
    _
  $region51: #{forward.3} parent=0 // pred_check_branch
    %52 = sbr.rel (0) target = $region53
  $region52: #{forward.3} parent=0 // pred_region
    _
  $region53: #{forward.3} parent=0 // pred_fallthru
    _
  // Predicated region
  $region54: #{forward.3} parent=0 // pred_check
    _
  $region55: #{forward.3} parent=0 // pred_check_branch
    %54 = sbr.rel (0) target = $region57
  $region56: #{forward.3} parent=0 // pred_region
    _
  $region57: #{forward.3} parent=0 // pred_fallthru
    _
  // Predicated region
  $region58: #{forward.3} parent=0 // pred_check
    _
  $region59: #{forward.3} parent=0 // pred_check_branch
    %56 = sbr.rel (0) target = $region61
  $region60: #{forward.3} parent=0 // pred_region
    _
  $region61: #{forward.3} parent=0 // pred_fallthru
    _
  // Predicated region
  $region62: #{forward.3} parent=0 // pred_check
    _
  $region63: #{forward.3} parent=0 // pred_check_branch
    %58 = sbr.rel (0) target = $region65
  $region64: #{forward.3} parent=0 // pred_region
    _
  $region65: #{forward.3} parent=0 // pred_fallthru
    _
  // Predicated region
  $region66: #{forward.3} parent=0 // pred_check
    _
  $region67: #{forward.3} parent=0 // pred_check_branch
    %60 = sbr.rel (0) target = $region69
  $region68: #{forward.3} parent=0 // pred_region
    _
  $region69: #{forward.3} parent=0 // pred_fallthru
    _
  // Predicated region
  $region70: #{forward.3} parent=0 // pred_check
    _
  $region71: #{forward.3} parent=0 // pred_check_branch
    %62 = sbr.rel (0) target = $region73
  $region72: #{forward.3} parent=0 // pred_region
    _
  $region73: #{forward.3} parent=0 // pred_fallthru
    _
  // Predicated region
  $region74: #{forward.3} parent=0 // pred_check
    _
  $region75: #{forward.3} parent=0 // pred_check_branch
    %64 = sbr.rel (0) target = $region77
  $region76: #{forward.3} parent=0 // pred_region
    _
  $region77: #{forward.3} parent=0 // pred_fallthru
    _
  // Predicated region
  $region78: #{forward.3} parent=0 // pred_check
    _
  $region79: #{forward.3} parent=0 // pred_check_branch
    %66 = sbr.rel (0) target = $region81
  $region80: #{forward.3} parent=0 // pred_region
    _
  $region81: #{forward.3} parent=0 // pred_fallthru
    _
  // Predicated region
  $region82: #{forward.3} parent=0 // pred_check
    _
  $region83: #{forward.3} parent=0 // pred_check_branch
    %68 = sbr.rel (0) target = $region85
  $region84: #{forward.3} parent=0 // pred_region
    _
  $region85: #{forward.3} parent=0 // pred_fallthru
    _
  // Predicated region
  $region86: #{forward.3} parent=0 // pred_check
    _
  $region87: #{forward.3} parent=0 // pred_check_branch
    %70 = sbr.rel (0) target = $region89
  $region88: #{forward.3} parent=0 // pred_region
    _
  $region89: #{forward.3} parent=0 // pred_fallthru
    _
  %v72 = vld [vmem:[%s0] sm:$0xf]
  %v73 = vld [vmem:[%s0 + $0x4] sm:$0xf]
  %v74 = vld [vmem:[%s0 + $0x8] sm:$0xf]
  %v75 = vld [vmem:[%s0 + $0xc] sm:$0xf]
  %v76 = vld [vmem:[%s0 + $0x10] sm:$0xf]
  %v77 = vld [vmem:[%s0 + $0x14] sm:$0xf]
  %v78 = vld [vmem:[%s0 + $0x18] sm:$0xf]
  %v79 = vld [vmem:[%s0 + $0x1c] sm:$0xf]
  %v80 = vld [vmem:[%s1] sm:$0xf]
  %v81 = vld [vmem:[%s1 + $0x4] sm:$0xf]
  %v82 = vld [vmem:[%s1 + $0x8] sm:$0xf]
  %v83 = vld [vmem:[%s1 + $0xc] sm:$0xf]
  %v84 = vld [vmem:[%s1 + $0x10] sm:$0xf]
  %v85 = vld [vmem:[%s1 + $0x14] sm:$0xf]
  %v86 = vld [vmem:[%s1 + $0x18] sm:$0xf]
  %v87 = vld [vmem:[%s1 + $0x1c] sm:$0xf]
  %v88 = vld [vmem:[%s3] sm:$0xf]
  %v89 = vld [vmem:[%s4] sm:$0xff]
  %v90 = vld [vmem:[%s4 + $0x8] sm:$0xff]
  %v91 = vld [vmem:[%s4 + $0x10] sm:$0xff]
  %v92 = vld [vmem:[%s4 + $0x18] sm:$0xff]
  %v93 = vld [vmem:[%s4 + $0x20] sm:$0xff]
  %v94 = vld [vmem:[%s4 + $0x28] sm:$0xff]
  %v95 = vld [vmem:[%s4 + $0x30] sm:$0xff]
  %v96 = vld [vmem:[%s4 + $0x38] sm:$0xff]
  %v97 = vld [vmem:[%s4 + $0x40] sm:$0xff]
  %v98 = vld [vmem:[%s4 + $0x48] sm:$0xff]
  %v99 = vld [vmem:[%s4 + $0x50] sm:$0xff]
  %v100 = vld [vmem:[%s4 + $0x58] sm:$0xff]
  %v101 = vld [vmem:[%s4 + $0x60] sm:$0xff]
  %v102 = vld [vmem:[%s4 + $0x68] sm:$0xff]
  %v103 = vld [vmem:[%s4 + $0x70] sm:$0xff]
  %v104 = vld [vmem:[%s4 + $0x78] sm:$0xff]
  %v113 = vunpack.c.l.b16 %v80
  %v114 = vunpack.c.l.b16 %v81
  %v115 = vunpack.c.l.b16 %v82
  %v116 = vunpack.c.l.b16 %v83
  %v117 = vunpack.c.l.b16 %v84
  %v118 = vunpack.c.l.b16 %v85
  %v119 = vunpack.c.l.b16 %v86
  %v120 = vunpack.c.l.b16 %v87
  %v121 = vpack.c.b16 %v114, %v113
  %v122 = vpack.c.b16 %v116, %v115
  %v123 = vpack.c.b16 %v118, %v117
  %v124 = vpack.c.b16 %v120, %v119
  %v145 = vunpack.c.l.b16 %v89
  %v146 = vunpack.c.h.b16 %v89
  %v147 = vunpack.c.l.b16 %v90
  %v148 = vunpack.c.h.b16 %v90
  %v149 = vunpack.c.l.b16 %v91
  %v150 = vunpack.c.h.b16 %v91
  %v151 = vunpack.c.l.b16 %v92
  %v152 = vunpack.c.h.b16 %v92
  %v153 = vunpack.c.l.b16 %v93
  %v154 = vunpack.c.h.b16 %v93
  %v155 = vunpack.c.l.b16 %v94
  %v156 = vunpack.c.h.b16 %v94
  %v157 = vunpack.c.l.b16 %v95
  %v158 = vunpack.c.h.b16 %v95
  %v159 = vunpack.c.l.b16 %v96
  %v160 = vunpack.c.h.b16 %v96
  %v161 = vunpack.c.l.b16 %v97
  %v162 = vunpack.c.h.b16 %v97
  %v163 = vunpack.c.l.b16 %v98
  %v164 = vunpack.c.h.b16 %v98
  %v165 = vunpack.c.l.b16 %v99
  %v166 = vunpack.c.h.b16 %v99
  %v167 = vunpack.c.l.b16 %v100
  %v168 = vunpack.c.h.b16 %v100
  %v169 = vunpack.c.l.b16 %v101
  %v170 = vunpack.c.h.b16 %v101
  %v171 = vunpack.c.l.b16 %v102
  %v172 = vunpack.c.h.b16 %v102
  %v173 = vunpack.c.l.b16 %v103
  %v174 = vunpack.c.h.b16 %v103
  %v175 = vunpack.c.l.b16 %v104
  %v176 = vunpack.c.h.b16 %v104
  %v177 = vpack.c.b16 %v147, %v145
  %v178 = vpack.c.b16 %v148, %v146
  %v179 = vpack.c.b16 %v151, %v149
  %v180 = vpack.c.b16 %v152, %v150
  %v181 = vpack.c.b16 %v155, %v153
  %v182 = vpack.c.b16 %v156, %v154
  %v183 = vpack.c.b16 %v159, %v157
  %v184 = vpack.c.b16 %v160, %v158
  %v185 = vpack.c.b16 %v163, %v161
  %v186 = vpack.c.b16 %v164, %v162
  %v187 = vpack.c.b16 %v167, %v165
  %v188 = vpack.c.b16 %v168, %v166
  %v189 = vpack.c.b16 %v171, %v169
  %v190 = vpack.c.b16 %v172, %v170
  %v191 = vpack.c.b16 %v175, %v173
  %v192 = vpack.c.b16 %v176, %v174
  %209 = vmatprep.subr.bf16.mxu0 %v178
  %210 = vmatpush1.bf16.msra.mxu0 %v177
  %211 = vmatprep.subr.bf16.mxu0 %v180
  %212 = vmatpush1.bf16.msra.mxu0 %v179
  %213 = vmatprep.subr.bf16.mxu0 %v182
  %214 = vmatpush1.bf16.msra.mxu0 %v181
  %215 = vmatprep.subr.bf16.mxu0 %v184
  %216 = vmatpush1.bf16.msra.mxu0 %v183
  %217 = vmatprep.subr.bf16.mxu0 %v186
  %218 = vmatpush1.bf16.msra.mxu0 %v185
  %219 = vmatprep.subr.bf16.mxu0 %v188
  %220 = vmatpush1.bf16.msra.mxu0 %v187
  %221 = vmatprep.subr.bf16.mxu0 %v190
  %222 = vmatpush1.bf16.msra.mxu0 %v189
  %223 = vmatprep.subr.bf16.mxu0 %v192
  %224 = vmatpush1.bf16.msra.mxu0 %v191
  %225 = vmatprep.subr.bf16.mxu0 0
  %226 = vmatpush1.bf16.msra.mxu0 0
  %227 = vmatprep.subr.bf16.mxu0 0
  %228 = vmatpush1.bf16.msra.mxu0 0
  %229 = vmatprep.subr.bf16.mxu0 0
  %230 = vmatpush1.bf16.msra.mxu0 0
  %231 = vmatprep.subr.bf16.mxu0 0
  %232 = vmatpush1.bf16.msra.mxu0 0
  %233 = vmatprep.subr.bf16.mxu0 0
  %234 = vmatpush1.bf16.msra.mxu0 0
  %235 = vmatprep.subr.bf16.mxu0 0
  %236 = vmatpush1.bf16.msra.mxu0 0
  %237 = vmatprep.subr.bf16.mxu0 0
  %238 = vmatpush1.bf16.msra.mxu0 0
  %239 = vmatprep.subr.bf16.mxu0 0
  %240 = vmatpush1.bf16.msra.mxu0 0
  %241 = vmatprep.mubr.bf16.mxu0 0
  %242 = vmatmul.mubr.bf16.gmra.mrb[0].mxu0 %v121
  %v243 = vpop.f32.mrb[0].mxu0
  %v244 = vadd.f32 0.0, %v243
  %v245 = vpop.f32.mrb[0].mxu0
  %v246 = vadd.f32 0.0, %v245
  %v247 = vpop.f32.mrb[0].mxu0
  %v248 = vadd.f32 0.0, %v247
  %v249 = vpop.f32.mrb[0].mxu0
  %v250 = vadd.f32 0.0, %v249
  %251 = vmatprep.mubr.bf16.mxu0 0
  %252 = vmatmul.mubr.bf16.gmra.mrb[0].mxu0 %v122
  %v253 = vpop.f32.mrb[0].mxu0
  %v254 = vadd.f32 0.0, %v253
  %v255 = vpop.f32.mrb[0].mxu0
  %v256 = vadd.f32 0.0, %v255
  %v257 = vpop.f32.mrb[0].mxu0
  %v258 = vadd.f32 0.0, %v257
  %v259 = vpop.f32.mrb[0].mxu0
  %v260 = vadd.f32 0.0, %v259
  %261 = vmatprep.mubr.bf16.mxu0 0
  %262 = vmatmul.mubr.bf16.gmra.mrb[0].mxu0 %v123
  %v263 = vpop.f32.mrb[0].mxu0
  %v264 = vadd.f32 0.0, %v263
  %v265 = vpop.f32.mrb[0].mxu0
  %v266 = vadd.f32 0.0, %v265
  %v267 = vpop.f32.mrb[0].mxu0
  %v268 = vadd.f32 0.0, %v267
  %v269 = vpop.f32.mrb[0].mxu0
  %v270 = vadd.f32 0.0, %v269
  %271 = vmatprep.mubr.bf16.mxu0 0
  %272 = vmatmul.mubr.bf16.gmra.mrb[0].mxu0 %v124
  %v273 = vpop.f32.mrb[0].mxu0
  %v274 = vadd.f32 0.0, %v273
  %v275 = vpop.f32.mrb[0].mxu0
  %v276 = vadd.f32 0.0, %v275
  %v277 = vpop.f32.mrb[0].mxu0
  %v278 = vadd.f32 0.0, %v277
  %v279 = vpop.f32.mrb[0].mxu0
  %v280 = vadd.f32 0.0, %v279
  %281 = vdwg.mxu0
  %v290 = vunpack.c.l.b16 %v72
  %v291 = vunpack.c.l.b16 %v73
  %v292 = vunpack.c.l.b16 %v74
  %v293 = vunpack.c.l.b16 %v75
  %v294 = vunpack.c.l.b16 %v76
  %v295 = vunpack.c.l.b16 %v77
  %v296 = vunpack.c.l.b16 %v78
  %v297 = vunpack.c.l.b16 %v79
  %v298 = vpack.c.b16 %v291, %v290
  %v299 = vpack.c.b16 %v293, %v292
  %v300 = vpack.c.b16 %v295, %v294
  %v301 = vpack.c.b16 %v297, %v296
  %v304 = vunpack.c.l.s4 1983009808
  %v305 = vunpack.c.0.s8 %v304
  %v306 = vlaneseq
  %v307 = vshrl.u32 %v306, 7
  %v308 = vsub.s32 %v305, %v307
  %v309 = vrot.slane %v88, %v308
  %v310 = vcombine.high %v309, %v309
  %vm311 = vcmask 23552
  %v313 = vsel %vm311, %v298, 0
  %v316 = vsel %vm311, %v299, 0
  %v319 = vsel %vm311, %v300, 0
  %v322 = vsel %vm311, %v301, 0
  %vm324 = vcmask 1040384
  %vm325 = vcmask 1041408
  %v326 = vsel %vm324, 4294967295, 65535
  %v327 = vsel %vm325, %v326, 0
  %v329 = vand.u32 %v309, %v327
  %v332 = vand.u32 %v310, %v327
  %334 = vmatprep.subr.bf16.mxu0 %v332
  %335 = vmatpush1.bf16.msra.mxu0 %v329
  %336 = vmatprep.subr.bf16.mxu0 0
  %337 = vmatpush1.bf16.msra.mxu0 0
  %338 = vmatprep.subr.bf16.mxu0 0
  %339 = vmatpush1.bf16.msra.mxu0 0
  %340 = vmatprep.subr.bf16.mxu0 0
  %341 = vmatpush1.bf16.msra.mxu0 0
  %342 = vmatprep.subr.bf16.mxu0 0
  %343 = vmatpush1.bf16.msra.mxu0 0
  %344 = vmatprep.subr.bf16.mxu0 0
  %345 = vmatpush1.bf16.msra.mxu0 0
  %346 = vmatprep.subr.bf16.mxu0 0
  %347 = vmatpush1.bf16.msra.mxu0 0
  %348 = vmatprep.subr.bf16.mxu0 0
  %349 = vmatpush1.bf16.msra.mxu0 0
  %350 = vmatprep.subr.bf16.mxu0 0
  %351 = vmatpush1.bf16.msra.mxu0 0
  %352 = vmatprep.subr.bf16.mxu0 0
  %353 = vmatpush1.bf16.msra.mxu0 0
  %354 = vmatprep.subr.bf16.mxu0 0
  %355 = vmatpush1.bf16.msra.mxu0 0
  %356 = vmatprep.subr.bf16.mxu0 0
  %357 = vmatpush1.bf16.msra.mxu0 0
  %358 = vmatprep.subr.bf16.mxu0 0
  %359 = vmatpush1.bf16.msra.mxu0 0
  %360 = vmatprep.subr.bf16.mxu0 0
  %361 = vmatpush1.bf16.msra.mxu0 0
  %362 = vmatprep.subr.bf16.mxu0 0
  %363 = vmatpush1.bf16.msra.mxu0 0
  %364 = vmatprep.subr.bf16.mxu0 0
  %365 = vmatpush1.bf16.msra.mxu0 0
  %366 = vmatprep.mubr.bf16.mxu0 0
  %367 = vmatmul.mubr.bf16.gmra.mrb[0].mxu0 %v313
  %v368 = vpop.f32.mrb[0].mxu0
  %v369 = vadd.f32 %v244, %v368
  %v370 = vpop.f32.mrb[0].mxu0
  %v371 = vadd.f32 %v246, %v370
  %v372 = vpop.f32.mrb[0].mxu0
  %v373 = vadd.f32 %v248, %v372
  %v374 = vpop.f32.mrb[0].mxu0
  %v375 = vadd.f32 %v250, %v374
  %376 = vmatprep.mubr.bf16.mxu0 0
  %377 = vmatmul.mubr.bf16.gmra.mrb[0].mxu0 %v316
  %v378 = vpop.f32.mrb[0].mxu0
  %v379 = vadd.f32 %v254, %v378
  %v380 = vpop.f32.mrb[0].mxu0
  %v381 = vadd.f32 %v256, %v380
  %v382 = vpop.f32.mrb[0].mxu0
  %v383 = vadd.f32 %v258, %v382
  %v384 = vpop.f32.mrb[0].mxu0
  %v385 = vadd.f32 %v260, %v384
  %386 = vmatprep.mubr.bf16.mxu0 0
  %387 = vmatmul.mubr.bf16.gmra.mrb[0].mxu0 %v319
  %v388 = vpop.f32.mrb[0].mxu0
  %v389 = vadd.f32 %v264, %v388
  %v390 = vpop.f32.mrb[0].mxu0
  %v391 = vadd.f32 %v266, %v390
  %v392 = vpop.f32.mrb[0].mxu0
  %v393 = vadd.f32 %v268, %v392
  %v394 = vpop.f32.mrb[0].mxu0
  %v395 = vadd.f32 %v270, %v394
  %396 = vmatprep.mubr.bf16.mxu0 0
  %397 = vmatmul.mubr.bf16.gmra.mrb[0].mxu0 %v322
  %v398 = vpop.f32.mrb[0].mxu0
  %v399 = vadd.f32 %v274, %v398
  %v400 = vpop.f32.mrb[0].mxu0
  %v401 = vadd.f32 %v276, %v400
  %v402 = vpop.f32.mrb[0].mxu0
  %v403 = vadd.f32 %v278, %v402
  %v404 = vpop.f32.mrb[0].mxu0
  %v405 = vadd.f32 %v280, %v404
  %406 = vdwg.mxu0
  %v407 = vld [vmem:[%s5] sm:$0x3]
  %v409 = vlaneseq
  %v410 = vshrl.u32 %v409, 7
  %v411 = vsub.s32 0, %v410
  %v412 = vrot.slane %v407, %v411
  %v413 = vlaneseq
  %v414 = vshrl.u32 %v413, 7
  %v415 = vsub.s32 1, %v414
  %v416 = vrot.slane %v407, %v415
  %v419 = vadd.f32 %v369, %v412
  %v420 = vadd.f32 %v371, %v416
  %v421 = vadd.f32 %v373, %v412
  %v422 = vadd.f32 %v375, %v416
  %v423 = vadd.f32 %v379, %v412
  %v424 = vadd.f32 %v381, %v416
  %v425 = vadd.f32 %v383, %v412
  %v426 = vadd.f32 %v385, %v416
  %v427 = vadd.f32 %v389, %v412
  %v428 = vadd.f32 %v391, %v416
  %v429 = vadd.f32 %v393, %v412
  %v430 = vadd.f32 %v395, %v416
  %v431 = vadd.f32 %v399, %v412
  %v432 = vadd.f32 %v401, %v416
  %v433 = vadd.f32 %v403, %v412
  %v434 = vadd.f32 %v405, %v416
  %v435 = vmax.f32 %v419, 0.0
  %v436 = vmax.f32 %v420, 0.0
  %v437 = vmax.f32 %v421, 0.0
  %v438 = vmax.f32 %v422, 0.0
  %v439 = vmax.f32 %v423, 0.0
  %v440 = vmax.f32 %v424, 0.0
  %v441 = vmax.f32 %v425, 0.0
  %v442 = vmax.f32 %v426, 0.0
  %v443 = vmax.f32 %v427, 0.0
  %v444 = vmax.f32 %v428, 0.0
  %v445 = vmax.f32 %v429, 0.0
  %v446 = vmax.f32 %v430, 0.0
  %v447 = vmax.f32 %v431, 0.0
  %v448 = vmax.f32 %v432, 0.0
  %v449 = vmax.f32 %v433, 0.0
  %v450 = vmax.f32 %v434, 0.0
  %v451 = vld [vmem:[%s6] sm:$0xff]
  %v452 = vld [vmem:[%s6 + $0x8] sm:$0xff]
  %v453 = vld [vmem:[%s6 + $0x10] sm:$0xff]
  %v454 = vld [vmem:[%s6 + $0x18] sm:$0xff]
  %v455 = vld [vmem:[%s6 + $0x20] sm:$0xff]
  %v456 = vld [vmem:[%s6 + $0x28] sm:$0xff]
  %v457 = vld [vmem:[%s6 + $0x30] sm:$0xff]
  %v458 = vld [vmem:[%s6 + $0x38] sm:$0xff]
  %v459 = vld [vmem:[%s6 + $0x40] sm:$0xff]
  %v460 = vld [vmem:[%s6 + $0x48] sm:$0xff]
  %v461 = vld [vmem:[%s6 + $0x50] sm:$0xff]
  %v462 = vld [vmem:[%s6 + $0x58] sm:$0xff]
  %v463 = vld [vmem:[%s6 + $0x60] sm:$0xff]
  %v464 = vld [vmem:[%s6 + $0x68] sm:$0xff]
  %v465 = vld [vmem:[%s6 + $0x70] sm:$0xff]
  %v466 = vld [vmem:[%s6 + $0x78] sm:$0xff]
  %v467 = vld [vmem:[%s6 + $0x80] sm:$0xff]
  %v468 = vld [vmem:[%s6 + $0x88] sm:$0xff]
  %v469 = vld [vmem:[%s6 + $0x90] sm:$0xff]
  %v470 = vld [vmem:[%s6 + $0x98] sm:$0xff]
  %v471 = vld [vmem:[%s6 + $0xa0] sm:$0xff]
  %v472 = vld [vmem:[%s6 + $0xa8] sm:$0xff]
  %v473 = vld [vmem:[%s6 + $0xb0] sm:$0xff]
  %v474 = vld [vmem:[%s6 + $0xb8] sm:$0xff]
  %v475 = vld [vmem:[%s6 + $0xc0] sm:$0xff]
  %v476 = vld [vmem:[%s6 + $0xc8] sm:$0xff]
  %v477 = vld [vmem:[%s6 + $0xd0] sm:$0xff]
  %v478 = vld [vmem:[%s6 + $0xd8] sm:$0xff]
  %v479 = vld [vmem:[%s6 + $0xe0] sm:$0xff]
  %v480 = vld [vmem:[%s6 + $0xe8] sm:$0xff]
  %v481 = vld [vmem:[%s6 + $0xf0] sm:$0xff]
  %v482 = vld [vmem:[%s6 + $0xf8] sm:$0xff]
  %v483 = vld [vmem:[%s7] sm:$0x3]
  %v484 = vpack.c.bf16 %v437, %v435
  %v485 = vpack.c.bf16 %v438, %v436
  %v486 = vpack.c.bf16 %v441, %v439
  %v487 = vpack.c.bf16 %v442, %v440
  %v488 = vpack.c.bf16 %v445, %v443
  %v489 = vpack.c.bf16 %v446, %v444
  %v490 = vpack.c.bf16 %v449, %v447
  %v491 = vpack.c.bf16 %v450, %v448
  %v493 = vlaneseq
  %v494 = vshrl.u32 %v493, 7
  %v495 = vsub.s32 0, %v494
  %v496 = vrot.slane %v483, %v495
  %v497 = vlaneseq
  %v498 = vshrl.u32 %v497, 7
  %v499 = vsub.s32 1, %v498
  %v500 = vrot.slane %v483, %v499
  %v535 = vunpack.c.l.b16 %v451
  %v536 = vunpack.c.h.b16 %v451
  %v537 = vunpack.c.l.b16 %v452
  %v538 = vunpack.c.h.b16 %v452
  %v539 = vunpack.c.l.b16 %v453
  %v540 = vunpack.c.h.b16 %v453
  %v541 = vunpack.c.l.b16 %v454
  %v542 = vunpack.c.h.b16 %v454
  %v543 = vunpack.c.l.b16 %v455
  %v544 = vunpack.c.h.b16 %v455
  %v545 = vunpack.c.l.b16 %v456
  %v546 = vunpack.c.h.b16 %v456
  %v547 = vunpack.c.l.b16 %v457
  %v548 = vunpack.c.h.b16 %v457
  %v549 = vunpack.c.l.b16 %v458
  %v550 = vunpack.c.h.b16 %v458
  %v551 = vunpack.c.l.b16 %v459
  %v552 = vunpack.c.h.b16 %v459
  %v553 = vunpack.c.l.b16 %v460
  %v554 = vunpack.c.h.b16 %v460
  %v555 = vunpack.c.l.b16 %v461
  %v556 = vunpack.c.h.b16 %v461
  %v557 = vunpack.c.l.b16 %v462
  %v558 = vunpack.c.h.b16 %v462
  %v559 = vunpack.c.l.b16 %v463
  %v560 = vunpack.c.h.b16 %v463
  %v561 = vunpack.c.l.b16 %v464
  %v562 = vunpack.c.h.b16 %v464
  %v563 = vunpack.c.l.b16 %v465
  %v564 = vunpack.c.h.b16 %v465
  %v565 = vunpack.c.l.b16 %v466
  %v566 = vunpack.c.h.b16 %v466
  %v567 = vunpack.c.l.b16 %v467
  %v568 = vunpack.c.h.b16 %v467
  %v569 = vunpack.c.l.b16 %v468
  %v570 = vunpack.c.h.b16 %v468
  %v571 = vunpack.c.l.b16 %v469
  %v572 = vunpack.c.h.b16 %v469
  %v573 = vunpack.c.l.b16 %v470
  %v574 = vunpack.c.h.b16 %v470
  %v575 = vunpack.c.l.b16 %v471
  %v576 = vunpack.c.h.b16 %v471
  %v577 = vunpack.c.l.b16 %v472
  %v578 = vunpack.c.h.b16 %v472
  %v579 = vunpack.c.l.b16 %v473
  %v580 = vunpack.c.h.b16 %v473
  %v581 = vunpack.c.l.b16 %v474
  %v582 = vunpack.c.h.b16 %v474
  %v583 = vunpack.c.l.b16 %v475
  %v584 = vunpack.c.h.b16 %v475
  %v585 = vunpack.c.l.b16 %v476
  %v586 = vunpack.c.h.b16 %v476
  %v587 = vunpack.c.l.b16 %v477
  %v588 = vunpack.c.h.b16 %v477
  %v589 = vunpack.c.l.b16 %v478
  %v590 = vunpack.c.h.b16 %v478
  %v591 = vunpack.c.l.b16 %v479
  %v592 = vunpack.c.h.b16 %v479
  %v593 = vunpack.c.l.b16 %v480
  %v594 = vunpack.c.h.b16 %v480
  %v595 = vunpack.c.l.b16 %v481
  %v596 = vunpack.c.h.b16 %v481
  %v597 = vunpack.c.l.b16 %v482
  %v598 = vunpack.c.h.b16 %v482
  %v599 = vpack.c.b16 %v537, %v535
  %v600 = vpack.c.b16 %v538, %v536
  %v601 = vpack.c.b16 %v541, %v539
  %v602 = vpack.c.b16 %v542, %v540
  %v603 = vpack.c.b16 %v545, %v543
  %v604 = vpack.c.b16 %v546, %v544
  %v605 = vpack.c.b16 %v549, %v547
  %v606 = vpack.c.b16 %v550, %v548
  %v607 = vpack.c.b16 %v553, %v551
  %v608 = vpack.c.b16 %v554, %v552
  %v609 = vpack.c.b16 %v557, %v555
  %v610 = vpack.c.b16 %v558, %v556
  %v611 = vpack.c.b16 %v561, %v559
  %v612 = vpack.c.b16 %v562, %v560
  %v613 = vpack.c.b16 %v565, %v563
  %v614 = vpack.c.b16 %v566, %v564
  %v615 = vpack.c.b16 %v569, %v567
  %v616 = vpack.c.b16 %v570, %v568
  %v617 = vpack.c.b16 %v573, %v571
  %v618 = vpack.c.b16 %v574, %v572
  %v619 = vpack.c.b16 %v577, %v575
  %v620 = vpack.c.b16 %v578, %v576
  %v621 = vpack.c.b16 %v581, %v579
  %v622 = vpack.c.b16 %v582, %v580
  %v623 = vpack.c.b16 %v585, %v583
  %v624 = vpack.c.b16 %v586, %v584
  %v625 = vpack.c.b16 %v589, %v587
  %v626 = vpack.c.b16 %v590, %v588
  %v627 = vpack.c.b16 %v593, %v591
  %v628 = vpack.c.b16 %v594, %v592
  %v629 = vpack.c.b16 %v597, %v595
  %v630 = vpack.c.b16 %v598, %v596
  %663 = vmatprep.subr.bf16.mxu0 %v600
  %664 = vmatpush1.bf16.msra.mxu0 %v599
  %665 = vmatprep.subr.bf16.mxu0 %v602
  %666 = vmatpush1.bf16.msra.mxu0 %v601
  %667 = vmatprep.subr.bf16.mxu0 %v604
  %668 = vmatpush1.bf16.msra.mxu0 %v603
  %669 = vmatprep.subr.bf16.mxu0 %v606
  %670 = vmatpush1.bf16.msra.mxu0 %v605
  %671 = vmatprep.subr.bf16.mxu0 %v608
  %672 = vmatpush1.bf16.msra.mxu0 %v607
  %673 = vmatprep.subr.bf16.mxu0 %v610
  %674 = vmatpush1.bf16.msra.mxu0 %v609
  %675 = vmatprep.subr.bf16.mxu0 %v612
  %676 = vmatpush1.bf16.msra.mxu0 %v611
  %677 = vmatprep.subr.bf16.mxu0 %v614
  %678 = vmatpush1.bf16.msra.mxu0 %v613
  %679 = vmatprep.subr.bf16.mxu0 %v616
  %680 = vmatpush1.bf16.msra.mxu0 %v615
  %681 = vmatprep.subr.bf16.mxu0 %v618
  %682 = vmatpush1.bf16.msra.mxu0 %v617
  %683 = vmatprep.subr.bf16.mxu0 %v620
  %684 = vmatpush1.bf16.msra.mxu0 %v619
  %685 = vmatprep.subr.bf16.mxu0 %v622
  %686 = vmatpush1.bf16.msra.mxu0 %v621
  %687 = vmatprep.subr.bf16.mxu0 %v624
  %688 = vmatpush1.bf16.msra.mxu0 %v623
  %689 = vmatprep.subr.bf16.mxu0 %v626
  %690 = vmatpush1.bf16.msra.mxu0 %v625
  %691 = vmatprep.subr.bf16.mxu0 %v628
  %692 = vmatpush1.bf16.msra.mxu0 %v627
  %693 = vmatprep.subr.bf16.mxu0 %v630
  %694 = vmatpush1.bf16.msra.mxu0 %v629
  %695 = vmatprep.mubr.bf16.mxu0 %v485
  %696 = vmatmul.mubr.bf16.gmra.mrb[0].mxu0 %v484
  %v697 = vpop.f32.mrb[0].mxu0
  %v698 = vadd.f32 %v496, %v697
  %v699 = vpop.f32.mrb[0].mxu0
  %v700 = vadd.f32 %v500, %v699
  %v701 = vpop.f32.mrb[0].mxu0
  %v702 = vadd.f32 %v496, %v701
  %v703 = vpop.f32.mrb[0].mxu0
  %v704 = vadd.f32 %v500, %v703
  %705 = vmatprep.mubr.bf16.mxu0 %v487
  %706 = vmatmul.mubr.bf16.gmra.mrb[0].mxu0 %v486
  %v707 = vpop.f32.mrb[0].mxu0
  %v708 = vadd.f32 %v496, %v707
  %v709 = vpop.f32.mrb[0].mxu0
  %v710 = vadd.f32 %v500, %v709
  %v711 = vpop.f32.mrb[0].mxu0
  %v712 = vadd.f32 %v496, %v711
  %v713 = vpop.f32.mrb[0].mxu0
  %v714 = vadd.f32 %v500, %v713
  %715 = vmatprep.mubr.bf16.mxu0 %v489
  %716 = vmatmul.mubr.bf16.gmra.mrb[0].mxu0 %v488
  %v717 = vpop.f32.mrb[0].mxu0
  %v718 = vadd.f32 %v496, %v717
  %v719 = vpop.f32.mrb[0].mxu0
  %v720 = vadd.f32 %v500, %v719
  %v721 = vpop.f32.mrb[0].mxu0
  %v722 = vadd.f32 %v496, %v721
  %v723 = vpop.f32.mrb[0].mxu0
  %v724 = vadd.f32 %v500, %v723
  %725 = vmatprep.mubr.bf16.mxu0 %v491
  %726 = vmatmul.mubr.bf16.gmra.mrb[0].mxu0 %v490
  %v727 = vpop.f32.mrb[0].mxu0
  %v728 = vadd.f32 %v496, %v727
  %v729 = vpop.f32.mrb[0].mxu0
  %v730 = vadd.f32 %v500, %v729
  %v731 = vpop.f32.mrb[0].mxu0
  %v732 = vadd.f32 %v496, %v731
  %v733 = vpop.f32.mrb[0].mxu0
  %v734 = vadd.f32 %v500, %v733
  %735 = vdwg.mxu0
  %v736 = vmax.f32 %v698, 0.0
  %v737 = vmax.f32 %v700, 0.0
  %v738 = vmax.f32 %v702, 0.0
  %v739 = vmax.f32 %v704, 0.0
  %v740 = vmax.f32 %v708, 0.0
  %v741 = vmax.f32 %v710, 0.0
  %v742 = vmax.f32 %v712, 0.0
  %v743 = vmax.f32 %v714, 0.0
  %v744 = vmax.f32 %v718, 0.0
  %v745 = vmax.f32 %v720, 0.0
  %v746 = vmax.f32 %v722, 0.0
  %v747 = vmax.f32 %v724, 0.0
  %v748 = vmax.f32 %v728, 0.0
  %v749 = vmax.f32 %v730, 0.0
  %v750 = vmax.f32 %v732, 0.0
  %v751 = vmax.f32 %v734, 0.0
  %v752 = vld [vmem:[%s8] sm:$0xff]
  %v753 = vld [vmem:[%s8 + $0x8] sm:$0xff]
  %v754 = vld [vmem:[%s8 + $0x10] sm:$0xff]
  %v755 = vld [vmem:[%s8 + $0x18] sm:$0xff]
  %v756 = vld [vmem:[%s8 + $0x20] sm:$0xff]
  %v757 = vld [vmem:[%s8 + $0x28] sm:$0xff]
  %v758 = vld [vmem:[%s8 + $0x30] sm:$0xff]
  %v759 = vld [vmem:[%s8 + $0x38] sm:$0xff]
  %v760 = vld [vmem:[%s8 + $0x40] sm:$0xff]
  %v761 = vld [vmem:[%s8 + $0x48] sm:$0xff]
  %v762 = vld [vmem:[%s8 + $0x50] sm:$0xff]
  %v763 = vld [vmem:[%s8 + $0x58] sm:$0xff]
  %v764 = vld [vmem:[%s8 + $0x60] sm:$0xff]
  %v765 = vld [vmem:[%s8 + $0x68] sm:$0xff]
  %v766 = vld [vmem:[%s8 + $0x70] sm:$0xff]
  %v767 = vld [vmem:[%s8 + $0x78] sm:$0xff]
  %v768 = vld [vmem:[%s8 + $0x80] sm:$0xff]
  %v769 = vld [vmem:[%s8 + $0x88] sm:$0xff]
  %v770 = vld [vmem:[%s8 + $0x90] sm:$0xff]
  %v771 = vld [vmem:[%s8 + $0x98] sm:$0xff]
  %v772 = vld [vmem:[%s8 + $0xa0] sm:$0xff]
  %v773 = vld [vmem:[%s8 + $0xa8] sm:$0xff]
  %v774 = vld [vmem:[%s8 + $0xb0] sm:$0xff]
  %v775 = vld [vmem:[%s8 + $0xb8] sm:$0xff]
  %v776 = vld [vmem:[%s8 + $0xc0] sm:$0xff]
  %v777 = vld [vmem:[%s8 + $0xc8] sm:$0xff]
  %v778 = vld [vmem:[%s8 + $0xd0] sm:$0xff]
  %v779 = vld [vmem:[%s8 + $0xd8] sm:$0xff]
  %v780 = vld [vmem:[%s8 + $0xe0] sm:$0xff]
  %v781 = vld [vmem:[%s8 + $0xe8] sm:$0xff]
  %v782 = vld [vmem:[%s8 + $0xf0] sm:$0xff]
  %v783 = vld [vmem:[%s8 + $0xf8] sm:$0xff]
  %v784 = vld [vmem:[%s9] sm:$0x3]
  %v785 = vpack.c.bf16 %v738, %v736
  %v786 = vpack.c.bf16 %v739, %v737
  %v787 = vpack.c.bf16 %v742, %v740
  %v788 = vpack.c.bf16 %v743, %v741
  %v789 = vpack.c.bf16 %v746, %v744
  %v790 = vpack.c.bf16 %v747, %v745
  %v791 = vpack.c.bf16 %v750, %v748
  %v792 = vpack.c.bf16 %v751, %v749
  %v794 = vlaneseq
  %v795 = vshrl.u32 %v794, 7
  %v796 = vsub.s32 0, %v795
  %v797 = vrot.slane %v784, %v796
  %v798 = vlaneseq
  %v799 = vshrl.u32 %v798, 7
  %v800 = vsub.s32 1, %v799
  %v801 = vrot.slane %v784, %v800
  %v836 = vunpack.c.l.b16 %v752
  %v837 = vunpack.c.h.b16 %v752
  %v838 = vunpack.c.l.b16 %v753
  %v839 = vunpack.c.h.b16 %v753
  %v840 = vunpack.c.l.b16 %v754
  %v841 = vunpack.c.h.b16 %v754
  %v842 = vunpack.c.l.b16 %v755
  %v843 = vunpack.c.h.b16 %v755
  %v844 = vunpack.c.l.b16 %v756
  %v845 = vunpack.c.h.b16 %v756
  %v846 = vunpack.c.l.b16 %v757
  %v847 = vunpack.c.h.b16 %v757
  %v848 = vunpack.c.l.b16 %v758
  %v849 = vunpack.c.h.b16 %v758
  %v850 = vunpack.c.l.b16 %v759
  %v851 = vunpack.c.h.b16 %v759
  %v852 = vunpack.c.l.b16 %v760
  %v853 = vunpack.c.h.b16 %v760
  %v854 = vunpack.c.l.b16 %v761
  %v855 = vunpack.c.h.b16 %v761
  %v856 = vunpack.c.l.b16 %v762
  %v857 = vunpack.c.h.b16 %v762
  %v858 = vunpack.c.l.b16 %v763
  %v859 = vunpack.c.h.b16 %v763
  %v860 = vunpack.c.l.b16 %v764
  %v861 = vunpack.c.h.b16 %v764
  %v862 = vunpack.c.l.b16 %v765
  %v863 = vunpack.c.h.b16 %v765
  %v864 = vunpack.c.l.b16 %v766
  %v865 = vunpack.c.h.b16 %v766
  %v866 = vunpack.c.l.b16 %v767
  %v867 = vunpack.c.h.b16 %v767
  %v868 = vunpack.c.l.b16 %v768
  %v869 = vunpack.c.h.b16 %v768
  %v870 = vunpack.c.l.b16 %v769
  %v871 = vunpack.c.h.b16 %v769
  %v872 = vunpack.c.l.b16 %v770
  %v873 = vunpack.c.h.b16 %v770
  %v874 = vunpack.c.l.b16 %v771
  %v875 = vunpack.c.h.b16 %v771
  %v876 = vunpack.c.l.b16 %v772
  %v877 = vunpack.c.h.b16 %v772
  %v878 = vunpack.c.l.b16 %v773
  %v879 = vunpack.c.h.b16 %v773
  %v880 = vunpack.c.l.b16 %v774
  %v881 = vunpack.c.h.b16 %v774
  %v882 = vunpack.c.l.b16 %v775
  %v883 = vunpack.c.h.b16 %v775
  %v884 = vunpack.c.l.b16 %v776
  %v885 = vunpack.c.h.b16 %v776
  %v886 = vunpack.c.l.b16 %v777
  %v887 = vunpack.c.h.b16 %v777
  %v888 = vunpack.c.l.b16 %v778
  %v889 = vunpack.c.h.b16 %v778
  %v890 = vunpack.c.l.b16 %v779
  %v891 = vunpack.c.h.b16 %v779
  %v892 = vunpack.c.l.b16 %v780
  %v893 = vunpack.c.h.b16 %v780
  %v894 = vunpack.c.l.b16 %v781
  %v895 = vunpack.c.h.b16 %v781
  %v896 = vunpack.c.l.b16 %v782
  %v897 = vunpack.c.h.b16 %v782
  %v898 = vunpack.c.l.b16 %v783
  %v899 = vunpack.c.h.b16 %v783
  %v900 = vpack.c.b16 %v838, %v836
  %v901 = vpack.c.b16 %v839, %v837
  %v902 = vpack.c.b16 %v842, %v840
  %v903 = vpack.c.b16 %v843, %v841
  %v904 = vpack.c.b16 %v846, %v844
  %v905 = vpack.c.b16 %v847, %v845
  %v906 = vpack.c.b16 %v850, %v848
  %v907 = vpack.c.b16 %v851, %v849
  %v908 = vpack.c.b16 %v854, %v852
  %v909 = vpack.c.b16 %v855, %v853
  %v910 = vpack.c.b16 %v858, %v856
  %v911 = vpack.c.b16 %v859, %v857
  %v912 = vpack.c.b16 %v862, %v860
  %v913 = vpack.c.b16 %v863, %v861
  %v914 = vpack.c.b16 %v866, %v864
  %v915 = vpack.c.b16 %v867, %v865
  %v916 = vpack.c.b16 %v870, %v868
  %v917 = vpack.c.b16 %v871, %v869
  %v918 = vpack.c.b16 %v874, %v872
  %v919 = vpack.c.b16 %v875, %v873
  %v920 = vpack.c.b16 %v878, %v876
  %v921 = vpack.c.b16 %v879, %v877
  %v922 = vpack.c.b16 %v882, %v880
  %v923 = vpack.c.b16 %v883, %v881
  %v924 = vpack.c.b16 %v886, %v884
  %v925 = vpack.c.b16 %v887, %v885
  %v926 = vpack.c.b16 %v890, %v888
  %v927 = vpack.c.b16 %v891, %v889
  %v928 = vpack.c.b16 %v894, %v892
  %v929 = vpack.c.b16 %v895, %v893
  %v930 = vpack.c.b16 %v898, %v896
  %v931 = vpack.c.b16 %v899, %v897
  %964 = vmatprep.subr.bf16.mxu0 %v901
  %965 = vmatpush1.bf16.msra.mxu0 %v900
  %966 = vmatprep.subr.bf16.mxu0 %v903
  %967 = vmatpush1.bf16.msra.mxu0 %v902
  %968 = vmatprep.subr.bf16.mxu0 %v905
  %969 = vmatpush1.bf16.msra.mxu0 %v904
  %970 = vmatprep.subr.bf16.mxu0 %v907
  %971 = vmatpush1.bf16.msra.mxu0 %v906
  %972 = vmatprep.subr.bf16.mxu0 %v909
  %973 = vmatpush1.bf16.msra.mxu0 %v908
  %974 = vmatprep.subr.bf16.mxu0 %v911
  %975 = vmatpush1.bf16.msra.mxu0 %v910
  %976 = vmatprep.subr.bf16.mxu0 %v913
  %977 = vmatpush1.bf16.msra.mxu0 %v912
  %978 = vmatprep.subr.bf16.mxu0 %v915
  %979 = vmatpush1.bf16.msra.mxu0 %v914
  %980 = vmatprep.subr.bf16.mxu0 %v917
  %981 = vmatpush1.bf16.msra.mxu0 %v916
  %982 = vmatprep.subr.bf16.mxu0 %v919
  %983 = vmatpush1.bf16.msra.mxu0 %v918
  %984 = vmatprep.subr.bf16.mxu0 %v921
  %985 = vmatpush1.bf16.msra.mxu0 %v920
  %986 = vmatprep.subr.bf16.mxu0 %v923
  %987 = vmatpush1.bf16.msra.mxu0 %v922
  %988 = vmatprep.subr.bf16.mxu0 %v925
  %989 = vmatpush1.bf16.msra.mxu0 %v924
  %990 = vmatprep.subr.bf16.mxu0 %v927
  %991 = vmatpush1.bf16.msra.mxu0 %v926
  %992 = vmatprep.subr.bf16.mxu0 %v929
  %993 = vmatpush1.bf16.msra.mxu0 %v928
  %994 = vmatprep.subr.bf16.mxu0 %v931
  %995 = vmatpush1.bf16.msra.mxu0 %v930
  %996 = vmatprep.mubr.bf16.mxu0 %v786
  %997 = vmatmul.mubr.bf16.gmra.mrb[0].mxu0 %v785
  %v998 = vpop.f32.mrb[0].mxu0
  %v999 = vadd.f32 %v797, %v998
  %v1000 = vpop.f32.mrb[0].mxu0
  %v1001 = vadd.f32 %v801, %v1000
  %v1002 = vpop.f32.mrb[0].mxu0
  %v1003 = vadd.f32 %v797, %v1002
  %v1004 = vpop.f32.mrb[0].mxu0
  %v1005 = vadd.f32 %v801, %v1004
  %1006 = vmatprep.mubr.bf16.mxu0 %v788
  %1007 = vmatmul.mubr.bf16.gmra.mrb[0].mxu0 %v787
  %v1008 = vpop.f32.mrb[0].mxu0
  %v1009 = vadd.f32 %v797, %v1008
  %v1010 = vpop.f32.mrb[0].mxu0
  %v1011 = vadd.f32 %v801, %v1010
  %v1012 = vpop.f32.mrb[0].mxu0
  %v1013 = vadd.f32 %v797, %v1012
  %v1014 = vpop.f32.mrb[0].mxu0
  %v1015 = vadd.f32 %v801, %v1014
  %1016 = vmatprep.mubr.bf16.mxu0 %v790
  %1017 = vmatmul.mubr.bf16.gmra.mrb[0].mxu0 %v789
  %v1018 = vpop.f32.mrb[0].mxu0
  %v1019 = vadd.f32 %v797, %v1018
  %v1020 = vpop.f32.mrb[0].mxu0
  %v1021 = vadd.f32 %v801, %v1020
  %v1022 = vpop.f32.mrb[0].mxu0
  %v1023 = vadd.f32 %v797, %v1022
  %v1024 = vpop.f32.mrb[0].mxu0
  %v1025 = vadd.f32 %v801, %v1024
  %1026 = vmatprep.mubr.bf16.mxu0 %v792
  %1027 = vmatmul.mubr.bf16.gmra.mrb[0].mxu0 %v791
  %v1028 = vpop.f32.mrb[0].mxu0
  %v1029 = vadd.f32 %v797, %v1028
  %v1030 = vpop.f32.mrb[0].mxu0
  %v1031 = vadd.f32 %v801, %v1030
  %v1032 = vpop.f32.mrb[0].mxu0
  %v1033 = vadd.f32 %v797, %v1032
  %v1034 = vpop.f32.mrb[0].mxu0
  %v1035 = vadd.f32 %v801, %v1034
  %1036 = vdwg.mxu0
  %v1037 = vmax.f32 %v999, 0.0
  %v1038 = vmax.f32 %v1001, 0.0
  %v1039 = vmax.f32 %v1003, 0.0
  %v1040 = vmax.f32 %v1005, 0.0
  %v1041 = vmax.f32 %v1009, 0.0
  %v1042 = vmax.f32 %v1011, 0.0
  %v1043 = vmax.f32 %v1013, 0.0
  %v1044 = vmax.f32 %v1015, 0.0
  %v1045 = vmax.f32 %v1019, 0.0
  %v1046 = vmax.f32 %v1021, 0.0
  %v1047 = vmax.f32 %v1023, 0.0
  %v1048 = vmax.f32 %v1025, 0.0
  %v1049 = vmax.f32 %v1029, 0.0
  %v1050 = vmax.f32 %v1031, 0.0
  %v1051 = vmax.f32 %v1033, 0.0
  %v1052 = vmax.f32 %v1035, 0.0
  %v1053 = vpack.c.bf16 %v1039, %v1037
  %v1054 = vpack.c.bf16 %v1040, %v1038
  %v1055 = vpack.c.bf16 %v1043, %v1041
  %v1056 = vpack.c.bf16 %v1044, %v1042
  %v1057 = vpack.c.bf16 %v1047, %v1045
  %v1058 = vpack.c.bf16 %v1048, %v1046
  %v1059 = vpack.c.bf16 %v1051, %v1049
  %v1060 = vpack.c.bf16 %v1052, %v1050
  %v1061 = vmax.bf16 %v1053, %v1055
  %v1062 = vmax.bf16 %v1054, %v1056
  %v1063 = vmax.bf16 %v1061, %v1057
  %v1064 = vmax.bf16 %v1062, %v1058
  %v1065 = vmax.bf16 %v1063, %v1059
  %v1066 = vmax.bf16 %v1064, %v1060
  %v1067 = vld [vmem:[%s11] sm:$0xff]
  %v1068 = vld [vmem:[%s11 + $0x8] sm:$0xff]
  %v1069 = vld [vmem:[%s11 + $0x10] sm:$0xff]
  %v1070 = vld [vmem:[%s11 + $0x18] sm:$0xff]
  %v1071 = vld [vmem:[%s11 + $0x20] sm:$0xff]
  %v1072 = vld [vmem:[%s11 + $0x28] sm:$0xff]
  %v1073 = vld [vmem:[%s11 + $0x30] sm:$0xff]
  %v1074 = vld [vmem:[%s11 + $0x38] sm:$0xff]
  %v1075 = vld [vmem:[%s11 + $0x40] sm:$0xff]
  %v1076 = vld [vmem:[%s11 + $0x48] sm:$0xff]
  %v1077 = vld [vmem:[%s11 + $0x50] sm:$0xff]
  %v1078 = vld [vmem:[%s11 + $0x58] sm:$0xff]
  %v1079 = vld [vmem:[%s11 + $0x60] sm:$0xff]
  %v1080 = vld [vmem:[%s11 + $0x68] sm:$0xff]
  %v1081 = vld [vmem:[%s11 + $0x70] sm:$0xff]
  %v1082 = vld [vmem:[%s11 + $0x78] sm:$0xff]
  %v1083 = vld [vmem:[%s11 + $0x80] sm:$0xff]
  %v1084 = vld [vmem:[%s11 + $0x88] sm:$0xff]
  %v1085 = vld [vmem:[%s11 + $0x90] sm:$0xff]
  %v1086 = vld [vmem:[%s11 + $0x98] sm:$0xff]
  %v1087 = vld [vmem:[%s11 + $0xa0] sm:$0xff]
  %v1088 = vld [vmem:[%s11 + $0xa8] sm:$0xff]
  %v1089 = vld [vmem:[%s11 + $0xb0] sm:$0xff]
  %v1090 = vld [vmem:[%s11 + $0xb8] sm:$0xff]
  %v1091 = vld [vmem:[%s11 + $0xc0] sm:$0xff]
  %v1092 = vld [vmem:[%s11 + $0xc8] sm:$0xff]
  %v1093 = vld [vmem:[%s11 + $0xd0] sm:$0xff]
  %v1094 = vld [vmem:[%s11 + $0xd8] sm:$0xff]
  %v1095 = vld [vmem:[%s11 + $0xe0] sm:$0xff]
  %v1096 = vld [vmem:[%s11 + $0xe8] sm:$0xff]
  %v1097 = vld [vmem:[%s11 + $0xf0] sm:$0xff]
  %v1098 = vld [vmem:[%s11 + $0xf8] sm:$0xff]
  %v1099 = vld [vmem:[%s11 + $0x100] sm:$0xff]
  %v1100 = vld [vmem:[%s11 + $0x108] sm:$0xff]
  %v1101 = vld [vmem:[%s11 + $0x110] sm:$0xff]
  %v1102 = vld [vmem:[%s11 + $0x118] sm:$0xff]
  %v1103 = vld [vmem:[%s11 + $0x120] sm:$0xff]
  %v1104 = vld [vmem:[%s11 + $0x128] sm:$0xff]
  %v1105 = vld [vmem:[%s11 + $0x130] sm:$0xff]
  %v1106 = vld [vmem:[%s11 + $0x138] sm:$0xff]
  %v1107 = vld [vmem:[%s11 + $0x140] sm:$0xff]
  %v1108 = vld [vmem:[%s11 + $0x148] sm:$0xff]
  %v1109 = vld [vmem:[%s11 + $0x150] sm:$0xff]
  %v1110 = vld [vmem:[%s11 + $0x158] sm:$0xff]
  %v1111 = vld [vmem:[%s11 + $0x160] sm:$0xff]
  %v1112 = vld [vmem:[%s11 + $0x168] sm:$0xff]
  %v1113 = vld [vmem:[%s11 + $0x170] sm:$0xff]
  %v1114 = vld [vmem:[%s11 + $0x178] sm:$0xff]
  %v1115 = vld [vmem:[%s11 + $0x180] sm:$0xff]
  %v1116 = vld [vmem:[%s11 + $0x188] sm:$0xff]
  %v1117 = vld [vmem:[%s11 + $0x190] sm:$0xff]
  %v1118 = vld [vmem:[%s11 + $0x198] sm:$0xff]
  %v1119 = vld [vmem:[%s11 + $0x1a0] sm:$0xff]
  %v1120 = vld [vmem:[%s11 + $0x1a8] sm:$0xff]
  %v1121 = vld [vmem:[%s11 + $0x1b0] sm:$0xff]
  %v1122 = vld [vmem:[%s11 + $0x1b8] sm:$0xff]
  %v1123 = vld [vmem:[%s11 + $0x1c0] sm:$0xff]
  %v1124 = vld [vmem:[%s11 + $0x1c8] sm:$0xff]
  %v1125 = vld [vmem:[%s11 + $0x1d0] sm:$0xff]
  %v1126 = vld [vmem:[%s11 + $0x1d8] sm:$0xff]
  %v1127 = vld [vmem:[%s11 + $0x1e0] sm:$0xff]
  %v1128 = vld [vmem:[%s11 + $0x1e8] sm:$0xff]
  %v1129 = vld [vmem:[%s11 + $0x1f0] sm:$0xff]
  %v1130 = vld [vmem:[%s11 + $0x1f8] sm:$0xff]
  %v1195 = vunpack.c.l.b16 %v1067
  %v1196 = vunpack.c.h.b16 %v1067
  %v1197 = vunpack.c.l.b16 %v1068
  %v1198 = vunpack.c.h.b16 %v1068
  %v1199 = vunpack.c.l.b16 %v1069
  %v1200 = vunpack.c.h.b16 %v1069
  %v1201 = vunpack.c.l.b16 %v1070
  %v1202 = vunpack.c.h.b16 %v1070
  %v1203 = vunpack.c.l.b16 %v1071
  %v1204 = vunpack.c.h.b16 %v1071
  %v1205 = vunpack.c.l.b16 %v1072
  %v1206 = vunpack.c.h.b16 %v1072
  %v1207 = vunpack.c.l.b16 %v1073
  %v1208 = vunpack.c.h.b16 %v1073
  %v1209 = vunpack.c.l.b16 %v1074
  %v1210 = vunpack.c.h.b16 %v1074
  %v1211 = vunpack.c.l.b16 %v1075
  %v1212 = vunpack.c.h.b16 %v1075
  %v1213 = vunpack.c.l.b16 %v1076
  %v1214 = vunpack.c.h.b16 %v1076
  %v1215 = vunpack.c.l.b16 %v1077
  %v1216 = vunpack.c.h.b16 %v1077
  %v1217 = vunpack.c.l.b16 %v1078
  %v1218 = vunpack.c.h.b16 %v1078
  %v1219 = vunpack.c.l.b16 %v1079
  %v1220 = vunpack.c.h.b16 %v1079
  %v1221 = vunpack.c.l.b16 %v1080
  %v1222 = vunpack.c.h.b16 %v1080
  %v1223 = vunpack.c.l.b16 %v1081
  %v1224 = vunpack.c.h.b16 %v1081
  %v1225 = vunpack.c.l.b16 %v1082
  %v1226 = vunpack.c.h.b16 %v1082
  %v1227 = vunpack.c.l.b16 %v1083
  %v1228 = vunpack.c.h.b16 %v1083
  %v1229 = vunpack.c.l.b16 %v1084
  %v1230 = vunpack.c.h.b16 %v1084
  %v1231 = vunpack.c.l.b16 %v1085
  %v1232 = vunpack.c.h.b16 %v1085
  %v1233 = vunpack.c.l.b16 %v1086
  %v1234 = vunpack.c.h.b16 %v1086
  %v1235 = vunpack.c.l.b16 %v1087
  %v1236 = vunpack.c.h.b16 %v1087
  %v1237 = vunpack.c.l.b16 %v1088
  %v1238 = vunpack.c.h.b16 %v1088
  %v1239 = vunpack.c.l.b16 %v1089
  %v1240 = vunpack.c.h.b16 %v1089
  %v1241 = vunpack.c.l.b16 %v1090
  %v1242 = vunpack.c.h.b16 %v1090
  %v1243 = vunpack.c.l.b16 %v1091
  %v1244 = vunpack.c.h.b16 %v1091
  %v1245 = vunpack.c.l.b16 %v1092
  %v1246 = vunpack.c.h.b16 %v1092
  %v1247 = vunpack.c.l.b16 %v1093
  %v1248 = vunpack.c.h.b16 %v1093
  %v1249 = vunpack.c.l.b16 %v1094
  %v1250 = vunpack.c.h.b16 %v1094
  %v1251 = vunpack.c.l.b16 %v1095
  %v1252 = vunpack.c.h.b16 %v1095
  %v1253 = vunpack.c.l.b16 %v1096
  %v1254 = vunpack.c.h.b16 %v1096
  %v1255 = vunpack.c.l.b16 %v1097
  %v1256 = vunpack.c.h.b16 %v1097
  %v1257 = vunpack.c.l.b16 %v1098
  %v1258 = vunpack.c.h.b16 %v1098
  %v1259 = vunpack.c.l.b16 %v1099
  %v1260 = vunpack.c.h.b16 %v1099
  %v1261 = vunpack.c.l.b16 %v1100
  %v1262 = vunpack.c.h.b16 %v1100
  %v1263 = vunpack.c.l.b16 %v1101
  %v1264 = vunpack.c.h.b16 %v1101
  %v1265 = vunpack.c.l.b16 %v1102
  %v1266 = vunpack.c.h.b16 %v1102
  %v1267 = vunpack.c.l.b16 %v1103
  %v1268 = vunpack.c.h.b16 %v1103
  %v1269 = vunpack.c.l.b16 %v1104
  %v1270 = vunpack.c.h.b16 %v1104
  %v1271 = vunpack.c.l.b16 %v1105
  %v1272 = vunpack.c.h.b16 %v1105
  %v1273 = vunpack.c.l.b16 %v1106
  %v1274 = vunpack.c.h.b16 %v1106
  %v1275 = vunpack.c.l.b16 %v1107
  %v1276 = vunpack.c.h.b16 %v1107
  %v1277 = vunpack.c.l.b16 %v1108
  %v1278 = vunpack.c.h.b16 %v1108
  %v1279 = vunpack.c.l.b16 %v1109
  %v1280 = vunpack.c.h.b16 %v1109
  %v1281 = vunpack.c.l.b16 %v1110
  %v1282 = vunpack.c.h.b16 %v1110
  %v1283 = vunpack.c.l.b16 %v1111
  %v1284 = vunpack.c.h.b16 %v1111
  %v1285 = vunpack.c.l.b16 %v1112
  %v1286 = vunpack.c.h.b16 %v1112
  %v1287 = vunpack.c.l.b16 %v1113
  %v1288 = vunpack.c.h.b16 %v1113
  %v1289 = vunpack.c.l.b16 %v1114
  %v1290 = vunpack.c.h.b16 %v1114
  %v1291 = vunpack.c.l.b16 %v1115
  %v1292 = vunpack.c.h.b16 %v1115
  %v1293 = vunpack.c.l.b16 %v1116
  %v1294 = vunpack.c.h.b16 %v1116
  %v1295 = vunpack.c.l.b16 %v1117
  %v1296 = vunpack.c.h.b16 %v1117
  %v1297 = vunpack.c.l.b16 %v1118
  %v1298 = vunpack.c.h.b16 %v1118
  %v1299 = vunpack.c.l.b16 %v1119
  %v1300 = vunpack.c.h.b16 %v1119
  %v1301 = vunpack.c.l.b16 %v1120
  %v1302 = vunpack.c.h.b16 %v1120
  %v1303 = vunpack.c.l.b16 %v1121
  %v1304 = vunpack.c.h.b16 %v1121
  %v1305 = vunpack.c.l.b16 %v1122
  %v1306 = vunpack.c.h.b16 %v1122
  %v1307 = vunpack.c.l.b16 %v1123
  %v1308 = vunpack.c.h.b16 %v1123
  %v1309 = vunpack.c.l.b16 %v1124
  %v1310 = vunpack.c.h.b16 %v1124
  %v1311 = vunpack.c.l.b16 %v1125
  %v1312 = vunpack.c.h.b16 %v1125
  %v1313 = vunpack.c.l.b16 %v1126
  %v1314 = vunpack.c.h.b16 %v1126
  %v1315 = vunpack.c.l.b16 %v1127
  %v1316 = vunpack.c.h.b16 %v1127
  %v1317 = vunpack.c.l.b16 %v1128
  %v1318 = vunpack.c.h.b16 %v1128
  %v1319 = vunpack.c.l.b16 %v1129
  %v1320 = vunpack.c.h.b16 %v1129
  %v1321 = vunpack.c.l.b16 %v1130
  %v1322 = vunpack.c.h.b16 %v1130
  %v1323 = vpack.c.b16 %v1199, %v1195
  %v1324 = vpack.c.b16 %v1200, %v1196
  %v1325 = vpack.c.b16 %v1201, %v1197
  %v1326 = vpack.c.b16 %v1202, %v1198
  %v1327 = vpack.c.b16 %v1207, %v1203
  %v1328 = vpack.c.b16 %v1208, %v1204
  %v1329 = vpack.c.b16 %v1209, %v1205
  %v1330 = vpack.c.b16 %v1210, %v1206
  %v1331 = vpack.c.b16 %v1215, %v1211
  %v1332 = vpack.c.b16 %v1216, %v1212
  %v1333 = vpack.c.b16 %v1217, %v1213
  %v1334 = vpack.c.b16 %v1218, %v1214
  %v1335 = vpack.c.b16 %v1223, %v1219
  %v1336 = vpack.c.b16 %v1224, %v1220
  %v1337 = vpack.c.b16 %v1225, %v1221
  %v1338 = vpack.c.b16 %v1226, %v1222
  %v1339 = vpack.c.b16 %v1231, %v1227
  %v1340 = vpack.c.b16 %v1232, %v1228
  %v1341 = vpack.c.b16 %v1233, %v1229
  %v1342 = vpack.c.b16 %v1234, %v1230
  %v1343 = vpack.c.b16 %v1239, %v1235
  %v1344 = vpack.c.b16 %v1240, %v1236
  %v1345 = vpack.c.b16 %v1241, %v1237
  %v1346 = vpack.c.b16 %v1242, %v1238
  %v1347 = vpack.c.b16 %v1247, %v1243
  %v1348 = vpack.c.b16 %v1248, %v1244
  %v1349 = vpack.c.b16 %v1249, %v1245
  %v1350 = vpack.c.b16 %v1250, %v1246
  %v1351 = vpack.c.b16 %v1255, %v1251
  %v1352 = vpack.c.b16 %v1256, %v1252
  %v1353 = vpack.c.b16 %v1257, %v1253
  %v1354 = vpack.c.b16 %v1258, %v1254
  %v1355 = vpack.c.b16 %v1263, %v1259
  %v1356 = vpack.c.b16 %v1264, %v1260
  %v1357 = vpack.c.b16 %v1265, %v1261
  %v1358 = vpack.c.b16 %v1266, %v1262
  %v1359 = vpack.c.b16 %v1271, %v1267
  %v1360 = vpack.c.b16 %v1272, %v1268
  %v1361 = vpack.c.b16 %v1273, %v1269
  %v1362 = vpack.c.b16 %v1274, %v1270
  %v1363 = vpack.c.b16 %v1279, %v1275
  %v1364 = vpack.c.b16 %v1280, %v1276
  %v1365 = vpack.c.b16 %v1281, %v1277
  %v1366 = vpack.c.b16 %v1282, %v1278
  %v1367 = vpack.c.b16 %v1287, %v1283
  %v1368 = vpack.c.b16 %v1288, %v1284
  %v1369 = vpack.c.b16 %v1289, %v1285
  %v1370 = vpack.c.b16 %v1290, %v1286
  %v1371 = vpack.c.b16 %v1295, %v1291
  %v1372 = vpack.c.b16 %v1296, %v1292
  %v1373 = vpack.c.b16 %v1297, %v1293
  %v1374 = vpack.c.b16 %v1298, %v1294
  %v1375 = vpack.c.b16 %v1303, %v1299
  %v1376 = vpack.c.b16 %v1304, %v1300
  %v1377 = vpack.c.b16 %v1305, %v1301
  %v1378 = vpack.c.b16 %v1306, %v1302
  %v1379 = vpack.c.b16 %v1311, %v1307
  %v1380 = vpack.c.b16 %v1312, %v1308
  %v1381 = vpack.c.b16 %v1313, %v1309
  %v1382 = vpack.c.b16 %v1314, %v1310
  %v1383 = vpack.c.b16 %v1319, %v1315
  %v1384 = vpack.c.b16 %v1320, %v1316
  %v1385 = vpack.c.b16 %v1321, %v1317
  %v1386 = vpack.c.b16 %v1322, %v1318
  %1451 = vmatprep.subr.bf16.mxu0 %v1324
  %1452 = vmatpush1.bf16.msra.mxu0 %v1323
  %1453 = vmatprep.subr.bf16.mxu0 %v1328
  %1454 = vmatpush1.bf16.msra.mxu0 %v1327
  %1455 = vmatprep.subr.bf16.mxu0 %v1332
  %1456 = vmatpush1.bf16.msra.mxu0 %v1331
  %1457 = vmatprep.subr.bf16.mxu0 %v1336
  %1458 = vmatpush1.bf16.msra.mxu0 %v1335
  %1459 = vmatprep.subr.bf16.mxu0 %v1340
  %1460 = vmatpush1.bf16.msra.mxu0 %v1339
  %1461 = vmatprep.subr.bf16.mxu0 %v1344
  %1462 = vmatpush1.bf16.msra.mxu0 %v1343
  %1463 = vmatprep.subr.bf16.mxu0 %v1348
  %1464 = vmatpush1.bf16.msra.mxu0 %v1347
  %1465 = vmatprep.subr.bf16.mxu0 %v1352
  %1466 = vmatpush1.bf16.msra.mxu0 %v1351
  %1467 = vmatprep.subr.bf16.mxu0 %v1356
  %1468 = vmatpush1.bf16.msra.mxu0 %v1355
  %1469 = vmatprep.subr.bf16.mxu0 %v1360
  %1470 = vmatpush1.bf16.msra.mxu0 %v1359
  %1471 = vmatprep.subr.bf16.mxu0 %v1364
  %1472 = vmatpush1.bf16.msra.mxu0 %v1363
  %1473 = vmatprep.subr.bf16.mxu0 %v1368
  %1474 = vmatpush1.bf16.msra.mxu0 %v1367
  %1475 = vmatprep.subr.bf16.mxu0 %v1372
  %1476 = vmatpush1.bf16.msra.mxu0 %v1371
  %1477 = vmatprep.subr.bf16.mxu0 %v1376
  %1478 = vmatpush1.bf16.msra.mxu0 %v1375
  %1479 = vmatprep.subr.bf16.mxu0 %v1380
  %1480 = vmatpush1.bf16.msra.mxu0 %v1379
  %1481 = vmatprep.subr.bf16.mxu0 %v1384
  %1482 = vmatpush1.bf16.msra.mxu0 %v1383
  %1483 = vmatprep.mubr.bf16.mxu0 %v1066
  %1484 = vmatmul.mubr.bf16.gmra.mrb[0].mxu0 %v1065
  %v1485 = vpop.f32.mrb[0].mxu0
  %v1486 = vadd.f32 0.0, %v1485
  %v1487 = vpop.f32.mrb[0].mxu0
  %v1488 = vadd.f32 0.0, %v1487
  %v1489 = vpop.f32.mrb[0].mxu0
  %v1490 = vadd.f32 0.0, %v1489
  %v1491 = vpop.f32.mrb[0].mxu0
  %v1492 = vadd.f32 0.0, %v1491
  %1493 = vdwg.mxu0
  %1494 = vmatprep.subr.bf16.mxu0 %v1326
  %1495 = vmatpush1.bf16.msra.mxu0 %v1325
  %1496 = vmatprep.subr.bf16.mxu0 %v1330
  %1497 = vmatpush1.bf16.msra.mxu0 %v1329
  %1498 = vmatprep.subr.bf16.mxu0 %v1334
  %1499 = vmatpush1.bf16.msra.mxu0 %v1333
  %1500 = vmatprep.subr.bf16.mxu0 %v1338
  %1501 = vmatpush1.bf16.msra.mxu0 %v1337
  %1502 = vmatprep.subr.bf16.mxu0 %v1342
  %1503 = vmatpush1.bf16.msra.mxu0 %v1341
  %1504 = vmatprep.subr.bf16.mxu0 %v1346
  %1505 = vmatpush1.bf16.msra.mxu0 %v1345
  %1506 = vmatprep.subr.bf16.mxu0 %v1350
  %1507 = vmatpush1.bf16.msra.mxu0 %v1349
  %1508 = vmatprep.subr.bf16.mxu0 %v1354
  %1509 = vmatpush1.bf16.msra.mxu0 %v1353
  %1510 = vmatprep.subr.bf16.mxu0 %v1358
  %1511 = vmatpush1.bf16.msra.mxu0 %v1357
  %1512 = vmatprep.subr.bf16.mxu0 %v1362
  %1513 = vmatpush1.bf16.msra.mxu0 %v1361
  %1514 = vmatprep.subr.bf16.mxu0 %v1366
  %1515 = vmatpush1.bf16.msra.mxu0 %v1365
  %1516 = vmatprep.subr.bf16.mxu0 %v1370
  %1517 = vmatpush1.bf16.msra.mxu0 %v1369
  %1518 = vmatprep.subr.bf16.mxu0 %v1374
  %1519 = vmatpush1.bf16.msra.mxu0 %v1373
  %1520 = vmatprep.subr.bf16.mxu0 %v1378
  %1521 = vmatpush1.bf16.msra.mxu0 %v1377
  %1522 = vmatprep.subr.bf16.mxu0 %v1382
  %1523 = vmatpush1.bf16.msra.mxu0 %v1381
  %1524 = vmatprep.subr.bf16.mxu0 %v1386
  %1525 = vmatpush1.bf16.msra.mxu0 %v1385
  %1526 = vmatprep.mubr.bf16.mxu0 %v1066
  %1527 = vmatmul.mubr.bf16.gmra.mrb[0].mxu0 %v1065
  %v1528 = vpop.f32.mrb[0].mxu0
  %v1529 = vadd.f32 0.0, %v1528
  %v1530 = vpop.f32.mrb[0].mxu0
  %v1531 = vadd.f32 0.0, %v1530
  %v1532 = vpop.f32.mrb[0].mxu0
  %v1533 = vadd.f32 0.0, %v1532
  %v1534 = vpop.f32.mrb[0].mxu0
  %v1535 = vadd.f32 0.0, %v1534
  %1536 = vdwg.mxu0
  %v1537 = vld [vmem:[%s10] sm:$0xff]
  %v1538 = vld [vmem:[%s10 + $0x8] sm:$0xff]
  %v1539 = vld [vmem:[%s10 + $0x10] sm:$0xff]
  %v1540 = vld [vmem:[%s10 + $0x18] sm:$0xff]
  %v1541 = vld [vmem:[%s10 + $0x20] sm:$0xff]
  %v1542 = vld [vmem:[%s10 + $0x28] sm:$0xff]
  %v1543 = vld [vmem:[%s10 + $0x30] sm:$0xff]
  %v1544 = vld [vmem:[%s10 + $0x38] sm:$0xff]
  %v1545 = vld [vmem:[%s10 + $0x40] sm:$0xff]
  %v1546 = vld [vmem:[%s10 + $0x48] sm:$0xff]
  %v1547 = vld [vmem:[%s10 + $0x50] sm:$0xff]
  %v1548 = vld [vmem:[%s10 + $0x58] sm:$0xff]
  %v1549 = vld [vmem:[%s10 + $0x60] sm:$0xff]
  %v1550 = vld [vmem:[%s10 + $0x68] sm:$0xff]
  %v1551 = vld [vmem:[%s10 + $0x70] sm:$0xff]
  %v1552 = vld [vmem:[%s10 + $0x78] sm:$0xff]
  %v1553 = vld [vmem:[%s10 + $0x80] sm:$0xff]
  %v1554 = vld [vmem:[%s10 + $0x88] sm:$0xff]
  %v1555 = vld [vmem:[%s10 + $0x90] sm:$0xff]
  %v1556 = vld [vmem:[%s10 + $0x98] sm:$0xff]
  %v1557 = vld [vmem:[%s10 + $0xa0] sm:$0xff]
  %v1558 = vld [vmem:[%s10 + $0xa8] sm:$0xff]
  %v1559 = vld [vmem:[%s10 + $0xb0] sm:$0xff]
  %v1560 = vld [vmem:[%s10 + $0xb8] sm:$0xff]
  %v1561 = vld [vmem:[%s10 + $0xc0] sm:$0xff]
  %v1562 = vld [vmem:[%s10 + $0xc8] sm:$0xff]
  %v1563 = vld [vmem:[%s10 + $0xd0] sm:$0xff]
  %v1564 = vld [vmem:[%s10 + $0xd8] sm:$0xff]
  %v1565 = vld [vmem:[%s10 + $0xe0] sm:$0xff]
  %v1566 = vld [vmem:[%s10 + $0xe8] sm:$0xff]
  %v1567 = vld [vmem:[%s10 + $0xf0] sm:$0xff]
  %v1568 = vld [vmem:[%s10 + $0xf8] sm:$0xff]
  %v1569 = vld [vmem:[%s10 + $0x100] sm:$0xff]
  %v1570 = vld [vmem:[%s10 + $0x108] sm:$0xff]
  %v1571 = vld [vmem:[%s10 + $0x110] sm:$0xff]
  %v1572 = vld [vmem:[%s10 + $0x118] sm:$0xff]
  %v1573 = vld [vmem:[%s10 + $0x120] sm:$0xff]
  %v1574 = vld [vmem:[%s10 + $0x128] sm:$0xff]
  %v1575 = vld [vmem:[%s10 + $0x130] sm:$0xff]
  %v1576 = vld [vmem:[%s10 + $0x138] sm:$0xff]
  %v1577 = vld [vmem:[%s10 + $0x140] sm:$0xff]
  %v1578 = vld [vmem:[%s10 + $0x148] sm:$0xff]
  %v1579 = vld [vmem:[%s10 + $0x150] sm:$0xff]
  %v1580 = vld [vmem:[%s10 + $0x158] sm:$0xff]
  %v1581 = vld [vmem:[%s10 + $0x160] sm:$0xff]
  %v1582 = vld [vmem:[%s10 + $0x168] sm:$0xff]
  %v1583 = vld [vmem:[%s10 + $0x170] sm:$0xff]
  %v1584 = vld [vmem:[%s10 + $0x178] sm:$0xff]
  %v1585 = vld [vmem:[%s10 + $0x180] sm:$0xff]
  %v1586 = vld [vmem:[%s10 + $0x188] sm:$0xff]
  %v1587 = vld [vmem:[%s10 + $0x190] sm:$0xff]
  %v1588 = vld [vmem:[%s10 + $0x198] sm:$0xff]
  %v1589 = vld [vmem:[%s10 + $0x1a0] sm:$0xff]
  %v1590 = vld [vmem:[%s10 + $0x1a8] sm:$0xff]
  %v1591 = vld [vmem:[%s10 + $0x1b0] sm:$0xff]
  %v1592 = vld [vmem:[%s10 + $0x1b8] sm:$0xff]
  %v1593 = vld [vmem:[%s10 + $0x1c0] sm:$0xff]
  %v1594 = vld [vmem:[%s10 + $0x1c8] sm:$0xff]
  %v1595 = vld [vmem:[%s10 + $0x1d0] sm:$0xff]
  %v1596 = vld [vmem:[%s10 + $0x1d8] sm:$0xff]
  %v1597 = vld [vmem:[%s10 + $0x1e0] sm:$0xff]
  %v1598 = vld [vmem:[%s10 + $0x1e8] sm:$0xff]
  %v1599 = vld [vmem:[%s10 + $0x1f0] sm:$0xff]
  %v1600 = vld [vmem:[%s10 + $0x1f8] sm:$0xff]
  %v1665 = vunpack.c.l.b16 %v1537
  %v1666 = vunpack.c.h.b16 %v1537
  %v1667 = vunpack.c.l.b16 %v1538
  %v1668 = vunpack.c.h.b16 %v1538
  %v1669 = vunpack.c.l.b16 %v1539
  %v1670 = vunpack.c.h.b16 %v1539
  %v1671 = vunpack.c.l.b16 %v1540
  %v1672 = vunpack.c.h.b16 %v1540
  %v1673 = vunpack.c.l.b16 %v1541
  %v1674 = vunpack.c.h.b16 %v1541
  %v1675 = vunpack.c.l.b16 %v1542
  %v1676 = vunpack.c.h.b16 %v1542
  %v1677 = vunpack.c.l.b16 %v1543
  %v1678 = vunpack.c.h.b16 %v1543
  %v1679 = vunpack.c.l.b16 %v1544
  %v1680 = vunpack.c.h.b16 %v1544
  %v1681 = vunpack.c.l.b16 %v1545
  %v1682 = vunpack.c.h.b16 %v1545
  %v1683 = vunpack.c.l.b16 %v1546
  %v1684 = vunpack.c.h.b16 %v1546
  %v1685 = vunpack.c.l.b16 %v1547
  %v1686 = vunpack.c.h.b16 %v1547
  %v1687 = vunpack.c.l.b16 %v1548
  %v1688 = vunpack.c.h.b16 %v1548
  %v1689 = vunpack.c.l.b16 %v1549
  %v1690 = vunpack.c.h.b16 %v1549
  %v1691 = vunpack.c.l.b16 %v1550
  %v1692 = vunpack.c.h.b16 %v1550
  %v1693 = vunpack.c.l.b16 %v1551
  %v1694 = vunpack.c.h.b16 %v1551
  %v1695 = vunpack.c.l.b16 %v1552
  %v1696 = vunpack.c.h.b16 %v1552
  %v1697 = vunpack.c.l.b16 %v1553
  %v1698 = vunpack.c.h.b16 %v1553
  %v1699 = vunpack.c.l.b16 %v1554
  %v1700 = vunpack.c.h.b16 %v1554
  %v1701 = vunpack.c.l.b16 %v1555
  %v1702 = vunpack.c.h.b16 %v1555
  %v1703 = vunpack.c.l.b16 %v1556
  %v1704 = vunpack.c.h.b16 %v1556
  %v1705 = vunpack.c.l.b16 %v1557
  %v1706 = vunpack.c.h.b16 %v1557
  %v1707 = vunpack.c.l.b16 %v1558
  %v1708 = vunpack.c.h.b16 %v1558
  %v1709 = vunpack.c.l.b16 %v1559
  %v1710 = vunpack.c.h.b16 %v1559
  %v1711 = vunpack.c.l.b16 %v1560
  %v1712 = vunpack.c.h.b16 %v1560
  %v1713 = vunpack.c.l.b16 %v1561
  %v1714 = vunpack.c.h.b16 %v1561
  %v1715 = vunpack.c.l.b16 %v1562
  %v1716 = vunpack.c.h.b16 %v1562
  %v1717 = vunpack.c.l.b16 %v1563
  %v1718 = vunpack.c.h.b16 %v1563
  %v1719 = vunpack.c.l.b16 %v1564
  %v1720 = vunpack.c.h.b16 %v1564
  %v1721 = vunpack.c.l.b16 %v1565
  %v1722 = vunpack.c.h.b16 %v1565
  %v1723 = vunpack.c.l.b16 %v1566
  %v1724 = vunpack.c.h.b16 %v1566
  %v1725 = vunpack.c.l.b16 %v1567
  %v1726 = vunpack.c.h.b16 %v1567
  %v1727 = vunpack.c.l.b16 %v1568
  %v1728 = vunpack.c.h.b16 %v1568
  %v1729 = vunpack.c.l.b16 %v1569
  %v1730 = vunpack.c.h.b16 %v1569
  %v1731 = vunpack.c.l.b16 %v1570
  %v1732 = vunpack.c.h.b16 %v1570
  %v1733 = vunpack.c.l.b16 %v1571
  %v1734 = vunpack.c.h.b16 %v1571
  %v1735 = vunpack.c.l.b16 %v1572
  %v1736 = vunpack.c.h.b16 %v1572
  %v1737 = vunpack.c.l.b16 %v1573
  %v1738 = vunpack.c.h.b16 %v1573
  %v1739 = vunpack.c.l.b16 %v1574
  %v1740 = vunpack.c.h.b16 %v1574
  %v1741 = vunpack.c.l.b16 %v1575
  %v1742 = vunpack.c.h.b16 %v1575
  %v1743 = vunpack.c.l.b16 %v1576
  %v1744 = vunpack.c.h.b16 %v1576
  %v1745 = vunpack.c.l.b16 %v1577
  %v1746 = vunpack.c.h.b16 %v1577
  %v1747 = vunpack.c.l.b16 %v1578
  %v1748 = vunpack.c.h.b16 %v1578
  %v1749 = vunpack.c.l.b16 %v1579
  %v1750 = vunpack.c.h.b16 %v1579
  %v1751 = vunpack.c.l.b16 %v1580
  %v1752 = vunpack.c.h.b16 %v1580
  %v1753 = vunpack.c.l.b16 %v1581
  %v1754 = vunpack.c.h.b16 %v1581
  %v1755 = vunpack.c.l.b16 %v1582
  %v1756 = vunpack.c.h.b16 %v1582
  %v1757 = vunpack.c.l.b16 %v1583
  %v1758 = vunpack.c.h.b16 %v1583
  %v1759 = vunpack.c.l.b16 %v1584
  %v1760 = vunpack.c.h.b16 %v1584
  %v1761 = vunpack.c.l.b16 %v1585
  %v1762 = vunpack.c.h.b16 %v1585
  %v1763 = vunpack.c.l.b16 %v1586
  %v1764 = vunpack.c.h.b16 %v1586
  %v1765 = vunpack.c.l.b16 %v1587
  %v1766 = vunpack.c.h.b16 %v1587
  %v1767 = vunpack.c.l.b16 %v1588
  %v1768 = vunpack.c.h.b16 %v1588
  %v1769 = vunpack.c.l.b16 %v1589
  %v1770 = vunpack.c.h.b16 %v1589
  %v1771 = vunpack.c.l.b16 %v1590
  %v1772 = vunpack.c.h.b16 %v1590
  %v1773 = vunpack.c.l.b16 %v1591
  %v1774 = vunpack.c.h.b16 %v1591
  %v1775 = vunpack.c.l.b16 %v1592
  %v1776 = vunpack.c.h.b16 %v1592
  %v1777 = vunpack.c.l.b16 %v1593
  %v1778 = vunpack.c.h.b16 %v1593
  %v1779 = vunpack.c.l.b16 %v1594
  %v1780 = vunpack.c.h.b16 %v1594
  %v1781 = vunpack.c.l.b16 %v1595
  %v1782 = vunpack.c.h.b16 %v1595
  %v1783 = vunpack.c.l.b16 %v1596
  %v1784 = vunpack.c.h.b16 %v1596
  %v1785 = vunpack.c.l.b16 %v1597
  %v1786 = vunpack.c.h.b16 %v1597
  %v1787 = vunpack.c.l.b16 %v1598
  %v1788 = vunpack.c.h.b16 %v1598
  %v1789 = vunpack.c.l.b16 %v1599
  %v1790 = vunpack.c.h.b16 %v1599
  %v1791 = vunpack.c.l.b16 %v1600
  %v1792 = vunpack.c.h.b16 %v1600
  %v1793 = vpack.c.b16 %v1669, %v1665
  %v1794 = vpack.c.b16 %v1670, %v1666
  %v1795 = vpack.c.b16 %v1671, %v1667
  %v1796 = vpack.c.b16 %v1672, %v1668
  %v1797 = vpack.c.b16 %v1677, %v1673
  %v1798 = vpack.c.b16 %v1678, %v1674
  %v1799 = vpack.c.b16 %v1679, %v1675
  %v1800 = vpack.c.b16 %v1680, %v1676
  %v1801 = vpack.c.b16 %v1685, %v1681
  %v1802 = vpack.c.b16 %v1686, %v1682
  %v1803 = vpack.c.b16 %v1687, %v1683
  %v1804 = vpack.c.b16 %v1688, %v1684
  %v1805 = vpack.c.b16 %v1693, %v1689
  %v1806 = vpack.c.b16 %v1694, %v1690
  %v1807 = vpack.c.b16 %v1695, %v1691
  %v1808 = vpack.c.b16 %v1696, %v1692
  %v1809 = vpack.c.b16 %v1701, %v1697
  %v1810 = vpack.c.b16 %v1702, %v1698
  %v1811 = vpack.c.b16 %v1703, %v1699
  %v1812 = vpack.c.b16 %v1704, %v1700
  %v1813 = vpack.c.b16 %v1709, %v1705
  %v1814 = vpack.c.b16 %v1710, %v1706
  %v1815 = vpack.c.b16 %v1711, %v1707
  %v1816 = vpack.c.b16 %v1712, %v1708
  %v1817 = vpack.c.b16 %v1717, %v1713
  %v1818 = vpack.c.b16 %v1718, %v1714
  %v1819 = vpack.c.b16 %v1719, %v1715
  %v1820 = vpack.c.b16 %v1720, %v1716
  %v1821 = vpack.c.b16 %v1725, %v1721
  %v1822 = vpack.c.b16 %v1726, %v1722
  %v1823 = vpack.c.b16 %v1727, %v1723
  %v1824 = vpack.c.b16 %v1728, %v1724
  %v1825 = vpack.c.b16 %v1733, %v1729
  %v1826 = vpack.c.b16 %v1734, %v1730
  %v1827 = vpack.c.b16 %v1735, %v1731
  %v1828 = vpack.c.b16 %v1736, %v1732
  %v1829 = vpack.c.b16 %v1741, %v1737
  %v1830 = vpack.c.b16 %v1742, %v1738
  %v1831 = vpack.c.b16 %v1743, %v1739
  %v1832 = vpack.c.b16 %v1744, %v1740
  %v1833 = vpack.c.b16 %v1749, %v1745
  %v1834 = vpack.c.b16 %v1750, %v1746
  %v1835 = vpack.c.b16 %v1751, %v1747
  %v1836 = vpack.c.b16 %v1752, %v1748
  %v1837 = vpack.c.b16 %v1757, %v1753
  %v1838 = vpack.c.b16 %v1758, %v1754
  %v1839 = vpack.c.b16 %v1759, %v1755
  %v1840 = vpack.c.b16 %v1760, %v1756
  %v1841 = vpack.c.b16 %v1765, %v1761
  %v1842 = vpack.c.b16 %v1766, %v1762
  %v1843 = vpack.c.b16 %v1767, %v1763
  %v1844 = vpack.c.b16 %v1768, %v1764
  %v1845 = vpack.c.b16 %v1773, %v1769
  %v1846 = vpack.c.b16 %v1774, %v1770
  %v1847 = vpack.c.b16 %v1775, %v1771
  %v1848 = vpack.c.b16 %v1776, %v1772
  %v1849 = vpack.c.b16 %v1781, %v1777
  %v1850 = vpack.c.b16 %v1782, %v1778
  %v1851 = vpack.c.b16 %v1783, %v1779
  %v1852 = vpack.c.b16 %v1784, %v1780
  %v1853 = vpack.c.b16 %v1789, %v1785
  %v1854 = vpack.c.b16 %v1790, %v1786
  %v1855 = vpack.c.b16 %v1791, %v1787
  %v1856 = vpack.c.b16 %v1792, %v1788
  %1921 = vmatprep.subr.bf16.mxu0 %v1794
  %1922 = vmatpush1.bf16.msra.mxu0 %v1793
  %1923 = vmatprep.subr.bf16.mxu0 %v1798
  %1924 = vmatpush1.bf16.msra.mxu0 %v1797
  %1925 = vmatprep.subr.bf16.mxu0 %v1802
  %1926 = vmatpush1.bf16.msra.mxu0 %v1801
  %1927 = vmatprep.subr.bf16.mxu0 %v1806
  %1928 = vmatpush1.bf16.msra.mxu0 %v1805
  %1929 = vmatprep.subr.bf16.mxu0 %v1810
  %1930 = vmatpush1.bf16.msra.mxu0 %v1809
  %1931 = vmatprep.subr.bf16.mxu0 %v1814
  %1932 = vmatpush1.bf16.msra.mxu0 %v1813
  %1933 = vmatprep.subr.bf16.mxu0 %v1818
  %1934 = vmatpush1.bf16.msra.mxu0 %v1817
  %1935 = vmatprep.subr.bf16.mxu0 %v1822
  %1936 = vmatpush1.bf16.msra.mxu0 %v1821
  %1937 = vmatprep.subr.bf16.mxu0 %v1826
  %1938 = vmatpush1.bf16.msra.mxu0 %v1825
  %1939 = vmatprep.subr.bf16.mxu0 %v1830
  %1940 = vmatpush1.bf16.msra.mxu0 %v1829
  %1941 = vmatprep.subr.bf16.mxu0 %v1834
  %1942 = vmatpush1.bf16.msra.mxu0 %v1833
  %1943 = vmatprep.subr.bf16.mxu0 %v1838
  %1944 = vmatpush1.bf16.msra.mxu0 %v1837
  %1945 = vmatprep.subr.bf16.mxu0 %v1842
  %1946 = vmatpush1.bf16.msra.mxu0 %v1841
  %1947 = vmatprep.subr.bf16.mxu0 %v1846
  %1948 = vmatpush1.bf16.msra.mxu0 %v1845
  %1949 = vmatprep.subr.bf16.mxu0 %v1850
  %1950 = vmatpush1.bf16.msra.mxu0 %v1849
  %1951 = vmatprep.subr.bf16.mxu0 %v1854
  %1952 = vmatpush1.bf16.msra.mxu0 %v1853
  %1953 = vmatprep.mubr.bf16.mxu0 %v1054
  %1954 = vmatmul.mubr.bf16.gmra.mrb[0].mxu0 %v1053
  %v1955 = vpop.f32.mrb[0].mxu0
  %v1956 = vadd.f32 0.0, %v1955
  %v1957 = vpop.f32.mrb[0].mxu0
  %v1958 = vadd.f32 0.0, %v1957
  %v1959 = vpop.f32.mrb[0].mxu0
  %v1960 = vadd.f32 0.0, %v1959
  %v1961 = vpop.f32.mrb[0].mxu0
  %v1962 = vadd.f32 0.0, %v1961
  %1963 = vmatprep.mubr.bf16.mxu0 %v1056
  %1964 = vmatmul.mubr.bf16.gmra.mrb[0].mxu0 %v1055
  %v1965 = vpop.f32.mrb[0].mxu0
  %v1966 = vadd.f32 0.0, %v1965
  %v1967 = vpop.f32.mrb[0].mxu0
  %v1968 = vadd.f32 0.0, %v1967
  %v1969 = vpop.f32.mrb[0].mxu0
  %v1970 = vadd.f32 0.0, %v1969
  %v1971 = vpop.f32.mrb[0].mxu0
  %v1972 = vadd.f32 0.0, %v1971
  %1973 = vmatprep.mubr.bf16.mxu0 %v1058
  %1974 = vmatmul.mubr.bf16.gmra.mrb[0].mxu0 %v1057
  %v1975 = vpop.f32.mrb[0].mxu0
  %v1976 = vadd.f32 0.0, %v1975
  %v1977 = vpop.f32.mrb[0].mxu0
  %v1978 = vadd.f32 0.0, %v1977
  %v1979 = vpop.f32.mrb[0].mxu0
  %v1980 = vadd.f32 0.0, %v1979
  %v1981 = vpop.f32.mrb[0].mxu0
  %v1982 = vadd.f32 0.0, %v1981
  %1983 = vmatprep.mubr.bf16.mxu0 %v1060
  %1984 = vmatmul.mubr.bf16.gmra.mrb[0].mxu0 %v1059
  %v1985 = vpop.f32.mrb[0].mxu0
  %v1986 = vadd.f32 0.0, %v1985
  %v1987 = vpop.f32.mrb[0].mxu0
  %v1988 = vadd.f32 0.0, %v1987
  %v1989 = vpop.f32.mrb[0].mxu0
  %v1990 = vadd.f32 0.0, %v1989
  %v1991 = vpop.f32.mrb[0].mxu0
  %v1992 = vadd.f32 0.0, %v1991
  %1993 = vdwg.mxu0
  %1994 = vmatprep.subr.bf16.mxu0 %v1796
  %1995 = vmatpush1.bf16.msra.mxu0 %v1795
  %1996 = vmatprep.subr.bf16.mxu0 %v1800
  %1997 = vmatpush1.bf16.msra.mxu0 %v1799
  %1998 = vmatprep.subr.bf16.mxu0 %v1804
  %1999 = vmatpush1.bf16.msra.mxu0 %v1803
  %2000 = vmatprep.subr.bf16.mxu0 %v1808
  %2001 = vmatpush1.bf16.msra.mxu0 %v1807
  %2002 = vmatprep.subr.bf16.mxu0 %v1812
  %2003 = vmatpush1.bf16.msra.mxu0 %v1811
  %2004 = vmatprep.subr.bf16.mxu0 %v1816
  %2005 = vmatpush1.bf16.msra.mxu0 %v1815
  %2006 = vmatprep.subr.bf16.mxu0 %v1820
  %2007 = vmatpush1.bf16.msra.mxu0 %v1819
  %2008 = vmatprep.subr.bf16.mxu0 %v1824
  %2009 = vmatpush1.bf16.msra.mxu0 %v1823
  %2010 = vmatprep.subr.bf16.mxu0 %v1828
  %2011 = vmatpush1.bf16.msra.mxu0 %v1827
  %2012 = vmatprep.subr.bf16.mxu0 %v1832
  %2013 = vmatpush1.bf16.msra.mxu0 %v1831
  %2014 = vmatprep.subr.bf16.mxu0 %v1836
  %2015 = vmatpush1.bf16.msra.mxu0 %v1835
  %2016 = vmatprep.subr.bf16.mxu0 %v1840
  %2017 = vmatpush1.bf16.msra.mxu0 %v1839
  %2018 = vmatprep.subr.bf16.mxu0 %v1844
  %2019 = vmatpush1.bf16.msra.mxu0 %v1843
  %2020 = vmatprep.subr.bf16.mxu0 %v1848
  %2021 = vmatpush1.bf16.msra.mxu0 %v1847
  %2022 = vmatprep.subr.bf16.mxu0 %v1852
  %2023 = vmatpush1.bf16.msra.mxu0 %v1851
  %2024 = vmatprep.subr.bf16.mxu0 %v1856
  %2025 = vmatpush1.bf16.msra.mxu0 %v1855
  %2026 = vmatprep.mubr.bf16.mxu0 %v1054
  %2027 = vmatmul.mubr.bf16.gmra.mrb[0].mxu0 %v1053
  %v2028 = vpop.f32.mrb[0].mxu0
  %v2029 = vadd.f32 0.0, %v2028
  %v2030 = vpop.f32.mrb[0].mxu0
  %v2031 = vadd.f32 0.0, %v2030
  %v2032 = vpop.f32.mrb[0].mxu0
  %v2033 = vadd.f32 0.0, %v2032
  %v2034 = vpop.f32.mrb[0].mxu0
  %v2035 = vadd.f32 0.0, %v2034
  %2036 = vmatprep.mubr.bf16.mxu0 %v1056
  %2037 = vmatmul.mubr.bf16.gmra.mrb[0].mxu0 %v1055
  %v2038 = vpop.f32.mrb[0].mxu0
  %v2039 = vadd.f32 0.0, %v2038
  %v2040 = vpop.f32.mrb[0].mxu0
  %v2041 = vadd.f32 0.0, %v2040
  %v2042 = vpop.f32.mrb[0].mxu0
  %v2043 = vadd.f32 0.0, %v2042
  %v2044 = vpop.f32.mrb[0].mxu0
  %v2045 = vadd.f32 0.0, %v2044
  %2046 = vmatprep.mubr.bf16.mxu0 %v1058
  %2047 = vmatmul.mubr.bf16.gmra.mrb[0].mxu0 %v1057
  %v2048 = vpop.f32.mrb[0].mxu0
  %v2049 = vadd.f32 0.0, %v2048
  %v2050 = vpop.f32.mrb[0].mxu0
  %v2051 = vadd.f32 0.0, %v2050
  %v2052 = vpop.f32.mrb[0].mxu0
  %v2053 = vadd.f32 0.0, %v2052
  %v2054 = vpop.f32.mrb[0].mxu0
  %v2055 = vadd.f32 0.0, %v2054
  %2056 = vmatprep.mubr.bf16.mxu0 %v1060
  %2057 = vmatmul.mubr.bf16.gmra.mrb[0].mxu0 %v1059
  %v2058 = vpop.f32.mrb[0].mxu0
  %v2059 = vadd.f32 0.0, %v2058
  %v2060 = vpop.f32.mrb[0].mxu0
  %v2061 = vadd.f32 0.0, %v2060
  %v2062 = vpop.f32.mrb[0].mxu0
  %v2063 = vadd.f32 0.0, %v2062
  %v2064 = vpop.f32.mrb[0].mxu0
  %v2065 = vadd.f32 0.0, %v2064
  %2066 = vdwg.mxu0
  %v2067 = vadd.f32 %v1956, %v1486
  %v2068 = vadd.f32 %v1958, %v1488
  %v2069 = vadd.f32 %v2029, %v1529
  %v2070 = vadd.f32 %v2031, %v1531
  %v2071 = vadd.f32 %v1960, %v1490
  %v2072 = vadd.f32 %v1962, %v1492
  %v2073 = vadd.f32 %v2033, %v1533
  %v2074 = vadd.f32 %v2035, %v1535
  %v2075 = vadd.f32 %v1966, %v1486
  %v2076 = vadd.f32 %v1968, %v1488
  %v2077 = vadd.f32 %v2039, %v1529
  %v2078 = vadd.f32 %v2041, %v1531
  %v2079 = vadd.f32 %v1970, %v1490
  %v2080 = vadd.f32 %v1972, %v1492
  %v2081 = vadd.f32 %v2043, %v1533
  %v2082 = vadd.f32 %v2045, %v1535
  %v2083 = vadd.f32 %v1976, %v1486
  %v2084 = vadd.f32 %v1978, %v1488
  %v2085 = vadd.f32 %v2049, %v1529
  %v2086 = vadd.f32 %v2051, %v1531
  %v2087 = vadd.f32 %v1980, %v1490
  %v2088 = vadd.f32 %v1982, %v1492
  %v2089 = vadd.f32 %v2053, %v1533
  %v2090 = vadd.f32 %v2055, %v1535
  %v2091 = vadd.f32 %v1986, %v1486
  %v2092 = vadd.f32 %v1988, %v1488
  %v2093 = vadd.f32 %v2059, %v1529
  %v2094 = vadd.f32 %v2061, %v1531
  %v2095 = vadd.f32 %v1990, %v1490
  %v2096 = vadd.f32 %v1992, %v1492
  %v2097 = vadd.f32 %v2063, %v1533
  %v2098 = vadd.f32 %v2065, %v1535
  %v2099 = vld [vmem:[%s12] sm:$0xf]
  %v2101 = vlaneseq
  %v2102 = vshrl.u32 %v2101, 7
  %v2103 = vsub.s32 0, %v2102
  %v2104 = vrot.slane %v2099, %v2103
  %v2105 = vlaneseq
  %v2106 = vshrl.u32 %v2105, 7
  %v2107 = vsub.s32 1, %v2106
  %v2108 = vrot.slane %v2099, %v2107
  %v2109 = vlaneseq
  %v2110 = vshrl.u32 %v2109, 7
  %v2111 = vsub.s32 2, %v2110
  %v2112 = vrot.slane %v2099, %v2111
  %v2113 = vlaneseq
  %v2114 = vshrl.u32 %v2113, 7
  %v2115 = vsub.s32 3, %v2114
  %v2116 = vrot.slane %v2099, %v2115
  %v2121 = vadd.f32 %v2067, %v2104
  %v2122 = vadd.f32 %v2068, %v2108
  %v2123 = vadd.f32 %v2069, %v2112
  %v2124 = vadd.f32 %v2070, %v2116
  %v2125 = vadd.f32 %v2071, %v2104
  %v2126 = vadd.f32 %v2072, %v2108
  %v2127 = vadd.f32 %v2073, %v2112
  %v2128 = vadd.f32 %v2074, %v2116
  %v2129 = vadd.f32 %v2075, %v2104
  %v2130 = vadd.f32 %v2076, %v2108
  %v2131 = vadd.f32 %v2077, %v2112
  %v2132 = vadd.f32 %v2078, %v2116
  %v2133 = vadd.f32 %v2079, %v2104
  %v2134 = vadd.f32 %v2080, %v2108
  %v2135 = vadd.f32 %v2081, %v2112
  %v2136 = vadd.f32 %v2082, %v2116
  %v2137 = vadd.f32 %v2083, %v2104
  %v2138 = vadd.f32 %v2084, %v2108
  %v2139 = vadd.f32 %v2085, %v2112
  %v2140 = vadd.f32 %v2086, %v2116
  %v2141 = vadd.f32 %v2087, %v2104
  %v2142 = vadd.f32 %v2088, %v2108
  %v2143 = vadd.f32 %v2089, %v2112
  %v2144 = vadd.f32 %v2090, %v2116
  %v2145 = vadd.f32 %v2091, %v2104
  %v2146 = vadd.f32 %v2092, %v2108
  %v2147 = vadd.f32 %v2093, %v2112
  %v2148 = vadd.f32 %v2094, %v2116
  %v2149 = vadd.f32 %v2095, %v2104
  %v2150 = vadd.f32 %v2096, %v2108
  %v2151 = vadd.f32 %v2097, %v2112
  %v2152 = vadd.f32 %v2098, %v2116
  %v2153 = vmax.f32 %v2121, 0.0
  %v2154 = vmax.f32 %v2122, 0.0
  %v2155 = vmax.f32 %v2123, 0.0
  %v2156 = vmax.f32 %v2124, 0.0
  %v2157 = vmax.f32 %v2125, 0.0
  %v2158 = vmax.f32 %v2126, 0.0
  %v2159 = vmax.f32 %v2127, 0.0
  %v2160 = vmax.f32 %v2128, 0.0
  %v2161 = vmax.f32 %v2129, 0.0
  %v2162 = vmax.f32 %v2130, 0.0
  %v2163 = vmax.f32 %v2131, 0.0
  %v2164 = vmax.f32 %v2132, 0.0
  %v2165 = vmax.f32 %v2133, 0.0
  %v2166 = vmax.f32 %v2134, 0.0
  %v2167 = vmax.f32 %v2135, 0.0
  %v2168 = vmax.f32 %v2136, 0.0
  %v2169 = vmax.f32 %v2137, 0.0
  %v2170 = vmax.f32 %v2138, 0.0
  %v2171 = vmax.f32 %v2139, 0.0
  %v2172 = vmax.f32 %v2140, 0.0
  %v2173 = vmax.f32 %v2141, 0.0
  %v2174 = vmax.f32 %v2142, 0.0
  %v2175 = vmax.f32 %v2143, 0.0
  %v2176 = vmax.f32 %v2144, 0.0
  %v2177 = vmax.f32 %v2145, 0.0
  %v2178 = vmax.f32 %v2146, 0.0
  %v2179 = vmax.f32 %v2147, 0.0
  %v2180 = vmax.f32 %v2148, 0.0
  %v2181 = vmax.f32 %v2149, 0.0
  %v2182 = vmax.f32 %v2150, 0.0
  %v2183 = vmax.f32 %v2151, 0.0
  %v2184 = vmax.f32 %v2152, 0.0
  %v2185 = vld [vmem:[%s13] sm:$0xff]
  %v2186 = vld [vmem:[%s13 + $0x8] sm:$0xff]
  %v2187 = vld [vmem:[%s13 + $0x10] sm:$0xff]
  %v2188 = vld [vmem:[%s13 + $0x18] sm:$0xff]
  %v2189 = vld [vmem:[%s13 + $0x20] sm:$0xff]
  %v2190 = vld [vmem:[%s13 + $0x28] sm:$0xff]
  %v2191 = vld [vmem:[%s13 + $0x30] sm:$0xff]
  %v2192 = vld [vmem:[%s13 + $0x38] sm:$0xff]
  %v2193 = vld [vmem:[%s13 + $0x40] sm:$0xff]
  %v2194 = vld [vmem:[%s13 + $0x48] sm:$0xff]
  %v2195 = vld [vmem:[%s13 + $0x50] sm:$0xff]
  %v2196 = vld [vmem:[%s13 + $0x58] sm:$0xff]
  %v2197 = vld [vmem:[%s13 + $0x60] sm:$0xff]
  %v2198 = vld [vmem:[%s13 + $0x68] sm:$0xff]
  %v2199 = vld [vmem:[%s13 + $0x70] sm:$0xff]
  %v2200 = vld [vmem:[%s13 + $0x78] sm:$0xff]
  %v2201 = vld [vmem:[%s13 + $0x80] sm:$0xff]
  %v2202 = vld [vmem:[%s13 + $0x88] sm:$0xff]
  %v2203 = vld [vmem:[%s13 + $0x90] sm:$0xff]
  %v2204 = vld [vmem:[%s13 + $0x98] sm:$0xff]
  %v2205 = vld [vmem:[%s13 + $0xa0] sm:$0xff]
  %v2206 = vld [vmem:[%s13 + $0xa8] sm:$0xff]
  %v2207 = vld [vmem:[%s13 + $0xb0] sm:$0xff]
  %v2208 = vld [vmem:[%s13 + $0xb8] sm:$0xff]
  %v2209 = vld [vmem:[%s13 + $0xc0] sm:$0xff]
  %v2210 = vld [vmem:[%s13 + $0xc8] sm:$0xff]
  %v2211 = vld [vmem:[%s13 + $0xd0] sm:$0xff]
  %v2212 = vld [vmem:[%s13 + $0xd8] sm:$0xff]
  %v2213 = vld [vmem:[%s13 + $0xe0] sm:$0xff]
  %v2214 = vld [vmem:[%s13 + $0xe8] sm:$0xff]
  %v2215 = vld [vmem:[%s13 + $0xf0] sm:$0xff]
  %v2216 = vld [vmem:[%s13 + $0xf8] sm:$0xff]
  %v2217 = vld [vmem:[%s13 + $0x100] sm:$0xff]
  %v2218 = vld [vmem:[%s13 + $0x108] sm:$0xff]
  %v2219 = vld [vmem:[%s13 + $0x110] sm:$0xff]
  %v2220 = vld [vmem:[%s13 + $0x118] sm:$0xff]
  %v2221 = vld [vmem:[%s13 + $0x120] sm:$0xff]
  %v2222 = vld [vmem:[%s13 + $0x128] sm:$0xff]
  %v2223 = vld [vmem:[%s13 + $0x130] sm:$0xff]
  %v2224 = vld [vmem:[%s13 + $0x138] sm:$0xff]
  %v2225 = vld [vmem:[%s13 + $0x140] sm:$0xff]
  %v2226 = vld [vmem:[%s13 + $0x148] sm:$0xff]
  %v2227 = vld [vmem:[%s13 + $0x150] sm:$0xff]
  %v2228 = vld [vmem:[%s13 + $0x158] sm:$0xff]
  %v2229 = vld [vmem:[%s13 + $0x160] sm:$0xff]
  %v2230 = vld [vmem:[%s13 + $0x168] sm:$0xff]
  %v2231 = vld [vmem:[%s13 + $0x170] sm:$0xff]
  %v2232 = vld [vmem:[%s13 + $0x178] sm:$0xff]
  %v2233 = vld [vmem:[%s13 + $0x180] sm:$0xff]
  %v2234 = vld [vmem:[%s13 + $0x188] sm:$0xff]
  %v2235 = vld [vmem:[%s13 + $0x190] sm:$0xff]
  %v2236 = vld [vmem:[%s13 + $0x198] sm:$0xff]
  %v2237 = vld [vmem:[%s13 + $0x1a0] sm:$0xff]
  %v2238 = vld [vmem:[%s13 + $0x1a8] sm:$0xff]
  %v2239 = vld [vmem:[%s13 + $0x1b0] sm:$0xff]
  %v2240 = vld [vmem:[%s13 + $0x1b8] sm:$0xff]
  %v2241 = vld [vmem:[%s13 + $0x1c0] sm:$0xff]
  %v2242 = vld [vmem:[%s13 + $0x1c8] sm:$0xff]
  %v2243 = vld [vmem:[%s13 + $0x1d0] sm:$0xff]
  %v2244 = vld [vmem:[%s13 + $0x1d8] sm:$0xff]
  %v2245 = vld [vmem:[%s13 + $0x1e0] sm:$0xff]
  %v2246 = vld [vmem:[%s13 + $0x1e8] sm:$0xff]
  %v2247 = vld [vmem:[%s13 + $0x1f0] sm:$0xff]
  %v2248 = vld [vmem:[%s13 + $0x1f8] sm:$0xff]
  %v2249 = vld [vmem:[%s13 + $0x200] sm:$0xff]
  %v2250 = vld [vmem:[%s13 + $0x208] sm:$0xff]
  %v2251 = vld [vmem:[%s13 + $0x210] sm:$0xff]
  %v2252 = vld [vmem:[%s13 + $0x218] sm:$0xff]
  %v2253 = vld [vmem:[%s13 + $0x220] sm:$0xff]
  %v2254 = vld [vmem:[%s13 + $0x228] sm:$0xff]
  %v2255 = vld [vmem:[%s13 + $0x230] sm:$0xff]
  %v2256 = vld [vmem:[%s13 + $0x238] sm:$0xff]
  %v2257 = vld [vmem:[%s13 + $0x240] sm:$0xff]
  %v2258 = vld [vmem:[%s13 + $0x248] sm:$0xff]
  %v2259 = vld [vmem:[%s13 + $0x250] sm:$0xff]
  %v2260 = vld [vmem:[%s13 + $0x258] sm:$0xff]
  %v2261 = vld [vmem:[%s13 + $0x260] sm:$0xff]
  %v2262 = vld [vmem:[%s13 + $0x268] sm:$0xff]
  %v2263 = vld [vmem:[%s13 + $0x270] sm:$0xff]
  %v2264 = vld [vmem:[%s13 + $0x278] sm:$0xff]
  %v2265 = vld [vmem:[%s13 + $0x280] sm:$0xff]
  %v2266 = vld [vmem:[%s13 + $0x288] sm:$0xff]
  %v2267 = vld [vmem:[%s13 + $0x290] sm:$0xff]
  %v2268 = vld [vmem:[%s13 + $0x298] sm:$0xff]
  %v2269 = vld [vmem:[%s13 + $0x2a0] sm:$0xff]
  %v2270 = vld [vmem:[%s13 + $0x2a8] sm:$0xff]
  %v2271 = vld [vmem:[%s13 + $0x2b0] sm:$0xff]
  %v2272 = vld [vmem:[%s13 + $0x2b8] sm:$0xff]
  %v2273 = vld [vmem:[%s13 + $0x2c0] sm:$0xff]
  %v2274 = vld [vmem:[%s13 + $0x2c8] sm:$0xff]
  %v2275 = vld [vmem:[%s13 + $0x2d0] sm:$0xff]
  %v2276 = vld [vmem:[%s13 + $0x2d8] sm:$0xff]
  %v2277 = vld [vmem:[%s13 + $0x2e0] sm:$0xff]
  %v2278 = vld [vmem:[%s13 + $0x2e8] sm:$0xff]
  %v2279 = vld [vmem:[%s13 + $0x2f0] sm:$0xff]
  %v2280 = vld [vmem:[%s13 + $0x2f8] sm:$0xff]
  %v2281 = vld [vmem:[%s13 + $0x300] sm:$0xff]
  %v2282 = vld [vmem:[%s13 + $0x308] sm:$0xff]
  %v2283 = vld [vmem:[%s13 + $0x310] sm:$0xff]
  %v2284 = vld [vmem:[%s13 + $0x318] sm:$0xff]
  %v2285 = vld [vmem:[%s13 + $0x320] sm:$0xff]
  %v2286 = vld [vmem:[%s13 + $0x328] sm:$0xff]
  %v2287 = vld [vmem:[%s13 + $0x330] sm:$0xff]
  %v2288 = vld [vmem:[%s13 + $0x338] sm:$0xff]
  %v2289 = vld [vmem:[%s13 + $0x340] sm:$0xff]
  %v2290 = vld [vmem:[%s13 + $0x348] sm:$0xff]
  %v2291 = vld [vmem:[%s13 + $0x350] sm:$0xff]
  %v2292 = vld [vmem:[%s13 + $0x358] sm:$0xff]
  %v2293 = vld [vmem:[%s13 + $0x360] sm:$0xff]
  %v2294 = vld [vmem:[%s13 + $0x368] sm:$0xff]
  %v2295 = vld [vmem:[%s13 + $0x370] sm:$0xff]
  %v2296 = vld [vmem:[%s13 + $0x378] sm:$0xff]
  %v2297 = vld [vmem:[%s13 + $0x380] sm:$0xff]
  %v2298 = vld [vmem:[%s13 + $0x388] sm:$0xff]
  %v2299 = vld [vmem:[%s13 + $0x390] sm:$0xff]
  %v2300 = vld [vmem:[%s13 + $0x398] sm:$0xff]
  %v2301 = vld [vmem:[%s13 + $0x3a0] sm:$0xff]
  %v2302 = vld [vmem:[%s13 + $0x3a8] sm:$0xff]
  %v2303 = vld [vmem:[%s13 + $0x3b0] sm:$0xff]
  %v2304 = vld [vmem:[%s13 + $0x3b8] sm:$0xff]
  %v2305 = vld [vmem:[%s13 + $0x3c0] sm:$0xff]
  %v2306 = vld [vmem:[%s13 + $0x3c8] sm:$0xff]
  %v2307 = vld [vmem:[%s13 + $0x3d0] sm:$0xff]
  %v2308 = vld [vmem:[%s13 + $0x3d8] sm:$0xff]
  %v2309 = vld [vmem:[%s13 + $0x3e0] sm:$0xff]
  %v2310 = vld [vmem:[%s13 + $0x3e8] sm:$0xff]
  %v2311 = vld [vmem:[%s13 + $0x3f0] sm:$0xff]
  %v2312 = vld [vmem:[%s13 + $0x3f8] sm:$0xff]
  %v2313 = vld [vmem:[%s14] sm:$0xf]
  %v2314 = vpack.c.bf16 %v2157, %v2153
  %v2315 = vpack.c.bf16 %v2158, %v2154
  %v2316 = vpack.c.bf16 %v2159, %v2155
  %v2317 = vpack.c.bf16 %v2160, %v2156
  %v2318 = vpack.c.bf16 %v2165, %v2161
  %v2319 = vpack.c.bf16 %v2166, %v2162
  %v2320 = vpack.c.bf16 %v2167, %v2163
  %v2321 = vpack.c.bf16 %v2168, %v2164
  %v2322 = vpack.c.bf16 %v2173, %v2169
  %v2323 = vpack.c.bf16 %v2174, %v2170
  %v2324 = vpack.c.bf16 %v2175, %v2171
  %v2325 = vpack.c.bf16 %v2176, %v2172
  %v2326 = vpack.c.bf16 %v2181, %v2177
  %v2327 = vpack.c.bf16 %v2182, %v2178
  %v2328 = vpack.c.bf16 %v2183, %v2179
  %v2329 = vpack.c.bf16 %v2184, %v2180
  %v2331 = vlaneseq
  %v2332 = vshrl.u32 %v2331, 7
  %v2333 = vsub.s32 0, %v2332
  %v2334 = vrot.slane %v2313, %v2333
  %v2335 = vlaneseq
  %v2336 = vshrl.u32 %v2335, 7
  %v2337 = vsub.s32 1, %v2336
  %v2338 = vrot.slane %v2313, %v2337
  %v2339 = vlaneseq
  %v2340 = vshrl.u32 %v2339, 7
  %v2341 = vsub.s32 2, %v2340
  %v2342 = vrot.slane %v2313, %v2341
  %v2343 = vlaneseq
  %v2344 = vshrl.u32 %v2343, 7
  %v2345 = vsub.s32 3, %v2344
  %v2346 = vrot.slane %v2313, %v2345
  %v2479 = vunpack.c.l.b16 %v2185
  %v2480 = vunpack.c.h.b16 %v2185
  %v2481 = vunpack.c.l.b16 %v2186
  %v2482 = vunpack.c.h.b16 %v2186
  %v2483 = vunpack.c.l.b16 %v2187
  %v2484 = vunpack.c.h.b16 %v2187
  %v2485 = vunpack.c.l.b16 %v2188
  %v2486 = vunpack.c.h.b16 %v2188
  %v2487 = vunpack.c.l.b16 %v2189
  %v2488 = vunpack.c.h.b16 %v2189
  %v2489 = vunpack.c.l.b16 %v2190
  %v2490 = vunpack.c.h.b16 %v2190
  %v2491 = vunpack.c.l.b16 %v2191
  %v2492 = vunpack.c.h.b16 %v2191
  %v2493 = vunpack.c.l.b16 %v2192
  %v2494 = vunpack.c.h.b16 %v2192
  %v2495 = vunpack.c.l.b16 %v2193
  %v2496 = vunpack.c.h.b16 %v2193
  %v2497 = vunpack.c.l.b16 %v2194
  %v2498 = vunpack.c.h.b16 %v2194
  %v2499 = vunpack.c.l.b16 %v2195
  %v2500 = vunpack.c.h.b16 %v2195
  %v2501 = vunpack.c.l.b16 %v2196
  %v2502 = vunpack.c.h.b16 %v2196
  %v2503 = vunpack.c.l.b16 %v2197
  %v2504 = vunpack.c.h.b16 %v2197
  %v2505 = vunpack.c.l.b16 %v2198
  %v2506 = vunpack.c.h.b16 %v2198
  %v2507 = vunpack.c.l.b16 %v2199
  %v2508 = vunpack.c.h.b16 %v2199
  %v2509 = vunpack.c.l.b16 %v2200
  %v2510 = vunpack.c.h.b16 %v2200
  %v2511 = vunpack.c.l.b16 %v2201
  %v2512 = vunpack.c.h.b16 %v2201
  %v2513 = vunpack.c.l.b16 %v2202
  %v2514 = vunpack.c.h.b16 %v2202
  %v2515 = vunpack.c.l.b16 %v2203
  %v2516 = vunpack.c.h.b16 %v2203
  %v2517 = vunpack.c.l.b16 %v2204
  %v2518 = vunpack.c.h.b16 %v2204
  %v2519 = vunpack.c.l.b16 %v2205
  %v2520 = vunpack.c.h.b16 %v2205
  %v2521 = vunpack.c.l.b16 %v2206
  %v2522 = vunpack.c.h.b16 %v2206
  %v2523 = vunpack.c.l.b16 %v2207
  %v2524 = vunpack.c.h.b16 %v2207
  %v2525 = vunpack.c.l.b16 %v2208
  %v2526 = vunpack.c.h.b16 %v2208
  %v2527 = vunpack.c.l.b16 %v2209
  %v2528 = vunpack.c.h.b16 %v2209
  %v2529 = vunpack.c.l.b16 %v2210
  %v2530 = vunpack.c.h.b16 %v2210
  %v2531 = vunpack.c.l.b16 %v2211
  %v2532 = vunpack.c.h.b16 %v2211
  %v2533 = vunpack.c.l.b16 %v2212
  %v2534 = vunpack.c.h.b16 %v2212
  %v2535 = vunpack.c.l.b16 %v2213
  %v2536 = vunpack.c.h.b16 %v2213
  %v2537 = vunpack.c.l.b16 %v2214
  %v2538 = vunpack.c.h.b16 %v2214
  %v2539 = vunpack.c.l.b16 %v2215
  %v2540 = vunpack.c.h.b16 %v2215
  %v2541 = vunpack.c.l.b16 %v2216
  %v2542 = vunpack.c.h.b16 %v2216
  %v2543 = vunpack.c.l.b16 %v2217
  %v2544 = vunpack.c.h.b16 %v2217
  %v2545 = vunpack.c.l.b16 %v2218
  %v2546 = vunpack.c.h.b16 %v2218
  %v2547 = vunpack.c.l.b16 %v2219
  %v2548 = vunpack.c.h.b16 %v2219
  %v2549 = vunpack.c.l.b16 %v2220
  %v2550 = vunpack.c.h.b16 %v2220
  %v2551 = vunpack.c.l.b16 %v2221
  %v2552 = vunpack.c.h.b16 %v2221
  %v2553 = vunpack.c.l.b16 %v2222
  %v2554 = vunpack.c.h.b16 %v2222
  %v2555 = vunpack.c.l.b16 %v2223
  %v2556 = vunpack.c.h.b16 %v2223
  %v2557 = vunpack.c.l.b16 %v2224
  %v2558 = vunpack.c.h.b16 %v2224
  %v2559 = vunpack.c.l.b16 %v2225
  %v2560 = vunpack.c.h.b16 %v2225
  %v2561 = vunpack.c.l.b16 %v2226
  %v2562 = vunpack.c.h.b16 %v2226
  %v2563 = vunpack.c.l.b16 %v2227
  %v2564 = vunpack.c.h.b16 %v2227
  %v2565 = vunpack.c.l.b16 %v2228
  %v2566 = vunpack.c.h.b16 %v2228
  %v2567 = vunpack.c.l.b16 %v2229
  %v2568 = vunpack.c.h.b16 %v2229
  %v2569 = vunpack.c.l.b16 %v2230
  %v2570 = vunpack.c.h.b16 %v2230
  %v2571 = vunpack.c.l.b16 %v2231
  %v2572 = vunpack.c.h.b16 %v2231
  %v2573 = vunpack.c.l.b16 %v2232
  %v2574 = vunpack.c.h.b16 %v2232
  %v2575 = vunpack.c.l.b16 %v2233
  %v2576 = vunpack.c.h.b16 %v2233
  %v2577 = vunpack.c.l.b16 %v2234
  %v2578 = vunpack.c.h.b16 %v2234
  %v2579 = vunpack.c.l.b16 %v2235
  %v2580 = vunpack.c.h.b16 %v2235
  %v2581 = vunpack.c.l.b16 %v2236
  %v2582 = vunpack.c.h.b16 %v2236
  %v2583 = vunpack.c.l.b16 %v2237
  %v2584 = vunpack.c.h.b16 %v2237
  %v2585 = vunpack.c.l.b16 %v2238
  %v2586 = vunpack.c.h.b16 %v2238
  %v2587 = vunpack.c.l.b16 %v2239
  %v2588 = vunpack.c.h.b16 %v2239
  %v2589 = vunpack.c.l.b16 %v2240
  %v2590 = vunpack.c.h.b16 %v2240
  %v2591 = vunpack.c.l.b16 %v2241
  %v2592 = vunpack.c.h.b16 %v2241
  %v2593 = vunpack.c.l.b16 %v2242
  %v2594 = vunpack.c.h.b16 %v2242
  %v2595 = vunpack.c.l.b16 %v2243
  %v2596 = vunpack.c.h.b16 %v2243
  %v2597 = vunpack.c.l.b16 %v2244
  %v2598 = vunpack.c.h.b16 %v2244
  %v2599 = vunpack.c.l.b16 %v2245
  %v2600 = vunpack.c.h.b16 %v2245
  %v2601 = vunpack.c.l.b16 %v2246
  %v2602 = vunpack.c.h.b16 %v2246
  %v2603 = vunpack.c.l.b16 %v2247
  %v2604 = vunpack.c.h.b16 %v2247
  %v2605 = vunpack.c.l.b16 %v2248
  %v2606 = vunpack.c.h.b16 %v2248
  %v2607 = vunpack.c.l.b16 %v2249
  %v2608 = vunpack.c.h.b16 %v2249
  %v2609 = vunpack.c.l.b16 %v2250
  %v2610 = vunpack.c.h.b16 %v2250
  %v2611 = vunpack.c.l.b16 %v2251
  %v2612 = vunpack.c.h.b16 %v2251
  %v2613 = vunpack.c.l.b16 %v2252
  %v2614 = vunpack.c.h.b16 %v2252
  %v2615 = vunpack.c.l.b16 %v2253
  %v2616 = vunpack.c.h.b16 %v2253
  %v2617 = vunpack.c.l.b16 %v2254
  %v2618 = vunpack.c.h.b16 %v2254
  %v2619 = vunpack.c.l.b16 %v2255
  %v2620 = vunpack.c.h.b16 %v2255
  %v2621 = vunpack.c.l.b16 %v2256
  %v2622 = vunpack.c.h.b16 %v2256
  %v2623 = vunpack.c.l.b16 %v2257
  %v2624 = vunpack.c.h.b16 %v2257
  %v2625 = vunpack.c.l.b16 %v2258
  %v2626 = vunpack.c.h.b16 %v2258
  %v2627 = vunpack.c.l.b16 %v2259
  %v2628 = vunpack.c.h.b16 %v2259
  %v2629 = vunpack.c.l.b16 %v2260
  %v2630 = vunpack.c.h.b16 %v2260
  %v2631 = vunpack.c.l.b16 %v2261
  %v2632 = vunpack.c.h.b16 %v2261
  %v2633 = vunpack.c.l.b16 %v2262
  %v2634 = vunpack.c.h.b16 %v2262
  %v2635 = vunpack.c.l.b16 %v2263
  %v2636 = vunpack.c.h.b16 %v2263
  %v2637 = vunpack.c.l.b16 %v2264
  %v2638 = vunpack.c.h.b16 %v2264
  %v2639 = vunpack.c.l.b16 %v2265
  %v2640 = vunpack.c.h.b16 %v2265
  %v2641 = vunpack.c.l.b16 %v2266
  %v2642 = vunpack.c.h.b16 %v2266
  %v2643 = vunpack.c.l.b16 %v2267
  %v2644 = vunpack.c.h.b16 %v2267
  %v2645 = vunpack.c.l.b16 %v2268
  %v2646 = vunpack.c.h.b16 %v2268
  %v2647 = vunpack.c.l.b16 %v2269
  %v2648 = vunpack.c.h.b16 %v2269
  %v2649 = vunpack.c.l.b16 %v2270
  %v2650 = vunpack.c.h.b16 %v2270
  %v2651 = vunpack.c.l.b16 %v2271
  %v2652 = vunpack.c.h.b16 %v2271
  %v2653 = vunpack.c.l.b16 %v2272
  %v2654 = vunpack.c.h.b16 %v2272
  %v2655 = vunpack.c.l.b16 %v2273
  %v2656 = vunpack.c.h.b16 %v2273
  %v2657 = vunpack.c.l.b16 %v2274
  %v2658 = vunpack.c.h.b16 %v2274
  %v2659 = vunpack.c.l.b16 %v2275
  %v2660 = vunpack.c.h.b16 %v2275
  %v2661 = vunpack.c.l.b16 %v2276
  %v2662 = vunpack.c.h.b16 %v2276
  %v2663 = vunpack.c.l.b16 %v2277
  %v2664 = vunpack.c.h.b16 %v2277
  %v2665 = vunpack.c.l.b16 %v2278
  %v2666 = vunpack.c.h.b16 %v2278
  %v2667 = vunpack.c.l.b16 %v2279
  %v2668 = vunpack.c.h.b16 %v2279
  %v2669 = vunpack.c.l.b16 %v2280
  %v2670 = vunpack.c.h.b16 %v2280
  %v2671 = vunpack.c.l.b16 %v2281
  %v2672 = vunpack.c.h.b16 %v2281
  %v2673 = vunpack.c.l.b16 %v2282
  %v2674 = vunpack.c.h.b16 %v2282
  %v2675 = vunpack.c.l.b16 %v2283
  %v2676 = vunpack.c.h.b16 %v2283
  %v2677 = vunpack.c.l.b16 %v2284
  %v2678 = vunpack.c.h.b16 %v2284
  %v2679 = vunpack.c.l.b16 %v2285
  %v2680 = vunpack.c.h.b16 %v2285
  %v2681 = vunpack.c.l.b16 %v2286
  %v2682 = vunpack.c.h.b16 %v2286
  %v2683 = vunpack.c.l.b16 %v2287
  %v2684 = vunpack.c.h.b16 %v2287
  %v2685 = vunpack.c.l.b16 %v2288
  %v2686 = vunpack.c.h.b16 %v2288
  %v2687 = vunpack.c.l.b16 %v2289
  %v2688 = vunpack.c.h.b16 %v2289
  %v2689 = vunpack.c.l.b16 %v2290
  %v2690 = vunpack.c.h.b16 %v2290
  %v2691 = vunpack.c.l.b16 %v2291
  %v2692 = vunpack.c.h.b16 %v2291
  %v2693 = vunpack.c.l.b16 %v2292
  %v2694 = vunpack.c.h.b16 %v2292
  %v2695 = vunpack.c.l.b16 %v2293
  %v2696 = vunpack.c.h.b16 %v2293
  %v2697 = vunpack.c.l.b16 %v2294
  %v2698 = vunpack.c.h.b16 %v2294
  %v2699 = vunpack.c.l.b16 %v2295
  %v2700 = vunpack.c.h.b16 %v2295
  %v2701 = vunpack.c.l.b16 %v2296
  %v2702 = vunpack.c.h.b16 %v2296
  %v2703 = vunpack.c.l.b16 %v2297
  %v2704 = vunpack.c.h.b16 %v2297
  %v2705 = vunpack.c.l.b16 %v2298
  %v2706 = vunpack.c.h.b16 %v2298
  %v2707 = vunpack.c.l.b16 %v2299
  %v2708 = vunpack.c.h.b16 %v2299
  %v2709 = vunpack.c.l.b16 %v2300
  %v2710 = vunpack.c.h.b16 %v2300
  %v2711 = vunpack.c.l.b16 %v2301
  %v2712 = vunpack.c.h.b16 %v2301
  %v2713 = vunpack.c.l.b16 %v2302
  %v2714 = vunpack.c.h.b16 %v2302
  %v2715 = vunpack.c.l.b16 %v2303
  %v2716 = vunpack.c.h.b16 %v2303
  %v2717 = vunpack.c.l.b16 %v2304
  %v2718 = vunpack.c.h.b16 %v2304
  %v2719 = vunpack.c.l.b16 %v2305
  %v2720 = vunpack.c.h.b16 %v2305
  %v2721 = vunpack.c.l.b16 %v2306
  %v2722 = vunpack.c.h.b16 %v2306
  %v2723 = vunpack.c.l.b16 %v2307
  %v2724 = vunpack.c.h.b16 %v2307
  %v2725 = vunpack.c.l.b16 %v2308
  %v2726 = vunpack.c.h.b16 %v2308
  %v2727 = vunpack.c.l.b16 %v2309
  %v2728 = vunpack.c.h.b16 %v2309
  %v2729 = vunpack.c.l.b16 %v2310
  %v2730 = vunpack.c.h.b16 %v2310
  %v2731 = vunpack.c.l.b16 %v2311
  %v2732 = vunpack.c.h.b16 %v2311
  %v2733 = vunpack.c.l.b16 %v2312
  %v2734 = vunpack.c.h.b16 %v2312
  %v2735 = vpack.c.b16 %v2483, %v2479
  %v2736 = vpack.c.b16 %v2484, %v2480
  %v2737 = vpack.c.b16 %v2485, %v2481
  %v2738 = vpack.c.b16 %v2486, %v2482
  %v2739 = vpack.c.b16 %v2491, %v2487
  %v2740 = vpack.c.b16 %v2492, %v2488
  %v2741 = vpack.c.b16 %v2493, %v2489
  %v2742 = vpack.c.b16 %v2494, %v2490
  %v2743 = vpack.c.b16 %v2499, %v2495
  %v2744 = vpack.c.b16 %v2500, %v2496
  %v2745 = vpack.c.b16 %v2501, %v2497
  %v2746 = vpack.c.b16 %v2502, %v2498
  %v2747 = vpack.c.b16 %v2507, %v2503
  %v2748 = vpack.c.b16 %v2508, %v2504
  %v2749 = vpack.c.b16 %v2509, %v2505
  %v2750 = vpack.c.b16 %v2510, %v2506
  %v2751 = vpack.c.b16 %v2515, %v2511
  %v2752 = vpack.c.b16 %v2516, %v2512
  %v2753 = vpack.c.b16 %v2517, %v2513
  %v2754 = vpack.c.b16 %v2518, %v2514
  %v2755 = vpack.c.b16 %v2523, %v2519
  %v2756 = vpack.c.b16 %v2524, %v2520
  %v2757 = vpack.c.b16 %v2525, %v2521
  %v2758 = vpack.c.b16 %v2526, %v2522
  %v2759 = vpack.c.b16 %v2531, %v2527
  %v2760 = vpack.c.b16 %v2532, %v2528
  %v2761 = vpack.c.b16 %v2533, %v2529
  %v2762 = vpack.c.b16 %v2534, %v2530
  %v2763 = vpack.c.b16 %v2539, %v2535
  %v2764 = vpack.c.b16 %v2540, %v2536
  %v2765 = vpack.c.b16 %v2541, %v2537
  %v2766 = vpack.c.b16 %v2542, %v2538
  %v2767 = vpack.c.b16 %v2547, %v2543
  %v2768 = vpack.c.b16 %v2548, %v2544
  %v2769 = vpack.c.b16 %v2549, %v2545
  %v2770 = vpack.c.b16 %v2550, %v2546
  %v2771 = vpack.c.b16 %v2555, %v2551
  %v2772 = vpack.c.b16 %v2556, %v2552
  %v2773 = vpack.c.b16 %v2557, %v2553
  %v2774 = vpack.c.b16 %v2558, %v2554
  %v2775 = vpack.c.b16 %v2563, %v2559
  %v2776 = vpack.c.b16 %v2564, %v2560
  %v2777 = vpack.c.b16 %v2565, %v2561
  %v2778 = vpack.c.b16 %v2566, %v2562
  %v2779 = vpack.c.b16 %v2571, %v2567
  %v2780 = vpack.c.b16 %v2572, %v2568
  %v2781 = vpack.c.b16 %v2573, %v2569
  %v2782 = vpack.c.b16 %v2574, %v2570
  %v2783 = vpack.c.b16 %v2579, %v2575
  %v2784 = vpack.c.b16 %v2580, %v2576
  %v2785 = vpack.c.b16 %v2581, %v2577
  %v2786 = vpack.c.b16 %v2582, %v2578
  %v2787 = vpack.c.b16 %v2587, %v2583
  %v2788 = vpack.c.b16 %v2588, %v2584
  %v2789 = vpack.c.b16 %v2589, %v2585
  %v2790 = vpack.c.b16 %v2590, %v2586
  %v2791 = vpack.c.b16 %v2595, %v2591
  %v2792 = vpack.c.b16 %v2596, %v2592
  %v2793 = vpack.c.b16 %v2597, %v2593
  %v2794 = vpack.c.b16 %v2598, %v2594
  %v2795 = vpack.c.b16 %v2603, %v2599
  %v2796 = vpack.c.b16 %v2604, %v2600
  %v2797 = vpack.c.b16 %v2605, %v2601
  %v2798 = vpack.c.b16 %v2606, %v2602
  %v2799 = vpack.c.b16 %v2611, %v2607
  %v2800 = vpack.c.b16 %v2612, %v2608
  %v2801 = vpack.c.b16 %v2613, %v2609
  %v2802 = vpack.c.b16 %v2614, %v2610
  %v2803 = vpack.c.b16 %v2619, %v2615
  %v2804 = vpack.c.b16 %v2620, %v2616
  %v2805 = vpack.c.b16 %v2621, %v2617
  %v2806 = vpack.c.b16 %v2622, %v2618
  %v2807 = vpack.c.b16 %v2627, %v2623
  %v2808 = vpack.c.b16 %v2628, %v2624
  %v2809 = vpack.c.b16 %v2629, %v2625
  %v2810 = vpack.c.b16 %v2630, %v2626
  %v2811 = vpack.c.b16 %v2635, %v2631
  %v2812 = vpack.c.b16 %v2636, %v2632
  %v2813 = vpack.c.b16 %v2637, %v2633
  %v2814 = vpack.c.b16 %v2638, %v2634
  %v2815 = vpack.c.b16 %v2643, %v2639
  %v2816 = vpack.c.b16 %v2644, %v2640
  %v2817 = vpack.c.b16 %v2645, %v2641
  %v2818 = vpack.c.b16 %v2646, %v2642
  %v2819 = vpack.c.b16 %v2651, %v2647
  %v2820 = vpack.c.b16 %v2652, %v2648
  %v2821 = vpack.c.b16 %v2653, %v2649
  %v2822 = vpack.c.b16 %v2654, %v2650
  %v2823 = vpack.c.b16 %v2659, %v2655
  %v2824 = vpack.c.b16 %v2660, %v2656
  %v2825 = vpack.c.b16 %v2661, %v2657
  %v2826 = vpack.c.b16 %v2662, %v2658
  %v2827 = vpack.c.b16 %v2667, %v2663
  %v2828 = vpack.c.b16 %v2668, %v2664
  %v2829 = vpack.c.b16 %v2669, %v2665
  %v2830 = vpack.c.b16 %v2670, %v2666
  %v2831 = vpack.c.b16 %v2675, %v2671
  %v2832 = vpack.c.b16 %v2676, %v2672
  %v2833 = vpack.c.b16 %v2677, %v2673
  %v2834 = vpack.c.b16 %v2678, %v2674
  %v2835 = vpack.c.b16 %v2683, %v2679
  %v2836 = vpack.c.b16 %v2684, %v2680
  %v2837 = vpack.c.b16 %v2685, %v2681
  %v2838 = vpack.c.b16 %v2686, %v2682
  %v2839 = vpack.c.b16 %v2691, %v2687
  %v2840 = vpack.c.b16 %v2692, %v2688
  %v2841 = vpack.c.b16 %v2693, %v2689
  %v2842 = vpack.c.b16 %v2694, %v2690
  %v2843 = vpack.c.b16 %v2699, %v2695
  %v2844 = vpack.c.b16 %v2700, %v2696
  %v2845 = vpack.c.b16 %v2701, %v2697
  %v2846 = vpack.c.b16 %v2702, %v2698
  %v2847 = vpack.c.b16 %v2707, %v2703
  %v2848 = vpack.c.b16 %v2708, %v2704
  %v2849 = vpack.c.b16 %v2709, %v2705
  %v2850 = vpack.c.b16 %v2710, %v2706
  %v2851 = vpack.c.b16 %v2715, %v2711
  %v2852 = vpack.c.b16 %v2716, %v2712
  %v2853 = vpack.c.b16 %v2717, %v2713
  %v2854 = vpack.c.b16 %v2718, %v2714
  %v2855 = vpack.c.b16 %v2723, %v2719
  %v2856 = vpack.c.b16 %v2724, %v2720
  %v2857 = vpack.c.b16 %v2725, %v2721
  %v2858 = vpack.c.b16 %v2726, %v2722
  %v2859 = vpack.c.b16 %v2731, %v2727
  %v2860 = vpack.c.b16 %v2732, %v2728
  %v2861 = vpack.c.b16 %v2733, %v2729
  %v2862 = vpack.c.b16 %v2734, %v2730
  %2991 = vmatprep.subr.bf16.mxu0 %v2736
  %2992 = vmatpush1.bf16.msra.mxu0 %v2735
  %2993 = vmatprep.subr.bf16.mxu0 %v2740
  %2994 = vmatpush1.bf16.msra.mxu0 %v2739
  %2995 = vmatprep.subr.bf16.mxu0 %v2744
  %2996 = vmatpush1.bf16.msra.mxu0 %v2743
  %2997 = vmatprep.subr.bf16.mxu0 %v2748
  %2998 = vmatpush1.bf16.msra.mxu0 %v2747
  %2999 = vmatprep.subr.bf16.mxu0 %v2752
  %3000 = vmatpush1.bf16.msra.mxu0 %v2751
  %3001 = vmatprep.subr.bf16.mxu0 %v2756
  %3002 = vmatpush1.bf16.msra.mxu0 %v2755
  %3003 = vmatprep.subr.bf16.mxu0 %v2760
  %3004 = vmatpush1.bf16.msra.mxu0 %v2759
  %3005 = vmatprep.subr.bf16.mxu0 %v2764
  %3006 = vmatpush1.bf16.msra.mxu0 %v2763
  %3007 = vmatprep.subr.bf16.mxu0 %v2768
  %3008 = vmatpush1.bf16.msra.mxu0 %v2767
  %3009 = vmatprep.subr.bf16.mxu0 %v2772
  %3010 = vmatpush1.bf16.msra.mxu0 %v2771
  %3011 = vmatprep.subr.bf16.mxu0 %v2776
  %3012 = vmatpush1.bf16.msra.mxu0 %v2775
  %3013 = vmatprep.subr.bf16.mxu0 %v2780
  %3014 = vmatpush1.bf16.msra.mxu0 %v2779
  %3015 = vmatprep.subr.bf16.mxu0 %v2784
  %3016 = vmatpush1.bf16.msra.mxu0 %v2783
  %3017 = vmatprep.subr.bf16.mxu0 %v2788
  %3018 = vmatpush1.bf16.msra.mxu0 %v2787
  %3019 = vmatprep.subr.bf16.mxu0 %v2792
  %3020 = vmatpush1.bf16.msra.mxu0 %v2791
  %3021 = vmatprep.subr.bf16.mxu0 %v2796
  %3022 = vmatpush1.bf16.msra.mxu0 %v2795
  %3023 = vmatprep.mubr.bf16.mxu0 %v2315
  %3024 = vmatmul.mubr.bf16.gmra.mrb[0].mxu0 %v2314
  %v3025 = vpop.f32.mrb[0].mxu0
  %v3026 = vadd.f32 %v2334, %v3025
  %v3027 = vpop.f32.mrb[0].mxu0
  %v3028 = vadd.f32 %v2338, %v3027
  %v3029 = vpop.f32.mrb[0].mxu0
  %v3030 = vadd.f32 %v2334, %v3029
  %v3031 = vpop.f32.mrb[0].mxu0
  %v3032 = vadd.f32 %v2338, %v3031
  %3033 = vmatprep.mubr.bf16.mxu0 %v2319
  %3034 = vmatmul.mubr.bf16.gmra.mrb[0].mxu0 %v2318
  %v3035 = vpop.f32.mrb[0].mxu0
  %v3036 = vadd.f32 %v2334, %v3035
  %v3037 = vpop.f32.mrb[0].mxu0
  %v3038 = vadd.f32 %v2338, %v3037
  %v3039 = vpop.f32.mrb[0].mxu0
  %v3040 = vadd.f32 %v2334, %v3039
  %v3041 = vpop.f32.mrb[0].mxu0
  %v3042 = vadd.f32 %v2338, %v3041
  %3043 = vmatprep.mubr.bf16.mxu0 %v2323
  %3044 = vmatmul.mubr.bf16.gmra.mrb[0].mxu0 %v2322
  %v3045 = vpop.f32.mrb[0].mxu0
  %v3046 = vadd.f32 %v2334, %v3045
  %v3047 = vpop.f32.mrb[0].mxu0
  %v3048 = vadd.f32 %v2338, %v3047
  %v3049 = vpop.f32.mrb[0].mxu0
  %v3050 = vadd.f32 %v2334, %v3049
  %v3051 = vpop.f32.mrb[0].mxu0
  %v3052 = vadd.f32 %v2338, %v3051
  %3053 = vmatprep.mubr.bf16.mxu0 %v2327
  %3054 = vmatmul.mubr.bf16.gmra.mrb[0].mxu0 %v2326
  %v3055 = vpop.f32.mrb[0].mxu0
  %v3056 = vadd.f32 %v2334, %v3055
  %v3057 = vpop.f32.mrb[0].mxu0
  %v3058 = vadd.f32 %v2338, %v3057
  %v3059 = vpop.f32.mrb[0].mxu0
  %v3060 = vadd.f32 %v2334, %v3059
  %v3061 = vpop.f32.mrb[0].mxu0
  %v3062 = vadd.f32 %v2338, %v3061
  %3063 = vdwg.mxu0
  %3064 = vmatprep.subr.bf16.mxu0 %v2800
  %3065 = vmatpush1.bf16.msra.mxu0 %v2799
  %3066 = vmatprep.subr.bf16.mxu0 %v2804
  %3067 = vmatpush1.bf16.msra.mxu0 %v2803
  %3068 = vmatprep.subr.bf16.mxu0 %v2808
  %3069 = vmatpush1.bf16.msra.mxu0 %v2807
  %3070 = vmatprep.subr.bf16.mxu0 %v2812
  %3071 = vmatpush1.bf16.msra.mxu0 %v2811
  %3072 = vmatprep.subr.bf16.mxu0 %v2816
  %3073 = vmatpush1.bf16.msra.mxu0 %v2815
  %3074 = vmatprep.subr.bf16.mxu0 %v2820
  %3075 = vmatpush1.bf16.msra.mxu0 %v2819
  %3076 = vmatprep.subr.bf16.mxu0 %v2824
  %3077 = vmatpush1.bf16.msra.mxu0 %v2823
  %3078 = vmatprep.subr.bf16.mxu0 %v2828
  %3079 = vmatpush1.bf16.msra.mxu0 %v2827
  %3080 = vmatprep.subr.bf16.mxu0 %v2832
  %3081 = vmatpush1.bf16.msra.mxu0 %v2831
  %3082 = vmatprep.subr.bf16.mxu0 %v2836
  %3083 = vmatpush1.bf16.msra.mxu0 %v2835
  %3084 = vmatprep.subr.bf16.mxu0 %v2840
  %3085 = vmatpush1.bf16.msra.mxu0 %v2839
  %3086 = vmatprep.subr.bf16.mxu0 %v2844
  %3087 = vmatpush1.bf16.msra.mxu0 %v2843
  %3088 = vmatprep.subr.bf16.mxu0 %v2848
  %3089 = vmatpush1.bf16.msra.mxu0 %v2847
  %3090 = vmatprep.subr.bf16.mxu0 %v2852
  %3091 = vmatpush1.bf16.msra.mxu0 %v2851
  %3092 = vmatprep.subr.bf16.mxu0 %v2856
  %3093 = vmatpush1.bf16.msra.mxu0 %v2855
  %3094 = vmatprep.subr.bf16.mxu0 %v2860
  %3095 = vmatpush1.bf16.msra.mxu0 %v2859
  %3096 = vmatprep.mubr.bf16.mxu0 %v2317
  %3097 = vmatmul.mubr.bf16.gmra.mrb[0].mxu0 %v2316
  %v3098 = vpop.f32.mrb[0].mxu0
  %v3099 = vadd.f32 %v3026, %v3098
  %v3100 = vpop.f32.mrb[0].mxu0
  %v3101 = vadd.f32 %v3028, %v3100
  %v3102 = vpop.f32.mrb[0].mxu0
  %v3103 = vadd.f32 %v3030, %v3102
  %v3104 = vpop.f32.mrb[0].mxu0
  %v3105 = vadd.f32 %v3032, %v3104
  %3106 = vmatprep.mubr.bf16.mxu0 %v2321
  %3107 = vmatmul.mubr.bf16.gmra.mrb[0].mxu0 %v2320
  %v3108 = vpop.f32.mrb[0].mxu0
  %v3109 = vadd.f32 %v3036, %v3108
  %v3110 = vpop.f32.mrb[0].mxu0
  %v3111 = vadd.f32 %v3038, %v3110
  %v3112 = vpop.f32.mrb[0].mxu0
  %v3113 = vadd.f32 %v3040, %v3112
  %v3114 = vpop.f32.mrb[0].mxu0
  %v3115 = vadd.f32 %v3042, %v3114
  %3116 = vmatprep.mubr.bf16.mxu0 %v2325
  %3117 = vmatmul.mubr.bf16.gmra.mrb[0].mxu0 %v2324
  %v3118 = vpop.f32.mrb[0].mxu0
  %v3119 = vadd.f32 %v3046, %v3118
  %v3120 = vpop.f32.mrb[0].mxu0
  %v3121 = vadd.f32 %v3048, %v3120
  %v3122 = vpop.f32.mrb[0].mxu0
  %v3123 = vadd.f32 %v3050, %v3122
  %v3124 = vpop.f32.mrb[0].mxu0
  %v3125 = vadd.f32 %v3052, %v3124
  %3126 = vmatprep.mubr.bf16.mxu0 %v2329
  %3127 = vmatmul.mubr.bf16.gmra.mrb[0].mxu0 %v2328
  %v3128 = vpop.f32.mrb[0].mxu0
  %v3129 = vadd.f32 %v3056, %v3128
  %v3130 = vpop.f32.mrb[0].mxu0
  %v3131 = vadd.f32 %v3058, %v3130
  %v3132 = vpop.f32.mrb[0].mxu0
  %v3133 = vadd.f32 %v3060, %v3132
  %v3134 = vpop.f32.mrb[0].mxu0
  %v3135 = vadd.f32 %v3062, %v3134
  %3136 = vdwg.mxu0
  %3137 = vmatprep.subr.bf16.mxu0 %v2738
  %3138 = vmatpush1.bf16.msra.mxu0 %v2737
  %3139 = vmatprep.subr.bf16.mxu0 %v2742
  %3140 = vmatpush1.bf16.msra.mxu0 %v2741
  %3141 = vmatprep.subr.bf16.mxu0 %v2746
  %3142 = vmatpush1.bf16.msra.mxu0 %v2745
  %3143 = vmatprep.subr.bf16.mxu0 %v2750
  %3144 = vmatpush1.bf16.msra.mxu0 %v2749
  %3145 = vmatprep.subr.bf16.mxu0 %v2754
  %3146 = vmatpush1.bf16.msra.mxu0 %v2753
  %3147 = vmatprep.subr.bf16.mxu0 %v2758
  %3148 = vmatpush1.bf16.msra.mxu0 %v2757
  %3149 = vmatprep.subr.bf16.mxu0 %v2762
  %3150 = vmatpush1.bf16.msra.mxu0 %v2761
  %3151 = vmatprep.subr.bf16.mxu0 %v2766
  %3152 = vmatpush1.bf16.msra.mxu0 %v2765
  %3153 = vmatprep.subr.bf16.mxu0 %v2770
  %3154 = vmatpush1.bf16.msra.mxu0 %v2769
  %3155 = vmatprep.subr.bf16.mxu0 %v2774
  %3156 = vmatpush1.bf16.msra.mxu0 %v2773
  %3157 = vmatprep.subr.bf16.mxu0 %v2778
  %3158 = vmatpush1.bf16.msra.mxu0 %v2777
  %3159 = vmatprep.subr.bf16.mxu0 %v2782
  %3160 = vmatpush1.bf16.msra.mxu0 %v2781
  %3161 = vmatprep.subr.bf16.mxu0 %v2786
  %3162 = vmatpush1.bf16.msra.mxu0 %v2785
  %3163 = vmatprep.subr.bf16.mxu0 %v2790
  %3164 = vmatpush1.bf16.msra.mxu0 %v2789
  %3165 = vmatprep.subr.bf16.mxu0 %v2794
  %3166 = vmatpush1.bf16.msra.mxu0 %v2793
  %3167 = vmatprep.subr.bf16.mxu0 %v2798
  %3168 = vmatpush1.bf16.msra.mxu0 %v2797
  %3169 = vmatprep.mubr.bf16.mxu0 %v2315
  %3170 = vmatmul.mubr.bf16.gmra.mrb[0].mxu0 %v2314
  %v3171 = vpop.f32.mrb[0].mxu0
  %v3172 = vadd.f32 %v2342, %v3171
  %v3173 = vpop.f32.mrb[0].mxu0
  %v3174 = vadd.f32 %v2346, %v3173
  %v3175 = vpop.f32.mrb[0].mxu0
  %v3176 = vadd.f32 %v2342, %v3175
  %v3177 = vpop.f32.mrb[0].mxu0
  %v3178 = vadd.f32 %v2346, %v3177
  %3179 = vmatprep.mubr.bf16.mxu0 %v2319
  %3180 = vmatmul.mubr.bf16.gmra.mrb[0].mxu0 %v2318
  %v3181 = vpop.f32.mrb[0].mxu0
  %v3182 = vadd.f32 %v2342, %v3181
  %v3183 = vpop.f32.mrb[0].mxu0
  %v3184 = vadd.f32 %v2346, %v3183
  %v3185 = vpop.f32.mrb[0].mxu0
  %v3186 = vadd.f32 %v2342, %v3185
  %v3187 = vpop.f32.mrb[0].mxu0
  %v3188 = vadd.f32 %v2346, %v3187
  %3189 = vmatprep.mubr.bf16.mxu0 %v2323
  %3190 = vmatmul.mubr.bf16.gmra.mrb[0].mxu0 %v2322
  %v3191 = vpop.f32.mrb[0].mxu0
  %v3192 = vadd.f32 %v2342, %v3191
  %v3193 = vpop.f32.mrb[0].mxu0
  %v3194 = vadd.f32 %v2346, %v3193
  %v3195 = vpop.f32.mrb[0].mxu0
  %v3196 = vadd.f32 %v2342, %v3195
  %v3197 = vpop.f32.mrb[0].mxu0
  %v3198 = vadd.f32 %v2346, %v3197
  %3199 = vmatprep.mubr.bf16.mxu0 %v2327
  %3200 = vmatmul.mubr.bf16.gmra.mrb[0].mxu0 %v2326
  %v3201 = vpop.f32.mrb[0].mxu0
  %v3202 = vadd.f32 %v2342, %v3201
  %v3203 = vpop.f32.mrb[0].mxu0
  %v3204 = vadd.f32 %v2346, %v3203
  %v3205 = vpop.f32.mrb[0].mxu0
  %v3206 = vadd.f32 %v2342, %v3205
  %v3207 = vpop.f32.mrb[0].mxu0
  %v3208 = vadd.f32 %v2346, %v3207
  %3209 = vdwg.mxu0
  %3210 = vmatprep.subr.bf16.mxu0 %v2802
  %3211 = vmatpush1.bf16.msra.mxu0 %v2801
  %3212 = vmatprep.subr.bf16.mxu0 %v2806
  %3213 = vmatpush1.bf16.msra.mxu0 %v2805
  %3214 = vmatprep.subr.bf16.mxu0 %v2810
  %3215 = vmatpush1.bf16.msra.mxu0 %v2809
  %3216 = vmatprep.subr.bf16.mxu0 %v2814
  %3217 = vmatpush1.bf16.msra.mxu0 %v2813
  %3218 = vmatprep.subr.bf16.mxu0 %v2818
  %3219 = vmatpush1.bf16.msra.mxu0 %v2817
  %3220 = vmatprep.subr.bf16.mxu0 %v2822
  %3221 = vmatpush1.bf16.msra.mxu0 %v2821
  %3222 = vmatprep.subr.bf16.mxu0 %v2826
  %3223 = vmatpush1.bf16.msra.mxu0 %v2825
  %3224 = vmatprep.subr.bf16.mxu0 %v2830
  %3225 = vmatpush1.bf16.msra.mxu0 %v2829
  %3226 = vmatprep.subr.bf16.mxu0 %v2834
  %3227 = vmatpush1.bf16.msra.mxu0 %v2833
  %3228 = vmatprep.subr.bf16.mxu0 %v2838
  %3229 = vmatpush1.bf16.msra.mxu0 %v2837
  %3230 = vmatprep.subr.bf16.mxu0 %v2842
  %3231 = vmatpush1.bf16.msra.mxu0 %v2841
  %3232 = vmatprep.subr.bf16.mxu0 %v2846
  %3233 = vmatpush1.bf16.msra.mxu0 %v2845
  %3234 = vmatprep.subr.bf16.mxu0 %v2850
  %3235 = vmatpush1.bf16.msra.mxu0 %v2849
  %3236 = vmatprep.subr.bf16.mxu0 %v2854
  %3237 = vmatpush1.bf16.msra.mxu0 %v2853
  %3238 = vmatprep.subr.bf16.mxu0 %v2858
  %3239 = vmatpush1.bf16.msra.mxu0 %v2857
  %3240 = vmatprep.subr.bf16.mxu0 %v2862
  %3241 = vmatpush1.bf16.msra.mxu0 %v2861
  %3242 = vmatprep.mubr.bf16.mxu0 %v2317
  %3243 = vmatmul.mubr.bf16.gmra.mrb[0].mxu0 %v2316
  %v3244 = vpop.f32.mrb[0].mxu0
  %v3245 = vadd.f32 %v3172, %v3244
  %v3246 = vpop.f32.mrb[0].mxu0
  %v3247 = vadd.f32 %v3174, %v3246
  %v3248 = vpop.f32.mrb[0].mxu0
  %v3249 = vadd.f32 %v3176, %v3248
  %v3250 = vpop.f32.mrb[0].mxu0
  %v3251 = vadd.f32 %v3178, %v3250
  %3252 = vmatprep.mubr.bf16.mxu0 %v2321
  %3253 = vmatmul.mubr.bf16.gmra.mrb[0].mxu0 %v2320
  %v3254 = vpop.f32.mrb[0].mxu0
  %v3255 = vadd.f32 %v3182, %v3254
  %v3256 = vpop.f32.mrb[0].mxu0
  %v3257 = vadd.f32 %v3184, %v3256
  %v3258 = vpop.f32.mrb[0].mxu0
  %v3259 = vadd.f32 %v3186, %v3258
  %v3260 = vpop.f32.mrb[0].mxu0
  %v3261 = vadd.f32 %v3188, %v3260
  %3262 = vmatprep.mubr.bf16.mxu0 %v2325
  %3263 = vmatmul.mubr.bf16.gmra.mrb[0].mxu0 %v2324
  %v3264 = vpop.f32.mrb[0].mxu0
  %v3265 = vadd.f32 %v3192, %v3264
  %v3266 = vpop.f32.mrb[0].mxu0
  %v3267 = vadd.f32 %v3194, %v3266
  %v3268 = vpop.f32.mrb[0].mxu0
  %v3269 = vadd.f32 %v3196, %v3268
  %v3270 = vpop.f32.mrb[0].mxu0
  %v3271 = vadd.f32 %v3198, %v3270
  %3272 = vmatprep.mubr.bf16.mxu0 %v2329
  %3273 = vmatmul.mubr.bf16.gmra.mrb[0].mxu0 %v2328
  %v3274 = vpop.f32.mrb[0].mxu0
  %v3275 = vadd.f32 %v3202, %v3274
  %v3276 = vpop.f32.mrb[0].mxu0
  %v3277 = vadd.f32 %v3204, %v3276
  %v3278 = vpop.f32.mrb[0].mxu0
  %v3279 = vadd.f32 %v3206, %v3278
  %v3280 = vpop.f32.mrb[0].mxu0
  %v3281 = vadd.f32 %v3208, %v3280
  %3282 = vdwg.mxu0
  %v3283 = vmax.f32 %v3099, 0.0
  %v3284 = vmax.f32 %v3101, 0.0
  %v3285 = vmax.f32 %v3245, 0.0
  %v3286 = vmax.f32 %v3247, 0.0
  %v3287 = vmax.f32 %v3103, 0.0
  %v3288 = vmax.f32 %v3105, 0.0
  %v3289 = vmax.f32 %v3249, 0.0
  %v3290 = vmax.f32 %v3251, 0.0
  %v3291 = vmax.f32 %v3109, 0.0
  %v3292 = vmax.f32 %v3111, 0.0
  %v3293 = vmax.f32 %v3255, 0.0
  %v3294 = vmax.f32 %v3257, 0.0
  %v3295 = vmax.f32 %v3113, 0.0
  %v3296 = vmax.f32 %v3115, 0.0
  %v3297 = vmax.f32 %v3259, 0.0
  %v3298 = vmax.f32 %v3261, 0.0
  %v3299 = vmax.f32 %v3119, 0.0
  %v3300 = vmax.f32 %v3121, 0.0
  %v3301 = vmax.f32 %v3265, 0.0
  %v3302 = vmax.f32 %v3267, 0.0
  %v3303 = vmax.f32 %v3123, 0.0
  %v3304 = vmax.f32 %v3125, 0.0
  %v3305 = vmax.f32 %v3269, 0.0
  %v3306 = vmax.f32 %v3271, 0.0
  %v3307 = vmax.f32 %v3129, 0.0
  %v3308 = vmax.f32 %v3131, 0.0
  %v3309 = vmax.f32 %v3275, 0.0
  %v3310 = vmax.f32 %v3277, 0.0
  %v3311 = vmax.f32 %v3133, 0.0
  %v3312 = vmax.f32 %v3135, 0.0
  %v3313 = vmax.f32 %v3279, 0.0
  %v3314 = vmax.f32 %v3281, 0.0
  %v3315 = vpack.c.bf16 %v3287, %v3283
  %v3316 = vpack.c.bf16 %v3288, %v3284
  %v3317 = vpack.c.bf16 %v3289, %v3285
  %v3318 = vpack.c.bf16 %v3290, %v3286
  %v3319 = vpack.c.bf16 %v3295, %v3291
  %v3320 = vpack.c.bf16 %v3296, %v3292
  %v3321 = vpack.c.bf16 %v3297, %v3293
  %v3322 = vpack.c.bf16 %v3298, %v3294
  %v3323 = vpack.c.bf16 %v3303, %v3299
  %v3324 = vpack.c.bf16 %v3304, %v3300
  %v3325 = vpack.c.bf16 %v3305, %v3301
  %v3326 = vpack.c.bf16 %v3306, %v3302
  %v3327 = vpack.c.bf16 %v3311, %v3307
  %v3328 = vpack.c.bf16 %v3312, %v3308
  %v3329 = vpack.c.bf16 %v3313, %v3309
  %v3330 = vpack.c.bf16 %v3314, %v3310
  %v3331 = vmax.bf16 %v3315, %v3319
  %v3332 = vmax.bf16 %v3316, %v3320
  %v3333 = vmax.bf16 %v3317, %v3321
  %v3334 = vmax.bf16 %v3318, %v3322
  %v3335 = vmax.bf16 %v3331, %v3323
  %v3336 = vmax.bf16 %v3332, %v3324
  %v3337 = vmax.bf16 %v3333, %v3325
  %v3338 = vmax.bf16 %v3334, %v3326
  %v3339 = vmax.bf16 %v3335, %v3327
  %v3340 = vmax.bf16 %v3336, %v3328
  %v3341 = vmax.bf16 %v3337, %v3329
  %v3342 = vmax.bf16 %v3338, %v3330
  %v3343 = vld [vmem:[%s2] sm:$0xf]
  %v3344 = vld [vmem:[%s2 + $0x4] sm:$0xf]
  %v3345 = vld [vmem:[%s15] sm:$0xff]
  %v3346 = vld [vmem:[%s15 + $0x8] sm:$0xff]
  %v3347 = vld [vmem:[%s15 + $0x10] sm:$0xff]
  %v3348 = vld [vmem:[%s15 + $0x18] sm:$0xff]
  %v3349 = vld [vmem:[%s15 + $0x20] sm:$0xff]
  %v3350 = vld [vmem:[%s15 + $0x28] sm:$0xff]
  %v3351 = vld [vmem:[%s15 + $0x30] sm:$0xff]
  %v3352 = vld [vmem:[%s15 + $0x38] sm:$0xff]
  %v3353 = vld [vmem:[%s15 + $0x40] sm:$0xff]
  %v3354 = vld [vmem:[%s15 + $0x48] sm:$0xff]
  %v3355 = vld [vmem:[%s15 + $0x50] sm:$0xff]
  %v3356 = vld [vmem:[%s15 + $0x58] sm:$0xff]
  %v3357 = vld [vmem:[%s15 + $0x60] sm:$0xff]
  %v3358 = vld [vmem:[%s15 + $0x68] sm:$0xff]
  %v3359 = vld [vmem:[%s15 + $0x70] sm:$0xff]
  %v3360 = vld [vmem:[%s15 + $0x78] sm:$0xff]
  %v3361 = vld [vmem:[%s15 + $0x80] sm:$0xff]
  %v3362 = vld [vmem:[%s15 + $0x88] sm:$0xff]
  %v3363 = vld [vmem:[%s15 + $0x90] sm:$0xff]
  %v3364 = vld [vmem:[%s15 + $0x98] sm:$0xff]
  %v3365 = vld [vmem:[%s15 + $0xa0] sm:$0xff]
  %v3366 = vld [vmem:[%s15 + $0xa8] sm:$0xff]
  %v3367 = vld [vmem:[%s15 + $0xb0] sm:$0xff]
  %v3368 = vld [vmem:[%s15 + $0xb8] sm:$0xff]
  %v3369 = vld [vmem:[%s15 + $0xc0] sm:$0xff]
  %v3370 = vld [vmem:[%s15 + $0xc8] sm:$0xff]
  %v3371 = vld [vmem:[%s15 + $0xd0] sm:$0xff]
  %v3372 = vld [vmem:[%s15 + $0xd8] sm:$0xff]
  %v3373 = vld [vmem:[%s15 + $0xe0] sm:$0xff]
  %v3374 = vld [vmem:[%s15 + $0xe8] sm:$0xff]
  %v3375 = vld [vmem:[%s15 + $0xf0] sm:$0xff]
  %v3376 = vld [vmem:[%s15 + $0xf8] sm:$0xff]
  %v3377 = vld [vmem:[%s16] sm:$0xff]
  %v3378 = vld [vmem:[%s16 + $0x8] sm:$0xff]
  %v3379 = vld [vmem:[%s16 + $0x10] sm:$0xff]
  %v3380 = vld [vmem:[%s16 + $0x18] sm:$0xff]
  %v3381 = vld [vmem:[%s16 + $0x20] sm:$0xff]
  %v3382 = vld [vmem:[%s16 + $0x28] sm:$0xff]
  %v3383 = vld [vmem:[%s16 + $0x30] sm:$0xff]
  %v3384 = vld [vmem:[%s16 + $0x38] sm:$0xff]
  %v3385 = vld [vmem:[%s16 + $0x40] sm:$0xff]
  %v3386 = vld [vmem:[%s16 + $0x48] sm:$0xff]
  %v3387 = vld [vmem:[%s16 + $0x50] sm:$0xff]
  %v3388 = vld [vmem:[%s16 + $0x58] sm:$0xff]
  %v3389 = vld [vmem:[%s16 + $0x60] sm:$0xff]
  %v3390 = vld [vmem:[%s16 + $0x68] sm:$0xff]
  %v3391 = vld [vmem:[%s16 + $0x70] sm:$0xff]
  %v3392 = vld [vmem:[%s16 + $0x78] sm:$0xff]
  %v3393 = vld [vmem:[%s16 + $0x80] sm:$0xff]
  %v3394 = vld [vmem:[%s16 + $0x88] sm:$0xff]
  %v3395 = vld [vmem:[%s16 + $0x90] sm:$0xff]
  %v3396 = vld [vmem:[%s16 + $0x98] sm:$0xff]
  %v3397 = vld [vmem:[%s16 + $0xa0] sm:$0xff]
  %v3398 = vld [vmem:[%s16 + $0xa8] sm:$0xff]
  %v3399 = vld [vmem:[%s16 + $0xb0] sm:$0xff]
  %v3400 = vld [vmem:[%s16 + $0xb8] sm:$0xff]
  %v3401 = vld [vmem:[%s16 + $0xc0] sm:$0xff]
  %v3402 = vld [vmem:[%s16 + $0xc8] sm:$0xff]
  %v3403 = vld [vmem:[%s16 + $0xd0] sm:$0xff]
  %v3404 = vld [vmem:[%s16 + $0xd8] sm:$0xff]
  %v3405 = vld [vmem:[%s16 + $0xe0] sm:$0xff]
  %v3406 = vld [vmem:[%s16 + $0xe8] sm:$0xff]
  %v3407 = vld [vmem:[%s16 + $0xf0] sm:$0xff]
  %v3408 = vld [vmem:[%s16 + $0xf8] sm:$0xff]
  %v3409 = vld [vmem:[%s16 + $0x100] sm:$0xff]
  %v3410 = vld [vmem:[%s16 + $0x108] sm:$0xff]
  %v3411 = vld [vmem:[%s16 + $0x110] sm:$0xff]
  %v3412 = vld [vmem:[%s16 + $0x118] sm:$0xff]
  %v3413 = vld [vmem:[%s16 + $0x120] sm:$0xff]
  %v3414 = vld [vmem:[%s16 + $0x128] sm:$0xff]
  %v3415 = vld [vmem:[%s16 + $0x130] sm:$0xff]
  %v3416 = vld [vmem:[%s16 + $0x138] sm:$0xff]
  %v3417 = vld [vmem:[%s16 + $0x140] sm:$0xff]
  %v3418 = vld [vmem:[%s16 + $0x148] sm:$0xff]
  %v3419 = vld [vmem:[%s16 + $0x150] sm:$0xff]
  %v3420 = vld [vmem:[%s16 + $0x158] sm:$0xff]
  %v3421 = vld [vmem:[%s16 + $0x160] sm:$0xff]
  %v3422 = vld [vmem:[%s16 + $0x168] sm:$0xff]
  %v3423 = vld [vmem:[%s16 + $0x170] sm:$0xff]
  %v3424 = vld [vmem:[%s16 + $0x178] sm:$0xff]
  %v3425 = vld [vmem:[%s16 + $0x180] sm:$0xff]
  %v3426 = vld [vmem:[%s16 + $0x188] sm:$0xff]
  %v3427 = vld [vmem:[%s16 + $0x190] sm:$0xff]
  %v3428 = vld [vmem:[%s16 + $0x198] sm:$0xff]
  %v3429 = vld [vmem:[%s16 + $0x1a0] sm:$0xff]
  %v3430 = vld [vmem:[%s16 + $0x1a8] sm:$0xff]
  %v3431 = vld [vmem:[%s16 + $0x1b0] sm:$0xff]
  %v3432 = vld [vmem:[%s16 + $0x1b8] sm:$0xff]
  %v3433 = vld [vmem:[%s16 + $0x1c0] sm:$0xff]
  %v3434 = vld [vmem:[%s16 + $0x1c8] sm:$0xff]
  %v3435 = vld [vmem:[%s16 + $0x1d0] sm:$0xff]
  %v3436 = vld [vmem:[%s16 + $0x1d8] sm:$0xff]
  %v3437 = vld [vmem:[%s16 + $0x1e0] sm:$0xff]
  %v3438 = vld [vmem:[%s16 + $0x1e8] sm:$0xff]
  %v3439 = vld [vmem:[%s16 + $0x1f0] sm:$0xff]
  %v3440 = vld [vmem:[%s16 + $0x1f8] sm:$0xff]
  %v3441 = vld [vmem:[%s16 + $0x200] sm:$0xff]
  %v3442 = vld [vmem:[%s16 + $0x208] sm:$0xff]
  %v3443 = vld [vmem:[%s16 + $0x210] sm:$0xff]
  %v3444 = vld [vmem:[%s16 + $0x218] sm:$0xff]
  %v3445 = vld [vmem:[%s16 + $0x220] sm:$0xff]
  %v3446 = vld [vmem:[%s16 + $0x228] sm:$0xff]
  %v3447 = vld [vmem:[%s16 + $0x230] sm:$0xff]
  %v3448 = vld [vmem:[%s16 + $0x238] sm:$0xff]
  %v3449 = vld [vmem:[%s16 + $0x240] sm:$0xff]
  %v3450 = vld [vmem:[%s16 + $0x248] sm:$0xff]
  %v3451 = vld [vmem:[%s16 + $0x250] sm:$0xff]
  %v3452 = vld [vmem:[%s16 + $0x258] sm:$0xff]
  %v3453 = vld [vmem:[%s16 + $0x260] sm:$0xff]
  %v3454 = vld [vmem:[%s16 + $0x268] sm:$0xff]
  %v3455 = vld [vmem:[%s16 + $0x270] sm:$0xff]
  %v3456 = vld [vmem:[%s16 + $0x278] sm:$0xff]
  %v3457 = vld [vmem:[%s16 + $0x280] sm:$0xff]
  %v3458 = vld [vmem:[%s16 + $0x288] sm:$0xff]
  %v3459 = vld [vmem:[%s16 + $0x290] sm:$0xff]
  %v3460 = vld [vmem:[%s16 + $0x298] sm:$0xff]
  %v3461 = vld [vmem:[%s16 + $0x2a0] sm:$0xff]
  %v3462 = vld [vmem:[%s16 + $0x2a8] sm:$0xff]
  %v3463 = vld [vmem:[%s16 + $0x2b0] sm:$0xff]
  %v3464 = vld [vmem:[%s16 + $0x2b8] sm:$0xff]
  %v3465 = vld [vmem:[%s16 + $0x2c0] sm:$0xff]
  %v3466 = vld [vmem:[%s16 + $0x2c8] sm:$0xff]
  %v3467 = vld [vmem:[%s16 + $0x2d0] sm:$0xff]
  %v3468 = vld [vmem:[%s16 + $0x2d8] sm:$0xff]
  %v3469 = vld [vmem:[%s16 + $0x2e0] sm:$0xff]
  %v3470 = vld [vmem:[%s16 + $0x2e8] sm:$0xff]
  %v3471 = vld [vmem:[%s16 + $0x2f0] sm:$0xff]
  %v3472 = vld [vmem:[%s16 + $0x2f8] sm:$0xff]
  %v3473 = vld [vmem:[%s16 + $0x300] sm:$0xff]
  %v3474 = vld [vmem:[%s16 + $0x308] sm:$0xff]
  %v3475 = vld [vmem:[%s16 + $0x310] sm:$0xff]
  %v3476 = vld [vmem:[%s16 + $0x318] sm:$0xff]
  %v3477 = vld [vmem:[%s16 + $0x320] sm:$0xff]
  %v3478 = vld [vmem:[%s16 + $0x328] sm:$0xff]
  %v3479 = vld [vmem:[%s16 + $0x330] sm:$0xff]
  %v3480 = vld [vmem:[%s16 + $0x338] sm:$0xff]
  %v3481 = vld [vmem:[%s16 + $0x340] sm:$0xff]
  %v3482 = vld [vmem:[%s16 + $0x348] sm:$0xff]
  %v3483 = vld [vmem:[%s16 + $0x350] sm:$0xff]
  %v3484 = vld [vmem:[%s16 + $0x358] sm:$0xff]
  %v3485 = vld [vmem:[%s16 + $0x360] sm:$0xff]
  %v3486 = vld [vmem:[%s16 + $0x368] sm:$0xff]
  %v3487 = vld [vmem:[%s16 + $0x370] sm:$0xff]
  %v3488 = vld [vmem:[%s16 + $0x378] sm:$0xff]
  %v3489 = vld [vmem:[%s16 + $0x380] sm:$0xff]
  %v3490 = vld [vmem:[%s16 + $0x388] sm:$0xff]
  %v3491 = vld [vmem:[%s16 + $0x390] sm:$0xff]
  %v3492 = vld [vmem:[%s16 + $0x398] sm:$0xff]
  %v3493 = vld [vmem:[%s16 + $0x3a0] sm:$0xff]
  %v3494 = vld [vmem:[%s16 + $0x3a8] sm:$0xff]
  %v3495 = vld [vmem:[%s16 + $0x3b0] sm:$0xff]
  %v3496 = vld [vmem:[%s16 + $0x3b8] sm:$0xff]
  %v3497 = vld [vmem:[%s16 + $0x3c0] sm:$0xff]
  %v3498 = vld [vmem:[%s16 + $0x3c8] sm:$0xff]
  %v3499 = vld [vmem:[%s16 + $0x3d0] sm:$0xff]
  %v3500 = vld [vmem:[%s16 + $0x3d8] sm:$0xff]
  %v3501 = vld [vmem:[%s16 + $0x3e0] sm:$0xff]
  %v3502 = vld [vmem:[%s16 + $0x3e8] sm:$0xff]
  %v3503 = vld [vmem:[%s16 + $0x3f0] sm:$0xff]
  %v3504 = vld [vmem:[%s16 + $0x3f8] sm:$0xff]
  %v3633 = vunpack.c.l.b16 %v3377
  %v3634 = vunpack.c.h.b16 %v3377
  %v3635 = vunpack.c.l.b16 %v3378
  %v3636 = vunpack.c.h.b16 %v3378
  %v3637 = vunpack.c.l.b16 %v3379
  %v3638 = vunpack.c.h.b16 %v3379
  %v3639 = vunpack.c.l.b16 %v3380
  %v3640 = vunpack.c.h.b16 %v3380
  %v3641 = vunpack.c.l.b16 %v3381
  %v3642 = vunpack.c.h.b16 %v3381
  %v3643 = vunpack.c.l.b16 %v3382
  %v3644 = vunpack.c.h.b16 %v3382
  %v3645 = vunpack.c.l.b16 %v3383
  %v3646 = vunpack.c.h.b16 %v3383
  %v3647 = vunpack.c.l.b16 %v3384
  %v3648 = vunpack.c.h.b16 %v3384
  %v3649 = vunpack.c.l.b16 %v3385
  %v3650 = vunpack.c.h.b16 %v3385
  %v3651 = vunpack.c.l.b16 %v3386
  %v3652 = vunpack.c.h.b16 %v3386
  %v3653 = vunpack.c.l.b16 %v3387
  %v3654 = vunpack.c.h.b16 %v3387
  %v3655 = vunpack.c.l.b16 %v3388
  %v3656 = vunpack.c.h.b16 %v3388
  %v3657 = vunpack.c.l.b16 %v3389
  %v3658 = vunpack.c.h.b16 %v3389
  %v3659 = vunpack.c.l.b16 %v3390
  %v3660 = vunpack.c.h.b16 %v3390
  %v3661 = vunpack.c.l.b16 %v3391
  %v3662 = vunpack.c.h.b16 %v3391
  %v3663 = vunpack.c.l.b16 %v3392
  %v3664 = vunpack.c.h.b16 %v3392
  %v3665 = vunpack.c.l.b16 %v3393
  %v3666 = vunpack.c.h.b16 %v3393
  %v3667 = vunpack.c.l.b16 %v3394
  %v3668 = vunpack.c.h.b16 %v3394
  %v3669 = vunpack.c.l.b16 %v3395
  %v3670 = vunpack.c.h.b16 %v3395
  %v3671 = vunpack.c.l.b16 %v3396
  %v3672 = vunpack.c.h.b16 %v3396
  %v3673 = vunpack.c.l.b16 %v3397
  %v3674 = vunpack.c.h.b16 %v3397
  %v3675 = vunpack.c.l.b16 %v3398
  %v3676 = vunpack.c.h.b16 %v3398
  %v3677 = vunpack.c.l.b16 %v3399
  %v3678 = vunpack.c.h.b16 %v3399
  %v3679 = vunpack.c.l.b16 %v3400
  %v3680 = vunpack.c.h.b16 %v3400
  %v3681 = vunpack.c.l.b16 %v3401
  %v3682 = vunpack.c.h.b16 %v3401
  %v3683 = vunpack.c.l.b16 %v3402
  %v3684 = vunpack.c.h.b16 %v3402
  %v3685 = vunpack.c.l.b16 %v3403
  %v3686 = vunpack.c.h.b16 %v3403
  %v3687 = vunpack.c.l.b16 %v3404
  %v3688 = vunpack.c.h.b16 %v3404
  %v3689 = vunpack.c.l.b16 %v3405
  %v3690 = vunpack.c.h.b16 %v3405
  %v3691 = vunpack.c.l.b16 %v3406
  %v3692 = vunpack.c.h.b16 %v3406
  %v3693 = vunpack.c.l.b16 %v3407
  %v3694 = vunpack.c.h.b16 %v3407
  %v3695 = vunpack.c.l.b16 %v3408
  %v3696 = vunpack.c.h.b16 %v3408
  %v3697 = vunpack.c.l.b16 %v3409
  %v3698 = vunpack.c.h.b16 %v3409
  %v3699 = vunpack.c.l.b16 %v3410
  %v3700 = vunpack.c.h.b16 %v3410
  %v3701 = vunpack.c.l.b16 %v3411
  %v3702 = vunpack.c.h.b16 %v3411
  %v3703 = vunpack.c.l.b16 %v3412
  %v3704 = vunpack.c.h.b16 %v3412
  %v3705 = vunpack.c.l.b16 %v3413
  %v3706 = vunpack.c.h.b16 %v3413
  %v3707 = vunpack.c.l.b16 %v3414
  %v3708 = vunpack.c.h.b16 %v3414
  %v3709 = vunpack.c.l.b16 %v3415
  %v3710 = vunpack.c.h.b16 %v3415
  %v3711 = vunpack.c.l.b16 %v3416
  %v3712 = vunpack.c.h.b16 %v3416
  %v3713 = vunpack.c.l.b16 %v3417
  %v3714 = vunpack.c.h.b16 %v3417
  %v3715 = vunpack.c.l.b16 %v3418
  %v3716 = vunpack.c.h.b16 %v3418
  %v3717 = vunpack.c.l.b16 %v3419
  %v3718 = vunpack.c.h.b16 %v3419
  %v3719 = vunpack.c.l.b16 %v3420
  %v3720 = vunpack.c.h.b16 %v3420
  %v3721 = vunpack.c.l.b16 %v3421
  %v3722 = vunpack.c.h.b16 %v3421
  %v3723 = vunpack.c.l.b16 %v3422
  %v3724 = vunpack.c.h.b16 %v3422
  %v3725 = vunpack.c.l.b16 %v3423
  %v3726 = vunpack.c.h.b16 %v3423
  %v3727 = vunpack.c.l.b16 %v3424
  %v3728 = vunpack.c.h.b16 %v3424
  %v3729 = vunpack.c.l.b16 %v3425
  %v3730 = vunpack.c.h.b16 %v3425
  %v3731 = vunpack.c.l.b16 %v3426
  %v3732 = vunpack.c.h.b16 %v3426
  %v3733 = vunpack.c.l.b16 %v3427
  %v3734 = vunpack.c.h.b16 %v3427
  %v3735 = vunpack.c.l.b16 %v3428
  %v3736 = vunpack.c.h.b16 %v3428
  %v3737 = vunpack.c.l.b16 %v3429
  %v3738 = vunpack.c.h.b16 %v3429
  %v3739 = vunpack.c.l.b16 %v3430
  %v3740 = vunpack.c.h.b16 %v3430
  %v3741 = vunpack.c.l.b16 %v3431
  %v3742 = vunpack.c.h.b16 %v3431
  %v3743 = vunpack.c.l.b16 %v3432
  %v3744 = vunpack.c.h.b16 %v3432
  %v3745 = vunpack.c.l.b16 %v3433
  %v3746 = vunpack.c.h.b16 %v3433
  %v3747 = vunpack.c.l.b16 %v3434
  %v3748 = vunpack.c.h.b16 %v3434
  %v3749 = vunpack.c.l.b16 %v3435
  %v3750 = vunpack.c.h.b16 %v3435
  %v3751 = vunpack.c.l.b16 %v3436
  %v3752 = vunpack.c.h.b16 %v3436
  %v3753 = vunpack.c.l.b16 %v3437
  %v3754 = vunpack.c.h.b16 %v3437
  %v3755 = vunpack.c.l.b16 %v3438
  %v3756 = vunpack.c.h.b16 %v3438
  %v3757 = vunpack.c.l.b16 %v3439
  %v3758 = vunpack.c.h.b16 %v3439
  %v3759 = vunpack.c.l.b16 %v3440
  %v3760 = vunpack.c.h.b16 %v3440
  %v3761 = vunpack.c.l.b16 %v3441
  %v3762 = vunpack.c.h.b16 %v3441
  %v3763 = vunpack.c.l.b16 %v3442
  %v3764 = vunpack.c.h.b16 %v3442
  %v3765 = vunpack.c.l.b16 %v3443
  %v3766 = vunpack.c.h.b16 %v3443
  %v3767 = vunpack.c.l.b16 %v3444
  %v3768 = vunpack.c.h.b16 %v3444
  %v3769 = vunpack.c.l.b16 %v3445
  %v3770 = vunpack.c.h.b16 %v3445
  %v3771 = vunpack.c.l.b16 %v3446
  %v3772 = vunpack.c.h.b16 %v3446
  %v3773 = vunpack.c.l.b16 %v3447
  %v3774 = vunpack.c.h.b16 %v3447
  %v3775 = vunpack.c.l.b16 %v3448
  %v3776 = vunpack.c.h.b16 %v3448
  %v3777 = vunpack.c.l.b16 %v3449
  %v3778 = vunpack.c.h.b16 %v3449
  %v3779 = vunpack.c.l.b16 %v3450
  %v3780 = vunpack.c.h.b16 %v3450
  %v3781 = vunpack.c.l.b16 %v3451
  %v3782 = vunpack.c.h.b16 %v3451
  %v3783 = vunpack.c.l.b16 %v3452
  %v3784 = vunpack.c.h.b16 %v3452
  %v3785 = vunpack.c.l.b16 %v3453
  %v3786 = vunpack.c.h.b16 %v3453
  %v3787 = vunpack.c.l.b16 %v3454
  %v3788 = vunpack.c.h.b16 %v3454
  %v3789 = vunpack.c.l.b16 %v3455
  %v3790 = vunpack.c.h.b16 %v3455
  %v3791 = vunpack.c.l.b16 %v3456
  %v3792 = vunpack.c.h.b16 %v3456
  %v3793 = vunpack.c.l.b16 %v3457
  %v3794 = vunpack.c.h.b16 %v3457
  %v3795 = vunpack.c.l.b16 %v3458
  %v3796 = vunpack.c.h.b16 %v3458
  %v3797 = vunpack.c.l.b16 %v3459
  %v3798 = vunpack.c.h.b16 %v3459
  %v3799 = vunpack.c.l.b16 %v3460
  %v3800 = vunpack.c.h.b16 %v3460
  %v3801 = vunpack.c.l.b16 %v3461
  %v3802 = vunpack.c.h.b16 %v3461
  %v3803 = vunpack.c.l.b16 %v3462
  %v3804 = vunpack.c.h.b16 %v3462
  %v3805 = vunpack.c.l.b16 %v3463
  %v3806 = vunpack.c.h.b16 %v3463
  %v3807 = vunpack.c.l.b16 %v3464
  %v3808 = vunpack.c.h.b16 %v3464
  %v3809 = vunpack.c.l.b16 %v3465
  %v3810 = vunpack.c.h.b16 %v3465
  %v3811 = vunpack.c.l.b16 %v3466
  %v3812 = vunpack.c.h.b16 %v3466
  %v3813 = vunpack.c.l.b16 %v3467
  %v3814 = vunpack.c.h.b16 %v3467
  %v3815 = vunpack.c.l.b16 %v3468
  %v3816 = vunpack.c.h.b16 %v3468
  %v3817 = vunpack.c.l.b16 %v3469
  %v3818 = vunpack.c.h.b16 %v3469
  %v3819 = vunpack.c.l.b16 %v3470
  %v3820 = vunpack.c.h.b16 %v3470
  %v3821 = vunpack.c.l.b16 %v3471
  %v3822 = vunpack.c.h.b16 %v3471
  %v3823 = vunpack.c.l.b16 %v3472
  %v3824 = vunpack.c.h.b16 %v3472
  %v3825 = vunpack.c.l.b16 %v3473
  %v3826 = vunpack.c.h.b16 %v3473
  %v3827 = vunpack.c.l.b16 %v3474
  %v3828 = vunpack.c.h.b16 %v3474
  %v3829 = vunpack.c.l.b16 %v3475
  %v3830 = vunpack.c.h.b16 %v3475
  %v3831 = vunpack.c.l.b16 %v3476
  %v3832 = vunpack.c.h.b16 %v3476
  %v3833 = vunpack.c.l.b16 %v3477
  %v3834 = vunpack.c.h.b16 %v3477
  %v3835 = vunpack.c.l.b16 %v3478
  %v3836 = vunpack.c.h.b16 %v3478
  %v3837 = vunpack.c.l.b16 %v3479
  %v3838 = vunpack.c.h.b16 %v3479
  %v3839 = vunpack.c.l.b16 %v3480
  %v3840 = vunpack.c.h.b16 %v3480
  %v3841 = vunpack.c.l.b16 %v3481
  %v3842 = vunpack.c.h.b16 %v3481
  %v3843 = vunpack.c.l.b16 %v3482
  %v3844 = vunpack.c.h.b16 %v3482
  %v3845 = vunpack.c.l.b16 %v3483
  %v3846 = vunpack.c.h.b16 %v3483
  %v3847 = vunpack.c.l.b16 %v3484
  %v3848 = vunpack.c.h.b16 %v3484
  %v3849 = vunpack.c.l.b16 %v3485
  %v3850 = vunpack.c.h.b16 %v3485
  %v3851 = vunpack.c.l.b16 %v3486
  %v3852 = vunpack.c.h.b16 %v3486
  %v3853 = vunpack.c.l.b16 %v3487
  %v3854 = vunpack.c.h.b16 %v3487
  %v3855 = vunpack.c.l.b16 %v3488
  %v3856 = vunpack.c.h.b16 %v3488
  %v3857 = vunpack.c.l.b16 %v3489
  %v3858 = vunpack.c.h.b16 %v3489
  %v3859 = vunpack.c.l.b16 %v3490
  %v3860 = vunpack.c.h.b16 %v3490
  %v3861 = vunpack.c.l.b16 %v3491
  %v3862 = vunpack.c.h.b16 %v3491
  %v3863 = vunpack.c.l.b16 %v3492
  %v3864 = vunpack.c.h.b16 %v3492
  %v3865 = vunpack.c.l.b16 %v3493
  %v3866 = vunpack.c.h.b16 %v3493
  %v3867 = vunpack.c.l.b16 %v3494
  %v3868 = vunpack.c.h.b16 %v3494
  %v3869 = vunpack.c.l.b16 %v3495
  %v3870 = vunpack.c.h.b16 %v3495
  %v3871 = vunpack.c.l.b16 %v3496
  %v3872 = vunpack.c.h.b16 %v3496
  %v3873 = vunpack.c.l.b16 %v3497
  %v3874 = vunpack.c.h.b16 %v3497
  %v3875 = vunpack.c.l.b16 %v3498
  %v3876 = vunpack.c.h.b16 %v3498
  %v3877 = vunpack.c.l.b16 %v3499
  %v3878 = vunpack.c.h.b16 %v3499
  %v3879 = vunpack.c.l.b16 %v3500
  %v3880 = vunpack.c.h.b16 %v3500
  %v3881 = vunpack.c.l.b16 %v3501
  %v3882 = vunpack.c.h.b16 %v3501
  %v3883 = vunpack.c.l.b16 %v3502
  %v3884 = vunpack.c.h.b16 %v3502
  %v3885 = vunpack.c.l.b16 %v3503
  %v3886 = vunpack.c.h.b16 %v3503
  %v3887 = vunpack.c.l.b16 %v3504
  %v3888 = vunpack.c.h.b16 %v3504
  %v3889 = vpack.c.b16 %v3637, %v3633
  %v3890 = vpack.c.b16 %v3638, %v3634
  %v3891 = vpack.c.b16 %v3639, %v3635
  %v3892 = vpack.c.b16 %v3640, %v3636
  %v3893 = vpack.c.b16 %v3645, %v3641
  %v3894 = vpack.c.b16 %v3646, %v3642
  %v3895 = vpack.c.b16 %v3647, %v3643
  %v3896 = vpack.c.b16 %v3648, %v3644
  %v3897 = vpack.c.b16 %v3653, %v3649
  %v3898 = vpack.c.b16 %v3654, %v3650
  %v3899 = vpack.c.b16 %v3655, %v3651
  %v3900 = vpack.c.b16 %v3656, %v3652
  %v3901 = vpack.c.b16 %v3661, %v3657
  %v3902 = vpack.c.b16 %v3662, %v3658
  %v3903 = vpack.c.b16 %v3663, %v3659
  %v3904 = vpack.c.b16 %v3664, %v3660
  %v3905 = vpack.c.b16 %v3669, %v3665
  %v3906 = vpack.c.b16 %v3670, %v3666
  %v3907 = vpack.c.b16 %v3671, %v3667
  %v3908 = vpack.c.b16 %v3672, %v3668
  %v3909 = vpack.c.b16 %v3677, %v3673
  %v3910 = vpack.c.b16 %v3678, %v3674
  %v3911 = vpack.c.b16 %v3679, %v3675
  %v3912 = vpack.c.b16 %v3680, %v3676
  %v3913 = vpack.c.b16 %v3685, %v3681
  %v3914 = vpack.c.b16 %v3686, %v3682
  %v3915 = vpack.c.b16 %v3687, %v3683
  %v3916 = vpack.c.b16 %v3688, %v3684
  %v3917 = vpack.c.b16 %v3693, %v3689
  %v3918 = vpack.c.b16 %v3694, %v3690
  %v3919 = vpack.c.b16 %v3695, %v3691
  %v3920 = vpack.c.b16 %v3696, %v3692
  %v3921 = vpack.c.b16 %v3701, %v3697
  %v3922 = vpack.c.b16 %v3702, %v3698
  %v3923 = vpack.c.b16 %v3703, %v3699
  %v3924 = vpack.c.b16 %v3704, %v3700
  %v3925 = vpack.c.b16 %v3709, %v3705
  %v3926 = vpack.c.b16 %v3710, %v3706
  %v3927 = vpack.c.b16 %v3711, %v3707
  %v3928 = vpack.c.b16 %v3712, %v3708
  %v3929 = vpack.c.b16 %v3717, %v3713
  %v3930 = vpack.c.b16 %v3718, %v3714
  %v3931 = vpack.c.b16 %v3719, %v3715
  %v3932 = vpack.c.b16 %v3720, %v3716
  %v3933 = vpack.c.b16 %v3725, %v3721
  %v3934 = vpack.c.b16 %v3726, %v3722
  %v3935 = vpack.c.b16 %v3727, %v3723
  %v3936 = vpack.c.b16 %v3728, %v3724
  %v3937 = vpack.c.b16 %v3733, %v3729
  %v3938 = vpack.c.b16 %v3734, %v3730
  %v3939 = vpack.c.b16 %v3735, %v3731
  %v3940 = vpack.c.b16 %v3736, %v3732
  %v3941 = vpack.c.b16 %v3741, %v3737
  %v3942 = vpack.c.b16 %v3742, %v3738
  %v3943 = vpack.c.b16 %v3743, %v3739
  %v3944 = vpack.c.b16 %v3744, %v3740
  %v3945 = vpack.c.b16 %v3749, %v3745
  %v3946 = vpack.c.b16 %v3750, %v3746
  %v3947 = vpack.c.b16 %v3751, %v3747
  %v3948 = vpack.c.b16 %v3752, %v3748
  %v3949 = vpack.c.b16 %v3757, %v3753
  %v3950 = vpack.c.b16 %v3758, %v3754
  %v3951 = vpack.c.b16 %v3759, %v3755
  %v3952 = vpack.c.b16 %v3760, %v3756
  %v3953 = vpack.c.b16 %v3765, %v3761
  %v3954 = vpack.c.b16 %v3766, %v3762
  %v3955 = vpack.c.b16 %v3767, %v3763
  %v3956 = vpack.c.b16 %v3768, %v3764
  %v3957 = vpack.c.b16 %v3773, %v3769
  %v3958 = vpack.c.b16 %v3774, %v3770
  %v3959 = vpack.c.b16 %v3775, %v3771
  %v3960 = vpack.c.b16 %v3776, %v3772
  %v3961 = vpack.c.b16 %v3781, %v3777
  %v3962 = vpack.c.b16 %v3782, %v3778
  %v3963 = vpack.c.b16 %v3783, %v3779
  %v3964 = vpack.c.b16 %v3784, %v3780
  %v3965 = vpack.c.b16 %v3789, %v3785
  %v3966 = vpack.c.b16 %v3790, %v3786
  %v3967 = vpack.c.b16 %v3791, %v3787
  %v3968 = vpack.c.b16 %v3792, %v3788
  %v3969 = vpack.c.b16 %v3797, %v3793
  %v3970 = vpack.c.b16 %v3798, %v3794
  %v3971 = vpack.c.b16 %v3799, %v3795
  %v3972 = vpack.c.b16 %v3800, %v3796
  %v3973 = vpack.c.b16 %v3805, %v3801
  %v3974 = vpack.c.b16 %v3806, %v3802
  %v3975 = vpack.c.b16 %v3807, %v3803
  %v3976 = vpack.c.b16 %v3808, %v3804
  %v3977 = vpack.c.b16 %v3813, %v3809
  %v3978 = vpack.c.b16 %v3814, %v3810
  %v3979 = vpack.c.b16 %v3815, %v3811
  %v3980 = vpack.c.b16 %v3816, %v3812
  %v3981 = vpack.c.b16 %v3821, %v3817
  %v3982 = vpack.c.b16 %v3822, %v3818
  %v3983 = vpack.c.b16 %v3823, %v3819
  %v3984 = vpack.c.b16 %v3824, %v3820
  %v3985 = vpack.c.b16 %v3829, %v3825
  %v3986 = vpack.c.b16 %v3830, %v3826
  %v3987 = vpack.c.b16 %v3831, %v3827
  %v3988 = vpack.c.b16 %v3832, %v3828
  %v3989 = vpack.c.b16 %v3837, %v3833
  %v3990 = vpack.c.b16 %v3838, %v3834
  %v3991 = vpack.c.b16 %v3839, %v3835
  %v3992 = vpack.c.b16 %v3840, %v3836
  %v3993 = vpack.c.b16 %v3845, %v3841
  %v3994 = vpack.c.b16 %v3846, %v3842
  %v3995 = vpack.c.b16 %v3847, %v3843
  %v3996 = vpack.c.b16 %v3848, %v3844
  %v3997 = vpack.c.b16 %v3853, %v3849
  %v3998 = vpack.c.b16 %v3854, %v3850
  %v3999 = vpack.c.b16 %v3855, %v3851
  %v4000 = vpack.c.b16 %v3856, %v3852
  %v4001 = vpack.c.b16 %v3861, %v3857
  %v4002 = vpack.c.b16 %v3862, %v3858
  %v4003 = vpack.c.b16 %v3863, %v3859
  %v4004 = vpack.c.b16 %v3864, %v3860
  %v4005 = vpack.c.b16 %v3869, %v3865
  %v4006 = vpack.c.b16 %v3870, %v3866
  %v4007 = vpack.c.b16 %v3871, %v3867
  %v4008 = vpack.c.b16 %v3872, %v3868
  %v4009 = vpack.c.b16 %v3877, %v3873
  %v4010 = vpack.c.b16 %v3878, %v3874
  %v4011 = vpack.c.b16 %v3879, %v3875
  %v4012 = vpack.c.b16 %v3880, %v3876
  %v4013 = vpack.c.b16 %v3885, %v3881
  %v4014 = vpack.c.b16 %v3886, %v3882
  %v4015 = vpack.c.b16 %v3887, %v3883
  %v4016 = vpack.c.b16 %v3888, %v3884
  %4145 = vmatprep.subr.bf16.mxu0 %v3890
  %4146 = vmatpush1.bf16.msra.mxu0 %v3889
  %4147 = vmatprep.subr.bf16.mxu0 %v3894
  %4148 = vmatpush1.bf16.msra.mxu0 %v3893
  %4149 = vmatprep.subr.bf16.mxu0 %v3898
  %4150 = vmatpush1.bf16.msra.mxu0 %v3897
  %4151 = vmatprep.subr.bf16.mxu0 %v3902
  %4152 = vmatpush1.bf16.msra.mxu0 %v3901
  %4153 = vmatprep.subr.bf16.mxu0 %v3906
  %4154 = vmatpush1.bf16.msra.mxu0 %v3905
  %4155 = vmatprep.subr.bf16.mxu0 %v3910
  %4156 = vmatpush1.bf16.msra.mxu0 %v3909
  %4157 = vmatprep.subr.bf16.mxu0 %v3914
  %4158 = vmatpush1.bf16.msra.mxu0 %v3913
  %4159 = vmatprep.subr.bf16.mxu0 %v3918
  %4160 = vmatpush1.bf16.msra.mxu0 %v3917
  %4161 = vmatprep.subr.bf16.mxu0 %v3922
  %4162 = vmatpush1.bf16.msra.mxu0 %v3921
  %4163 = vmatprep.subr.bf16.mxu0 %v3926
  %4164 = vmatpush1.bf16.msra.mxu0 %v3925
  %4165 = vmatprep.subr.bf16.mxu0 %v3930
  %4166 = vmatpush1.bf16.msra.mxu0 %v3929
  %4167 = vmatprep.subr.bf16.mxu0 %v3934
  %4168 = vmatpush1.bf16.msra.mxu0 %v3933
  %4169 = vmatprep.subr.bf16.mxu0 %v3938
  %4170 = vmatpush1.bf16.msra.mxu0 %v3937
  %4171 = vmatprep.subr.bf16.mxu0 %v3942
  %4172 = vmatpush1.bf16.msra.mxu0 %v3941
  %4173 = vmatprep.subr.bf16.mxu0 %v3946
  %4174 = vmatpush1.bf16.msra.mxu0 %v3945
  %4175 = vmatprep.subr.bf16.mxu0 %v3950
  %4176 = vmatpush1.bf16.msra.mxu0 %v3949
  %4177 = vmatprep.mubr.bf16.mxu0 %v3340
  %4178 = vmatmul.mubr.bf16.gmra.mrb[0].mxu0 %v3339
  %v4179 = vpop.f32.mrb[0].mxu0
  %v4180 = vadd.f32 0.0, %v4179
  %v4181 = vpop.f32.mrb[0].mxu0
  %v4182 = vadd.f32 0.0, %v4181
  %v4183 = vpop.f32.mrb[0].mxu0
  %v4184 = vadd.f32 0.0, %v4183
  %v4185 = vpop.f32.mrb[0].mxu0
  %v4186 = vadd.f32 0.0, %v4185
  %4187 = vdwg.mxu0
  %4188 = vmatprep.subr.bf16.mxu0 %v3954
  %4189 = vmatpush1.bf16.msra.mxu0 %v3953
  %4190 = vmatprep.subr.bf16.mxu0 %v3958
  %4191 = vmatpush1.bf16.msra.mxu0 %v3957
  %4192 = vmatprep.subr.bf16.mxu0 %v3962
  %4193 = vmatpush1.bf16.msra.mxu0 %v3961
  %4194 = vmatprep.subr.bf16.mxu0 %v3966
  %4195 = vmatpush1.bf16.msra.mxu0 %v3965
  %4196 = vmatprep.subr.bf16.mxu0 %v3970
  %4197 = vmatpush1.bf16.msra.mxu0 %v3969
  %4198 = vmatprep.subr.bf16.mxu0 %v3974
  %4199 = vmatpush1.bf16.msra.mxu0 %v3973
  %4200 = vmatprep.subr.bf16.mxu0 %v3978
  %4201 = vmatpush1.bf16.msra.mxu0 %v3977
  %4202 = vmatprep.subr.bf16.mxu0 %v3982
  %4203 = vmatpush1.bf16.msra.mxu0 %v3981
  %4204 = vmatprep.subr.bf16.mxu0 %v3986
  %4205 = vmatpush1.bf16.msra.mxu0 %v3985
  %4206 = vmatprep.subr.bf16.mxu0 %v3990
  %4207 = vmatpush1.bf16.msra.mxu0 %v3989
  %4208 = vmatprep.subr.bf16.mxu0 %v3994
  %4209 = vmatpush1.bf16.msra.mxu0 %v3993
  %4210 = vmatprep.subr.bf16.mxu0 %v3998
  %4211 = vmatpush1.bf16.msra.mxu0 %v3997
  %4212 = vmatprep.subr.bf16.mxu0 %v4002
  %4213 = vmatpush1.bf16.msra.mxu0 %v4001
  %4214 = vmatprep.subr.bf16.mxu0 %v4006
  %4215 = vmatpush1.bf16.msra.mxu0 %v4005
  %4216 = vmatprep.subr.bf16.mxu0 %v4010
  %4217 = vmatpush1.bf16.msra.mxu0 %v4009
  %4218 = vmatprep.subr.bf16.mxu0 %v4014
  %4219 = vmatpush1.bf16.msra.mxu0 %v4013
  %4220 = vmatprep.mubr.bf16.mxu0 %v3342
  %4221 = vmatmul.mubr.bf16.gmra.mrb[0].mxu0 %v3341
  %v4222 = vpop.f32.mrb[0].mxu0
  %v4223 = vadd.f32 %v4180, %v4222
  %v4224 = vpop.f32.mrb[0].mxu0
  %v4225 = vadd.f32 %v4182, %v4224
  %v4226 = vpop.f32.mrb[0].mxu0
  %v4227 = vadd.f32 %v4184, %v4226
  %v4228 = vpop.f32.mrb[0].mxu0
  %v4229 = vadd.f32 %v4186, %v4228
  %4230 = vdwg.mxu0
  %4231 = vmatprep.subr.bf16.mxu0 %v3892
  %4232 = vmatpush1.bf16.msra.mxu0 %v3891
  %4233 = vmatprep.subr.bf16.mxu0 %v3896
  %4234 = vmatpush1.bf16.msra.mxu0 %v3895
  %4235 = vmatprep.subr.bf16.mxu0 %v3900
  %4236 = vmatpush1.bf16.msra.mxu0 %v3899
  %4237 = vmatprep.subr.bf16.mxu0 %v3904
  %4238 = vmatpush1.bf16.msra.mxu0 %v3903
  %4239 = vmatprep.subr.bf16.mxu0 %v3908
  %4240 = vmatpush1.bf16.msra.mxu0 %v3907
  %4241 = vmatprep.subr.bf16.mxu0 %v3912
  %4242 = vmatpush1.bf16.msra.mxu0 %v3911
  %4243 = vmatprep.subr.bf16.mxu0 %v3916
  %4244 = vmatpush1.bf16.msra.mxu0 %v3915
  %4245 = vmatprep.subr.bf16.mxu0 %v3920
  %4246 = vmatpush1.bf16.msra.mxu0 %v3919
  %4247 = vmatprep.subr.bf16.mxu0 %v3924
  %4248 = vmatpush1.bf16.msra.mxu0 %v3923
  %4249 = vmatprep.subr.bf16.mxu0 %v3928
  %4250 = vmatpush1.bf16.msra.mxu0 %v3927
  %4251 = vmatprep.subr.bf16.mxu0 %v3932
  %4252 = vmatpush1.bf16.msra.mxu0 %v3931
  %4253 = vmatprep.subr.bf16.mxu0 %v3936
  %4254 = vmatpush1.bf16.msra.mxu0 %v3935
  %4255 = vmatprep.subr.bf16.mxu0 %v3940
  %4256 = vmatpush1.bf16.msra.mxu0 %v3939
  %4257 = vmatprep.subr.bf16.mxu0 %v3944
  %4258 = vmatpush1.bf16.msra.mxu0 %v3943
  %4259 = vmatprep.subr.bf16.mxu0 %v3948
  %4260 = vmatpush1.bf16.msra.mxu0 %v3947
  %4261 = vmatprep.subr.bf16.mxu0 %v3952
  %4262 = vmatpush1.bf16.msra.mxu0 %v3951
  %4263 = vmatprep.mubr.bf16.mxu0 %v3340
  %4264 = vmatmul.mubr.bf16.gmra.mrb[0].mxu0 %v3339
  %v4265 = vpop.f32.mrb[0].mxu0
  %v4266 = vadd.f32 0.0, %v4265
  %v4267 = vpop.f32.mrb[0].mxu0
  %v4268 = vadd.f32 0.0, %v4267
  %v4269 = vpop.f32.mrb[0].mxu0
  %v4270 = vadd.f32 0.0, %v4269
  %v4271 = vpop.f32.mrb[0].mxu0
  %v4272 = vadd.f32 0.0, %v4271
  %4273 = vdwg.mxu0
  %4274 = vmatprep.subr.bf16.mxu0 %v3956
  %4275 = vmatpush1.bf16.msra.mxu0 %v3955
  %4276 = vmatprep.subr.bf16.mxu0 %v3960
  %4277 = vmatpush1.bf16.msra.mxu0 %v3959
  %4278 = vmatprep.subr.bf16.mxu0 %v3964
  %4279 = vmatpush1.bf16.msra.mxu0 %v3963
  %4280 = vmatprep.subr.bf16.mxu0 %v3968
  %4281 = vmatpush1.bf16.msra.mxu0 %v3967
  %4282 = vmatprep.subr.bf16.mxu0 %v3972
  %4283 = vmatpush1.bf16.msra.mxu0 %v3971
  %4284 = vmatprep.subr.bf16.mxu0 %v3976
  %4285 = vmatpush1.bf16.msra.mxu0 %v3975
  %4286 = vmatprep.subr.bf16.mxu0 %v3980
  %4287 = vmatpush1.bf16.msra.mxu0 %v3979
  %4288 = vmatprep.subr.bf16.mxu0 %v3984
  %4289 = vmatpush1.bf16.msra.mxu0 %v3983
  %4290 = vmatprep.subr.bf16.mxu0 %v3988
  %4291 = vmatpush1.bf16.msra.mxu0 %v3987
  %4292 = vmatprep.subr.bf16.mxu0 %v3992
  %4293 = vmatpush1.bf16.msra.mxu0 %v3991
  %4294 = vmatprep.subr.bf16.mxu0 %v3996
  %4295 = vmatpush1.bf16.msra.mxu0 %v3995
  %4296 = vmatprep.subr.bf16.mxu0 %v4000
  %4297 = vmatpush1.bf16.msra.mxu0 %v3999
  %4298 = vmatprep.subr.bf16.mxu0 %v4004
  %4299 = vmatpush1.bf16.msra.mxu0 %v4003
  %4300 = vmatprep.subr.bf16.mxu0 %v4008
  %4301 = vmatpush1.bf16.msra.mxu0 %v4007
  %4302 = vmatprep.subr.bf16.mxu0 %v4012
  %4303 = vmatpush1.bf16.msra.mxu0 %v4011
  %4304 = vmatprep.subr.bf16.mxu0 %v4016
  %4305 = vmatpush1.bf16.msra.mxu0 %v4015
  %4306 = vmatprep.mubr.bf16.mxu0 %v3342
  %4307 = vmatmul.mubr.bf16.gmra.mrb[0].mxu0 %v3341
  %v4308 = vpop.f32.mrb[0].mxu0
  %v4309 = vadd.f32 %v4266, %v4308
  %v4310 = vpop.f32.mrb[0].mxu0
  %v4311 = vadd.f32 %v4268, %v4310
  %v4312 = vpop.f32.mrb[0].mxu0
  %v4313 = vadd.f32 %v4270, %v4312
  %v4314 = vpop.f32.mrb[0].mxu0
  %v4315 = vadd.f32 %v4272, %v4314
  %4316 = vdwg.mxu0
  %v4319 = vunpack.c.l.b16 %v3343
  %v4320 = vunpack.c.l.b16 %v3344
  %v4321 = vpack.c.b16 %v4320, %v4319
  %v4355 = vunpack.c.l.b16 %v3345
  %v4356 = vunpack.c.h.b16 %v3345
  %v4357 = vunpack.c.l.b16 %v3346
  %v4358 = vunpack.c.h.b16 %v3346
  %v4359 = vunpack.c.l.b16 %v3347
  %v4360 = vunpack.c.h.b16 %v3347
  %v4361 = vunpack.c.l.b16 %v3348
  %v4362 = vunpack.c.h.b16 %v3348
  %v4363 = vunpack.c.l.b16 %v3349
  %v4364 = vunpack.c.h.b16 %v3349
  %v4365 = vunpack.c.l.b16 %v3350
  %v4366 = vunpack.c.h.b16 %v3350
  %v4367 = vunpack.c.l.b16 %v3351
  %v4368 = vunpack.c.h.b16 %v3351
  %v4369 = vunpack.c.l.b16 %v3352
  %v4370 = vunpack.c.h.b16 %v3352
  %v4371 = vunpack.c.l.b16 %v3353
  %v4372 = vunpack.c.h.b16 %v3353
  %v4373 = vunpack.c.l.b16 %v3354
  %v4374 = vunpack.c.h.b16 %v3354
  %v4375 = vunpack.c.l.b16 %v3355
  %v4376 = vunpack.c.h.b16 %v3355
  %v4377 = vunpack.c.l.b16 %v3356
  %v4378 = vunpack.c.h.b16 %v3356
  %v4379 = vunpack.c.l.b16 %v3357
  %v4380 = vunpack.c.h.b16 %v3357
  %v4381 = vunpack.c.l.b16 %v3358
  %v4382 = vunpack.c.h.b16 %v3358
  %v4383 = vunpack.c.l.b16 %v3359
  %v4384 = vunpack.c.h.b16 %v3359
  %v4385 = vunpack.c.l.b16 %v3360
  %v4386 = vunpack.c.h.b16 %v3360
  %v4387 = vunpack.c.l.b16 %v3361
  %v4388 = vunpack.c.h.b16 %v3361
  %v4389 = vunpack.c.l.b16 %v3362
  %v4390 = vunpack.c.h.b16 %v3362
  %v4391 = vunpack.c.l.b16 %v3363
  %v4392 = vunpack.c.h.b16 %v3363
  %v4393 = vunpack.c.l.b16 %v3364
  %v4394 = vunpack.c.h.b16 %v3364
  %v4395 = vunpack.c.l.b16 %v3365
  %v4396 = vunpack.c.h.b16 %v3365
  %v4397 = vunpack.c.l.b16 %v3366
  %v4398 = vunpack.c.h.b16 %v3366
  %v4399 = vunpack.c.l.b16 %v3367
  %v4400 = vunpack.c.h.b16 %v3367
  %v4401 = vunpack.c.l.b16 %v3368
  %v4402 = vunpack.c.h.b16 %v3368
  %v4403 = vunpack.c.l.b16 %v3369
  %v4404 = vunpack.c.h.b16 %v3369
  %v4405 = vunpack.c.l.b16 %v3370
  %v4406 = vunpack.c.h.b16 %v3370
  %v4407 = vunpack.c.l.b16 %v3371
  %v4408 = vunpack.c.h.b16 %v3371
  %v4409 = vunpack.c.l.b16 %v3372
  %v4410 = vunpack.c.h.b16 %v3372
  %v4411 = vunpack.c.l.b16 %v3373
  %v4412 = vunpack.c.h.b16 %v3373
  %v4413 = vunpack.c.l.b16 %v3374
  %v4414 = vunpack.c.h.b16 %v3374
  %v4415 = vunpack.c.l.b16 %v3375
  %v4416 = vunpack.c.h.b16 %v3375
  %v4417 = vunpack.c.l.b16 %v3376
  %v4418 = vunpack.c.h.b16 %v3376
  %v4419 = vpack.c.b16 %v4359, %v4355
  %v4420 = vpack.c.b16 %v4360, %v4356
  %v4421 = vpack.c.b16 %v4361, %v4357
  %v4422 = vpack.c.b16 %v4362, %v4358
  %v4423 = vpack.c.b16 %v4367, %v4363
  %v4424 = vpack.c.b16 %v4368, %v4364
  %v4425 = vpack.c.b16 %v4369, %v4365
  %v4426 = vpack.c.b16 %v4370, %v4366
  %v4427 = vpack.c.b16 %v4375, %v4371
  %v4428 = vpack.c.b16 %v4376, %v4372
  %v4429 = vpack.c.b16 %v4377, %v4373
  %v4430 = vpack.c.b16 %v4378, %v4374
  %v4431 = vpack.c.b16 %v4383, %v4379
  %v4432 = vpack.c.b16 %v4384, %v4380
  %v4433 = vpack.c.b16 %v4385, %v4381
  %v4434 = vpack.c.b16 %v4386, %v4382
  %v4435 = vpack.c.b16 %v4391, %v4387
  %v4436 = vpack.c.b16 %v4392, %v4388
  %v4437 = vpack.c.b16 %v4393, %v4389
  %v4438 = vpack.c.b16 %v4394, %v4390
  %v4439 = vpack.c.b16 %v4399, %v4395
  %v4440 = vpack.c.b16 %v4400, %v4396
  %v4441 = vpack.c.b16 %v4401, %v4397
  %v4442 = vpack.c.b16 %v4402, %v4398
  %v4443 = vpack.c.b16 %v4407, %v4403
  %v4444 = vpack.c.b16 %v4408, %v4404
  %v4445 = vpack.c.b16 %v4409, %v4405
  %v4446 = vpack.c.b16 %v4410, %v4406
  %v4447 = vpack.c.b16 %v4415, %v4411
  %v4448 = vpack.c.b16 %v4416, %v4412
  %v4449 = vpack.c.b16 %v4417, %v4413
  %v4450 = vpack.c.b16 %v4418, %v4414
  %4483 = vmatprep.subr.bf16.mxu0 %v4420
  %4484 = vmatpush1.bf16.msra.mxu0 %v4419
  %4485 = vmatprep.subr.bf16.mxu0 %v4424
  %4486 = vmatpush1.bf16.msra.mxu0 %v4423
  %4487 = vmatprep.subr.bf16.mxu0 %v4428
  %4488 = vmatpush1.bf16.msra.mxu0 %v4427
  %4489 = vmatprep.subr.bf16.mxu0 %v4432
  %4490 = vmatpush1.bf16.msra.mxu0 %v4431
  %4491 = vmatprep.subr.bf16.mxu0 %v4436
  %4492 = vmatpush1.bf16.msra.mxu0 %v4435
  %4493 = vmatprep.subr.bf16.mxu0 %v4440
  %4494 = vmatpush1.bf16.msra.mxu0 %v4439
  %4495 = vmatprep.subr.bf16.mxu0 %v4444
  %4496 = vmatpush1.bf16.msra.mxu0 %v4443
  %4497 = vmatprep.subr.bf16.mxu0 %v4448
  %4498 = vmatpush1.bf16.msra.mxu0 %v4447
  %4499 = vmatprep.subr.bf16.mxu0 0
  %4500 = vmatpush1.bf16.msra.mxu0 0
  %4501 = vmatprep.subr.bf16.mxu0 0
  %4502 = vmatpush1.bf16.msra.mxu0 0
  %4503 = vmatprep.subr.bf16.mxu0 0
  %4504 = vmatpush1.bf16.msra.mxu0 0
  %4505 = vmatprep.subr.bf16.mxu0 0
  %4506 = vmatpush1.bf16.msra.mxu0 0
  %4507 = vmatprep.subr.bf16.mxu0 0
  %4508 = vmatpush1.bf16.msra.mxu0 0
  %4509 = vmatprep.subr.bf16.mxu0 0
  %4510 = vmatpush1.bf16.msra.mxu0 0
  %4511 = vmatprep.subr.bf16.mxu0 0
  %4512 = vmatpush1.bf16.msra.mxu0 0
  %4513 = vmatprep.subr.bf16.mxu0 0
  %4514 = vmatpush1.bf16.msra.mxu0 0
  %4515 = vmatprep.mubr.bf16.mxu0 0
  %4516 = vmatmul.mubr.bf16.gmra.mrb[0].mxu0 %v4321
  %v4517 = vpop.f32.mrb[0].mxu0
  %v4518 = vadd.f32 %v4223, %v4517
  %v4519 = vpop.f32.mrb[0].mxu0
  %v4520 = vadd.f32 %v4225, %v4519
  %v4521 = vpop.f32.mrb[0].mxu0
  %v4522 = vadd.f32 %v4227, %v4521
  %v4523 = vpop.f32.mrb[0].mxu0
  %v4524 = vadd.f32 %v4229, %v4523
  %4525 = vdwg.mxu0
  %4526 = vmatprep.subr.bf16.mxu0 %v4422
  %4527 = vmatpush1.bf16.msra.mxu0 %v4421
  %4528 = vmatprep.subr.bf16.mxu0 %v4426
  %4529 = vmatpush1.bf16.msra.mxu0 %v4425
  %4530 = vmatprep.subr.bf16.mxu0 %v4430
  %4531 = vmatpush1.bf16.msra.mxu0 %v4429
  %4532 = vmatprep.subr.bf16.mxu0 %v4434
  %4533 = vmatpush1.bf16.msra.mxu0 %v4433
  %4534 = vmatprep.subr.bf16.mxu0 %v4438
  %4535 = vmatpush1.bf16.msra.mxu0 %v4437
  %4536 = vmatprep.subr.bf16.mxu0 %v4442
  %4537 = vmatpush1.bf16.msra.mxu0 %v4441
  %4538 = vmatprep.subr.bf16.mxu0 %v4446
  %4539 = vmatpush1.bf16.msra.mxu0 %v4445
  %4540 = vmatprep.subr.bf16.mxu0 %v4450
  %4541 = vmatpush1.bf16.msra.mxu0 %v4449
  %4542 = vmatprep.subr.bf16.mxu0 0
  %4543 = vmatpush1.bf16.msra.mxu0 0
  %4544 = vmatprep.subr.bf16.mxu0 0
  %4545 = vmatpush1.bf16.msra.mxu0 0
  %4546 = vmatprep.subr.bf16.mxu0 0
  %4547 = vmatpush1.bf16.msra.mxu0 0
  %4548 = vmatprep.subr.bf16.mxu0 0
  %4549 = vmatpush1.bf16.msra.mxu0 0
  %4550 = vmatprep.subr.bf16.mxu0 0
  %4551 = vmatpush1.bf16.msra.mxu0 0
  %4552 = vmatprep.subr.bf16.mxu0 0
  %4553 = vmatpush1.bf16.msra.mxu0 0
  %4554 = vmatprep.subr.bf16.mxu0 0
  %4555 = vmatpush1.bf16.msra.mxu0 0
  %4556 = vmatprep.subr.bf16.mxu0 0
  %4557 = vmatpush1.bf16.msra.mxu0 0
  %4558 = vmatprep.mubr.bf16.mxu0 0
  %4559 = vmatmul.mubr.bf16.gmra.mrb[0].mxu0 %v4321
  %v4560 = vpop.f32.mrb[0].mxu0
  %v4561 = vadd.f32 %v4309, %v4560
  %v4562 = vpop.f32.mrb[0].mxu0
  %v4563 = vadd.f32 %v4311, %v4562
  %v4564 = vpop.f32.mrb[0].mxu0
  %v4565 = vadd.f32 %v4313, %v4564
  %v4566 = vpop.f32.mrb[0].mxu0
  %v4567 = vadd.f32 %v4315, %v4566
  %4568 = vdwg.mxu0
  %v4569 = vld [vmem:[%s17] sm:$0xf]
  %v4571 = vlaneseq
  %v4572 = vshrl.u32 %v4571, 7
  %v4573 = vsub.s32 0, %v4572
  %v4574 = vrot.slane %v4569, %v4573
  %v4575 = vlaneseq
  %v4576 = vshrl.u32 %v4575, 7
  %v4577 = vsub.s32 1, %v4576
  %v4578 = vrot.slane %v4569, %v4577
  %v4579 = vlaneseq
  %v4580 = vshrl.u32 %v4579, 7
  %v4581 = vsub.s32 2, %v4580
  %v4582 = vrot.slane %v4569, %v4581
  %v4583 = vlaneseq
  %v4584 = vshrl.u32 %v4583, 7
  %v4585 = vsub.s32 3, %v4584
  %v4586 = vrot.slane %v4569, %v4585
  %v4591 = vadd.f32 %v4518, %v4574
  %v4592 = vadd.f32 %v4520, %v4578
  %v4593 = vadd.f32 %v4561, %v4582
  %v4594 = vadd.f32 %v4563, %v4586
  %v4595 = vadd.f32 %v4522, %v4574
  %v4596 = vadd.f32 %v4524, %v4578
  %v4597 = vadd.f32 %v4565, %v4582
  %v4598 = vadd.f32 %v4567, %v4586
  %v4599 = vmax.f32 %v4591, 0.0
  %v4600 = vmax.f32 %v4592, 0.0
  %v4601 = vmax.f32 %v4593, 0.0
  %v4602 = vmax.f32 %v4594, 0.0
  %v4603 = vmax.f32 %v4595, 0.0
  %v4604 = vmax.f32 %v4596, 0.0
  %v4605 = vmax.f32 %v4597, 0.0
  %v4606 = vmax.f32 %v4598, 0.0
  %v4607 = vld [vmem:[%s18] sm:$0xff]
  %v4608 = vld [vmem:[%s18 + $0x8] sm:$0xff]
  %v4609 = vld [vmem:[%s18 + $0x10] sm:$0xff]
  %v4610 = vld [vmem:[%s18 + $0x18] sm:$0xff]
  %v4611 = vld [vmem:[%s18 + $0x20] sm:$0xff]
  %v4612 = vld [vmem:[%s18 + $0x28] sm:$0xff]
  %v4613 = vld [vmem:[%s18 + $0x30] sm:$0xff]
  %v4614 = vld [vmem:[%s18 + $0x38] sm:$0xff]
  %v4615 = vld [vmem:[%s18 + $0x40] sm:$0xff]
  %v4616 = vld [vmem:[%s18 + $0x48] sm:$0xff]
  %v4617 = vld [vmem:[%s18 + $0x50] sm:$0xff]
  %v4618 = vld [vmem:[%s18 + $0x58] sm:$0xff]
  %v4619 = vld [vmem:[%s18 + $0x60] sm:$0xff]
  %v4620 = vld [vmem:[%s18 + $0x68] sm:$0xff]
  %v4621 = vld [vmem:[%s18 + $0x70] sm:$0xff]
  %v4622 = vld [vmem:[%s18 + $0x78] sm:$0xff]
  %v4623 = vld [vmem:[%s18 + $0x80] sm:$0xff]
  %v4624 = vld [vmem:[%s18 + $0x88] sm:$0xff]
  %v4625 = vld [vmem:[%s18 + $0x90] sm:$0xff]
  %v4626 = vld [vmem:[%s18 + $0x98] sm:$0xff]
  %v4627 = vld [vmem:[%s18 + $0xa0] sm:$0xff]
  %v4628 = vld [vmem:[%s18 + $0xa8] sm:$0xff]
  %v4629 = vld [vmem:[%s18 + $0xb0] sm:$0xff]
  %v4630 = vld [vmem:[%s18 + $0xb8] sm:$0xff]
  %v4631 = vld [vmem:[%s18 + $0xc0] sm:$0xff]
  %v4632 = vld [vmem:[%s18 + $0xc8] sm:$0xff]
  %v4633 = vld [vmem:[%s18 + $0xd0] sm:$0xff]
  %v4634 = vld [vmem:[%s18 + $0xd8] sm:$0xff]
  %v4635 = vld [vmem:[%s18 + $0xe0] sm:$0xff]
  %v4636 = vld [vmem:[%s18 + $0xe8] sm:$0xff]
  %v4637 = vld [vmem:[%s18 + $0xf0] sm:$0xff]
  %v4638 = vld [vmem:[%s18 + $0xf8] sm:$0xff]
  %v4639 = vld [vmem:[%s18 + $0x100] sm:$0xff]
  %v4640 = vld [vmem:[%s18 + $0x108] sm:$0xff]
  %v4641 = vld [vmem:[%s18 + $0x110] sm:$0xff]
  %v4642 = vld [vmem:[%s18 + $0x118] sm:$0xff]
  %v4643 = vld [vmem:[%s18 + $0x120] sm:$0xff]
  %v4644 = vld [vmem:[%s18 + $0x128] sm:$0xff]
  %v4645 = vld [vmem:[%s18 + $0x130] sm:$0xff]
  %v4646 = vld [vmem:[%s18 + $0x138] sm:$0xff]
  %v4647 = vld [vmem:[%s18 + $0x140] sm:$0xff]
  %v4648 = vld [vmem:[%s18 + $0x148] sm:$0xff]
  %v4649 = vld [vmem:[%s18 + $0x150] sm:$0xff]
  %v4650 = vld [vmem:[%s18 + $0x158] sm:$0xff]
  %v4651 = vld [vmem:[%s18 + $0x160] sm:$0xff]
  %v4652 = vld [vmem:[%s18 + $0x168] sm:$0xff]
  %v4653 = vld [vmem:[%s18 + $0x170] sm:$0xff]
  %v4654 = vld [vmem:[%s18 + $0x178] sm:$0xff]
  %v4655 = vld [vmem:[%s18 + $0x180] sm:$0xff]
  %v4656 = vld [vmem:[%s18 + $0x188] sm:$0xff]
  %v4657 = vld [vmem:[%s18 + $0x190] sm:$0xff]
  %v4658 = vld [vmem:[%s18 + $0x198] sm:$0xff]
  %v4659 = vld [vmem:[%s18 + $0x1a0] sm:$0xff]
  %v4660 = vld [vmem:[%s18 + $0x1a8] sm:$0xff]
  %v4661 = vld [vmem:[%s18 + $0x1b0] sm:$0xff]
  %v4662 = vld [vmem:[%s18 + $0x1b8] sm:$0xff]
  %v4663 = vld [vmem:[%s18 + $0x1c0] sm:$0xff]
  %v4664 = vld [vmem:[%s18 + $0x1c8] sm:$0xff]
  %v4665 = vld [vmem:[%s18 + $0x1d0] sm:$0xff]
  %v4666 = vld [vmem:[%s18 + $0x1d8] sm:$0xff]
  %v4667 = vld [vmem:[%s18 + $0x1e0] sm:$0xff]
  %v4668 = vld [vmem:[%s18 + $0x1e8] sm:$0xff]
  %v4669 = vld [vmem:[%s18 + $0x1f0] sm:$0xff]
  %v4670 = vld [vmem:[%s18 + $0x1f8] sm:$0xff]
  %v4671 = vld [vmem:[%s19] sm:$0x3]
  %v4672 = vpack.c.bf16 %v4603, %v4599
  %v4673 = vpack.c.bf16 %v4604, %v4600
  %v4674 = vpack.c.bf16 %v4605, %v4601
  %v4675 = vpack.c.bf16 %v4606, %v4602
  %v4677 = vlaneseq
  %v4678 = vshrl.u32 %v4677, 7
  %v4679 = vsub.s32 0, %v4678
  %v4680 = vrot.slane %v4671, %v4679
  %v4681 = vlaneseq
  %v4682 = vshrl.u32 %v4681, 7
  %v4683 = vsub.s32 1, %v4682
  %v4684 = vrot.slane %v4671, %v4683
  %v4751 = vunpack.c.l.b16 %v4607
  %v4752 = vunpack.c.h.b16 %v4607
  %v4753 = vunpack.c.l.b16 %v4608
  %v4754 = vunpack.c.h.b16 %v4608
  %v4755 = vunpack.c.l.b16 %v4609
  %v4756 = vunpack.c.h.b16 %v4609
  %v4757 = vunpack.c.l.b16 %v4610
  %v4758 = vunpack.c.h.b16 %v4610
  %v4759 = vunpack.c.l.b16 %v4611
  %v4760 = vunpack.c.h.b16 %v4611
  %v4761 = vunpack.c.l.b16 %v4612
  %v4762 = vunpack.c.h.b16 %v4612
  %v4763 = vunpack.c.l.b16 %v4613
  %v4764 = vunpack.c.h.b16 %v4613
  %v4765 = vunpack.c.l.b16 %v4614
  %v4766 = vunpack.c.h.b16 %v4614
  %v4767 = vunpack.c.l.b16 %v4615
  %v4768 = vunpack.c.h.b16 %v4615
  %v4769 = vunpack.c.l.b16 %v4616
  %v4770 = vunpack.c.h.b16 %v4616
  %v4771 = vunpack.c.l.b16 %v4617
  %v4772 = vunpack.c.h.b16 %v4617
  %v4773 = vunpack.c.l.b16 %v4618
  %v4774 = vunpack.c.h.b16 %v4618
  %v4775 = vunpack.c.l.b16 %v4619
  %v4776 = vunpack.c.h.b16 %v4619
  %v4777 = vunpack.c.l.b16 %v4620
  %v4778 = vunpack.c.h.b16 %v4620
  %v4779 = vunpack.c.l.b16 %v4621
  %v4780 = vunpack.c.h.b16 %v4621
  %v4781 = vunpack.c.l.b16 %v4622
  %v4782 = vunpack.c.h.b16 %v4622
  %v4783 = vunpack.c.l.b16 %v4623
  %v4784 = vunpack.c.h.b16 %v4623
  %v4785 = vunpack.c.l.b16 %v4624
  %v4786 = vunpack.c.h.b16 %v4624
  %v4787 = vunpack.c.l.b16 %v4625
  %v4788 = vunpack.c.h.b16 %v4625
  %v4789 = vunpack.c.l.b16 %v4626
  %v4790 = vunpack.c.h.b16 %v4626
  %v4791 = vunpack.c.l.b16 %v4627
  %v4792 = vunpack.c.h.b16 %v4627
  %v4793 = vunpack.c.l.b16 %v4628
  %v4794 = vunpack.c.h.b16 %v4628
  %v4795 = vunpack.c.l.b16 %v4629
  %v4796 = vunpack.c.h.b16 %v4629
  %v4797 = vunpack.c.l.b16 %v4630
  %v4798 = vunpack.c.h.b16 %v4630
  %v4799 = vunpack.c.l.b16 %v4631
  %v4800 = vunpack.c.h.b16 %v4631
  %v4801 = vunpack.c.l.b16 %v4632
  %v4802 = vunpack.c.h.b16 %v4632
  %v4803 = vunpack.c.l.b16 %v4633
  %v4804 = vunpack.c.h.b16 %v4633
  %v4805 = vunpack.c.l.b16 %v4634
  %v4806 = vunpack.c.h.b16 %v4634
  %v4807 = vunpack.c.l.b16 %v4635
  %v4808 = vunpack.c.h.b16 %v4635
  %v4809 = vunpack.c.l.b16 %v4636
  %v4810 = vunpack.c.h.b16 %v4636
  %v4811 = vunpack.c.l.b16 %v4637
  %v4812 = vunpack.c.h.b16 %v4637
  %v4813 = vunpack.c.l.b16 %v4638
  %v4814 = vunpack.c.h.b16 %v4638
  %v4815 = vunpack.c.l.b16 %v4639
  %v4816 = vunpack.c.h.b16 %v4639
  %v4817 = vunpack.c.l.b16 %v4640
  %v4818 = vunpack.c.h.b16 %v4640
  %v4819 = vunpack.c.l.b16 %v4641
  %v4820 = vunpack.c.h.b16 %v4641
  %v4821 = vunpack.c.l.b16 %v4642
  %v4822 = vunpack.c.h.b16 %v4642
  %v4823 = vunpack.c.l.b16 %v4643
  %v4824 = vunpack.c.h.b16 %v4643
  %v4825 = vunpack.c.l.b16 %v4644
  %v4826 = vunpack.c.h.b16 %v4644
  %v4827 = vunpack.c.l.b16 %v4645
  %v4828 = vunpack.c.h.b16 %v4645
  %v4829 = vunpack.c.l.b16 %v4646
  %v4830 = vunpack.c.h.b16 %v4646
  %v4831 = vunpack.c.l.b16 %v4647
  %v4832 = vunpack.c.h.b16 %v4647
  %v4833 = vunpack.c.l.b16 %v4648
  %v4834 = vunpack.c.h.b16 %v4648
  %v4835 = vunpack.c.l.b16 %v4649
  %v4836 = vunpack.c.h.b16 %v4649
  %v4837 = vunpack.c.l.b16 %v4650
  %v4838 = vunpack.c.h.b16 %v4650
  %v4839 = vunpack.c.l.b16 %v4651
  %v4840 = vunpack.c.h.b16 %v4651
  %v4841 = vunpack.c.l.b16 %v4652
  %v4842 = vunpack.c.h.b16 %v4652
  %v4843 = vunpack.c.l.b16 %v4653
  %v4844 = vunpack.c.h.b16 %v4653
  %v4845 = vunpack.c.l.b16 %v4654
  %v4846 = vunpack.c.h.b16 %v4654
  %v4847 = vunpack.c.l.b16 %v4655
  %v4848 = vunpack.c.h.b16 %v4655
  %v4849 = vunpack.c.l.b16 %v4656
  %v4850 = vunpack.c.h.b16 %v4656
  %v4851 = vunpack.c.l.b16 %v4657
  %v4852 = vunpack.c.h.b16 %v4657
  %v4853 = vunpack.c.l.b16 %v4658
  %v4854 = vunpack.c.h.b16 %v4658
  %v4855 = vunpack.c.l.b16 %v4659
  %v4856 = vunpack.c.h.b16 %v4659
  %v4857 = vunpack.c.l.b16 %v4660
  %v4858 = vunpack.c.h.b16 %v4660
  %v4859 = vunpack.c.l.b16 %v4661
  %v4860 = vunpack.c.h.b16 %v4661
  %v4861 = vunpack.c.l.b16 %v4662
  %v4862 = vunpack.c.h.b16 %v4662
  %v4863 = vunpack.c.l.b16 %v4663
  %v4864 = vunpack.c.h.b16 %v4663
  %v4865 = vunpack.c.l.b16 %v4664
  %v4866 = vunpack.c.h.b16 %v4664
  %v4867 = vunpack.c.l.b16 %v4665
  %v4868 = vunpack.c.h.b16 %v4665
  %v4869 = vunpack.c.l.b16 %v4666
  %v4870 = vunpack.c.h.b16 %v4666
  %v4871 = vunpack.c.l.b16 %v4667
  %v4872 = vunpack.c.h.b16 %v4667
  %v4873 = vunpack.c.l.b16 %v4668
  %v4874 = vunpack.c.h.b16 %v4668
  %v4875 = vunpack.c.l.b16 %v4669
  %v4876 = vunpack.c.h.b16 %v4669
  %v4877 = vunpack.c.l.b16 %v4670
  %v4878 = vunpack.c.h.b16 %v4670
  %v4879 = vpack.c.b16 %v4753, %v4751
  %v4880 = vpack.c.b16 %v4754, %v4752
  %v4881 = vpack.c.b16 %v4757, %v4755
  %v4882 = vpack.c.b16 %v4758, %v4756
  %v4883 = vpack.c.b16 %v4761, %v4759
  %v4884 = vpack.c.b16 %v4762, %v4760
  %v4885 = vpack.c.b16 %v4765, %v4763
  %v4886 = vpack.c.b16 %v4766, %v4764
  %v4887 = vpack.c.b16 %v4769, %v4767
  %v4888 = vpack.c.b16 %v4770, %v4768
  %v4889 = vpack.c.b16 %v4773, %v4771
  %v4890 = vpack.c.b16 %v4774, %v4772
  %v4891 = vpack.c.b16 %v4777, %v4775
  %v4892 = vpack.c.b16 %v4778, %v4776
  %v4893 = vpack.c.b16 %v4781, %v4779
  %v4894 = vpack.c.b16 %v4782, %v4780
  %v4895 = vpack.c.b16 %v4785, %v4783
  %v4896 = vpack.c.b16 %v4786, %v4784
  %v4897 = vpack.c.b16 %v4789, %v4787
  %v4898 = vpack.c.b16 %v4790, %v4788
  %v4899 = vpack.c.b16 %v4793, %v4791
  %v4900 = vpack.c.b16 %v4794, %v4792
  %v4901 = vpack.c.b16 %v4797, %v4795
  %v4902 = vpack.c.b16 %v4798, %v4796
  %v4903 = vpack.c.b16 %v4801, %v4799
  %v4904 = vpack.c.b16 %v4802, %v4800
  %v4905 = vpack.c.b16 %v4805, %v4803
  %v4906 = vpack.c.b16 %v4806, %v4804
  %v4907 = vpack.c.b16 %v4809, %v4807
  %v4908 = vpack.c.b16 %v4810, %v4808
  %v4909 = vpack.c.b16 %v4813, %v4811
  %v4910 = vpack.c.b16 %v4814, %v4812
  %v4911 = vpack.c.b16 %v4817, %v4815
  %v4912 = vpack.c.b16 %v4818, %v4816
  %v4913 = vpack.c.b16 %v4821, %v4819
  %v4914 = vpack.c.b16 %v4822, %v4820
  %v4915 = vpack.c.b16 %v4825, %v4823
  %v4916 = vpack.c.b16 %v4826, %v4824
  %v4917 = vpack.c.b16 %v4829, %v4827
  %v4918 = vpack.c.b16 %v4830, %v4828
  %v4919 = vpack.c.b16 %v4833, %v4831
  %v4920 = vpack.c.b16 %v4834, %v4832
  %v4921 = vpack.c.b16 %v4837, %v4835
  %v4922 = vpack.c.b16 %v4838, %v4836
  %v4923 = vpack.c.b16 %v4841, %v4839
  %v4924 = vpack.c.b16 %v4842, %v4840
  %v4925 = vpack.c.b16 %v4845, %v4843
  %v4926 = vpack.c.b16 %v4846, %v4844
  %v4927 = vpack.c.b16 %v4849, %v4847
  %v4928 = vpack.c.b16 %v4850, %v4848
  %v4929 = vpack.c.b16 %v4853, %v4851
  %v4930 = vpack.c.b16 %v4854, %v4852
  %v4931 = vpack.c.b16 %v4857, %v4855
  %v4932 = vpack.c.b16 %v4858, %v4856
  %v4933 = vpack.c.b16 %v4861, %v4859
  %v4934 = vpack.c.b16 %v4862, %v4860
  %v4935 = vpack.c.b16 %v4865, %v4863
  %v4936 = vpack.c.b16 %v4866, %v4864
  %v4937 = vpack.c.b16 %v4869, %v4867
  %v4938 = vpack.c.b16 %v4870, %v4868
  %v4939 = vpack.c.b16 %v4873, %v4871
  %v4940 = vpack.c.b16 %v4874, %v4872
  %v4941 = vpack.c.b16 %v4877, %v4875
  %v4942 = vpack.c.b16 %v4878, %v4876
  %5007 = vmatprep.subr.bf16.mxu0 %v4880
  %5008 = vmatpush1.bf16.msra.mxu0 %v4879
  %5009 = vmatprep.subr.bf16.mxu0 %v4882
  %5010 = vmatpush1.bf16.msra.mxu0 %v4881
  %5011 = vmatprep.subr.bf16.mxu0 %v4884
  %5012 = vmatpush1.bf16.msra.mxu0 %v4883
  %5013 = vmatprep.subr.bf16.mxu0 %v4886
  %5014 = vmatpush1.bf16.msra.mxu0 %v4885
  %5015 = vmatprep.subr.bf16.mxu0 %v4888
  %5016 = vmatpush1.bf16.msra.mxu0 %v4887
  %5017 = vmatprep.subr.bf16.mxu0 %v4890
  %5018 = vmatpush1.bf16.msra.mxu0 %v4889
  %5019 = vmatprep.subr.bf16.mxu0 %v4892
  %5020 = vmatpush1.bf16.msra.mxu0 %v4891
  %5021 = vmatprep.subr.bf16.mxu0 %v4894
  %5022 = vmatpush1.bf16.msra.mxu0 %v4893
  %5023 = vmatprep.subr.bf16.mxu0 %v4896
  %5024 = vmatpush1.bf16.msra.mxu0 %v4895
  %5025 = vmatprep.subr.bf16.mxu0 %v4898
  %5026 = vmatpush1.bf16.msra.mxu0 %v4897
  %5027 = vmatprep.subr.bf16.mxu0 %v4900
  %5028 = vmatpush1.bf16.msra.mxu0 %v4899
  %5029 = vmatprep.subr.bf16.mxu0 %v4902
  %5030 = vmatpush1.bf16.msra.mxu0 %v4901
  %5031 = vmatprep.subr.bf16.mxu0 %v4904
  %5032 = vmatpush1.bf16.msra.mxu0 %v4903
  %5033 = vmatprep.subr.bf16.mxu0 %v4906
  %5034 = vmatpush1.bf16.msra.mxu0 %v4905
  %5035 = vmatprep.subr.bf16.mxu0 %v4908
  %5036 = vmatpush1.bf16.msra.mxu0 %v4907
  %5037 = vmatprep.subr.bf16.mxu0 %v4910
  %5038 = vmatpush1.bf16.msra.mxu0 %v4909
  %5039 = vmatprep.mubr.bf16.mxu0 %v4673
  %5040 = vmatmul.mubr.bf16.gmra.mrb[0].mxu0 %v4672
  %v5041 = vpop.f32.mrb[0].mxu0
  %v5042 = vadd.f32 %v4680, %v5041
  %v5043 = vpop.f32.mrb[0].mxu0
  %v5044 = vadd.f32 %v4684, %v5043
  %v5045 = vpop.f32.mrb[0].mxu0
  %v5046 = vadd.f32 %v4680, %v5045
  %v5047 = vpop.f32.mrb[0].mxu0
  %v5048 = vadd.f32 %v4684, %v5047
  %5049 = vdwg.mxu0
  %5050 = vmatprep.subr.bf16.mxu0 %v4912
  %5051 = vmatpush1.bf16.msra.mxu0 %v4911
  %5052 = vmatprep.subr.bf16.mxu0 %v4914
  %5053 = vmatpush1.bf16.msra.mxu0 %v4913
  %5054 = vmatprep.subr.bf16.mxu0 %v4916
  %5055 = vmatpush1.bf16.msra.mxu0 %v4915
  %5056 = vmatprep.subr.bf16.mxu0 %v4918
  %5057 = vmatpush1.bf16.msra.mxu0 %v4917
  %5058 = vmatprep.subr.bf16.mxu0 %v4920
  %5059 = vmatpush1.bf16.msra.mxu0 %v4919
  %5060 = vmatprep.subr.bf16.mxu0 %v4922
  %5061 = vmatpush1.bf16.msra.mxu0 %v4921
  %5062 = vmatprep.subr.bf16.mxu0 %v4924
  %5063 = vmatpush1.bf16.msra.mxu0 %v4923
  %5064 = vmatprep.subr.bf16.mxu0 %v4926
  %5065 = vmatpush1.bf16.msra.mxu0 %v4925
  %5066 = vmatprep.subr.bf16.mxu0 %v4928
  %5067 = vmatpush1.bf16.msra.mxu0 %v4927
  %5068 = vmatprep.subr.bf16.mxu0 %v4930
  %5069 = vmatpush1.bf16.msra.mxu0 %v4929
  %5070 = vmatprep.subr.bf16.mxu0 %v4932
  %5071 = vmatpush1.bf16.msra.mxu0 %v4931
  %5072 = vmatprep.subr.bf16.mxu0 %v4934
  %5073 = vmatpush1.bf16.msra.mxu0 %v4933
  %5074 = vmatprep.subr.bf16.mxu0 %v4936
  %5075 = vmatpush1.bf16.msra.mxu0 %v4935
  %5076 = vmatprep.subr.bf16.mxu0 %v4938
  %5077 = vmatpush1.bf16.msra.mxu0 %v4937
  %5078 = vmatprep.subr.bf16.mxu0 %v4940
  %5079 = vmatpush1.bf16.msra.mxu0 %v4939
  %5080 = vmatprep.subr.bf16.mxu0 %v4942
  %5081 = vmatpush1.bf16.msra.mxu0 %v4941
  %5082 = vmatprep.mubr.bf16.mxu0 %v4675
  %5083 = vmatmul.mubr.bf16.gmra.mrb[0].mxu0 %v4674
  %v5084 = vpop.f32.mrb[0].mxu0
  %v5085 = vadd.f32 %v5042, %v5084
  %v5086 = vpop.f32.mrb[0].mxu0
  %v5087 = vadd.f32 %v5044, %v5086
  %v5088 = vpop.f32.mrb[0].mxu0
  %v5089 = vadd.f32 %v5046, %v5088
  %v5090 = vpop.f32.mrb[0].mxu0
  %v5091 = vadd.f32 %v5048, %v5090
  %5092 = vdwg.mxu0
  %v5093 = vmax.f32 %v5085, 0.0
  %v5094 = vmax.f32 %v5087, 0.0
  %v5095 = vmax.f32 %v5089, 0.0
  %v5096 = vmax.f32 %v5091, 0.0
  %v5097 = vld [vmem:[%s20] sm:$0xf]
  %v5098 = vld [vmem:[%s20 + $0x4] sm:$0xf]
  %v5099 = vld [vmem:[%s20 + $0x8] sm:$0xf]
  %v5100 = vld [vmem:[%s20 + $0xc] sm:$0xf]
  %v5101 = vld [vmem:[%s20 + $0x10] sm:$0xf]
  %v5102 = vld [vmem:[%s20 + $0x14] sm:$0xf]
  %v5103 = vld [vmem:[%s20 + $0x18] sm:$0xf]
  %v5104 = vld [vmem:[%s20 + $0x1c] sm:$0xf]
  %v5105 = vld [vmem:[%s20 + $0x20] sm:$0xf]
  %v5106 = vld [vmem:[%s20 + $0x24] sm:$0xf]
  %v5107 = vld [vmem:[%s20 + $0x28] sm:$0xf]
  %v5108 = vld [vmem:[%s20 + $0x2c] sm:$0xf]
  %v5109 = vld [vmem:[%s20 + $0x30] sm:$0xf]
  %v5110 = vld [vmem:[%s20 + $0x34] sm:$0xf]
  %v5111 = vld [vmem:[%s20 + $0x38] sm:$0xf]
  %v5112 = vld [vmem:[%s20 + $0x3c] sm:$0xf]
  %v5113 = vld [vmem:[%s20 + $0x40] sm:$0xf]
  %v5114 = vld [vmem:[%s20 + $0x44] sm:$0xf]
  %v5115 = vld [vmem:[%s20 + $0x48] sm:$0xf]
  %v5116 = vld [vmem:[%s20 + $0x4c] sm:$0xf]
  %v5117 = vld [vmem:[%s20 + $0x50] sm:$0xf]
  %v5118 = vld [vmem:[%s20 + $0x54] sm:$0xf]
  %v5119 = vld [vmem:[%s20 + $0x58] sm:$0xf]
  %v5120 = vld [vmem:[%s20 + $0x5c] sm:$0xf]
  %v5121 = vld [vmem:[%s20 + $0x60] sm:$0xf]
  %v5122 = vld [vmem:[%s20 + $0x64] sm:$0xf]
  %v5123 = vld [vmem:[%s20 + $0x68] sm:$0xf]
  %v5124 = vld [vmem:[%s20 + $0x6c] sm:$0xf]
  %v5125 = vld [vmem:[%s20 + $0x70] sm:$0xf]
  %v5126 = vld [vmem:[%s20 + $0x74] sm:$0xf]
  %v5127 = vld [vmem:[%s20 + $0x78] sm:$0xf]
  %v5128 = vld [vmem:[%s20 + $0x7c] sm:$0xf]
  %v5129 = vpack.c.bf16 %v5095, %v5093
  %v5130 = vpack.c.bf16 %v5096, %v5094
  %v5131 = vld [vmem:[%s21] sm:$0x1]
  %v5133 = vlaneseq
  %v5134 = vshrl.u32 %v5133, 7
  %v5135 = vsub.s32 0, %v5134
  %v5136 = vrot.slane %v5131, %v5135
  %v5170 = vunpack.c.l.b16 %v5097
  %v5171 = vunpack.c.l.b16 %v5098
  %v5172 = vunpack.c.l.b16 %v5099
  %v5173 = vunpack.c.l.b16 %v5100
  %v5174 = vunpack.c.l.b16 %v5101
  %v5175 = vunpack.c.l.b16 %v5102
  %v5176 = vunpack.c.l.b16 %v5103
  %v5177 = vunpack.c.l.b16 %v5104
  %v5178 = vunpack.c.l.b16 %v5105
  %v5179 = vunpack.c.l.b16 %v5106
  %v5180 = vunpack.c.l.b16 %v5107
  %v5181 = vunpack.c.l.b16 %v5108
  %v5182 = vunpack.c.l.b16 %v5109
  %v5183 = vunpack.c.l.b16 %v5110
  %v5184 = vunpack.c.l.b16 %v5111
  %v5185 = vunpack.c.l.b16 %v5112
  %v5186 = vunpack.c.l.b16 %v5113
  %v5187 = vunpack.c.l.b16 %v5114
  %v5188 = vunpack.c.l.b16 %v5115
  %v5189 = vunpack.c.l.b16 %v5116
  %v5190 = vunpack.c.l.b16 %v5117
  %v5191 = vunpack.c.l.b16 %v5118
  %v5192 = vunpack.c.l.b16 %v5119
  %v5193 = vunpack.c.l.b16 %v5120
  %v5194 = vunpack.c.l.b16 %v5121
  %v5195 = vunpack.c.l.b16 %v5122
  %v5196 = vunpack.c.l.b16 %v5123
  %v5197 = vunpack.c.l.b16 %v5124
  %v5198 = vunpack.c.l.b16 %v5125
  %v5199 = vunpack.c.l.b16 %v5126
  %v5200 = vunpack.c.l.b16 %v5127
  %v5201 = vunpack.c.l.b16 %v5128
  %v5202 = vpack.c.b16 %v5171, %v5170
  %v5203 = vpack.c.b16 %v5173, %v5172
  %v5204 = vpack.c.b16 %v5175, %v5174
  %v5205 = vpack.c.b16 %v5177, %v5176
  %v5206 = vpack.c.b16 %v5179, %v5178
  %v5207 = vpack.c.b16 %v5181, %v5180
  %v5208 = vpack.c.b16 %v5183, %v5182
  %v5209 = vpack.c.b16 %v5185, %v5184
  %v5210 = vpack.c.b16 %v5187, %v5186
  %v5211 = vpack.c.b16 %v5189, %v5188
  %v5212 = vpack.c.b16 %v5191, %v5190
  %v5213 = vpack.c.b16 %v5193, %v5192
  %v5214 = vpack.c.b16 %v5195, %v5194
  %v5215 = vpack.c.b16 %v5197, %v5196
  %v5216 = vpack.c.b16 %v5199, %v5198
  %v5217 = vpack.c.b16 %v5201, %v5200
  %5234 = vmatprep.subr.bf16.mxu0 0
  %5235 = vmatpush1.bf16.msra.mxu0 %v5202
  %5236 = vmatprep.subr.bf16.mxu0 0
  %5237 = vmatpush1.bf16.msra.mxu0 %v5203
  %5238 = vmatprep.subr.bf16.mxu0 0
  %5239 = vmatpush1.bf16.msra.mxu0 %v5204
  %5240 = vmatprep.subr.bf16.mxu0 0
  %5241 = vmatpush1.bf16.msra.mxu0 %v5205
  %5242 = vmatprep.subr.bf16.mxu0 0
  %5243 = vmatpush1.bf16.msra.mxu0 %v5206
  %5244 = vmatprep.subr.bf16.mxu0 0
  %5245 = vmatpush1.bf16.msra.mxu0 %v5207
  %5246 = vmatprep.subr.bf16.mxu0 0
  %5247 = vmatpush1.bf16.msra.mxu0 %v5208
  %5248 = vmatprep.subr.bf16.mxu0 0
  %5249 = vmatpush1.bf16.msra.mxu0 %v5209
  %5250 = vmatprep.subr.bf16.mxu0 0
  %5251 = vmatpush1.bf16.msra.mxu0 %v5210
  %5252 = vmatprep.subr.bf16.mxu0 0
  %5253 = vmatpush1.bf16.msra.mxu0 %v5211
  %5254 = vmatprep.subr.bf16.mxu0 0
  %5255 = vmatpush1.bf16.msra.mxu0 %v5212
  %5256 = vmatprep.subr.bf16.mxu0 0
  %5257 = vmatpush1.bf16.msra.mxu0 %v5213
  %5258 = vmatprep.subr.bf16.mxu0 0
  %5259 = vmatpush1.bf16.msra.mxu0 %v5214
  %5260 = vmatprep.subr.bf16.mxu0 0
  %5261 = vmatpush1.bf16.msra.mxu0 %v5215
  %5262 = vmatprep.subr.bf16.mxu0 0
  %5263 = vmatpush1.bf16.msra.mxu0 %v5216
  %5264 = vmatprep.subr.bf16.mxu0 0
  %5265 = vmatpush1.bf16.msra.mxu0 %v5217
  %5266 = vmatprep.mubr.bf16.mxu0 %v5130
  %5267 = vmatmul.mubr.bf16.gmra.mrb[0].mxu0 %v5129
  %v5268 = vpop.f32.mrb[0].mxu0
  %v5269 = vadd.f32 %v5136, %v5268
  %v5270 = vpop.f32.mrb[0].mxu0
  %v5271 = vpop.f32.mrb[0].mxu0
  %v5272 = vadd.f32 %v5136, %v5271
  %v5273 = vpop.f32.mrb[0].mxu0
  %5274 = vdwg.mxu0
  %5275 = vst [vmem:[%s22] sm:$0xff] %v5269
  %5276 = vst [vmem:[%s22 + $0x8] sm:$0xff] %v5272
  // Predicated region
  $region90: #{forward.3} parent=0 // pred_check
    _
  $region91: #{forward.3} parent=0 // pred_check_branch
    %5278 = sbr.rel (0) target = $region93
  $region92: #{forward.3} parent=0 // pred_region
    _
  $region93: #{forward.3} parent=0 // pred_fallthru
    _
  // Predicated region
  $region94: #{forward.3} parent=0 // pred_check
    _
  $region95: #{forward.3} parent=0 // pred_check_branch
    %5280 = sbr.rel (0) target = $region97
  $region96: #{forward.3} parent=0 // pred_region
    _
  $region97: #{forward.3} parent=0 // pred_fallthru
    _

</llo_original>
